<compile_context>
chip_gen: v7x
topology: tpu7x:2x2x1
jax: 0.10.0
libtpu: 0.0.40
codegen_flags: <defaults>
</compile_context>

<pallas_src>
import jax
import jax.numpy as jnp
from jax.experimental import pallas as pl
from jax.experimental.pallas import tpu as pltpu  # noqa: F401  (kept for TPU-specific params if needed)


# ----------------------------- config (small, deterministic) -----------------------------
SEQ_LEN   = 16   # configs.seq_len
PRED_LEN  = 8    # configs.pred_len
ENC_IN    = 7    # number of variates N
D_MODEL   = 32   # configs.d_model
N_HEADS   = 4    # configs.n_heads
D_FF      = 64   # configs.d_ff
E_LAYERS  = 2    # configs.e_layers
BATCH     = 2
LN_EPS    = 1e-5
# configs.activation == 'relu', task_name == 'long_term_forecast', dropout -> eval (identity)


def _layernorm(x, gamma, beta, eps=LN_EPS):
    mu = jnp.mean(x, axis=-1, keepdims=True)
    var = jnp.mean((x - mu) ** 2, axis=-1, keepdims=True)
    return (x - mu) * jax.lax.rsqrt(var + eps) * gamma + beta


# ----------------------------------- fused kernel -----------------------------------------
def caformer_kernel(x_ref, emb_w_ref, emb_b_ref,
                    wq_ref, bq_ref, wk_ref, bk_ref, wv_ref, bv_ref,
                    wo_ref, bo_ref, ln1_g_ref, ln1_b_ref,
                    w1_ref, b1_ref, w2_ref, b2_ref, ln2_g_ref, ln2_b_ref,
                    lnf_g_ref, lnf_b_ref, wp_ref, bp_ref,
                    o_ref):
    """Whole forward pass for the whole batch in one invocation.
    x_ref: [B, L, N]  ->  o_ref: [B, P, N]."""
    f32 = jnp.float32

    # Load shared weights once.
    emb_w = emb_w_ref[...]        # [L, D]
    emb_b = emb_b_ref[...]        # [1, D]
    lnf_g = lnf_g_ref[...]
    lnf_b = lnf_b_ref[...]
    wp = wp_ref[...]              # [D, P]
    bp = bp_ref[...]              # [P, 1]

    # Load per-layer weights once (static layer indices).
    layers = []
    for l in range(E_LAYERS):
        layers.append((wq_ref[l], bq_ref[l], wk_ref[l], bk_ref[l],
                       wv_ref[l], bv_ref[l], wo_ref[l], bo_ref[l],
                       ln1_g_ref[l], ln1_b_ref[l],
                       w1_ref[l], b1_ref[l], w2_ref[l], b2_ref[l],
                       ln2_g_ref[l], ln2_b_ref[l]))

    dh = D_MODEL // N_HEADS
    scale = 1.0 / (dh ** 0.5)

    for b in range(BATCH):                              # static unroll over batch
        # ---- non-stationary normalization over time (per variate) ----
        xb = x_ref[b].astype(f32)                       # [L, N]
        mu = jnp.mean(xb, axis=0, keepdims=True)        # [1, N]
        xc = xb - mu
        var = jnp.mean(xc * xc, axis=0, keepdims=True)  # biased variance (unbiased=False)
        std = jnp.sqrt(var + 1e-5)
        xn = xc / std                                   # [L, N]

        # ---- inverted embedding: Linear(seq_len -> d_model) over the time axis ----
        h = jax.lax.dot_general(xn, emb_w, (((0,), (0,)), ((), ())),
                                preferred_element_type=f32) + emb_b          # [N, D]

        # ---- encoder layers: MHA + residual + LN, FFN + residual + LN ----
        for (wq, bq, wk, bk, wv, bv, wo, bo,
             g1, bt1, w1, bf1, w2, bf2, g2, bt2) in layers:
            q = jnp.dot(h, wq, preferred_element_type=f32) + bq              # [N, D]
            k = jnp.dot(h, wk, preferred_element_type=f32) + bk
            v = jnp.dot(h, wv, preferred_element_type=f32) + bv

            attn_out = None
            for hd in range(N_HEADS):
                sl = slice(hd * dh, (hd + 1) * dh)
                qh, kh, vh = q[:, sl], k[:, sl], v[:, sl]                    # [N, dh]
                s = jax.lax.dot_general(qh, kh, (((1,), (1,)), ((), ())),
                                        preferred_element_type=f32) * scale  # [N, N]
                s = s - jnp.max(s, axis=-1, keepdims=True)
                e = jnp.exp(s)
                a = e / jnp.sum(e, axis=-1, keepdims=True)
                oh = jnp.dot(a, vh, preferred_element_type=f32)              # [N, dh]
                # per-head output projection (sum over heads == concat(heads) @ wo)
                contrib = jnp.dot(oh, wo[sl, :], preferred_element_type=f32) # [N, D]
                attn_out = contrib if attn_out is None else attn_out + contrib

            y = _layernorm(h + attn_out + bo, g1, bt1)                       # LN1
            ff = jnp.maximum(jnp.dot(y, w1, preferred_element_type=f32) + bf1, 0.0)
            ff = jnp.dot(ff, w2, preferred_element_type=f32) + bf2
            h = _layernorm(y + ff, g2, bt2)                                  # LN2

        # ---- final encoder LayerNorm + projection(d_model -> pred_len) + de-norm ----
        h = _layernorm(h, lnf_g, lnf_b)                                      # [N, D]
        # proj[p, n] = sum_d wp[d, p] * h[n, d]   ->  [P, N]  (matches PyTorch permute)
        proj = jax.lax.dot_general(wp, h, (((0,), (1,)), ((), ())),
                                   preferred_element_type=f32) + bp          # [P, N]
        o_ref[b] = proj * std + mu                                           # de-normalize


# ----------------------------------- wrapper -----------------------------------------------
def caformer_forward(params, x_enc, x_mark_enc=None, x_dec=None, x_mark_dec=None):
    """Forecast path.  x_enc: [B, L, N] -> [B, pred_len, N].
    (x_mark_enc is None; x_dec / x_mark_dec unused in the forecast branch.)"""
    B, L, N = x_enc.shape
    out = pl.pallas_call(
        caformer_kernel,
        out_shape=jax.ShapeDtypeStruct((B, PRED_LEN, N), jnp.float32),
    )(x_enc,
      params["emb_w"], params["emb_b"],
      params["wq"], params["bq"], params["wk"], params["bk"],
      params["wv"], params["bv"], params["wo"], params["bo"],
      params["ln1_g"], params["ln1_b"],
      params["w1"], params["b1"], params["w2"], params["b2"],
      params["ln2_g"], params["ln2_b"],
      params["lnf_g"], params["lnf_b"], params["wp"], params["bp"])
    return out[:, -PRED_LEN:, :]


# ----------------------------------- params ------------------------------------------------
def init_params(key):
    keys = jax.random.split(key, 24)
    it = iter(keys)
    nrm = lambda shape, s=0.1: s * jax.random.normal(next(it), shape, jnp.float32)
    E, D, F, L, P = E_LAYERS, D_MODEL, D_FF, SEQ_LEN, PRED_LEN
    return {
        "emb_w": nrm((L, D)), "emb_b": nrm((1, D)),
        "wq": nrm((E, D, D)), "bq": nrm((E, 1, D)),
        "wk": nrm((E, D, D)), "bk": nrm((E, 1, D)),
        "wv": nrm((E, D, D)), "bv": nrm((E, 1, D)),
        "wo": nrm((E, D, D)), "bo": nrm((E, 1, D)),
        "ln1_g": jnp.ones((E, 1, D), jnp.float32), "ln1_b": jnp.zeros((E, 1, D), jnp.float32),
        "w1": nrm((E, D, F)), "b1": nrm((E, 1, F)),
        "w2": nrm((E, F, D)), "b2": nrm((E, 1, D)),
        "ln2_g": jnp.ones((E, 1, D), jnp.float32), "ln2_b": jnp.zeros((E, 1, D), jnp.float32),
        "lnf_g": jnp.ones((1, D), jnp.float32), "lnf_b": jnp.zeros((1, D), jnp.float32),
        "wp": nrm((D, P)), "bp": nrm((P, 1)),
    }


# ----------------------------------- pure-JAX reference -----------------------------------
def caformer_reference(params, x_enc):
    hi = jax.lax.Precision.HIGHEST
    x = x_enc.astype(jnp.float32)
    mu = jnp.mean(x, axis=1, keepdims=True)                                  # [B,1,N]
    xc = x - mu
    std = jnp.sqrt(jnp.mean(xc * xc, axis=1, keepdims=True) + 1e-5)
    xn = xc / std
    h = jnp.einsum('bln,ld->bnd', xn, params["emb_w"], precision=hi) + params["emb_b"]
    dh = D_MODEL // N_HEADS
    scale = 1.0 / (dh ** 0.5)
    for l in range(E_LAYERS):
        q = jnp.einsum('bnd,de->bne', h, params["wq"][l], precision=hi) + params["bq"][l]
        k = jnp.einsum('bnd,de->bne', h, params["wk"][l], precision=hi) + params["bk"][l]
        v = jnp.einsum('bnd,de->bne', h, params["wv"][l], precision=hi) + params["bv"][l]
        B, N, D = q.shape
        qh = q.reshape(B, N, N_HEADS, dh)
        kh = k.reshape(B, N, N_HEADS, dh)
        vh = v.reshape(B, N, N_HEADS, dh)
        s = jnp.einsum('bnhd,bmhd->bhnm', qh, kh, precision=hi) * scale
        a = jax.nn.softmax(s, axis=-1)
        o = jnp.einsum('bhnm,bmhd->bnhd', a, vh, precision=hi).reshape(B, N, D)
        y = _layernorm(h + jnp.einsum('bnd,de->bne', o, params["wo"][l], precision=hi)
                       + params["bo"][l], params["ln1_g"][l], params["ln1_b"][l])
        ff = jax.nn.relu(jnp.einsum('bnd,df->bnf', y, params["w1"][l], precision=hi)
                         + params["b1"][l])
        ff = jnp.einsum('bnf,fd->bnd', ff, params["w2"][l], precision=hi) + params["b2"][l]
        h = _layernorm(y + ff, params["ln2_g"][l], params["ln2_b"][l])
    h = _layernorm(h, params["lnf_g"], params["lnf_b"])
    proj = jnp.einsum('bnd,dp->bnp', h, params["wp"], precision=hi) + params["bp"][:, 0]
    out = jnp.transpose(proj, (0, 2, 1))                                     # [B, P, N]
    out = out * std[:, 0, :][:, None, :] + mu[:, 0, :][:, None, :]
    return out[:, -PRED_LEN:, :]


if __name__ == "__main__":
    key = jax.random.PRNGKey(0)
    k_param, k_x = jax.random.split(key)
    params = init_params(k_param)
    x_enc = jax.random.normal(k_x, (BATCH, SEQ_LEN, ENC_IN), jnp.float32)

    out = caformer_forward(params, x_enc)
    out = jax.block_until_ready(out)
    assert out.shape == (BATCH, PRED_LEN, ENC_IN), out.shape
    assert bool(jnp.all(jnp.isfinite(out)))

    ref = caformer_reference(params, x_enc)
    max_err = float(jnp.max(jnp.abs(out - ref)))
    assert bool(jnp.allclose(out, ref, atol=2e-3, rtol=2e-3)), max_err

    print("KERNEL_OK")
</pallas_src>

<mosaic_0001>
module attributes {stable_mosaic.version = 11 : i64} {
  func.func @caformer_kernel(%arg0: memref<2x16x7xf32, #tpu.memory_space<vmem>>, %arg1: memref<16x32xf32, #tpu.memory_space<vmem>>, %arg2: memref<1x32xf32, #tpu.memory_space<vmem>>, %arg3: memref<2x32x32xf32, #tpu.memory_space<vmem>>, %arg4: memref<2x1x32xf32, #tpu.memory_space<vmem>>, %arg5: memref<2x32x32xf32, #tpu.memory_space<vmem>>, %arg6: memref<2x1x32xf32, #tpu.memory_space<vmem>>, %arg7: memref<2x32x32xf32, #tpu.memory_space<vmem>>, %arg8: memref<2x1x32xf32, #tpu.memory_space<vmem>>, %arg9: memref<2x32x32xf32, #tpu.memory_space<vmem>>, %arg10: memref<2x1x32xf32, #tpu.memory_space<vmem>>, %arg11: memref<2x1x32xf32, #tpu.memory_space<vmem>>, %arg12: memref<2x1x32xf32, #tpu.memory_space<vmem>>, %arg13: memref<2x32x64xf32, #tpu.memory_space<vmem>>, %arg14: memref<2x1x64xf32, #tpu.memory_space<vmem>>, %arg15: memref<2x64x32xf32, #tpu.memory_space<vmem>>, %arg16: memref<2x1x32xf32, #tpu.memory_space<vmem>>, %arg17: memref<2x1x32xf32, #tpu.memory_space<vmem>>, %arg18: memref<2x1x32xf32, #tpu.memory_space<vmem>>, %arg19: memref<1x32xf32, #tpu.memory_space<vmem>>, %arg20: memref<1x32xf32, #tpu.memory_space<vmem>>, %arg21: memref<32x8xf32, #tpu.memory_space<vmem>>, %arg22: memref<8x1xf32, #tpu.memory_space<vmem>>, %arg23: memref<2x8x7xf32, #tpu.memory_space<vmem>>) attributes {dimension_semantics = [], scalar_prefetch = 0 : i64, scratch_operands = 0 : i64, tpu.core_type = #tpu.core_type<tc>} {
    %c0 = arith.constant 0 : index
    %c0_0 = arith.constant 0 : index
    %0 = vector.load %arg1[%c0, %c0_0] : memref<16x32xf32, #tpu.memory_space<vmem>>, vector<16x32xf32>
    %c0_1 = arith.constant 0 : index
    %c0_2 = arith.constant 0 : index
    %1 = vector.load %arg2[%c0_1, %c0_2] : memref<1x32xf32, #tpu.memory_space<vmem>>, vector<1x32xf32>
    %c0_3 = arith.constant 0 : index
    %c0_4 = arith.constant 0 : index
    %2 = vector.load %arg19[%c0_3, %c0_4] : memref<1x32xf32, #tpu.memory_space<vmem>>, vector<1x32xf32>
    %c0_5 = arith.constant 0 : index
    %c0_6 = arith.constant 0 : index
    %3 = vector.load %arg20[%c0_5, %c0_6] : memref<1x32xf32, #tpu.memory_space<vmem>>, vector<1x32xf32>
    %c0_7 = arith.constant 0 : index
    %c0_8 = arith.constant 0 : index
    %4 = vector.load %arg21[%c0_7, %c0_8] : memref<32x8xf32, #tpu.memory_space<vmem>>, vector<32x8xf32>
    %c0_9 = arith.constant 0 : index
    %c0_10 = arith.constant 0 : index
    %5 = vector.load %arg22[%c0_9, %c0_10] : memref<8x1xf32, #tpu.memory_space<vmem>>, vector<8x1xf32>
    %c0_11 = arith.constant 0 : index
    %c0_12 = arith.constant 0 : index
    %c0_13 = arith.constant 0 : index
    %6 = vector.load %arg3[%c0_11, %c0_12, %c0_13] : memref<2x32x32xf32, #tpu.memory_space<vmem>>, vector<1x32x32xf32>
    %7 = vector.shape_cast %6 : vector<1x32x32xf32> to vector<32x32xf32>
    %c0_14 = arith.constant 0 : index
    %c0_15 = arith.constant 0 : index
    %c0_16 = arith.constant 0 : index
    %8 = vector.load %arg4[%c0_14, %c0_15, %c0_16] : memref<2x1x32xf32, #tpu.memory_space<vmem>>, vector<1x1x32xf32>
    %9 = vector.shape_cast %8 : vector<1x1x32xf32> to vector<1x32xf32>
    %c0_17 = arith.constant 0 : index
    %c0_18 = arith.constant 0 : index
    %c0_19 = arith.constant 0 : index
    %10 = vector.load %arg5[%c0_17, %c0_18, %c0_19] : memref<2x32x32xf32, #tpu.memory_space<vmem>>, vector<1x32x32xf32>
    %11 = vector.shape_cast %10 : vector<1x32x32xf32> to vector<32x32xf32>
    %c0_20 = arith.constant 0 : index
    %c0_21 = arith.constant 0 : index
    %c0_22 = arith.constant 0 : index
    %12 = vector.load %arg6[%c0_20, %c0_21, %c0_22] : memref<2x1x32xf32, #tpu.memory_space<vmem>>, vector<1x1x32xf32>
    %13 = vector.shape_cast %12 : vector<1x1x32xf32> to vector<1x32xf32>
    %c0_23 = arith.constant 0 : index
    %c0_24 = arith.constant 0 : index
    %c0_25 = arith.constant 0 : index
    %14 = vector.load %arg7[%c0_23, %c0_24, %c0_25] : memref<2x32x32xf32, #tpu.memory_space<vmem>>, vector<1x32x32xf32>
    %15 = vector.shape_cast %14 : vector<1x32x32xf32> to vector<32x32xf32>
    %c0_26 = arith.constant 0 : index
    %c0_27 = arith.constant 0 : index
    %c0_28 = arith.constant 0 : index
    %16 = vector.load %arg8[%c0_26, %c0_27, %c0_28] : memref<2x1x32xf32, #tpu.memory_space<vmem>>, vector<1x1x32xf32>
    %17 = vector.shape_cast %16 : vector<1x1x32xf32> to vector<1x32xf32>
    %c0_29 = arith.constant 0 : index
    %c0_30 = arith.constant 0 : index
    %c0_31 = arith.constant 0 : index
    %18 = vector.load %arg9[%c0_29, %c0_30, %c0_31] : memref<2x32x32xf32, #tpu.memory_space<vmem>>, vector<1x32x32xf32>
    %19 = vector.shape_cast %18 : vector<1x32x32xf32> to vector<32x32xf32>
    %c0_32 = arith.constant 0 : index
    %c0_33 = arith.constant 0 : index
    %c0_34 = arith.constant 0 : index
    %20 = vector.load %arg10[%c0_32, %c0_33, %c0_34] : memref<2x1x32xf32, #tpu.memory_space<vmem>>, vector<1x1x32xf32>
    %21 = vector.shape_cast %20 : vector<1x1x32xf32> to vector<1x32xf32>
    %c0_35 = arith.constant 0 : index
    %c0_36 = arith.constant 0 : index
    %c0_37 = arith.constant 0 : index
    %22 = vector.load %arg11[%c0_35, %c0_36, %c0_37] : memref<2x1x32xf32, #tpu.memory_space<vmem>>, vector<1x1x32xf32>
    %23 = vector.shape_cast %22 : vector<1x1x32xf32> to vector<1x32xf32>
    %c0_38 = arith.constant 0 : index
    %c0_39 = arith.constant 0 : index
    %c0_40 = arith.constant 0 : index
    %24 = vector.load %arg12[%c0_38, %c0_39, %c0_40] : memref<2x1x32xf32, #tpu.memory_space<vmem>>, vector<1x1x32xf32>
    %25 = vector.shape_cast %24 : vector<1x1x32xf32> to vector<1x32xf32>
    %c0_41 = arith.constant 0 : index
    %c0_42 = arith.constant 0 : index
    %c0_43 = arith.constant 0 : index
    %26 = vector.load %arg13[%c0_41, %c0_42, %c0_43] : memref<2x32x64xf32, #tpu.memory_space<vmem>>, vector<1x32x64xf32>
    %27 = vector.shape_cast %26 : vector<1x32x64xf32> to vector<32x64xf32>
    %c0_44 = arith.constant 0 : index
    %c0_45 = arith.constant 0 : index
    %c0_46 = arith.constant 0 : index
    %28 = vector.load %arg14[%c0_44, %c0_45, %c0_46] : memref<2x1x64xf32, #tpu.memory_space<vmem>>, vector<1x1x64xf32>
    %29 = vector.shape_cast %28 : vector<1x1x64xf32> to vector<1x64xf32>
    %c0_47 = arith.constant 0 : index
    %c0_48 = arith.constant 0 : index
    %c0_49 = arith.constant 0 : index
    %30 = vector.load %arg15[%c0_47, %c0_48, %c0_49] : memref<2x64x32xf32, #tpu.memory_space<vmem>>, vector<1x64x32xf32>
    %31 = vector.shape_cast %30 : vector<1x64x32xf32> to vector<64x32xf32>
    %c0_50 = arith.constant 0 : index
    %c0_51 = arith.constant 0 : index
    %c0_52 = arith.constant 0 : index
    %32 = vector.load %arg16[%c0_50, %c0_51, %c0_52] : memref<2x1x32xf32, #tpu.memory_space<vmem>>, vector<1x1x32xf32>
    %33 = vector.shape_cast %32 : vector<1x1x32xf32> to vector<1x32xf32>
    %c0_53 = arith.constant 0 : index
    %c0_54 = arith.constant 0 : index
    %c0_55 = arith.constant 0 : index
    %34 = vector.load %arg17[%c0_53, %c0_54, %c0_55] : memref<2x1x32xf32, #tpu.memory_space<vmem>>, vector<1x1x32xf32>
    %35 = vector.shape_cast %34 : vector<1x1x32xf32> to vector<1x32xf32>
    %c0_56 = arith.constant 0 : index
    %c0_57 = arith.constant 0 : index
    %c0_58 = arith.constant 0 : index
    %36 = vector.load %arg18[%c0_56, %c0_57, %c0_58] : memref<2x1x32xf32, #tpu.memory_space<vmem>>, vector<1x1x32xf32>
    %37 = vector.shape_cast %36 : vector<1x1x32xf32> to vector<1x32xf32>
    %c1 = arith.constant 1 : index
    %c0_59 = arith.constant 0 : index
    %c0_60 = arith.constant 0 : index
    %38 = vector.load %arg3[%c1, %c0_59, %c0_60] : memref<2x32x32xf32, #tpu.memory_space<vmem>>, vector<1x32x32xf32>
    %39 = vector.shape_cast %38 : vector<1x32x32xf32> to vector<32x32xf32>
    %c1_61 = arith.constant 1 : index
    %c0_62 = arith.constant 0 : index
    %c0_63 = arith.constant 0 : index
    %40 = vector.load %arg4[%c1_61, %c0_62, %c0_63] : memref<2x1x32xf32, #tpu.memory_space<vmem>>, vector<1x1x32xf32>
    %41 = vector.shape_cast %40 : vector<1x1x32xf32> to vector<1x32xf32>
    %c1_64 = arith.constant 1 : index
    %c0_65 = arith.constant 0 : index
    %c0_66 = arith.constant 0 : index
    %42 = vector.load %arg5[%c1_64, %c0_65, %c0_66] : memref<2x32x32xf32, #tpu.memory_space<vmem>>, vector<1x32x32xf32>
    %43 = vector.shape_cast %42 : vector<1x32x32xf32> to vector<32x32xf32>
    %c1_67 = arith.constant 1 : index
    %c0_68 = arith.constant 0 : index
    %c0_69 = arith.constant 0 : index
    %44 = vector.load %arg6[%c1_67, %c0_68, %c0_69] : memref<2x1x32xf32, #tpu.memory_space<vmem>>, vector<1x1x32xf32>
    %45 = vector.shape_cast %44 : vector<1x1x32xf32> to vector<1x32xf32>
    %c1_70 = arith.constant 1 : index
    %c0_71 = arith.constant 0 : index
    %c0_72 = arith.constant 0 : index
    %46 = vector.load %arg7[%c1_70, %c0_71, %c0_72] : memref<2x32x32xf32, #tpu.memory_space<vmem>>, vector<1x32x32xf32>
    %47 = vector.shape_cast %46 : vector<1x32x32xf32> to vector<32x32xf32>
    %c1_73 = arith.constant 1 : index
    %c0_74 = arith.constant 0 : index
    %c0_75 = arith.constant 0 : index
    %48 = vector.load %arg8[%c1_73, %c0_74, %c0_75] : memref<2x1x32xf32, #tpu.memory_space<vmem>>, vector<1x1x32xf32>
    %49 = vector.shape_cast %48 : vector<1x1x32xf32> to vector<1x32xf32>
    %c1_76 = arith.constant 1 : index
    %c0_77 = arith.constant 0 : index
    %c0_78 = arith.constant 0 : index
    %50 = vector.load %arg9[%c1_76, %c0_77, %c0_78] : memref<2x32x32xf32, #tpu.memory_space<vmem>>, vector<1x32x32xf32>
    %51 = vector.shape_cast %50 : vector<1x32x32xf32> to vector<32x32xf32>
    %c1_79 = arith.constant 1 : index
    %c0_80 = arith.constant 0 : index
    %c0_81 = arith.constant 0 : index
    %52 = vector.load %arg10[%c1_79, %c0_80, %c0_81] : memref<2x1x32xf32, #tpu.memory_space<vmem>>, vector<1x1x32xf32>
    %53 = vector.shape_cast %52 : vector<1x1x32xf32> to vector<1x32xf32>
    %c1_82 = arith.constant 1 : index
    %c0_83 = arith.constant 0 : index
    %c0_84 = arith.constant 0 : index
    %54 = vector.load %arg11[%c1_82, %c0_83, %c0_84] : memref<2x1x32xf32, #tpu.memory_space<vmem>>, vector<1x1x32xf32>
    %55 = vector.shape_cast %54 : vector<1x1x32xf32> to vector<1x32xf32>
    %c1_85 = arith.constant 1 : index
    %c0_86 = arith.constant 0 : index
    %c0_87 = arith.constant 0 : index
    %56 = vector.load %arg12[%c1_85, %c0_86, %c0_87] : memref<2x1x32xf32, #tpu.memory_space<vmem>>, vector<1x1x32xf32>
    %57 = vector.shape_cast %56 : vector<1x1x32xf32> to vector<1x32xf32>
    %c1_88 = arith.constant 1 : index
    %c0_89 = arith.constant 0 : index
    %c0_90 = arith.constant 0 : index
    %58 = vector.load %arg13[%c1_88, %c0_89, %c0_90] : memref<2x32x64xf32, #tpu.memory_space<vmem>>, vector<1x32x64xf32>
    %59 = vector.shape_cast %58 : vector<1x32x64xf32> to vector<32x64xf32>
    %c1_91 = arith.constant 1 : index
    %c0_92 = arith.constant 0 : index
    %c0_93 = arith.constant 0 : index
    %60 = vector.load %arg14[%c1_91, %c0_92, %c0_93] : memref<2x1x64xf32, #tpu.memory_space<vmem>>, vector<1x1x64xf32>
    %61 = vector.shape_cast %60 : vector<1x1x64xf32> to vector<1x64xf32>
    %c1_94 = arith.constant 1 : index
    %c0_95 = arith.constant 0 : index
    %c0_96 = arith.constant 0 : index
    %62 = vector.load %arg15[%c1_94, %c0_95, %c0_96] : memref<2x64x32xf32, #tpu.memory_space<vmem>>, vector<1x64x32xf32>
    %63 = vector.shape_cast %62 : vector<1x64x32xf32> to vector<64x32xf32>
    %c1_97 = arith.constant 1 : index
    %c0_98 = arith.constant 0 : index
    %c0_99 = arith.constant 0 : index
    %64 = vector.load %arg16[%c1_97, %c0_98, %c0_99] : memref<2x1x32xf32, #tpu.memory_space<vmem>>, vector<1x1x32xf32>
    %65 = vector.shape_cast %64 : vector<1x1x32xf32> to vector<1x32xf32>
    %c1_100 = arith.constant 1 : index
    %c0_101 = arith.constant 0 : index
    %c0_102 = arith.constant 0 : index
    %66 = vector.load %arg17[%c1_100, %c0_101, %c0_102] : memref<2x1x32xf32, #tpu.memory_space<vmem>>, vector<1x1x32xf32>
    %67 = vector.shape_cast %66 : vector<1x1x32xf32> to vector<1x32xf32>
    %c1_103 = arith.constant 1 : index
    %c0_104 = arith.constant 0 : index
    %c0_105 = arith.constant 0 : index
    %68 = vector.load %arg18[%c1_103, %c0_104, %c0_105] : memref<2x1x32xf32, #tpu.memory_space<vmem>>, vector<1x1x32xf32>
    %69 = vector.shape_cast %68 : vector<1x1x32xf32> to vector<1x32xf32>
    %c0_106 = arith.constant 0 : index
    %c0_107 = arith.constant 0 : index
    %c0_108 = arith.constant 0 : index
    %70 = vector.load %arg0[%c0_106, %c0_107, %c0_108] : memref<2x16x7xf32, #tpu.memory_space<vmem>>, vector<1x16x7xf32>
    %71 = vector.shape_cast %70 : vector<1x16x7xf32> to vector<16x7xf32>
    %cst = arith.constant dense<0.000000e+00> : vector<7xf32>
    %72 = vector.multi_reduction <add>, %71, %cst [0] : vector<16x7xf32> to vector<7xf32>
    %73 = vector.shape_cast %72 : vector<7xf32> to vector<1x7xf32>
    %cst_109 = arith.constant 1.600000e+01 : f32
    %74 = vector.broadcast %cst_109 : f32 to vector<1x7xf32>
    %75 = arith.divf %73, %74 : vector<1x7xf32>
    %76 = vector.broadcast %75 : vector<1x7xf32> to vector<16x7xf32>
    %77 = arith.subf %71, %76 : vector<16x7xf32>
    %78 = arith.mulf %77, %77 : vector<16x7xf32>
    %cst_110 = arith.constant dense<0.000000e+00> : vector<7xf32>
    %79 = vector.multi_reduction <add>, %78, %cst_110 [0] : vector<16x7xf32> to vector<7xf32>
    %80 = vector.shape_cast %79 : vector<7xf32> to vector<1x7xf32>
    %cst_111 = arith.constant 1.600000e+01 : f32
    %81 = vector.broadcast %cst_111 : f32 to vector<1x7xf32>
    %82 = arith.divf %80, %81 : vector<1x7xf32>
    %cst_112 = arith.constant 9.99999974E-6 : f32
    %83 = vector.broadcast %cst_112 : f32 to vector<1x7xf32>
    %84 = arith.addf %82, %83 : vector<1x7xf32>
    %85 = math.sqrt %84 : vector<1x7xf32>
    %86 = vector.broadcast %85 : vector<1x7xf32> to vector<16x7xf32>
    %87 = arith.divf %77, %86 : vector<16x7xf32>
    %cst_113 = arith.constant dense<0.000000e+00> : vector<7x32xf32>
    %88 = tpu.matmul %87, %0, %cst_113 {dimension_numbers = #tpu.dot_dimension_numbers<[0], [0], [1], [1], [0, 1, 1, 1], [], []>} : vector<16x7xf32>, vector<16x32xf32>, vector<7x32xf32> -> vector<7x32xf32>
    %89 = vector.broadcast %1 : vector<1x32xf32> to vector<7x32xf32>
    %90 = arith.addf %88, %89 : vector<7x32xf32>
    %cst_114 = arith.constant dense<0.000000e+00> : vector<7x32xf32>
    %91 = tpu.matmul %90, %7, %cst_114 {dimension_numbers = #tpu.dot_dimension_numbers<[1], [0], [0], [1], [0, 0, 1, 1], [], []>} : vector<7x32xf32>, vector<32x32xf32>, vector<7x32xf32> -> vector<7x32xf32>
    %92 = vector.broadcast %9 : vector<1x32xf32> to vector<7x32xf32>
    %93 = arith.addf %91, %92 : vector<7x32xf32>
    %cst_115 = arith.constant dense<0.000000e+00> : vector<7x32xf32>
    %94 = tpu.matmul %90, %11, %cst_115 {dimension_numbers = #tpu.dot_dimension_numbers<[1], [0], [0], [1], [0, 0, 1, 1], [], []>} : vector<7x32xf32>, vector<32x32xf32>, vector<7x32xf32> -> vector<7x32xf32>
    %95 = vector.broadcast %13 : vector<1x32xf32> to vector<7x32xf32>
    %96 = arith.addf %94, %95 : vector<7x32xf32>
    %cst_116 = arith.constant dense<0.000000e+00> : vector<7x32xf32>
    %97 = tpu.matmul %90, %15, %cst_116 {dimension_numbers = #tpu.dot_dimension_numbers<[1], [0], [0], [1], [0, 0, 1, 1], [], []>} : vector<7x32xf32>, vector<32x32xf32>, vector<7x32xf32> -> vector<7x32xf32>
    %98 = vector.broadcast %17 : vector<1x32xf32> to vector<7x32xf32>
    %99 = arith.addf %97, %98 : vector<7x32xf32>
    %100 = vector.extract_strided_slice %93 {offsets = [0, 0], sizes = [7, 8], strides = [1, 1]} : vector<7x32xf32> to vector<7x8xf32>
    %101 = vector.extract_strided_slice %96 {offsets = [0, 0], sizes = [7, 8], strides = [1, 1]} : vector<7x32xf32> to vector<7x8xf32>
    %102 = vector.extract_strided_slice %99 {offsets = [0, 0], sizes = [7, 8], strides = [1, 1]} : vector<7x32xf32> to vector<7x8xf32>
    %cst_117 = arith.constant dense<0.000000e+00> : vector<7x7xf32>
    %103 = tpu.matmul %100, %101, %cst_117 {dimension_numbers = #tpu.dot_dimension_numbers<[1], [1], [0], [0], [0, 0, 1, 0], [], []>} : vector<7x8xf32>, vector<7x8xf32>, vector<7x7xf32> -> vector<7x7xf32>
    %cst_118 = arith.constant 0.353553385 : f32
    %104 = vector.broadcast %cst_118 : f32 to vector<7x7xf32>
    %105 = arith.mulf %103, %104 : vector<7x7xf32>
    %cst_119 = arith.constant dense<0xFF800000> : vector<7xf32>
    %106 = vector.multi_reduction <maximumf>, %105, %cst_119 [1] : vector<7x7xf32> to vector<7xf32>
    %107 = vector.shape_cast %106 : vector<7xf32> to vector<7x1xf32>
    %108 = vector.broadcast %107 : vector<7x1xf32> to vector<7x7xf32>
    %109 = arith.subf %105, %108 : vector<7x7xf32>
    %110 = math.exp %109 : vector<7x7xf32>
    %cst_120 = arith.constant dense<0.000000e+00> : vector<7xf32>
    %111 = vector.multi_reduction <add>, %110, %cst_120 [1] : vector<7x7xf32> to vector<7xf32>
    %112 = vector.shape_cast %111 : vector<7xf32> to vector<7x1xf32>
    %113 = vector.broadcast %112 : vector<7x1xf32> to vector<7x7xf32>
    %114 = arith.divf %110, %113 : vector<7x7xf32>
    %cst_121 = arith.constant dense<0.000000e+00> : vector<7x8xf32>
    %115 = tpu.matmul %114, %102, %cst_121 {dimension_numbers = #tpu.dot_dimension_numbers<[1], [0], [0], [1], [0, 0, 1, 1], [], []>} : vector<7x7xf32>, vector<7x8xf32>, vector<7x8xf32> -> vector<7x8xf32>
    %116 = vector.extract_strided_slice %19 {offsets = [0, 0], sizes = [8, 32], strides = [1, 1]} : vector<32x32xf32> to vector<8x32xf32>
    %cst_122 = arith.constant dense<0.000000e+00> : vector<7x32xf32>
    %117 = tpu.matmul %115, %116, %cst_122 {dimension_numbers = #tpu.dot_dimension_numbers<[1], [0], [0], [1], [0, 0, 1, 1], [], []>} : vector<7x8xf32>, vector<8x32xf32>, vector<7x32xf32> -> vector<7x32xf32>
    %118 = vector.extract_strided_slice %93 {offsets = [0, 8], sizes = [7, 8], strides = [1, 1]} : vector<7x32xf32> to vector<7x8xf32>
    %119 = vector.extract_strided_slice %96 {offsets = [0, 8], sizes = [7, 8], strides = [1, 1]} : vector<7x32xf32> to vector<7x8xf32>
    %120 = vector.extract_strided_slice %99 {offsets = [0, 8], sizes = [7, 8], strides = [1, 1]} : vector<7x32xf32> to vector<7x8xf32>
    %cst_123 = arith.constant dense<0.000000e+00> : vector<7x7xf32>
    %121 = tpu.matmul %118, %119, %cst_123 {dimension_numbers = #tpu.dot_dimension_numbers<[1], [1], [0], [0], [0, 0, 1, 0], [], []>} : vector<7x8xf32>, vector<7x8xf32>, vector<7x7xf32> -> vector<7x7xf32>
    %cst_124 = arith.constant 0.353553385 : f32
    %122 = vector.broadcast %cst_124 : f32 to vector<7x7xf32>
    %123 = arith.mulf %121, %122 : vector<7x7xf32>
    %cst_125 = arith.constant dense<0xFF800000> : vector<7xf32>
    %124 = vector.multi_reduction <maximumf>, %123, %cst_125 [1] : vector<7x7xf32> to vector<7xf32>
    %125 = vector.shape_cast %124 : vector<7xf32> to vector<7x1xf32>
    %126 = vector.broadcast %125 : vector<7x1xf32> to vector<7x7xf32>
    %127 = arith.subf %123, %126 : vector<7x7xf32>
    %128 = math.exp %127 : vector<7x7xf32>
    %cst_126 = arith.constant dense<0.000000e+00> : vector<7xf32>
    %129 = vector.multi_reduction <add>, %128, %cst_126 [1] : vector<7x7xf32> to vector<7xf32>
    %130 = vector.shape_cast %129 : vector<7xf32> to vector<7x1xf32>
    %131 = vector.broadcast %130 : vector<7x1xf32> to vector<7x7xf32>
    %132 = arith.divf %128, %131 : vector<7x7xf32>
    %cst_127 = arith.constant dense<0.000000e+00> : vector<7x8xf32>
    %133 = tpu.matmul %132, %120, %cst_127 {dimension_numbers = #tpu.dot_dimension_numbers<[1], [0], [0], [1], [0, 0, 1, 1], [], []>} : vector<7x7xf32>, vector<7x8xf32>, vector<7x8xf32> -> vector<7x8xf32>
    %134 = vector.extract_strided_slice %19 {offsets = [8, 0], sizes = [8, 32], strides = [1, 1]} : vector<32x32xf32> to vector<8x32xf32>
    %cst_128 = arith.constant dense<0.000000e+00> : vector<7x32xf32>
    %135 = tpu.matmul %133, %134, %cst_128 {dimension_numbers = #tpu.dot_dimension_numbers<[1], [0], [0], [1], [0, 0, 1, 1], [], []>} : vector<7x8xf32>, vector<8x32xf32>, vector<7x32xf32> -> vector<7x32xf32>
    %136 = arith.addf %117, %135 : vector<7x32xf32>
    %137 = vector.extract_strided_slice %93 {offsets = [0, 16], sizes = [7, 8], strides = [1, 1]} : vector<7x32xf32> to vector<7x8xf32>
    %138 = vector.extract_strided_slice %96 {offsets = [0, 16], sizes = [7, 8], strides = [1, 1]} : vector<7x32xf32> to vector<7x8xf32>
    %139 = vector.extract_strided_slice %99 {offsets = [0, 16], sizes = [7, 8], strides = [1, 1]} : vector<7x32xf32> to vector<7x8xf32>
    %cst_129 = arith.constant dense<0.000000e+00> : vector<7x7xf32>
    %140 = tpu.matmul %137, %138, %cst_129 {dimension_numbers = #tpu.dot_dimension_numbers<[1], [1], [0], [0], [0, 0, 1, 0], [], []>} : vector<7x8xf32>, vector<7x8xf32>, vector<7x7xf32> -> vector<7x7xf32>
    %cst_130 = arith.constant 0.353553385 : f32
    %141 = vector.broadcast %cst_130 : f32 to vector<7x7xf32>
    %142 = arith.mulf %140, %141 : vector<7x7xf32>
    %cst_131 = arith.constant dense<0xFF800000> : vector<7xf32>
    %143 = vector.multi_reduction <maximumf>, %142, %cst_131 [1] : vector<7x7xf32> to vector<7xf32>
    %144 = vector.shape_cast %143 : vector<7xf32> to vector<7x1xf32>
    %145 = vector.broadcast %144 : vector<7x1xf32> to vector<7x7xf32>
    %146 = arith.subf %142, %145 : vector<7x7xf32>
    %147 = math.exp %146 : vector<7x7xf32>
    %cst_132 = arith.constant dense<0.000000e+00> : vector<7xf32>
    %148 = vector.multi_reduction <add>, %147, %cst_132 [1] : vector<7x7xf32> to vector<7xf32>
    %149 = vector.shape_cast %148 : vector<7xf32> to vector<7x1xf32>
    %150 = vector.broadcast %149 : vector<7x1xf32> to vector<7x7xf32>
    %151 = arith.divf %147, %150 : vector<7x7xf32>
    %cst_133 = arith.constant dense<0.000000e+00> : vector<7x8xf32>
    %152 = tpu.matmul %151, %139, %cst_133 {dimension_numbers = #tpu.dot_dimension_numbers<[1], [0], [0], [1], [0, 0, 1, 1], [], []>} : vector<7x7xf32>, vector<7x8xf32>, vector<7x8xf32> -> vector<7x8xf32>
    %153 = vector.extract_strided_slice %19 {offsets = [16, 0], sizes = [8, 32], strides = [1, 1]} : vector<32x32xf32> to vector<8x32xf32>
    %cst_134 = arith.constant dense<0.000000e+00> : vector<7x32xf32>
    %154 = tpu.matmul %152, %153, %cst_134 {dimension_numbers = #tpu.dot_dimension_numbers<[1], [0], [0], [1], [0, 0, 1, 1], [], []>} : vector<7x8xf32>, vector<8x32xf32>, vector<7x32xf32> -> vector<7x32xf32>
    %155 = arith.addf %136, %154 : vector<7x32xf32>
    %156 = vector.extract_strided_slice %93 {offsets = [0, 24], sizes = [7, 8], strides = [1, 1]} : vector<7x32xf32> to vector<7x8xf32>
    %157 = vector.extract_strided_slice %96 {offsets = [0, 24], sizes = [7, 8], strides = [1, 1]} : vector<7x32xf32> to vector<7x8xf32>
    %158 = vector.extract_strided_slice %99 {offsets = [0, 24], sizes = [7, 8], strides = [1, 1]} : vector<7x32xf32> to vector<7x8xf32>
    %cst_135 = arith.constant dense<0.000000e+00> : vector<7x7xf32>
    %159 = tpu.matmul %156, %157, %cst_135 {dimension_numbers = #tpu.dot_dimension_numbers<[1], [1], [0], [0], [0, 0, 1, 0], [], []>} : vector<7x8xf32>, vector<7x8xf32>, vector<7x7xf32> -> vector<7x7xf32>
    %cst_136 = arith.constant 0.353553385 : f32
    %160 = vector.broadcast %cst_136 : f32 to vector<7x7xf32>
    %161 = arith.mulf %159, %160 : vector<7x7xf32>
    %cst_137 = arith.constant dense<0xFF800000> : vector<7xf32>
    %162 = vector.multi_reduction <maximumf>, %161, %cst_137 [1] : vector<7x7xf32> to vector<7xf32>
    %163 = vector.shape_cast %162 : vector<7xf32> to vector<7x1xf32>
    %164 = vector.broadcast %163 : vector<7x1xf32> to vector<7x7xf32>
    %165 = arith.subf %161, %164 : vector<7x7xf32>
    %166 = math.exp %165 : vector<7x7xf32>
    %cst_138 = arith.constant dense<0.000000e+00> : vector<7xf32>
    %167 = vector.multi_reduction <add>, %166, %cst_138 [1] : vector<7x7xf32> to vector<7xf32>
    %168 = vector.shape_cast %167 : vector<7xf32> to vector<7x1xf32>
    %169 = vector.broadcast %168 : vector<7x1xf32> to vector<7x7xf32>
    %170 = arith.divf %166, %169 : vector<7x7xf32>
    %cst_139 = arith.constant dense<0.000000e+00> : vector<7x8xf32>
    %171 = tpu.matmul %170, %158, %cst_139 {dimension_numbers = #tpu.dot_dimension_numbers<[1], [0], [0], [1], [0, 0, 1, 1], [], []>} : vector<7x7xf32>, vector<7x8xf32>, vector<7x8xf32> -> vector<7x8xf32>
    %172 = vector.extract_strided_slice %19 {offsets = [24, 0], sizes = [8, 32], strides = [1, 1]} : vector<32x32xf32> to vector<8x32xf32>
    %cst_140 = arith.constant dense<0.000000e+00> : vector<7x32xf32>
    %173 = tpu.matmul %171, %172, %cst_140 {dimension_numbers = #tpu.dot_dimension_numbers<[1], [0], [0], [1], [0, 0, 1, 1], [], []>} : vector<7x8xf32>, vector<8x32xf32>, vector<7x32xf32> -> vector<7x32xf32>
    %174 = arith.addf %155, %173 : vector<7x32xf32>
    %175 = arith.addf %90, %174 : vector<7x32xf32>
    %176 = vector.broadcast %21 : vector<1x32xf32> to vector<7x32xf32>
    %177 = arith.addf %175, %176 : vector<7x32xf32>
    %cst_141 = arith.constant dense<0.000000e+00> : vector<7xf32>
    %178 = vector.multi_reduction <add>, %177, %cst_141 [1] : vector<7x32xf32> to vector<7xf32>
    %179 = vector.shape_cast %178 : vector<7xf32> to vector<7x1xf32>
    %cst_142 = arith.constant 3.200000e+01 : f32
    %180 = vector.broadcast %cst_142 : f32 to vector<7x1xf32>
    %181 = arith.divf %179, %180 : vector<7x1xf32>
    %182 = vector.broadcast %181 : vector<7x1xf32> to vector<7x32xf32>
    %183 = arith.subf %177, %182 : vector<7x32xf32>
    %184 = arith.mulf %183, %183 : vector<7x32xf32>
    %cst_143 = arith.constant dense<0.000000e+00> : vector<7xf32>
    %185 = vector.multi_reduction <add>, %184, %cst_143 [1] : vector<7x32xf32> to vector<7xf32>
    %186 = vector.shape_cast %185 : vector<7xf32> to vector<7x1xf32>
    %cst_144 = arith.constant 3.200000e+01 : f32
    %187 = vector.broadcast %cst_144 : f32 to vector<7x1xf32>
    %188 = arith.divf %186, %187 : vector<7x1xf32>
    %189 = vector.broadcast %181 : vector<7x1xf32> to vector<7x32xf32>
    %190 = arith.subf %177, %189 : vector<7x32xf32>
    %cst_145 = arith.constant 9.99999974E-6 : f32
    %191 = vector.broadcast %cst_145 : f32 to vector<7x1xf32>
    %192 = arith.addf %188, %191 : vector<7x1xf32>
    %193 = math.rsqrt %192 : vector<7x1xf32>
    %194 = vector.broadcast %193 : vector<7x1xf32> to vector<7x32xf32>
    %195 = arith.mulf %190, %194 : vector<7x32xf32>
    %196 = vector.broadcast %23 : vector<1x32xf32> to vector<7x32xf32>
    %197 = arith.mulf %195, %196 : vector<7x32xf32>
    %198 = vector.broadcast %25 : vector<1x32xf32> to vector<7x32xf32>
    %199 = arith.addf %197, %198 : vector<7x32xf32>
    %cst_146 = arith.constant dense<0.000000e+00> : vector<7x64xf32>
    %200 = tpu.matmul %199, %27, %cst_146 {dimension_numbers = #tpu.dot_dimension_numbers<[1], [0], [0], [1], [0, 0, 1, 1], [], []>} : vector<7x32xf32>, vector<32x64xf32>, vector<7x64xf32> -> vector<7x64xf32>
    %201 = vector.broadcast %29 : vector<1x64xf32> to vector<7x64xf32>
    %202 = arith.addf %200, %201 : vector<7x64xf32>
    %cst_147 = arith.constant 0.000000e+00 : f32
    %203 = vector.broadcast %cst_147 : f32 to vector<7x64xf32>
    %204 = arith.maximumf %202, %203 : vector<7x64xf32>
    %cst_148 = arith.constant dense<0.000000e+00> : vector<7x32xf32>
    %205 = tpu.matmul %204, %31, %cst_148 {dimension_numbers = #tpu.dot_dimension_numbers<[1], [0], [0], [1], [0, 0, 1, 1], [], []>} : vector<7x64xf32>, vector<64x32xf32>, vector<7x32xf32> -> vector<7x32xf32>
    %206 = vector.broadcast %33 : vector<1x32xf32> to vector<7x32xf32>
    %207 = arith.addf %205, %206 : vector<7x32xf32>
    %208 = arith.addf %199, %207 : vector<7x32xf32>
    %cst_149 = arith.constant dense<0.000000e+00> : vector<7xf32>
    %209 = vector.multi_reduction <add>, %208, %cst_149 [1] : vector<7x32xf32> to vector<7xf32>
    %210 = vector.shape_cast %209 : vector<7xf32> to vector<7x1xf32>
    %cst_150 = arith.constant 3.200000e+01 : f32
    %211 = vector.broadcast %cst_150 : f32 to vector<7x1xf32>
    %212 = arith.divf %210, %211 : vector<7x1xf32>
    %213 = vector.broadcast %212 : vector<7x1xf32> to vector<7x32xf32>
    %214 = arith.subf %208, %213 : vector<7x32xf32>
    %215 = arith.mulf %214, %214 : vector<7x32xf32>
    %cst_151 = arith.constant dense<0.000000e+00> : vector<7xf32>
    %216 = vector.multi_reduction <add>, %215, %cst_151 [1] : vector<7x32xf32> to vector<7xf32>
    %217 = vector.shape_cast %216 : vector<7xf32> to vector<7x1xf32>
    %cst_152 = arith.constant 3.200000e+01 : f32
    %218 = vector.broadcast %cst_152 : f32 to vector<7x1xf32>
    %219 = arith.divf %217, %218 : vector<7x1xf32>
    %220 = vector.broadcast %212 : vector<7x1xf32> to vector<7x32xf32>
    %221 = arith.subf %208, %220 : vector<7x32xf32>
    %cst_153 = arith.constant 9.99999974E-6 : f32
    %222 = vector.broadcast %cst_153 : f32 to vector<7x1xf32>
    %223 = arith.addf %219, %222 : vector<7x1xf32>
    %224 = math.rsqrt %223 : vector<7x1xf32>
    %225 = vector.broadcast %224 : vector<7x1xf32> to vector<7x32xf32>
    %226 = arith.mulf %221, %225 : vector<7x32xf32>
    %227 = vector.broadcast %35 : vector<1x32xf32> to vector<7x32xf32>
    %228 = arith.mulf %226, %227 : vector<7x32xf32>
    %229 = vector.broadcast %37 : vector<1x32xf32> to vector<7x32xf32>
    %230 = arith.addf %228, %229 : vector<7x32xf32>
    %cst_154 = arith.constant dense<0.000000e+00> : vector<7x32xf32>
    %231 = tpu.matmul %230, %39, %cst_154 {dimension_numbers = #tpu.dot_dimension_numbers<[1], [0], [0], [1], [0, 0, 1, 1], [], []>} : vector<7x32xf32>, vector<32x32xf32>, vector<7x32xf32> -> vector<7x32xf32>
    %232 = vector.broadcast %41 : vector<1x32xf32> to vector<7x32xf32>
    %233 = arith.addf %231, %232 : vector<7x32xf32>
    %cst_155 = arith.constant dense<0.000000e+00> : vector<7x32xf32>
    %234 = tpu.matmul %230, %43, %cst_155 {dimension_numbers = #tpu.dot_dimension_numbers<[1], [0], [0], [1], [0, 0, 1, 1], [], []>} : vector<7x32xf32>, vector<32x32xf32>, vector<7x32xf32> -> vector<7x32xf32>
    %235 = vector.broadcast %45 : vector<1x32xf32> to vector<7x32xf32>
    %236 = arith.addf %234, %235 : vector<7x32xf32>
    %cst_156 = arith.constant dense<0.000000e+00> : vector<7x32xf32>
    %237 = tpu.matmul %230, %47, %cst_156 {dimension_numbers = #tpu.dot_dimension_numbers<[1], [0], [0], [1], [0, 0, 1, 1], [], []>} : vector<7x32xf32>, vector<32x32xf32>, vector<7x32xf32> -> vector<7x32xf32>
    %238 = vector.broadcast %49 : vector<1x32xf32> to vector<7x32xf32>
    %239 = arith.addf %237, %238 : vector<7x32xf32>
    %240 = vector.extract_strided_slice %233 {offsets = [0, 0], sizes = [7, 8], strides = [1, 1]} : vector<7x32xf32> to vector<7x8xf32>
    %241 = vector.extract_strided_slice %236 {offsets = [0, 0], sizes = [7, 8], strides = [1, 1]} : vector<7x32xf32> to vector<7x8xf32>
    %242 = vector.extract_strided_slice %239 {offsets = [0, 0], sizes = [7, 8], strides = [1, 1]} : vector<7x32xf32> to vector<7x8xf32>
    %cst_157 = arith.constant dense<0.000000e+00> : vector<7x7xf32>
    %243 = tpu.matmul %240, %241, %cst_157 {dimension_numbers = #tpu.dot_dimension_numbers<[1], [1], [0], [0], [0, 0, 1, 0], [], []>} : vector<7x8xf32>, vector<7x8xf32>, vector<7x7xf32> -> vector<7x7xf32>
    %cst_158 = arith.constant 0.353553385 : f32
    %244 = vector.broadcast %cst_158 : f32 to vector<7x7xf32>
    %245 = arith.mulf %243, %244 : vector<7x7xf32>
    %cst_159 = arith.constant dense<0xFF800000> : vector<7xf32>
    %246 = vector.multi_reduction <maximumf>, %245, %cst_159 [1] : vector<7x7xf32> to vector<7xf32>
    %247 = vector.shape_cast %246 : vector<7xf32> to vector<7x1xf32>
    %248 = vector.broadcast %247 : vector<7x1xf32> to vector<7x7xf32>
    %249 = arith.subf %245, %248 : vector<7x7xf32>
    %250 = math.exp %249 : vector<7x7xf32>
    %cst_160 = arith.constant dense<0.000000e+00> : vector<7xf32>
    %251 = vector.multi_reduction <add>, %250, %cst_160 [1] : vector<7x7xf32> to vector<7xf32>
    %252 = vector.shape_cast %251 : vector<7xf32> to vector<7x1xf32>
    %253 = vector.broadcast %252 : vector<7x1xf32> to vector<7x7xf32>
    %254 = arith.divf %250, %253 : vector<7x7xf32>
    %cst_161 = arith.constant dense<0.000000e+00> : vector<7x8xf32>
    %255 = tpu.matmul %254, %242, %cst_161 {dimension_numbers = #tpu.dot_dimension_numbers<[1], [0], [0], [1], [0, 0, 1, 1], [], []>} : vector<7x7xf32>, vector<7x8xf32>, vector<7x8xf32> -> vector<7x8xf32>
    %256 = vector.extract_strided_slice %51 {offsets = [0, 0], sizes = [8, 32], strides = [1, 1]} : vector<32x32xf32> to vector<8x32xf32>
    %cst_162 = arith.constant dense<0.000000e+00> : vector<7x32xf32>
    %257 = tpu.matmul %255, %256, %cst_162 {dimension_numbers = #tpu.dot_dimension_numbers<[1], [0], [0], [1], [0, 0, 1, 1], [], []>} : vector<7x8xf32>, vector<8x32xf32>, vector<7x32xf32> -> vector<7x32xf32>
    %258 = vector.extract_strided_slice %233 {offsets = [0, 8], sizes = [7, 8], strides = [1, 1]} : vector<7x32xf32> to vector<7x8xf32>
    %259 = vector.extract_strided_slice %236 {offsets = [0, 8], sizes = [7, 8], strides = [1, 1]} : vector<7x32xf32> to vector<7x8xf32>
    %260 = vector.extract_strided_slice %239 {offsets = [0, 8], sizes = [7, 8], strides = [1, 1]} : vector<7x32xf32> to vector<7x8xf32>
    %cst_163 = arith.constant dense<0.000000e+00> : vector<7x7xf32>
    %261 = tpu.matmul %258, %259, %cst_163 {dimension_numbers = #tpu.dot_dimension_numbers<[1], [1], [0], [0], [0, 0, 1, 0], [], []>} : vector<7x8xf32>, vector<7x8xf32>, vector<7x7xf32> -> vector<7x7xf32>
    %cst_164 = arith.constant 0.353553385 : f32
    %262 = vector.broadcast %cst_164 : f32 to vector<7x7xf32>
    %263 = arith.mulf %261, %262 : vector<7x7xf32>
    %cst_165 = arith.constant dense<0xFF800000> : vector<7xf32>
    %264 = vector.multi_reduction <maximumf>, %263, %cst_165 [1] : vector<7x7xf32> to vector<7xf32>
    %265 = vector.shape_cast %264 : vector<7xf32> to vector<7x1xf32>
    %266 = vector.broadcast %265 : vector<7x1xf32> to vector<7x7xf32>
    %267 = arith.subf %263, %266 : vector<7x7xf32>
    %268 = math.exp %267 : vector<7x7xf32>
    %cst_166 = arith.constant dense<0.000000e+00> : vector<7xf32>
    %269 = vector.multi_reduction <add>, %268, %cst_166 [1] : vector<7x7xf32> to vector<7xf32>
    %270 = vector.shape_cast %269 : vector<7xf32> to vector<7x1xf32>
    %271 = vector.broadcast %270 : vector<7x1xf32> to vector<7x7xf32>
    %272 = arith.divf %268, %271 : vector<7x7xf32>
    %cst_167 = arith.constant dense<0.000000e+00> : vector<7x8xf32>
    %273 = tpu.matmul %272, %260, %cst_167 {dimension_numbers = #tpu.dot_dimension_numbers<[1], [0], [0], [1], [0, 0, 1, 1], [], []>} : vector<7x7xf32>, vector<7x8xf32>, vector<7x8xf32> -> vector<7x8xf32>
    %274 = vector.extract_strided_slice %51 {offsets = [8, 0], sizes = [8, 32], strides = [1, 1]} : vector<32x32xf32> to vector<8x32xf32>
    %cst_168 = arith.constant dense<0.000000e+00> : vector<7x32xf32>
    %275 = tpu.matmul %273, %274, %cst_168 {dimension_numbers = #tpu.dot_dimension_numbers<[1], [0], [0], [1], [0, 0, 1, 1], [], []>} : vector<7x8xf32>, vector<8x32xf32>, vector<7x32xf32> -> vector<7x32xf32>
    %276 = arith.addf %257, %275 : vector<7x32xf32>
    %277 = vector.extract_strided_slice %233 {offsets = [0, 16], sizes = [7, 8], strides = [1, 1]} : vector<7x32xf32> to vector<7x8xf32>
    %278 = vector.extract_strided_slice %236 {offsets = [0, 16], sizes = [7, 8], strides = [1, 1]} : vector<7x32xf32> to vector<7x8xf32>
    %279 = vector.extract_strided_slice %239 {offsets = [0, 16], sizes = [7, 8], strides = [1, 1]} : vector<7x32xf32> to vector<7x8xf32>
    %cst_169 = arith.constant dense<0.000000e+00> : vector<7x7xf32>
    %280 = tpu.matmul %277, %278, %cst_169 {dimension_numbers = #tpu.dot_dimension_numbers<[1], [1], [0], [0], [0, 0, 1, 0], [], []>} : vector<7x8xf32>, vector<7x8xf32>, vector<7x7xf32> -> vector<7x7xf32>
    %cst_170 = arith.constant 0.353553385 : f32
    %281 = vector.broadcast %cst_170 : f32 to vector<7x7xf32>
    %282 = arith.mulf %280, %281 : vector<7x7xf32>
    %cst_171 = arith.constant dense<0xFF800000> : vector<7xf32>
    %283 = vector.multi_reduction <maximumf>, %282, %cst_171 [1] : vector<7x7xf32> to vector<7xf32>
    %284 = vector.shape_cast %283 : vector<7xf32> to vector<7x1xf32>
    %285 = vector.broadcast %284 : vector<7x1xf32> to vector<7x7xf32>
    %286 = arith.subf %282, %285 : vector<7x7xf32>
    %287 = math.exp %286 : vector<7x7xf32>
    %cst_172 = arith.constant dense<0.000000e+00> : vector<7xf32>
    %288 = vector.multi_reduction <add>, %287, %cst_172 [1] : vector<7x7xf32> to vector<7xf32>
    %289 = vector.shape_cast %288 : vector<7xf32> to vector<7x1xf32>
    %290 = vector.broadcast %289 : vector<7x1xf32> to vector<7x7xf32>
    %291 = arith.divf %287, %290 : vector<7x7xf32>
    %cst_173 = arith.constant dense<0.000000e+00> : vector<7x8xf32>
    %292 = tpu.matmul %291, %279, %cst_173 {dimension_numbers = #tpu.dot_dimension_numbers<[1], [0], [0], [1], [0, 0, 1, 1], [], []>} : vector<7x7xf32>, vector<7x8xf32>, vector<7x8xf32> -> vector<7x8xf32>
    %293 = vector.extract_strided_slice %51 {offsets = [16, 0], sizes = [8, 32], strides = [1, 1]} : vector<32x32xf32> to vector<8x32xf32>
    %cst_174 = arith.constant dense<0.000000e+00> : vector<7x32xf32>
    %294 = tpu.matmul %292, %293, %cst_174 {dimension_numbers = #tpu.dot_dimension_numbers<[1], [0], [0], [1], [0, 0, 1, 1], [], []>} : vector<7x8xf32>, vector<8x32xf32>, vector<7x32xf32> -> vector<7x32xf32>
    %295 = arith.addf %276, %294 : vector<7x32xf32>
    %296 = vector.extract_strided_slice %233 {offsets = [0, 24], sizes = [7, 8], strides = [1, 1]} : vector<7x32xf32> to vector<7x8xf32>
    %297 = vector.extract_strided_slice %236 {offsets = [0, 24], sizes = [7, 8], strides = [1, 1]} : vector<7x32xf32> to vector<7x8xf32>
    %298 = vector.extract_strided_slice %239 {offsets = [0, 24], sizes = [7, 8], strides = [1, 1]} : vector<7x32xf32> to vector<7x8xf32>
    %cst_175 = arith.constant dense<0.000000e+00> : vector<7x7xf32>
    %299 = tpu.matmul %296, %297, %cst_175 {dimension_numbers = #tpu.dot_dimension_numbers<[1], [1], [0], [0], [0, 0, 1, 0], [], []>} : vector<7x8xf32>, vector<7x8xf32>, vector<7x7xf32> -> vector<7x7xf32>
    %cst_176 = arith.constant 0.353553385 : f32
    %300 = vector.broadcast %cst_176 : f32 to vector<7x7xf32>
    %301 = arith.mulf %299, %300 : vector<7x7xf32>
    %cst_177 = arith.constant dense<0xFF800000> : vector<7xf32>
    %302 = vector.multi_reduction <maximumf>, %301, %cst_177 [1] : vector<7x7xf32> to vector<7xf32>
    %303 = vector.shape_cast %302 : vector<7xf32> to vector<7x1xf32>
    %304 = vector.broadcast %303 : vector<7x1xf32> to vector<7x7xf32>
    %305 = arith.subf %301, %304 : vector<7x7xf32>
    %306 = math.exp %305 : vector<7x7xf32>
    %cst_178 = arith.constant dense<0.000000e+00> : vector<7xf32>
    %307 = vector.multi_reduction <add>, %306, %cst_178 [1] : vector<7x7xf32> to vector<7xf32>
    %308 = vector.shape_cast %307 : vector<7xf32> to vector<7x1xf32>
    %309 = vector.broadcast %308 : vector<7x1xf32> to vector<7x7xf32>
    %310 = arith.divf %306, %309 : vector<7x7xf32>
    %cst_179 = arith.constant dense<0.000000e+00> : vector<7x8xf32>
    %311 = tpu.matmul %310, %298, %cst_179 {dimension_numbers = #tpu.dot_dimension_numbers<[1], [0], [0], [1], [0, 0, 1, 1], [], []>} : vector<7x7xf32>, vector<7x8xf32>, vector<7x8xf32> -> vector<7x8xf32>
    %312 = vector.extract_strided_slice %51 {offsets = [24, 0], sizes = [8, 32], strides = [1, 1]} : vector<32x32xf32> to vector<8x32xf32>
    %cst_180 = arith.constant dense<0.000000e+00> : vector<7x32xf32>
    %313 = tpu.matmul %311, %312, %cst_180 {dimension_numbers = #tpu.dot_dimension_numbers<[1], [0], [0], [1], [0, 0, 1, 1], [], []>} : vector<7x8xf32>, vector<8x32xf32>, vector<7x32xf32> -> vector<7x32xf32>
    %314 = arith.addf %295, %313 : vector<7x32xf32>
    %315 = arith.addf %230, %314 : vector<7x32xf32>
    %316 = vector.broadcast %53 : vector<1x32xf32> to vector<7x32xf32>
    %317 = arith.addf %315, %316 : vector<7x32xf32>
    %cst_181 = arith.constant dense<0.000000e+00> : vector<7xf32>
    %318 = vector.multi_reduction <add>, %317, %cst_181 [1] : vector<7x32xf32> to vector<7xf32>
    %319 = vector.shape_cast %318 : vector<7xf32> to vector<7x1xf32>
    %cst_182 = arith.constant 3.200000e+01 : f32
    %320 = vector.broadcast %cst_182 : f32 to vector<7x1xf32>
    %321 = arith.divf %319, %320 : vector<7x1xf32>
    %322 = vector.broadcast %321 : vector<7x1xf32> to vector<7x32xf32>
    %323 = arith.subf %317, %322 : vector<7x32xf32>
    %324 = arith.mulf %323, %323 : vector<7x32xf32>
    %cst_183 = arith.constant dense<0.000000e+00> : vector<7xf32>
    %325 = vector.multi_reduction <add>, %324, %cst_183 [1] : vector<7x32xf32> to vector<7xf32>
    %326 = vector.shape_cast %325 : vector<7xf32> to vector<7x1xf32>
    %cst_184 = arith.constant 3.200000e+01 : f32
    %327 = vector.broadcast %cst_184 : f32 to vector<7x1xf32>
    %328 = arith.divf %326, %327 : vector<7x1xf32>
    %329 = vector.broadcast %321 : vector<7x1xf32> to vector<7x32xf32>
    %330 = arith.subf %317, %329 : vector<7x32xf32>
    %cst_185 = arith.constant 9.99999974E-6 : f32
    %331 = vector.broadcast %cst_185 : f32 to vector<7x1xf32>
    %332 = arith.addf %328, %331 : vector<7x1xf32>
    %333 = math.rsqrt %332 : vector<7x1xf32>
    %334 = vector.broadcast %333 : vector<7x1xf32> to vector<7x32xf32>
    %335 = arith.mulf %330, %334 : vector<7x32xf32>
    %336 = vector.broadcast %55 : vector<1x32xf32> to vector<7x32xf32>
    %337 = arith.mulf %335, %336 : vector<7x32xf32>
    %338 = vector.broadcast %57 : vector<1x32xf32> to vector<7x32xf32>
    %339 = arith.addf %337, %338 : vector<7x32xf32>
    %cst_186 = arith.constant dense<0.000000e+00> : vector<7x64xf32>
    %340 = tpu.matmul %339, %59, %cst_186 {dimension_numbers = #tpu.dot_dimension_numbers<[1], [0], [0], [1], [0, 0, 1, 1], [], []>} : vector<7x32xf32>, vector<32x64xf32>, vector<7x64xf32> -> vector<7x64xf32>
    %341 = vector.broadcast %61 : vector<1x64xf32> to vector<7x64xf32>
    %342 = arith.addf %340, %341 : vector<7x64xf32>
    %cst_187 = arith.constant 0.000000e+00 : f32
    %343 = vector.broadcast %cst_187 : f32 to vector<7x64xf32>
    %344 = arith.maximumf %342, %343 : vector<7x64xf32>
    %cst_188 = arith.constant dense<0.000000e+00> : vector<7x32xf32>
    %345 = tpu.matmul %344, %63, %cst_188 {dimension_numbers = #tpu.dot_dimension_numbers<[1], [0], [0], [1], [0, 0, 1, 1], [], []>} : vector<7x64xf32>, vector<64x32xf32>, vector<7x32xf32> -> vector<7x32xf32>
    %346 = vector.broadcast %65 : vector<1x32xf32> to vector<7x32xf32>
    %347 = arith.addf %345, %346 : vector<7x32xf32>
    %348 = arith.addf %339, %347 : vector<7x32xf32>
    %cst_189 = arith.constant dense<0.000000e+00> : vector<7xf32>
    %349 = vector.multi_reduction <add>, %348, %cst_189 [1] : vector<7x32xf32> to vector<7xf32>
    %350 = vector.shape_cast %349 : vector<7xf32> to vector<7x1xf32>
    %cst_190 = arith.constant 3.200000e+01 : f32
    %351 = vector.broadcast %cst_190 : f32 to vector<7x1xf32>
    %352 = arith.divf %350, %351 : vector<7x1xf32>
    %353 = vector.broadcast %352 : vector<7x1xf32> to vector<7x32xf32>
    %354 = arith.subf %348, %353 : vector<7x32xf32>
    %355 = arith.mulf %354, %354 : vector<7x32xf32>
    %cst_191 = arith.constant dense<0.000000e+00> : vector<7xf32>
    %356 = vector.multi_reduction <add>, %355, %cst_191 [1] : vector<7x32xf32> to vector<7xf32>
    %357 = vector.shape_cast %356 : vector<7xf32> to vector<7x1xf32>
    %cst_192 = arith.constant 3.200000e+01 : f32
    %358 = vector.broadcast %cst_192 : f32 to vector<7x1xf32>
    %359 = arith.divf %357, %358 : vector<7x1xf32>
    %360 = vector.broadcast %352 : vector<7x1xf32> to vector<7x32xf32>
    %361 = arith.subf %348, %360 : vector<7x32xf32>
    %cst_193 = arith.constant 9.99999974E-6 : f32
    %362 = vector.broadcast %cst_193 : f32 to vector<7x1xf32>
    %363 = arith.addf %359, %362 : vector<7x1xf32>
    %364 = math.rsqrt %363 : vector<7x1xf32>
    %365 = vector.broadcast %364 : vector<7x1xf32> to vector<7x32xf32>
    %366 = arith.mulf %361, %365 : vector<7x32xf32>
    %367 = vector.broadcast %67 : vector<1x32xf32> to vector<7x32xf32>
    %368 = arith.mulf %366, %367 : vector<7x32xf32>
    %369 = vector.broadcast %69 : vector<1x32xf32> to vector<7x32xf32>
    %370 = arith.addf %368, %369 : vector<7x32xf32>
    %cst_194 = arith.constant dense<0.000000e+00> : vector<7xf32>
    %371 = vector.multi_reduction <add>, %370, %cst_194 [1] : vector<7x32xf32> to vector<7xf32>
    %372 = vector.shape_cast %371 : vector<7xf32> to vector<7x1xf32>
    %cst_195 = arith.constant 3.200000e+01 : f32
    %373 = vector.broadcast %cst_195 : f32 to vector<7x1xf32>
    %374 = arith.divf %372, %373 : vector<7x1xf32>
    %375 = vector.broadcast %374 : vector<7x1xf32> to vector<7x32xf32>
    %376 = arith.subf %370, %375 : vector<7x32xf32>
    %377 = arith.mulf %376, %376 : vector<7x32xf32>
    %cst_196 = arith.constant dense<0.000000e+00> : vector<7xf32>
    %378 = vector.multi_reduction <add>, %377, %cst_196 [1] : vector<7x32xf32> to vector<7xf32>
    %379 = vector.shape_cast %378 : vector<7xf32> to vector<7x1xf32>
    %cst_197 = arith.constant 3.200000e+01 : f32
    %380 = vector.broadcast %cst_197 : f32 to vector<7x1xf32>
    %381 = arith.divf %379, %380 : vector<7x1xf32>
    %382 = vector.broadcast %374 : vector<7x1xf32> to vector<7x32xf32>
    %383 = arith.subf %370, %382 : vector<7x32xf32>
    %cst_198 = arith.constant 9.99999974E-6 : f32
    %384 = vector.broadcast %cst_198 : f32 to vector<7x1xf32>
    %385 = arith.addf %381, %384 : vector<7x1xf32>
    %386 = math.rsqrt %385 : vector<7x1xf32>
    %387 = vector.broadcast %386 : vector<7x1xf32> to vector<7x32xf32>
    %388 = arith.mulf %383, %387 : vector<7x32xf32>
    %389 = vector.broadcast %2 : vector<1x32xf32> to vector<7x32xf32>
    %390 = arith.mulf %388, %389 : vector<7x32xf32>
    %391 = vector.broadcast %3 : vector<1x32xf32> to vector<7x32xf32>
    %392 = arith.addf %390, %391 : vector<7x32xf32>
    %cst_199 = arith.constant dense<0.000000e+00> : vector<8x7xf32>
    %393 = tpu.matmul %4, %392, %cst_199 {dimension_numbers = #tpu.dot_dimension_numbers<[0], [1], [1], [0], [0, 1, 1, 0], [], []>} : vector<32x8xf32>, vector<7x32xf32>, vector<8x7xf32> -> vector<8x7xf32>
    %394 = vector.broadcast %5 : vector<8x1xf32> to vector<8x7xf32>
    %395 = arith.addf %393, %394 : vector<8x7xf32>
    %396 = vector.broadcast %85 : vector<1x7xf32> to vector<8x7xf32>
    %397 = arith.mulf %395, %396 : vector<8x7xf32>
    %398 = vector.broadcast %75 : vector<1x7xf32> to vector<8x7xf32>
    %399 = arith.addf %397, %398 : vector<8x7xf32>
    %c0_200 = arith.constant 0 : index
    %c0_201 = arith.constant 0 : index
    %c0_202 = arith.constant 0 : index
    %400 = vector.load %arg23[%c0_200, %c0_201, %c0_202] : memref<2x8x7xf32, #tpu.memory_space<vmem>>, vector<1x8x7xf32>
    %401 = vector.shape_cast %400 : vector<1x8x7xf32> to vector<8x7xf32>
    %402 = vector.shape_cast %399 : vector<8x7xf32> to vector<1x8x7xf32>
    tpu.vector_store %arg23[%c0_200, %c0_201, %c0_202], %402 {strides = array<i32>} : memref<2x8x7xf32, #tpu.memory_space<vmem>>, vector<1x8x7xf32>,
    %c1_203 = arith.constant 1 : index
    %c0_204 = arith.constant 0 : index
    %c0_205 = arith.constant 0 : index
    %403 = vector.load %arg0[%c1_203, %c0_204, %c0_205] : memref<2x16x7xf32, #tpu.memory_space<vmem>>, vector<1x16x7xf32>
    %404 = vector.shape_cast %403 : vector<1x16x7xf32> to vector<16x7xf32>
    %cst_206 = arith.constant dense<0.000000e+00> : vector<7xf32>
    %405 = vector.multi_reduction <add>, %404, %cst_206 [0] : vector<16x7xf32> to vector<7xf32>
    %406 = vector.shape_cast %405 : vector<7xf32> to vector<1x7xf32>
    %cst_207 = arith.constant 1.600000e+01 : f32
    %407 = vector.broadcast %cst_207 : f32 to vector<1x7xf32>
    %408 = arith.divf %406, %407 : vector<1x7xf32>
    %409 = vector.broadcast %408 : vector<1x7xf32> to vector<16x7xf32>
    %410 = arith.subf %404, %409 : vector<16x7xf32>
    %411 = arith.mulf %410, %410 : vector<16x7xf32>
    %cst_208 = arith.constant dense<0.000000e+00> : vector<7xf32>
    %412 = vector.multi_reduction <add>, %411, %cst_208 [0] : vector<16x7xf32> to vector<7xf32>
    %413 = vector.shape_cast %412 : vector<7xf32> to vector<1x7xf32>
    %cst_209 = arith.constant 1.600000e+01 : f32
    %414 = vector.broadcast %cst_209 : f32 to vector<1x7xf32>
    %415 = arith.divf %413, %414 : vector<1x7xf32>
    %cst_210 = arith.constant 9.99999974E-6 : f32
    %416 = vector.broadcast %cst_210 : f32 to vector<1x7xf32>
    %417 = arith.addf %415, %416 : vector<1x7xf32>
    %418 = math.sqrt %417 : vector<1x7xf32>
    %419 = vector.broadcast %418 : vector<1x7xf32> to vector<16x7xf32>
    %420 = arith.divf %410, %419 : vector<16x7xf32>
    %cst_211 = arith.constant dense<0.000000e+00> : vector<7x32xf32>
    %421 = tpu.matmul %420, %0, %cst_211 {dimension_numbers = #tpu.dot_dimension_numbers<[0], [0], [1], [1], [0, 1, 1, 1], [], []>} : vector<16x7xf32>, vector<16x32xf32>, vector<7x32xf32> -> vector<7x32xf32>
    %422 = vector.broadcast %1 : vector<1x32xf32> to vector<7x32xf32>
    %423 = arith.addf %421, %422 : vector<7x32xf32>
    %cst_212 = arith.constant dense<0.000000e+00> : vector<7x32xf32>
    %424 = tpu.matmul %423, %7, %cst_212 {dimension_numbers = #tpu.dot_dimension_numbers<[1], [0], [0], [1], [0, 0, 1, 1], [], []>} : vector<7x32xf32>, vector<32x32xf32>, vector<7x32xf32> -> vector<7x32xf32>
    %425 = vector.broadcast %9 : vector<1x32xf32> to vector<7x32xf32>
    %426 = arith.addf %424, %425 : vector<7x32xf32>
    %cst_213 = arith.constant dense<0.000000e+00> : vector<7x32xf32>
    %427 = tpu.matmul %423, %11, %cst_213 {dimension_numbers = #tpu.dot_dimension_numbers<[1], [0], [0], [1], [0, 0, 1, 1], [], []>} : vector<7x32xf32>, vector<32x32xf32>, vector<7x32xf32> -> vector<7x32xf32>
    %428 = vector.broadcast %13 : vector<1x32xf32> to vector<7x32xf32>
    %429 = arith.addf %427, %428 : vector<7x32xf32>
    %cst_214 = arith.constant dense<0.000000e+00> : vector<7x32xf32>
    %430 = tpu.matmul %423, %15, %cst_214 {dimension_numbers = #tpu.dot_dimension_numbers<[1], [0], [0], [1], [0, 0, 1, 1], [], []>} : vector<7x32xf32>, vector<32x32xf32>, vector<7x32xf32> -> vector<7x32xf32>
    %431 = vector.broadcast %17 : vector<1x32xf32> to vector<7x32xf32>
    %432 = arith.addf %430, %431 : vector<7x32xf32>
    %433 = vector.extract_strided_slice %426 {offsets = [0, 0], sizes = [7, 8], strides = [1, 1]} : vector<7x32xf32> to vector<7x8xf32>
    %434 = vector.extract_strided_slice %429 {offsets = [0, 0], sizes = [7, 8], strides = [1, 1]} : vector<7x32xf32> to vector<7x8xf32>
    %435 = vector.extract_strided_slice %432 {offsets = [0, 0], sizes = [7, 8], strides = [1, 1]} : vector<7x32xf32> to vector<7x8xf32>
    %cst_215 = arith.constant dense<0.000000e+00> : vector<7x7xf32>
    %436 = tpu.matmul %433, %434, %cst_215 {dimension_numbers = #tpu.dot_dimension_numbers<[1], [1], [0], [0], [0, 0, 1, 0], [], []>} : vector<7x8xf32>, vector<7x8xf32>, vector<7x7xf32> -> vector<7x7xf32>
    %cst_216 = arith.constant 0.353553385 : f32
    %437 = vector.broadcast %cst_216 : f32 to vector<7x7xf32>
    %438 = arith.mulf %436, %437 : vector<7x7xf32>
    %cst_217 = arith.constant dense<0xFF800000> : vector<7xf32>
    %439 = vector.multi_reduction <maximumf>, %438, %cst_217 [1] : vector<7x7xf32> to vector<7xf32>
    %440 = vector.shape_cast %439 : vector<7xf32> to vector<7x1xf32>
    %441 = vector.broadcast %440 : vector<7x1xf32> to vector<7x7xf32>
    %442 = arith.subf %438, %441 : vector<7x7xf32>
    %443 = math.exp %442 : vector<7x7xf32>
    %cst_218 = arith.constant dense<0.000000e+00> : vector<7xf32>
    %444 = vector.multi_reduction <add>, %443, %cst_218 [1] : vector<7x7xf32> to vector<7xf32>
    %445 = vector.shape_cast %444 : vector<7xf32> to vector<7x1xf32>
    %446 = vector.broadcast %445 : vector<7x1xf32> to vector<7x7xf32>
    %447 = arith.divf %443, %446 : vector<7x7xf32>
    %cst_219 = arith.constant dense<0.000000e+00> : vector<7x8xf32>
    %448 = tpu.matmul %447, %435, %cst_219 {dimension_numbers = #tpu.dot_dimension_numbers<[1], [0], [0], [1], [0, 0, 1, 1], [], []>} : vector<7x7xf32>, vector<7x8xf32>, vector<7x8xf32> -> vector<7x8xf32>
    %449 = vector.extract_strided_slice %19 {offsets = [0, 0], sizes = [8, 32], strides = [1, 1]} : vector<32x32xf32> to vector<8x32xf32>
    %cst_220 = arith.constant dense<0.000000e+00> : vector<7x32xf32>
    %450 = tpu.matmul %448, %449, %cst_220 {dimension_numbers = #tpu.dot_dimension_numbers<[1], [0], [0], [1], [0, 0, 1, 1], [], []>} : vector<7x8xf32>, vector<8x32xf32>, vector<7x32xf32> -> vector<7x32xf32>
    %451 = vector.extract_strided_slice %426 {offsets = [0, 8], sizes = [7, 8], strides = [1, 1]} : vector<7x32xf32> to vector<7x8xf32>
    %452 = vector.extract_strided_slice %429 {offsets = [0, 8], sizes = [7, 8], strides = [1, 1]} : vector<7x32xf32> to vector<7x8xf32>
    %453 = vector.extract_strided_slice %432 {offsets = [0, 8], sizes = [7, 8], strides = [1, 1]} : vector<7x32xf32> to vector<7x8xf32>
    %cst_221 = arith.constant dense<0.000000e+00> : vector<7x7xf32>
    %454 = tpu.matmul %451, %452, %cst_221 {dimension_numbers = #tpu.dot_dimension_numbers<[1], [1], [0], [0], [0, 0, 1, 0], [], []>} : vector<7x8xf32>, vector<7x8xf32>, vector<7x7xf32> -> vector<7x7xf32>
    %cst_222 = arith.constant 0.353553385 : f32
    %455 = vector.broadcast %cst_222 : f32 to vector<7x7xf32>
    %456 = arith.mulf %454, %455 : vector<7x7xf32>
    %cst_223 = arith.constant dense<0xFF800000> : vector<7xf32>
    %457 = vector.multi_reduction <maximumf>, %456, %cst_223 [1] : vector<7x7xf32> to vector<7xf32>
    %458 = vector.shape_cast %457 : vector<7xf32> to vector<7x1xf32>
    %459 = vector.broadcast %458 : vector<7x1xf32> to vector<7x7xf32>
    %460 = arith.subf %456, %459 : vector<7x7xf32>
    %461 = math.exp %460 : vector<7x7xf32>
    %cst_224 = arith.constant dense<0.000000e+00> : vector<7xf32>
    %462 = vector.multi_reduction <add>, %461, %cst_224 [1] : vector<7x7xf32> to vector<7xf32>
    %463 = vector.shape_cast %462 : vector<7xf32> to vector<7x1xf32>
    %464 = vector.broadcast %463 : vector<7x1xf32> to vector<7x7xf32>
    %465 = arith.divf %461, %464 : vector<7x7xf32>
    %cst_225 = arith.constant dense<0.000000e+00> : vector<7x8xf32>
    %466 = tpu.matmul %465, %453, %cst_225 {dimension_numbers = #tpu.dot_dimension_numbers<[1], [0], [0], [1], [0, 0, 1, 1], [], []>} : vector<7x7xf32>, vector<7x8xf32>, vector<7x8xf32> -> vector<7x8xf32>
    %467 = vector.extract_strided_slice %19 {offsets = [8, 0], sizes = [8, 32], strides = [1, 1]} : vector<32x32xf32> to vector<8x32xf32>
    %cst_226 = arith.constant dense<0.000000e+00> : vector<7x32xf32>
    %468 = tpu.matmul %466, %467, %cst_226 {dimension_numbers = #tpu.dot_dimension_numbers<[1], [0], [0], [1], [0, 0, 1, 1], [], []>} : vector<7x8xf32>, vector<8x32xf32>, vector<7x32xf32> -> vector<7x32xf32>
    %469 = arith.addf %450, %468 : vector<7x32xf32>
    %470 = vector.extract_strided_slice %426 {offsets = [0, 16], sizes = [7, 8], strides = [1, 1]} : vector<7x32xf32> to vector<7x8xf32>
    %471 = vector.extract_strided_slice %429 {offsets = [0, 16], sizes = [7, 8], strides = [1, 1]} : vector<7x32xf32> to vector<7x8xf32>
    %472 = vector.extract_strided_slice %432 {offsets = [0, 16], sizes = [7, 8], strides = [1, 1]} : vector<7x32xf32> to vector<7x8xf32>
    %cst_227 = arith.constant dense<0.000000e+00> : vector<7x7xf32>
    %473 = tpu.matmul %470, %471, %cst_227 {dimension_numbers = #tpu.dot_dimension_numbers<[1], [1], [0], [0], [0, 0, 1, 0], [], []>} : vector<7x8xf32>, vector<7x8xf32>, vector<7x7xf32> -> vector<7x7xf32>
    %cst_228 = arith.constant 0.353553385 : f32
    %474 = vector.broadcast %cst_228 : f32 to vector<7x7xf32>
    %475 = arith.mulf %473, %474 : vector<7x7xf32>
    %cst_229 = arith.constant dense<0xFF800000> : vector<7xf32>
    %476 = vector.multi_reduction <maximumf>, %475, %cst_229 [1] : vector<7x7xf32> to vector<7xf32>
    %477 = vector.shape_cast %476 : vector<7xf32> to vector<7x1xf32>
    %478 = vector.broadcast %477 : vector<7x1xf32> to vector<7x7xf32>
    %479 = arith.subf %475, %478 : vector<7x7xf32>
    %480 = math.exp %479 : vector<7x7xf32>
    %cst_230 = arith.constant dense<0.000000e+00> : vector<7xf32>
    %481 = vector.multi_reduction <add>, %480, %cst_230 [1] : vector<7x7xf32> to vector<7xf32>
    %482 = vector.shape_cast %481 : vector<7xf32> to vector<7x1xf32>
    %483 = vector.broadcast %482 : vector<7x1xf32> to vector<7x7xf32>
    %484 = arith.divf %480, %483 : vector<7x7xf32>
    %cst_231 = arith.constant dense<0.000000e+00> : vector<7x8xf32>
    %485 = tpu.matmul %484, %472, %cst_231 {dimension_numbers = #tpu.dot_dimension_numbers<[1], [0], [0], [1], [0, 0, 1, 1], [], []>} : vector<7x7xf32>, vector<7x8xf32>, vector<7x8xf32> -> vector<7x8xf32>
    %486 = vector.extract_strided_slice %19 {offsets = [16, 0], sizes = [8, 32], strides = [1, 1]} : vector<32x32xf32> to vector<8x32xf32>
    %cst_232 = arith.constant dense<0.000000e+00> : vector<7x32xf32>
    %487 = tpu.matmul %485, %486, %cst_232 {dimension_numbers = #tpu.dot_dimension_numbers<[1], [0], [0], [1], [0, 0, 1, 1], [], []>} : vector<7x8xf32>, vector<8x32xf32>, vector<7x32xf32> -> vector<7x32xf32>
    %488 = arith.addf %469, %487 : vector<7x32xf32>
    %489 = vector.extract_strided_slice %426 {offsets = [0, 24], sizes = [7, 8], strides = [1, 1]} : vector<7x32xf32> to vector<7x8xf32>
    %490 = vector.extract_strided_slice %429 {offsets = [0, 24], sizes = [7, 8], strides = [1, 1]} : vector<7x32xf32> to vector<7x8xf32>
    %491 = vector.extract_strided_slice %432 {offsets = [0, 24], sizes = [7, 8], strides = [1, 1]} : vector<7x32xf32> to vector<7x8xf32>
    %cst_233 = arith.constant dense<0.000000e+00> : vector<7x7xf32>
    %492 = tpu.matmul %489, %490, %cst_233 {dimension_numbers = #tpu.dot_dimension_numbers<[1], [1], [0], [0], [0, 0, 1, 0], [], []>} : vector<7x8xf32>, vector<7x8xf32>, vector<7x7xf32> -> vector<7x7xf32>
    %cst_234 = arith.constant 0.353553385 : f32
    %493 = vector.broadcast %cst_234 : f32 to vector<7x7xf32>
    %494 = arith.mulf %492, %493 : vector<7x7xf32>
    %cst_235 = arith.constant dense<0xFF800000> : vector<7xf32>
    %495 = vector.multi_reduction <maximumf>, %494, %cst_235 [1] : vector<7x7xf32> to vector<7xf32>
    %496 = vector.shape_cast %495 : vector<7xf32> to vector<7x1xf32>
    %497 = vector.broadcast %496 : vector<7x1xf32> to vector<7x7xf32>
    %498 = arith.subf %494, %497 : vector<7x7xf32>
    %499 = math.exp %498 : vector<7x7xf32>
    %cst_236 = arith.constant dense<0.000000e+00> : vector<7xf32>
    %500 = vector.multi_reduction <add>, %499, %cst_236 [1] : vector<7x7xf32> to vector<7xf32>
    %501 = vector.shape_cast %500 : vector<7xf32> to vector<7x1xf32>
    %502 = vector.broadcast %501 : vector<7x1xf32> to vector<7x7xf32>
    %503 = arith.divf %499, %502 : vector<7x7xf32>
    %cst_237 = arith.constant dense<0.000000e+00> : vector<7x8xf32>
    %504 = tpu.matmul %503, %491, %cst_237 {dimension_numbers = #tpu.dot_dimension_numbers<[1], [0], [0], [1], [0, 0, 1, 1], [], []>} : vector<7x7xf32>, vector<7x8xf32>, vector<7x8xf32> -> vector<7x8xf32>
    %505 = vector.extract_strided_slice %19 {offsets = [24, 0], sizes = [8, 32], strides = [1, 1]} : vector<32x32xf32> to vector<8x32xf32>
    %cst_238 = arith.constant dense<0.000000e+00> : vector<7x32xf32>
    %506 = tpu.matmul %504, %505, %cst_238 {dimension_numbers = #tpu.dot_dimension_numbers<[1], [0], [0], [1], [0, 0, 1, 1], [], []>} : vector<7x8xf32>, vector<8x32xf32>, vector<7x32xf32> -> vector<7x32xf32>
    %507 = arith.addf %488, %506 : vector<7x32xf32>
    %508 = arith.addf %423, %507 : vector<7x32xf32>
    %509 = vector.broadcast %21 : vector<1x32xf32> to vector<7x32xf32>
    %510 = arith.addf %508, %509 : vector<7x32xf32>
    %cst_239 = arith.constant dense<0.000000e+00> : vector<7xf32>
    %511 = vector.multi_reduction <add>, %510, %cst_239 [1] : vector<7x32xf32> to vector<7xf32>
    %512 = vector.shape_cast %511 : vector<7xf32> to vector<7x1xf32>
    %cst_240 = arith.constant 3.200000e+01 : f32
    %513 = vector.broadcast %cst_240 : f32 to vector<7x1xf32>
    %514 = arith.divf %512, %513 : vector<7x1xf32>
    %515 = vector.broadcast %514 : vector<7x1xf32> to vector<7x32xf32>
    %516 = arith.subf %510, %515 : vector<7x32xf32>
    %517 = arith.mulf %516, %516 : vector<7x32xf32>
    %cst_241 = arith.constant dense<0.000000e+00> : vector<7xf32>
    %518 = vector.multi_reduction <add>, %517, %cst_241 [1] : vector<7x32xf32> to vector<7xf32>
    %519 = vector.shape_cast %518 : vector<7xf32> to vector<7x1xf32>
    %cst_242 = arith.constant 3.200000e+01 : f32
    %520 = vector.broadcast %cst_242 : f32 to vector<7x1xf32>
    %521 = arith.divf %519, %520 : vector<7x1xf32>
    %522 = vector.broadcast %514 : vector<7x1xf32> to vector<7x32xf32>
    %523 = arith.subf %510, %522 : vector<7x32xf32>
    %cst_243 = arith.constant 9.99999974E-6 : f32
    %524 = vector.broadcast %cst_243 : f32 to vector<7x1xf32>
    %525 = arith.addf %521, %524 : vector<7x1xf32>
    %526 = math.rsqrt %525 : vector<7x1xf32>
    %527 = vector.broadcast %526 : vector<7x1xf32> to vector<7x32xf32>
    %528 = arith.mulf %523, %527 : vector<7x32xf32>
    %529 = vector.broadcast %23 : vector<1x32xf32> to vector<7x32xf32>
    %530 = arith.mulf %528, %529 : vector<7x32xf32>
    %531 = vector.broadcast %25 : vector<1x32xf32> to vector<7x32xf32>
    %532 = arith.addf %530, %531 : vector<7x32xf32>
    %cst_244 = arith.constant dense<0.000000e+00> : vector<7x64xf32>
    %533 = tpu.matmul %532, %27, %cst_244 {dimension_numbers = #tpu.dot_dimension_numbers<[1], [0], [0], [1], [0, 0, 1, 1], [], []>} : vector<7x32xf32>, vector<32x64xf32>, vector<7x64xf32> -> vector<7x64xf32>
    %534 = vector.broadcast %29 : vector<1x64xf32> to vector<7x64xf32>
    %535 = arith.addf %533, %534 : vector<7x64xf32>
    %cst_245 = arith.constant 0.000000e+00 : f32
    %536 = vector.broadcast %cst_245 : f32 to vector<7x64xf32>
    %537 = arith.maximumf %535, %536 : vector<7x64xf32>
    %cst_246 = arith.constant dense<0.000000e+00> : vector<7x32xf32>
    %538 = tpu.matmul %537, %31, %cst_246 {dimension_numbers = #tpu.dot_dimension_numbers<[1], [0], [0], [1], [0, 0, 1, 1], [], []>} : vector<7x64xf32>, vector<64x32xf32>, vector<7x32xf32> -> vector<7x32xf32>
    %539 = vector.broadcast %33 : vector<1x32xf32> to vector<7x32xf32>
    %540 = arith.addf %538, %539 : vector<7x32xf32>
    %541 = arith.addf %532, %540 : vector<7x32xf32>
    %cst_247 = arith.constant dense<0.000000e+00> : vector<7xf32>
    %542 = vector.multi_reduction <add>, %541, %cst_247 [1] : vector<7x32xf32> to vector<7xf32>
    %543 = vector.shape_cast %542 : vector<7xf32> to vector<7x1xf32>
    %cst_248 = arith.constant 3.200000e+01 : f32
    %544 = vector.broadcast %cst_248 : f32 to vector<7x1xf32>
    %545 = arith.divf %543, %544 : vector<7x1xf32>
    %546 = vector.broadcast %545 : vector<7x1xf32> to vector<7x32xf32>
    %547 = arith.subf %541, %546 : vector<7x32xf32>
    %548 = arith.mulf %547, %547 : vector<7x32xf32>
    %cst_249 = arith.constant dense<0.000000e+00> : vector<7xf32>
    %549 = vector.multi_reduction <add>, %548, %cst_249 [1] : vector<7x32xf32> to vector<7xf32>
    %550 = vector.shape_cast %549 : vector<7xf32> to vector<7x1xf32>
    %cst_250 = arith.constant 3.200000e+01 : f32
    %551 = vector.broadcast %cst_250 : f32 to vector<7x1xf32>
    %552 = arith.divf %550, %551 : vector<7x1xf32>
    %553 = vector.broadcast %545 : vector<7x1xf32> to vector<7x32xf32>
    %554 = arith.subf %541, %553 : vector<7x32xf32>
    %cst_251 = arith.constant 9.99999974E-6 : f32
    %555 = vector.broadcast %cst_251 : f32 to vector<7x1xf32>
    %556 = arith.addf %552, %555 : vector<7x1xf32>
    %557 = math.rsqrt %556 : vector<7x1xf32>
    %558 = vector.broadcast %557 : vector<7x1xf32> to vector<7x32xf32>
    %559 = arith.mulf %554, %558 : vector<7x32xf32>
    %560 = vector.broadcast %35 : vector<1x32xf32> to vector<7x32xf32>
    %561 = arith.mulf %559, %560 : vector<7x32xf32>
    %562 = vector.broadcast %37 : vector<1x32xf32> to vector<7x32xf32>
    %563 = arith.addf %561, %562 : vector<7x32xf32>
    %cst_252 = arith.constant dense<0.000000e+00> : vector<7x32xf32>
    %564 = tpu.matmul %563, %39, %cst_252 {dimension_numbers = #tpu.dot_dimension_numbers<[1], [0], [0], [1], [0, 0, 1, 1], [], []>} : vector<7x32xf32>, vector<32x32xf32>, vector<7x32xf32> -> vector<7x32xf32>
    %565 = vector.broadcast %41 : vector<1x32xf32> to vector<7x32xf32>
    %566 = arith.addf %564, %565 : vector<7x32xf32>
    %cst_253 = arith.constant dense<0.000000e+00> : vector<7x32xf32>
    %567 = tpu.matmul %563, %43, %cst_253 {dimension_numbers = #tpu.dot_dimension_numbers<[1], [0], [0], [1], [0, 0, 1, 1], [], []>} : vector<7x32xf32>, vector<32x32xf32>, vector<7x32xf32> -> vector<7x32xf32>
    %568 = vector.broadcast %45 : vector<1x32xf32> to vector<7x32xf32>
    %569 = arith.addf %567, %568 : vector<7x32xf32>
    %cst_254 = arith.constant dense<0.000000e+00> : vector<7x32xf32>
    %570 = tpu.matmul %563, %47, %cst_254 {dimension_numbers = #tpu.dot_dimension_numbers<[1], [0], [0], [1], [0, 0, 1, 1], [], []>} : vector<7x32xf32>, vector<32x32xf32>, vector<7x32xf32> -> vector<7x32xf32>
    %571 = vector.broadcast %49 : vector<1x32xf32> to vector<7x32xf32>
    %572 = arith.addf %570, %571 : vector<7x32xf32>
    %573 = vector.extract_strided_slice %566 {offsets = [0, 0], sizes = [7, 8], strides = [1, 1]} : vector<7x32xf32> to vector<7x8xf32>
    %574 = vector.extract_strided_slice %569 {offsets = [0, 0], sizes = [7, 8], strides = [1, 1]} : vector<7x32xf32> to vector<7x8xf32>
    %575 = vector.extract_strided_slice %572 {offsets = [0, 0], sizes = [7, 8], strides = [1, 1]} : vector<7x32xf32> to vector<7x8xf32>
    %cst_255 = arith.constant dense<0.000000e+00> : vector<7x7xf32>
    %576 = tpu.matmul %573, %574, %cst_255 {dimension_numbers = #tpu.dot_dimension_numbers<[1], [1], [0], [0], [0, 0, 1, 0], [], []>} : vector<7x8xf32>, vector<7x8xf32>, vector<7x7xf32> -> vector<7x7xf32>
    %cst_256 = arith.constant 0.353553385 : f32
    %577 = vector.broadcast %cst_256 : f32 to vector<7x7xf32>
    %578 = arith.mulf %576, %577 : vector<7x7xf32>
    %cst_257 = arith.constant dense<0xFF800000> : vector<7xf32>
    %579 = vector.multi_reduction <maximumf>, %578, %cst_257 [1] : vector<7x7xf32> to vector<7xf32>
    %580 = vector.shape_cast %579 : vector<7xf32> to vector<7x1xf32>
    %581 = vector.broadcast %580 : vector<7x1xf32> to vector<7x7xf32>
    %582 = arith.subf %578, %581 : vector<7x7xf32>
    %583 = math.exp %582 : vector<7x7xf32>
    %cst_258 = arith.constant dense<0.000000e+00> : vector<7xf32>
    %584 = vector.multi_reduction <add>, %583, %cst_258 [1] : vector<7x7xf32> to vector<7xf32>
    %585 = vector.shape_cast %584 : vector<7xf32> to vector<7x1xf32>
    %586 = vector.broadcast %585 : vector<7x1xf32> to vector<7x7xf32>
    %587 = arith.divf %583, %586 : vector<7x7xf32>
    %cst_259 = arith.constant dense<0.000000e+00> : vector<7x8xf32>
    %588 = tpu.matmul %587, %575, %cst_259 {dimension_numbers = #tpu.dot_dimension_numbers<[1], [0], [0], [1], [0, 0, 1, 1], [], []>} : vector<7x7xf32>, vector<7x8xf32>, vector<7x8xf32> -> vector<7x8xf32>
    %589 = vector.extract_strided_slice %51 {offsets = [0, 0], sizes = [8, 32], strides = [1, 1]} : vector<32x32xf32> to vector<8x32xf32>
    %cst_260 = arith.constant dense<0.000000e+00> : vector<7x32xf32>
    %590 = tpu.matmul %588, %589, %cst_260 {dimension_numbers = #tpu.dot_dimension_numbers<[1], [0], [0], [1], [0, 0, 1, 1], [], []>} : vector<7x8xf32>, vector<8x32xf32>, vector<7x32xf32> -> vector<7x32xf32>
    %591 = vector.extract_strided_slice %566 {offsets = [0, 8], sizes = [7, 8], strides = [1, 1]} : vector<7x32xf32> to vector<7x8xf32>
    %592 = vector.extract_strided_slice %569 {offsets = [0, 8], sizes = [7, 8], strides = [1, 1]} : vector<7x32xf32> to vector<7x8xf32>
    %593 = vector.extract_strided_slice %572 {offsets = [0, 8], sizes = [7, 8], strides = [1, 1]} : vector<7x32xf32> to vector<7x8xf32>
    %cst_261 = arith.constant dense<0.000000e+00> : vector<7x7xf32>
    %594 = tpu.matmul %591, %592, %cst_261 {dimension_numbers = #tpu.dot_dimension_numbers<[1], [1], [0], [0], [0, 0, 1, 0], [], []>} : vector<7x8xf32>, vector<7x8xf32>, vector<7x7xf32> -> vector<7x7xf32>
    %cst_262 = arith.constant 0.353553385 : f32
    %595 = vector.broadcast %cst_262 : f32 to vector<7x7xf32>
    %596 = arith.mulf %594, %595 : vector<7x7xf32>
    %cst_263 = arith.constant dense<0xFF800000> : vector<7xf32>
    %597 = vector.multi_reduction <maximumf>, %596, %cst_263 [1] : vector<7x7xf32> to vector<7xf32>
    %598 = vector.shape_cast %597 : vector<7xf32> to vector<7x1xf32>
    %599 = vector.broadcast %598 : vector<7x1xf32> to vector<7x7xf32>
    %600 = arith.subf %596, %599 : vector<7x7xf32>
    %601 = math.exp %600 : vector<7x7xf32>
    %cst_264 = arith.constant dense<0.000000e+00> : vector<7xf32>
    %602 = vector.multi_reduction <add>, %601, %cst_264 [1] : vector<7x7xf32> to vector<7xf32>
    %603 = vector.shape_cast %602 : vector<7xf32> to vector<7x1xf32>
    %604 = vector.broadcast %603 : vector<7x1xf32> to vector<7x7xf32>
    %605 = arith.divf %601, %604 : vector<7x7xf32>
    %cst_265 = arith.constant dense<0.000000e+00> : vector<7x8xf32>
    %606 = tpu.matmul %605, %593, %cst_265 {dimension_numbers = #tpu.dot_dimension_numbers<[1], [0], [0], [1], [0, 0, 1, 1], [], []>} : vector<7x7xf32>, vector<7x8xf32>, vector<7x8xf32> -> vector<7x8xf32>
    %607 = vector.extract_strided_slice %51 {offsets = [8, 0], sizes = [8, 32], strides = [1, 1]} : vector<32x32xf32> to vector<8x32xf32>
    %cst_266 = arith.constant dense<0.000000e+00> : vector<7x32xf32>
    %608 = tpu.matmul %606, %607, %cst_266 {dimension_numbers = #tpu.dot_dimension_numbers<[1], [0], [0], [1], [0, 0, 1, 1], [], []>} : vector<7x8xf32>, vector<8x32xf32>, vector<7x32xf32> -> vector<7x32xf32>
    %609 = arith.addf %590, %608 : vector<7x32xf32>
    %610 = vector.extract_strided_slice %566 {offsets = [0, 16], sizes = [7, 8], strides = [1, 1]} : vector<7x32xf32> to vector<7x8xf32>
    %611 = vector.extract_strided_slice %569 {offsets = [0, 16], sizes = [7, 8], strides = [1, 1]} : vector<7x32xf32> to vector<7x8xf32>
    %612 = vector.extract_strided_slice %572 {offsets = [0, 16], sizes = [7, 8], strides = [1, 1]} : vector<7x32xf32> to vector<7x8xf32>
    %cst_267 = arith.constant dense<0.000000e+00> : vector<7x7xf32>
    %613 = tpu.matmul %610, %611, %cst_267 {dimension_numbers = #tpu.dot_dimension_numbers<[1], [1], [0], [0], [0, 0, 1, 0], [], []>} : vector<7x8xf32>, vector<7x8xf32>, vector<7x7xf32> -> vector<7x7xf32>
    %cst_268 = arith.constant 0.353553385 : f32
    %614 = vector.broadcast %cst_268 : f32 to vector<7x7xf32>
    %615 = arith.mulf %613, %614 : vector<7x7xf32>
    %cst_269 = arith.constant dense<0xFF800000> : vector<7xf32>
    %616 = vector.multi_reduction <maximumf>, %615, %cst_269 [1] : vector<7x7xf32> to vector<7xf32>
    %617 = vector.shape_cast %616 : vector<7xf32> to vector<7x1xf32>
    %618 = vector.broadcast %617 : vector<7x1xf32> to vector<7x7xf32>
    %619 = arith.subf %615, %618 : vector<7x7xf32>
    %620 = math.exp %619 : vector<7x7xf32>
    %cst_270 = arith.constant dense<0.000000e+00> : vector<7xf32>
    %621 = vector.multi_reduction <add>, %620, %cst_270 [1] : vector<7x7xf32> to vector<7xf32>
    %622 = vector.shape_cast %621 : vector<7xf32> to vector<7x1xf32>
    %623 = vector.broadcast %622 : vector<7x1xf32> to vector<7x7xf32>
    %624 = arith.divf %620, %623 : vector<7x7xf32>
    %cst_271 = arith.constant dense<0.000000e+00> : vector<7x8xf32>
    %625 = tpu.matmul %624, %612, %cst_271 {dimension_numbers = #tpu.dot_dimension_numbers<[1], [0], [0], [1], [0, 0, 1, 1], [], []>} : vector<7x7xf32>, vector<7x8xf32>, vector<7x8xf32> -> vector<7x8xf32>
    %626 = vector.extract_strided_slice %51 {offsets = [16, 0], sizes = [8, 32], strides = [1, 1]} : vector<32x32xf32> to vector<8x32xf32>
    %cst_272 = arith.constant dense<0.000000e+00> : vector<7x32xf32>
    %627 = tpu.matmul %625, %626, %cst_272 {dimension_numbers = #tpu.dot_dimension_numbers<[1], [0], [0], [1], [0, 0, 1, 1], [], []>} : vector<7x8xf32>, vector<8x32xf32>, vector<7x32xf32> -> vector<7x32xf32>
    %628 = arith.addf %609, %627 : vector<7x32xf32>
    %629 = vector.extract_strided_slice %566 {offsets = [0, 24], sizes = [7, 8], strides = [1, 1]} : vector<7x32xf32> to vector<7x8xf32>
    %630 = vector.extract_strided_slice %569 {offsets = [0, 24], sizes = [7, 8], strides = [1, 1]} : vector<7x32xf32> to vector<7x8xf32>
    %631 = vector.extract_strided_slice %572 {offsets = [0, 24], sizes = [7, 8], strides = [1, 1]} : vector<7x32xf32> to vector<7x8xf32>
    %cst_273 = arith.constant dense<0.000000e+00> : vector<7x7xf32>
    %632 = tpu.matmul %629, %630, %cst_273 {dimension_numbers = #tpu.dot_dimension_numbers<[1], [1], [0], [0], [0, 0, 1, 0], [], []>} : vector<7x8xf32>, vector<7x8xf32>, vector<7x7xf32> -> vector<7x7xf32>
    %cst_274 = arith.constant 0.353553385 : f32
    %633 = vector.broadcast %cst_274 : f32 to vector<7x7xf32>
    %634 = arith.mulf %632, %633 : vector<7x7xf32>
    %cst_275 = arith.constant dense<0xFF800000> : vector<7xf32>
    %635 = vector.multi_reduction <maximumf>, %634, %cst_275 [1] : vector<7x7xf32> to vector<7xf32>
    %636 = vector.shape_cast %635 : vector<7xf32> to vector<7x1xf32>
    %637 = vector.broadcast %636 : vector<7x1xf32> to vector<7x7xf32>
    %638 = arith.subf %634, %637 : vector<7x7xf32>
    %639 = math.exp %638 : vector<7x7xf32>
    %cst_276 = arith.constant dense<0.000000e+00> : vector<7xf32>
    %640 = vector.multi_reduction <add>, %639, %cst_276 [1] : vector<7x7xf32> to vector<7xf32>
    %641 = vector.shape_cast %640 : vector<7xf32> to vector<7x1xf32>
    %642 = vector.broadcast %641 : vector<7x1xf32> to vector<7x7xf32>
    %643 = arith.divf %639, %642 : vector<7x7xf32>
    %cst_277 = arith.constant dense<0.000000e+00> : vector<7x8xf32>
    %644 = tpu.matmul %643, %631, %cst_277 {dimension_numbers = #tpu.dot_dimension_numbers<[1], [0], [0], [1], [0, 0, 1, 1], [], []>} : vector<7x7xf32>, vector<7x8xf32>, vector<7x8xf32> -> vector<7x8xf32>
    %645 = vector.extract_strided_slice %51 {offsets = [24, 0], sizes = [8, 32], strides = [1, 1]} : vector<32x32xf32> to vector<8x32xf32>
    %cst_278 = arith.constant dense<0.000000e+00> : vector<7x32xf32>
    %646 = tpu.matmul %644, %645, %cst_278 {dimension_numbers = #tpu.dot_dimension_numbers<[1], [0], [0], [1], [0, 0, 1, 1], [], []>} : vector<7x8xf32>, vector<8x32xf32>, vector<7x32xf32> -> vector<7x32xf32>
    %647 = arith.addf %628, %646 : vector<7x32xf32>
    %648 = arith.addf %563, %647 : vector<7x32xf32>
    %649 = vector.broadcast %53 : vector<1x32xf32> to vector<7x32xf32>
    %650 = arith.addf %648, %649 : vector<7x32xf32>
    %cst_279 = arith.constant dense<0.000000e+00> : vector<7xf32>
    %651 = vector.multi_reduction <add>, %650, %cst_279 [1] : vector<7x32xf32> to vector<7xf32>
    %652 = vector.shape_cast %651 : vector<7xf32> to vector<7x1xf32>
    %cst_280 = arith.constant 3.200000e+01 : f32
    %653 = vector.broadcast %cst_280 : f32 to vector<7x1xf32>
    %654 = arith.divf %652, %653 : vector<7x1xf32>
    %655 = vector.broadcast %654 : vector<7x1xf32> to vector<7x32xf32>
    %656 = arith.subf %650, %655 : vector<7x32xf32>
    %657 = arith.mulf %656, %656 : vector<7x32xf32>
    %cst_281 = arith.constant dense<0.000000e+00> : vector<7xf32>
    %658 = vector.multi_reduction <add>, %657, %cst_281 [1] : vector<7x32xf32> to vector<7xf32>
    %659 = vector.shape_cast %658 : vector<7xf32> to vector<7x1xf32>
    %cst_282 = arith.constant 3.200000e+01 : f32
    %660 = vector.broadcast %cst_282 : f32 to vector<7x1xf32>
    %661 = arith.divf %659, %660 : vector<7x1xf32>
    %662 = vector.broadcast %654 : vector<7x1xf32> to vector<7x32xf32>
    %663 = arith.subf %650, %662 : vector<7x32xf32>
    %cst_283 = arith.constant 9.99999974E-6 : f32
    %664 = vector.broadcast %cst_283 : f32 to vector<7x1xf32>
    %665 = arith.addf %661, %664 : vector<7x1xf32>
    %666 = math.rsqrt %665 : vector<7x1xf32>
    %667 = vector.broadcast %666 : vector<7x1xf32> to vector<7x32xf32>
    %668 = arith.mulf %663, %667 : vector<7x32xf32>
    %669 = vector.broadcast %55 : vector<1x32xf32> to vector<7x32xf32>
    %670 = arith.mulf %668, %669 : vector<7x32xf32>
    %671 = vector.broadcast %57 : vector<1x32xf32> to vector<7x32xf32>
    %672 = arith.addf %670, %671 : vector<7x32xf32>
    %cst_284 = arith.constant dense<0.000000e+00> : vector<7x64xf32>
    %673 = tpu.matmul %672, %59, %cst_284 {dimension_numbers = #tpu.dot_dimension_numbers<[1], [0], [0], [1], [0, 0, 1, 1], [], []>} : vector<7x32xf32>, vector<32x64xf32>, vector<7x64xf32> -> vector<7x64xf32>
    %674 = vector.broadcast %61 : vector<1x64xf32> to vector<7x64xf32>
    %675 = arith.addf %673, %674 : vector<7x64xf32>
    %cst_285 = arith.constant 0.000000e+00 : f32
    %676 = vector.broadcast %cst_285 : f32 to vector<7x64xf32>
    %677 = arith.maximumf %675, %676 : vector<7x64xf32>
    %cst_286 = arith.constant dense<0.000000e+00> : vector<7x32xf32>
    %678 = tpu.matmul %677, %63, %cst_286 {dimension_numbers = #tpu.dot_dimension_numbers<[1], [0], [0], [1], [0, 0, 1, 1], [], []>} : vector<7x64xf32>, vector<64x32xf32>, vector<7x32xf32> -> vector<7x32xf32>
    %679 = vector.broadcast %65 : vector<1x32xf32> to vector<7x32xf32>
    %680 = arith.addf %678, %679 : vector<7x32xf32>
    %681 = arith.addf %672, %680 : vector<7x32xf32>
    %cst_287 = arith.constant dense<0.000000e+00> : vector<7xf32>
    %682 = vector.multi_reduction <add>, %681, %cst_287 [1] : vector<7x32xf32> to vector<7xf32>
    %683 = vector.shape_cast %682 : vector<7xf32> to vector<7x1xf32>
    %cst_288 = arith.constant 3.200000e+01 : f32
    %684 = vector.broadcast %cst_288 : f32 to vector<7x1xf32>
    %685 = arith.divf %683, %684 : vector<7x1xf32>
    %686 = vector.broadcast %685 : vector<7x1xf32> to vector<7x32xf32>
    %687 = arith.subf %681, %686 : vector<7x32xf32>
    %688 = arith.mulf %687, %687 : vector<7x32xf32>
    %cst_289 = arith.constant dense<0.000000e+00> : vector<7xf32>
    %689 = vector.multi_reduction <add>, %688, %cst_289 [1] : vector<7x32xf32> to vector<7xf32>
    %690 = vector.shape_cast %689 : vector<7xf32> to vector<7x1xf32>
    %cst_290 = arith.constant 3.200000e+01 : f32
    %691 = vector.broadcast %cst_290 : f32 to vector<7x1xf32>
    %692 = arith.divf %690, %691 : vector<7x1xf32>
    %693 = vector.broadcast %685 : vector<7x1xf32> to vector<7x32xf32>
    %694 = arith.subf %681, %693 : vector<7x32xf32>
    %cst_291 = arith.constant 9.99999974E-6 : f32
    %695 = vector.broadcast %cst_291 : f32 to vector<7x1xf32>
    %696 = arith.addf %692, %695 : vector<7x1xf32>
    %697 = math.rsqrt %696 : vector<7x1xf32>
    %698 = vector.broadcast %697 : vector<7x1xf32> to vector<7x32xf32>
    %699 = arith.mulf %694, %698 : vector<7x32xf32>
    %700 = vector.broadcast %67 : vector<1x32xf32> to vector<7x32xf32>
    %701 = arith.mulf %699, %700 : vector<7x32xf32>
    %702 = vector.broadcast %69 : vector<1x32xf32> to vector<7x32xf32>
    %703 = arith.addf %701, %702 : vector<7x32xf32>
    %cst_292 = arith.constant dense<0.000000e+00> : vector<7xf32>
    %704 = vector.multi_reduction <add>, %703, %cst_292 [1] : vector<7x32xf32> to vector<7xf32>
    %705 = vector.shape_cast %704 : vector<7xf32> to vector<7x1xf32>
    %cst_293 = arith.constant 3.200000e+01 : f32
    %706 = vector.broadcast %cst_293 : f32 to vector<7x1xf32>
    %707 = arith.divf %705, %706 : vector<7x1xf32>
    %708 = vector.broadcast %707 : vector<7x1xf32> to vector<7x32xf32>
    %709 = arith.subf %703, %708 : vector<7x32xf32>
    %710 = arith.mulf %709, %709 : vector<7x32xf32>
    %cst_294 = arith.constant dense<0.000000e+00> : vector<7xf32>
    %711 = vector.multi_reduction <add>, %710, %cst_294 [1] : vector<7x32xf32> to vector<7xf32>
    %712 = vector.shape_cast %711 : vector<7xf32> to vector<7x1xf32>
    %cst_295 = arith.constant 3.200000e+01 : f32
    %713 = vector.broadcast %cst_295 : f32 to vector<7x1xf32>
    %714 = arith.divf %712, %713 : vector<7x1xf32>
    %715 = vector.broadcast %707 : vector<7x1xf32> to vector<7x32xf32>
    %716 = arith.subf %703, %715 : vector<7x32xf32>
    %cst_296 = arith.constant 9.99999974E-6 : f32
    %717 = vector.broadcast %cst_296 : f32 to vector<7x1xf32>
    %718 = arith.addf %714, %717 : vector<7x1xf32>
    %719 = math.rsqrt %718 : vector<7x1xf32>
    %720 = vector.broadcast %719 : vector<7x1xf32> to vector<7x32xf32>
    %721 = arith.mulf %716, %720 : vector<7x32xf32>
    %722 = vector.broadcast %2 : vector<1x32xf32> to vector<7x32xf32>
    %723 = arith.mulf %721, %722 : vector<7x32xf32>
    %724 = vector.broadcast %3 : vector<1x32xf32> to vector<7x32xf32>
    %725 = arith.addf %723, %724 : vector<7x32xf32>
    %cst_297 = arith.constant dense<0.000000e+00> : vector<8x7xf32>
    %726 = tpu.matmul %4, %725, %cst_297 {dimension_numbers = #tpu.dot_dimension_numbers<[0], [1], [1], [0], [0, 1, 1, 0], [], []>} : vector<32x8xf32>, vector<7x32xf32>, vector<8x7xf32> -> vector<8x7xf32>
    %727 = vector.broadcast %5 : vector<8x1xf32> to vector<8x7xf32>
    %728 = arith.addf %726, %727 : vector<8x7xf32>
    %729 = vector.broadcast %418 : vector<1x7xf32> to vector<8x7xf32>
    %730 = arith.mulf %728, %729 : vector<8x7xf32>
    %731 = vector.broadcast %408 : vector<1x7xf32> to vector<8x7xf32>
    %732 = arith.addf %730, %731 : vector<8x7xf32>
    %c1_298 = arith.constant 1 : index
    %c0_299 = arith.constant 0 : index
    %c0_300 = arith.constant 0 : index
    %733 = vector.load %arg23[%c1_298, %c0_299, %c0_300] : memref<2x8x7xf32, #tpu.memory_space<vmem>>, vector<1x8x7xf32>
    %734 = vector.shape_cast %733 : vector<1x8x7xf32> to vector<8x7xf32>
    %735 = vector.shape_cast %732 : vector<8x7xf32> to vector<1x8x7xf32>
    tpu.vector_store %arg23[%c1_298, %c0_299, %c0_300], %735 {strides = array<i32>} : memref<2x8x7xf32, #tpu.memory_space<vmem>>, vector<1x8x7xf32>,
    return
  }
}

</mosaic_0001>

<llo_original>
// kernel: tpu_custom_call.1
$region0: #{tpu_custom_call.1}
  #allocation0 [shape = 'u32[]', space=smem, size = 0x4, offset = 0x4, fixed_abs, tag = 'smem constant byte address 0x4 - core index']
  #allocation1 [shape = 'u32[144,128]{1,0:T(1,128)}', space=vmem, size = 0x12000, scoped, tag = 'internal scratch']
  %s0 = inlined_call_operand.vmem [shape: f32[2,16,7], index: 0, kind: input, shape index: {}]
  %s1 = inlined_call_operand.hbm [shape: f32[16,32], index: 1, kind: input, shape index: {}]
  %s2 = inlined_call_operand.hbm [shape: f32[1,32], index: 2, kind: input, shape index: {}]
  %s3 = inlined_call_operand.vmem [shape: f32[2,32,32], index: 3, kind: input, shape index: {}]
  %s4 = inlined_call_operand.hbm [shape: f32[2,1,32], index: 4, kind: input, shape index: {}]
  %s5 = inlined_call_operand.vmem [shape: f32[2,32,32], index: 5, kind: input, shape index: {}]
  %s6 = inlined_call_operand.hbm [shape: f32[2,1,32], index: 6, kind: input, shape index: {}]
  %s7 = inlined_call_operand.vmem [shape: f32[2,32,32], index: 7, kind: input, shape index: {}]
  %s8 = inlined_call_operand.hbm [shape: f32[2,1,32], index: 8, kind: input, shape index: {}]
  %s9 = inlined_call_operand.vmem [shape: f32[2,32,32], index: 9, kind: input, shape index: {}]
  %s10 = inlined_call_operand.hbm [shape: f32[2,1,32], index: 10, kind: input, shape index: {}]
  %s11 = inlined_call_operand.hbm [shape: f32[2,1,32], index: 11, kind: input, shape index: {}]
  %s12 = inlined_call_operand.vmem [shape: f32[2,1,32], index: 12, kind: input, shape index: {}]
  %s13 = inlined_call_operand.hbm [shape: f32[2,32,64], index: 13, kind: input, shape index: {}]
  %s14 = inlined_call_operand.vmem [shape: f32[2,1,64], index: 14, kind: input, shape index: {}]
  %s15 = inlined_call_operand.vmem [shape: f32[2,64,32], index: 15, kind: input, shape index: {}]
  %s16 = inlined_call_operand.vmem [shape: f32[2,1,32], index: 16, kind: input, shape index: {}]
  %s17 = inlined_call_operand.vmem [shape: f32[2,1,32], index: 17, kind: input, shape index: {}]
  %s18 = inlined_call_operand.vmem [shape: f32[2,1,32], index: 18, kind: input, shape index: {}]
  %s19 = inlined_call_operand.vmem [shape: f32[1,32], index: 19, kind: input, shape index: {}]
  %s20 = inlined_call_operand.vmem [shape: f32[1,32], index: 20, kind: input, shape index: {}]
  %s21 = inlined_call_operand.vmem [shape: f32[32,8], index: 21, kind: input, shape index: {}]
  %s22 = inlined_call_operand.vmem [shape: f32[8,1], index: 22, kind: input, shape index: {}]
  %s23 = inlined_call_operand.vmem [shape: f32[2,8,7], index: 23, kind: output, shape index: {}]
  %s24 = sld [smem:[#allocation0]]
  $region134: #{tpu_custom_call.1} parent=0
    _
  %s26 = ssub.s32 1, %s24
  %s27 = scalar_select 0, %s26, %s24
  $region1: #{tpu_custom_call.1} parent=0
    #allocation2 [shape = 'u8[8192]{0}', space=vmem, size = 0x2000, scoped, tag = 'input window, operand 1, single buffered']
    #allocation3 [shape = 's32[1]{0}', space=sflag, size = 0x4, scoped, tag = 'scoped memory for tpu_custom_call.1']
    #allocation4 [shape = 'u8[512]{0}', space=vmem, size = 0x400, scoped, tag = 'input window, operand 2, single buffered']
    #allocation5 [shape = 's32[1]{0}', space=sflag, size = 0x4, scoped, tag = 'scoped memory for tpu_custom_call.1']
    #allocation6 [shape = 'u8[1024]{0}', space=vmem, size = 0x400, scoped, tag = 'input window, operand 4, single buffered']
    #allocation7 [shape = 'u8[1024]{0}', space=vmem, size = 0x400, scoped, tag = 'input window, operand 6, single buffered']
    #allocation8 [shape = 's32[1]{0}', space=sflag, size = 0x4, scoped, tag = 'scoped memory for tpu_custom_call.1']
    #allocation9 [shape = 'u8[1024]{0}', space=vmem, size = 0x400, scoped, tag = 'input window, operand 8, single buffered']
    #allocation10 [shape = 'u8[1024]{0}', space=vmem, size = 0x400, scoped, tag = 'input window, operand 10, single buffered']
    #allocation11 [shape = 's32[1]{0}', space=sflag, size = 0x4, scoped, tag = 'scoped memory for tpu_custom_call.1']
    #allocation12 [shape = 'u8[1024]{0}', space=vmem, size = 0x400, scoped, tag = 'input window, operand 11, single buffered']
    #allocation13 [shape = 'u8[32768]{0}', space=vmem, size = 0x8000, scoped, tag = 'input window, operand 13, single buffered']
    #allocation14 [shape = 's32[1]{0}', space=sflag, size = 0x4, scoped, tag = 'scoped memory for tpu_custom_call.1']
    %28 = vsyncpa [#allocation3], 0
    %29 = vsyncpa [#allocation5], 0
    %30 = vsyncpa [#allocation8], 0
    %31 = vsyncpa [#allocation11], 0
    %32 = vsyncpa [#allocation14], 0
    // Predicated region
    $region2: #{tpu_custom_call.1} parent=1 // pred_check
      _
    $region3: #{tpu_custom_call.1} parent=1 // pred_check_branch
      %34 = sbr.rel (0) target = $region5
    $region4: #{tpu_custom_call.1} parent=1 // pred_region
      _
    $region5: #{tpu_custom_call.1} parent=1 // pred_fallthru
      _
    // Predicated region
    $region6: #{tpu_custom_call.1} parent=1 // pred_check
      _
    $region7: #{tpu_custom_call.1} parent=1 // pred_check_branch
      %36 = sbr.rel (0) target = $region9
    $region8: #{tpu_custom_call.1} parent=1 // pred_region
      %s38 = ssub.s32 256, 256
      %39 = vsyncadd [#allocation3], %s38
      %s40 = sshll.u32 [#allocation2], 4
      %s41 = int_to_ptr.vmem [resolvable:$true] %s40
      %46 = dma.hbm_to_vmem [thread:$0]  %s1, 256, %s41, [#allocation3], 128, 128, 8
    $region9: #{tpu_custom_call.1} parent=1 // pred_fallthru
      _
    // Predicated region
    $region10: #{tpu_custom_call.1} parent=1 // pred_check
      _
    $region11: #{tpu_custom_call.1} parent=1 // pred_check_branch
      %48 = sbr.rel (0) target = $region13
    $region12: #{tpu_custom_call.1} parent=1 // pred_region
      %s50 = ssub.s32 16, 16
      %51 = vsyncadd [#allocation5], %s50
      %s53 = sshll.u32 [#allocation4], 4
      %s54 = int_to_ptr.vmem [resolvable:$true] %s53
      %56 = dma.hbm_to_vmem [thread:$0]  %s2, 16, %s54, [#allocation5]
    $region13: #{tpu_custom_call.1} parent=1 // pred_fallthru
      _
    // Predicated region
    $region14: #{tpu_custom_call.1} parent=1 // pred_check
      _
    $region15: #{tpu_custom_call.1} parent=1 // pred_check_branch
      %58 = sbr.rel (0) target = $region17
    $region16: #{tpu_custom_call.1} parent=1 // pred_region
      _
    $region17: #{tpu_custom_call.1} parent=1 // pred_fallthru
      _
    // Predicated region
    $region18: #{tpu_custom_call.1} parent=1 // pred_check
      _
    $region19: #{tpu_custom_call.1} parent=1 // pred_check_branch
      %60 = sbr.rel (0) target = $region21
    $region20: #{tpu_custom_call.1} parent=1 // pred_region
      %s62 = ssub.s32 32, 32
      %63 = vsyncadd [#allocation5], %s62
      %s64 = sshll.u32 [#allocation6], 4
      %s65 = int_to_ptr.vmem [resolvable:$true] %s64
      %70 = dma.hbm_to_vmem [thread:$0]  %s4, 32, %s65, [#allocation5], 16, 16, 1
    $region21: #{tpu_custom_call.1} parent=1 // pred_fallthru
      _
    // Predicated region
    $region22: #{tpu_custom_call.1} parent=1 // pred_check
      _
    $region23: #{tpu_custom_call.1} parent=1 // pred_check_branch
      %72 = sbr.rel (0) target = $region25
    $region24: #{tpu_custom_call.1} parent=1 // pred_region
      _
    $region25: #{tpu_custom_call.1} parent=1 // pred_fallthru
      _
    // Predicated region
    $region26: #{tpu_custom_call.1} parent=1 // pred_check
      _
    $region27: #{tpu_custom_call.1} parent=1 // pred_check_branch
      %74 = sbr.rel (0) target = $region29
    $region28: #{tpu_custom_call.1} parent=1 // pred_region
      %s76 = ssub.s32 32, 32
      %77 = vsyncadd [#allocation8], %s76
      %s78 = sshll.u32 [#allocation7], 4
      %s79 = int_to_ptr.vmem [resolvable:$true] %s78
      %84 = dma.hbm_to_vmem [thread:$0]  %s6, 32, %s79, [#allocation8], 16, 16, 1
    $region29: #{tpu_custom_call.1} parent=1 // pred_fallthru
      _
    // Predicated region
    $region30: #{tpu_custom_call.1} parent=1 // pred_check
      _
    $region31: #{tpu_custom_call.1} parent=1 // pred_check_branch
      %86 = sbr.rel (0) target = $region33
    $region32: #{tpu_custom_call.1} parent=1 // pred_region
      _
    $region33: #{tpu_custom_call.1} parent=1 // pred_fallthru
      _
    // Predicated region
    $region34: #{tpu_custom_call.1} parent=1 // pred_check
      _
    $region35: #{tpu_custom_call.1} parent=1 // pred_check_branch
      %88 = sbr.rel (0) target = $region37
    $region36: #{tpu_custom_call.1} parent=1 // pred_region
      %s90 = ssub.s32 32, 32
      %91 = vsyncadd [#allocation8], %s90
      %s92 = sshll.u32 [#allocation9], 4
      %s93 = int_to_ptr.vmem [resolvable:$true] %s92
      %98 = dma.hbm_to_vmem [thread:$0]  %s8, 32, %s93, [#allocation8], 16, 16, 1
    $region37: #{tpu_custom_call.1} parent=1 // pred_fallthru
      _
    // Predicated region
    $region38: #{tpu_custom_call.1} parent=1 // pred_check
      _
    $region39: #{tpu_custom_call.1} parent=1 // pred_check_branch
      %100 = sbr.rel (0) target = $region41
    $region40: #{tpu_custom_call.1} parent=1 // pred_region
      _
    $region41: #{tpu_custom_call.1} parent=1 // pred_fallthru
      _
    // Predicated region
    $region42: #{tpu_custom_call.1} parent=1 // pred_check
      _
    $region43: #{tpu_custom_call.1} parent=1 // pred_check_branch
      %102 = sbr.rel (0) target = $region45
    $region44: #{tpu_custom_call.1} parent=1 // pred_region
      %s104 = ssub.s32 32, 32
      %105 = vsyncadd [#allocation11], %s104
      %s106 = sshll.u32 [#allocation10], 4
      %s107 = int_to_ptr.vmem [resolvable:$true] %s106
      %112 = dma.hbm_to_vmem [thread:$0]  %s10, 32, %s107, [#allocation11], 16, 16, 1
    $region45: #{tpu_custom_call.1} parent=1 // pred_fallthru
      _
    // Predicated region
    $region46: #{tpu_custom_call.1} parent=1 // pred_check
      _
    $region47: #{tpu_custom_call.1} parent=1 // pred_check_branch
      %114 = sbr.rel (0) target = $region49
    $region48: #{tpu_custom_call.1} parent=1 // pred_region
      %s116 = ssub.s32 32, 32
      %117 = vsyncadd [#allocation11], %s116
      %s118 = sshll.u32 [#allocation12], 4
      %s119 = int_to_ptr.vmem [resolvable:$true] %s118
      %124 = dma.hbm_to_vmem [thread:$0]  %s11, 32, %s119, [#allocation11], 16, 16, 1
    $region49: #{tpu_custom_call.1} parent=1 // pred_fallthru
      _
    // Predicated region
    $region50: #{tpu_custom_call.1} parent=1 // pred_check
      _
    $region51: #{tpu_custom_call.1} parent=1 // pred_check_branch
      %126 = sbr.rel (0) target = $region53
    $region52: #{tpu_custom_call.1} parent=1 // pred_region
      _
    $region53: #{tpu_custom_call.1} parent=1 // pred_fallthru
      _
    // Predicated region
    $region54: #{tpu_custom_call.1} parent=1 // pred_check
      _
    $region55: #{tpu_custom_call.1} parent=1 // pred_check_branch
      %128 = sbr.rel (0) target = $region57
    $region56: #{tpu_custom_call.1} parent=1 // pred_region
      %s130 = ssub.s32 1024, 1024
      %131 = vsyncadd [#allocation14], %s130
      %s132 = sshll.u32 [#allocation13], 4
      %s133 = int_to_ptr.vmem [resolvable:$true] %s132
      %138 = dma.hbm_to_vmem [thread:$0]  %s13, 1024, %s133, [#allocation14], 128, 128, 8
    $region57: #{tpu_custom_call.1} parent=1 // pred_fallthru
      _
    // Predicated region
    $region58: #{tpu_custom_call.1} parent=1 // pred_check
      _
    $region59: #{tpu_custom_call.1} parent=1 // pred_check_branch
      %140 = sbr.rel (0) target = $region61
    $region60: #{tpu_custom_call.1} parent=1 // pred_region
      _
    $region61: #{tpu_custom_call.1} parent=1 // pred_fallthru
      _
    // Predicated region
    $region62: #{tpu_custom_call.1} parent=1 // pred_check
      _
    $region63: #{tpu_custom_call.1} parent=1 // pred_check_branch
      %142 = sbr.rel (0) target = $region65
    $region64: #{tpu_custom_call.1} parent=1 // pred_region
      _
    $region65: #{tpu_custom_call.1} parent=1 // pred_fallthru
      _
    // Predicated region
    $region66: #{tpu_custom_call.1} parent=1 // pred_check
      _
    $region67: #{tpu_custom_call.1} parent=1 // pred_check_branch
      %144 = sbr.rel (0) target = $region69
    $region68: #{tpu_custom_call.1} parent=1 // pred_region
      _
    $region69: #{tpu_custom_call.1} parent=1 // pred_fallthru
      _
    // Predicated region
    $region70: #{tpu_custom_call.1} parent=1 // pred_check
      _
    $region71: #{tpu_custom_call.1} parent=1 // pred_check_branch
      %146 = sbr.rel (0) target = $region73
    $region72: #{tpu_custom_call.1} parent=1 // pred_region
      _
    $region73: #{tpu_custom_call.1} parent=1 // pred_fallthru
      _
    // Predicated region
    $region74: #{tpu_custom_call.1} parent=1 // pred_check
      _
    $region75: #{tpu_custom_call.1} parent=1 // pred_check_branch
      %148 = sbr.rel (0) target = $region77
    $region76: #{tpu_custom_call.1} parent=1 // pred_region
      _
    $region77: #{tpu_custom_call.1} parent=1 // pred_fallthru
      _
    // Predicated region
    $region78: #{tpu_custom_call.1} parent=1 // pred_check
      _
    $region79: #{tpu_custom_call.1} parent=1 // pred_check_branch
      %150 = sbr.rel (0) target = $region81
    $region80: #{tpu_custom_call.1} parent=1 // pred_region
      _
    $region81: #{tpu_custom_call.1} parent=1 // pred_fallthru
      _
    // Predicated region
    $region82: #{tpu_custom_call.1} parent=1 // pred_check
      _
    $region83: #{tpu_custom_call.1} parent=1 // pred_check_branch
      %152 = sbr.rel (0) target = $region85
    $region84: #{tpu_custom_call.1} parent=1 // pred_region
      _
    $region85: #{tpu_custom_call.1} parent=1 // pred_fallthru
      _
    // Predicated region
    $region86: #{tpu_custom_call.1} parent=1 // pred_check
      _
    $region87: #{tpu_custom_call.1} parent=1 // pred_check_branch
      %154 = sbr.rel (0) target = $region89
    $region88: #{tpu_custom_call.1} parent=1 // pred_region
      _
    $region89: #{tpu_custom_call.1} parent=1 // pred_fallthru
      _
    // Predicated region
    $region90: #{tpu_custom_call.1} parent=1 // pred_check
      _
    $region91: #{tpu_custom_call.1} parent=1 // pred_check_branch
      %156 = sbr.rel (0) target = $region93
    $region92: #{tpu_custom_call.1} parent=1 // pred_region
      _
    $region93: #{tpu_custom_call.1} parent=1 // pred_fallthru
      _
    // Predicated region
    $region94: #{tpu_custom_call.1} parent=1 // pred_check
      _
    $region95: #{tpu_custom_call.1} parent=1 // pred_check_branch
      %158 = sbr.rel (0) target = $region97
    $region96: #{tpu_custom_call.1} parent=1 // pred_region
      %159 = dma.done [#allocation3], 256
    $region97: #{tpu_custom_call.1} parent=1 // pred_fallthru
      _
    // Predicated region
    $region98: #{tpu_custom_call.1} parent=1 // pred_check
      _
    $region99: #{tpu_custom_call.1} parent=1 // pred_check_branch
      %161 = sbr.rel (0) target = $region101
    $region100: #{tpu_custom_call.1} parent=1 // pred_region
      %162 = dma.done [#allocation5], 16
    $region101: #{tpu_custom_call.1} parent=1 // pred_fallthru
      _
    // Predicated region
    $region102: #{tpu_custom_call.1} parent=1 // pred_check
      _
    $region103: #{tpu_custom_call.1} parent=1 // pred_check_branch
      %164 = sbr.rel (0) target = $region105
    $region104: #{tpu_custom_call.1} parent=1 // pred_region
      %165 = dma.done [#allocation5], 32
    $region105: #{tpu_custom_call.1} parent=1 // pred_fallthru
      _
    // Predicated region
    $region106: #{tpu_custom_call.1} parent=1 // pred_check
      _
    $region107: #{tpu_custom_call.1} parent=1 // pred_check_branch
      %167 = sbr.rel (0) target = $region109
    $region108: #{tpu_custom_call.1} parent=1 // pred_region
      %168 = dma.done [#allocation8], 32
    $region109: #{tpu_custom_call.1} parent=1 // pred_fallthru
      _
    // Predicated region
    $region110: #{tpu_custom_call.1} parent=1 // pred_check
      _
    $region111: #{tpu_custom_call.1} parent=1 // pred_check_branch
      %170 = sbr.rel (0) target = $region113
    $region112: #{tpu_custom_call.1} parent=1 // pred_region
      %171 = dma.done [#allocation8], 32
    $region113: #{tpu_custom_call.1} parent=1 // pred_fallthru
      _
    // Predicated region
    $region114: #{tpu_custom_call.1} parent=1 // pred_check
      _
    $region115: #{tpu_custom_call.1} parent=1 // pred_check_branch
      %173 = sbr.rel (0) target = $region117
    $region116: #{tpu_custom_call.1} parent=1 // pred_region
      %174 = dma.done [#allocation11], 32
    $region117: #{tpu_custom_call.1} parent=1 // pred_fallthru
      _
    // Predicated region
    $region118: #{tpu_custom_call.1} parent=1 // pred_check
      _
    $region119: #{tpu_custom_call.1} parent=1 // pred_check_branch
      %176 = sbr.rel (0) target = $region121
    $region120: #{tpu_custom_call.1} parent=1 // pred_region
      %177 = dma.done [#allocation11], 32
    $region121: #{tpu_custom_call.1} parent=1 // pred_fallthru
      _
    // Predicated region
    $region122: #{tpu_custom_call.1} parent=1 // pred_check
      _
    $region123: #{tpu_custom_call.1} parent=1 // pred_check_branch
      %179 = sbr.rel (0) target = $region125
    $region124: #{tpu_custom_call.1} parent=1 // pred_region
      %180 = dma.done [#allocation14], 1024
    $region125: #{tpu_custom_call.1} parent=1 // pred_fallthru
      _
    %v181 = vld [vmem:[#allocation2] sm:$0xff]
    %v182 = vld [vmem:[#allocation2 + $0x8] sm:$0xff]
    %v183 = vld [vmem:[#allocation4] sm:$0x1]
    %v184 = vld [vmem:[%s19] sm:$0x1]
    %v185 = vld [vmem:[%s20] sm:$0x1]
    %v186 = vld [vmem:[%s21] sm:$0xff]
    %v187 = vld [vmem:[%s21 + $0x8] sm:$0xff]
    %v188 = vld [vmem:[%s21 + $0x10] sm:$0xff]
    %v189 = vld [vmem:[%s21 + $0x18] sm:$0xff]
    %v190 = vld [vmem:[%s22] sm:$0xff]
    %v191 = vld [vmem:[%s3] sm:$0xff]
    %v192 = vld [vmem:[%s3 + $0x8] sm:$0xff]
    %v193 = vld [vmem:[%s3 + $0x10] sm:$0xff]
    %v194 = vld [vmem:[%s3 + $0x18] sm:$0xff]
    %v195 = vld [vmem:[#allocation6] sm:$0x1]
    %v196 = vld [vmem:[%s5] sm:$0xff]
    %v197 = vld [vmem:[%s5 + $0x8] sm:$0xff]
    %v198 = vld [vmem:[%s5 + $0x10] sm:$0xff]
    %v199 = vld [vmem:[%s5 + $0x18] sm:$0xff]
    %v200 = vld [vmem:[#allocation7] sm:$0x1]
    %v201 = vld [vmem:[%s7] sm:$0xff]
    %v202 = vld [vmem:[%s7 + $0x8] sm:$0xff]
    %v203 = vld [vmem:[%s7 + $0x10] sm:$0xff]
    %v204 = vld [vmem:[%s7 + $0x18] sm:$0xff]
    %v205 = vld [vmem:[#allocation9] sm:$0x1]
    %v206 = vld [vmem:[%s9] sm:$0xff]
    %v207 = vld [vmem:[%s9 + $0x8] sm:$0xff]
    %v208 = vld [vmem:[%s9 + $0x10] sm:$0xff]
    %v209 = vld [vmem:[%s9 + $0x18] sm:$0xff]
    %v210 = vld [vmem:[#allocation10] sm:$0x1]
    %v211 = vld [vmem:[#allocation12] sm:$0x1]
    %v212 = vld [vmem:[%s12] sm:$0x1]
    %v213 = vld [vmem:[#allocation13] sm:$0xff]
    %v214 = vld [vmem:[#allocation13 + $0x8] sm:$0xff]
    %v215 = vld [vmem:[#allocation13 + $0x10] sm:$0xff]
    %v216 = vld [vmem:[#allocation13 + $0x18] sm:$0xff]
    %v217 = vld [vmem:[%s14] sm:$0x1]
    %v218 = vld [vmem:[%s15] sm:$0xff]
    %v219 = vld [vmem:[%s15 + $0x8] sm:$0xff]
    %v220 = vld [vmem:[%s15 + $0x10] sm:$0xff]
    %v221 = vld [vmem:[%s15 + $0x18] sm:$0xff]
    %v222 = vld [vmem:[%s15 + $0x20] sm:$0xff]
    %v223 = vld [vmem:[%s15 + $0x28] sm:$0xff]
    %v224 = vld [vmem:[%s15 + $0x30] sm:$0xff]
    %v225 = vld [vmem:[%s15 + $0x38] sm:$0xff]
    %v226 = vld [vmem:[%s16] sm:$0x1]
    %v227 = vld [vmem:[%s17] sm:$0x1]
    %v228 = vld [vmem:[%s18] sm:$0x1]
    %s229 = scalar_lea.vmem %s3, 32
    %v230 = vld [vmem:[%s229] sm:$0xff]
    %v231 = vld [vmem:[%s229 + $0x8] sm:$0xff]
    %v232 = vld [vmem:[%s229 + $0x10] sm:$0xff]
    %v233 = vld [vmem:[%s229 + $0x18] sm:$0xff]
    %s234 = scalar_lea.vmem [#allocation6], 1
    %v235 = vld [vmem:[%s234] sm:$0x1]
    %s236 = scalar_lea.vmem %s5, 32
    %v237 = vld [vmem:[%s236] sm:$0xff]
    %v238 = vld [vmem:[%s236 + $0x8] sm:$0xff]
    %v239 = vld [vmem:[%s236 + $0x10] sm:$0xff]
    %v240 = vld [vmem:[%s236 + $0x18] sm:$0xff]
    %s241 = scalar_lea.vmem [#allocation7], 1
    %v242 = vld [vmem:[%s241] sm:$0x1]
    %s243 = scalar_lea.vmem %s7, 32
    %v244 = vld [vmem:[%s243] sm:$0xff]
    %v245 = vld [vmem:[%s243 + $0x8] sm:$0xff]
    %v246 = vld [vmem:[%s243 + $0x10] sm:$0xff]
    %v247 = vld [vmem:[%s243 + $0x18] sm:$0xff]
    %s248 = scalar_lea.vmem [#allocation9], 1
    %v249 = vld [vmem:[%s248] sm:$0x1]
    %s250 = scalar_lea.vmem %s9, 32
    %v251 = vld [vmem:[%s250] sm:$0xff]
    %v252 = vld [vmem:[%s250 + $0x8] sm:$0xff]
    %v253 = vld [vmem:[%s250 + $0x10] sm:$0xff]
    %v254 = vld [vmem:[%s250 + $0x18] sm:$0xff]
    %s255 = scalar_lea.vmem [#allocation10], 1
    %v256 = vld [vmem:[%s255] sm:$0x1]
    %s257 = scalar_lea.vmem [#allocation12], 1
    %v258 = vld [vmem:[%s257] sm:$0x1]
    %s259 = scalar_lea.vmem %s12, 1
    %v260 = vld [vmem:[%s259] sm:$0x1]
    %s261 = scalar_lea.vmem [#allocation13], 32
    %v262 = vld [vmem:[%s261] sm:$0xff]
    %v263 = vld [vmem:[%s261 + $0x8] sm:$0xff]
    %v264 = vld [vmem:[%s261 + $0x10] sm:$0xff]
    %v265 = vld [vmem:[%s261 + $0x18] sm:$0xff]
    %s266 = scalar_lea.vmem %s14, 1
    %v267 = vld [vmem:[%s266] sm:$0x1]
    %s268 = scalar_lea.vmem %s15, 64
    %v269 = vld [vmem:[%s268] sm:$0xff]
    %v270 = vld [vmem:[%s268 + $0x8] sm:$0xff]
    %v271 = vld [vmem:[%s268 + $0x10] sm:$0xff]
    %v272 = vld [vmem:[%s268 + $0x18] sm:$0xff]
    %v273 = vld [vmem:[%s268 + $0x20] sm:$0xff]
    %v274 = vld [vmem:[%s268 + $0x28] sm:$0xff]
    %v275 = vld [vmem:[%s268 + $0x30] sm:$0xff]
    %v276 = vld [vmem:[%s268 + $0x38] sm:$0xff]
    %s277 = scalar_lea.vmem %s16, 1
    %v278 = vld [vmem:[%s277] sm:$0x1]
    %s279 = scalar_lea.vmem %s17, 1
    %v280 = vld [vmem:[%s279] sm:$0x1]
    %s281 = scalar_lea.vmem %s18, 1
    %v282 = vld [vmem:[%s281] sm:$0x1]
    %v283 = vld [vmem:[%s0] sm:$0xff]
    %v284 = vld [vmem:[%s0 + $0x8] sm:$0xff]
    %vm285 = vcmask 56320
    %v286 = vsel %vm285, %v283, 0.0
    %v287 = vsel %vm285, %v284, 0.0
    %v288 = vadd.f32 %v286, %v287
    %v289 = vrot.slane %v288, 4
    %v290 = vadd.f32 %v288, %v289
    %v291 = vrot.slane %v290, 2
    %v292 = vadd.f32 %v290, %v291
    %v293 = vrot.slane %v292, 1
    %v294 = vadd.f32 %v292, %v293
    %v295 = vrcp.pop 16.0
    %v296 = vmul.f32 %v294, %v295
    %v297 = vsub.f32 %v283, %v296
    %v298 = vsub.f32 %v284, %v296
    %v299 = vmul.f32 %v297, %v297
    %v300 = vmul.f32 %v298, %v298
    %v301 = vsel %vm285, %v299, 0.0
    %v302 = vsel %vm285, %v300, 0.0
    %v303 = vadd.f32 %v301, %v302
    %v304 = vrot.slane %v303, 4
    %v305 = vadd.f32 %v303, %v304
    %v306 = vrot.slane %v305, 2
    %v307 = vadd.f32 %v305, %v306
    %v308 = vrot.slane %v307, 1
    %v309 = vadd.f32 %v307, %v308
    %v310 = vmul.f32 %v309, %v295
    %v311 = vadd.f32 %v310, 1e-05
    %v312 = vrsqrt.pop %v311
    %v313 = vmul.f32 %v311, %v312
    %vm314 = vcmp.eq.f32.partialorder %v311, inf
    %v315 = vsel %vm314, %v311, %v313
    %vm316 = vcmp.eq.f32.partialorder %v311, 0.0
    %v317 = vand.u32 %v311, 2147483648
    %v318 = vsel %vm316, %v317, %v315
    %v319 = vrcp.pop %v318
    %v320 = vmul.f32 %v297, %v319
    %v321 = vmul.f32 %v298, %v319
    %v323 = vlaneseq
    %v324 = vshrl.u32 %v323, 7
    %v325 = vsub.s32 0, %v324
    %v326 = vrot.slane %v183, %v325
    %328 = vxpose.xlu0.b32.start [1/16] %v320, 128
    %329 = vxpose.xlu0.b32.cont [2/16] %v321, 128
    %330 = vxpose.xlu0.b32.cont [3/16] 0.0, 128
    %331 = vxpose.xlu0.b32.cont [4/16] 0.0, 128
    %332 = vxpose.xlu0.b32.cont [5/16] 0.0, 128
    %333 = vxpose.xlu0.b32.cont [6/16] 0.0, 128
    %334 = vxpose.xlu0.b32.cont [7/16] 0.0, 128
    %335 = vxpose.xlu0.b32.cont [8/16] 0.0, 128
    %336 = vxpose.xlu0.b32.cont [9/16] 0.0, 128
    %337 = vxpose.xlu0.b32.cont [10/16] 0.0, 128
    %338 = vxpose.xlu0.b32.cont [11/16] 0.0, 128
    %339 = vxpose.xlu0.b32.cont [12/16] 0.0, 128
    %340 = vxpose.xlu0.b32.cont [13/16] 0.0, 128
    %341 = vxpose.xlu0.b32.cont [14/16] 0.0, 128
    %342 = vxpose.xlu0.b32.cont [15/16] 0.0, 128
    %343 = vxpose.xlu0.b32.end [16/16] 0.0, 128
    %v344 = vpop.trf.xlu0
    %v345 = vpop.trf.xlu0
    %v346 = vpop.trf.xlu0
    %v347 = vpop.trf.xlu0
    %v348 = vpop.trf.xlu0
    %v349 = vpop.trf.xlu0
    %v350 = vpop.trf.xlu0
    %v351 = vpop.trf.xlu0
    %v352 = vpop.trf.xlu0
    %v353 = vpop.trf.xlu0
    %v354 = vpop.trf.xlu0
    %v355 = vpop.trf.xlu0
    %v356 = vpop.trf.xlu0
    %v357 = vpop.trf.xlu0
    %v358 = vpop.trf.xlu0
    %v359 = vpop.trf.xlu0
    %vm360 = vcmask 130048
    %v362 = vsel %vm360, %v344, 0
    %364 = vmatprep.subr.mxu0 0.0
    %365 = vmatpush1.msra.mxu0 %v181
    %366 = vmatprep.subr.mxu0 0.0
    %367 = vmatpush1.msra.mxu0 %v182
    %368 = vmatprep.subr.mxu0 0.0
    %369 = vmatpush1.msra.mxu0 0.0
    %370 = vmatprep.subr.mxu0 0.0
    %371 = vmatpush1.msra.mxu0 0.0
    %372 = vmatprep.subr.mxu0 0.0
    %373 = vmatpush1.msra.mxu0 0.0
    %374 = vmatprep.subr.mxu0 0.0
    %375 = vmatpush1.msra.mxu0 0.0
    %376 = vmatprep.subr.mxu0 0.0
    %377 = vmatpush1.msra.mxu0 0.0
    %378 = vmatprep.subr.mxu0 0.0
    %379 = vmatpush1.msra.mxu0 0.0
    %380 = vmatprep.subr.mxu0 0.0
    %381 = vmatpush1.msra.mxu0 0.0
    %382 = vmatprep.subr.mxu0 0.0
    %383 = vmatpush1.msra.mxu0 0.0
    %384 = vmatprep.subr.mxu0 0.0
    %385 = vmatpush1.msra.mxu0 0.0
    %386 = vmatprep.subr.mxu0 0.0
    %387 = vmatpush1.msra.mxu0 0.0
    %388 = vmatprep.subr.mxu0 0.0
    %389 = vmatpush1.msra.mxu0 0.0
    %390 = vmatprep.subr.mxu0 0.0
    %391 = vmatpush1.msra.mxu0 0.0
    %392 = vmatprep.subr.mxu0 0.0
    %393 = vmatpush1.msra.mxu0 0.0
    %394 = vmatprep.subr.mxu0 0.0
    %395 = vmatpush1.msra.mxu0 0.0
    %396 = vmatprep.subr.mxu0 0.0
    %397 = vmatpush1.msra.mxu0 0.0
    %398 = vmatprep.subr.mxu0 0.0
    %399 = vmatpush1.msra.mxu0 0.0
    %400 = vmatprep.subr.mxu0 0.0
    %401 = vmatpush1.msra.mxu0 0.0
    %402 = vmatprep.subr.mxu0 0.0
    %403 = vmatpush1.msra.mxu0 0.0
    %404 = vmatprep.subr.mxu0 0.0
    %405 = vmatpush1.msra.mxu0 0.0
    %406 = vmatprep.subr.mxu0 0.0
    %407 = vmatpush1.msra.mxu0 0.0
    %408 = vmatprep.subr.mxu0 0.0
    %409 = vmatpush1.msra.mxu0 0.0
    %410 = vmatprep.subr.mxu0 0.0
    %411 = vmatpush1.msra.mxu0 0.0
    %412 = vmatprep.subr.mxu0 0.0
    %413 = vmatpush1.msra.mxu0 0.0
    %414 = vmatprep.subr.mxu0 0.0
    %415 = vmatpush1.msra.mxu0 0.0
    %416 = vmatprep.subr.mxu0 0.0
    %417 = vmatpush1.msra.mxu0 0.0
    %418 = vmatprep.subr.mxu0 0.0
    %419 = vmatpush1.msra.mxu0 0.0
    %420 = vmatprep.subr.mxu0 0.0
    %421 = vmatpush1.msra.mxu0 0.0
    %422 = vmatprep.subr.mxu0 0.0
    %423 = vmatpush1.msra.mxu0 0.0
    %424 = vmatprep.subr.mxu0 0.0
    %425 = vmatpush1.msra.mxu0 0.0
    %426 = vmatprep.subr.mxu0 0.0
    %427 = vmatpush1.msra.mxu0 0.0
    %428 = vmatprep.mubr.f32.mxu0 0.0
    %429 = vmatmul.mubr.f32.gmra.mrb[0].mxu0 %v362
    %v430 = vpop.f32.mrb[0].mxu0
    %v431 = vadd.f32 %v326, %v430
    %v432 = vpop.f32.mrb[0].mxu0
    %433 = vdwg.mxu0
    %v435 = vlaneseq
    %v436 = vshrl.u32 %v435, 7
    %v437 = vsub.s32 0, %v436
    %v438 = vrot.slane %v195, %v437
    %vm440 = vcmask 261120
    %v442 = vsel %vm440, %v431, 0
    %444 = vmatprep.subr.mxu0 0.0
    %445 = vmatpush1.msra.mxu0 %v191
    %446 = vmatprep.subr.mxu0 0.0
    %447 = vmatpush1.msra.mxu0 %v192
    %448 = vmatprep.subr.mxu0 0.0
    %449 = vmatpush1.msra.mxu0 %v193
    %450 = vmatprep.subr.mxu0 0.0
    %451 = vmatpush1.msra.mxu0 %v194
    %452 = vmatprep.subr.mxu0 0.0
    %453 = vmatpush1.msra.mxu0 0.0
    %454 = vmatprep.subr.mxu0 0.0
    %455 = vmatpush1.msra.mxu0 0.0
    %456 = vmatprep.subr.mxu0 0.0
    %457 = vmatpush1.msra.mxu0 0.0
    %458 = vmatprep.subr.mxu0 0.0
    %459 = vmatpush1.msra.mxu0 0.0
    %460 = vmatprep.subr.mxu0 0.0
    %461 = vmatpush1.msra.mxu0 0.0
    %462 = vmatprep.subr.mxu0 0.0
    %463 = vmatpush1.msra.mxu0 0.0
    %464 = vmatprep.subr.mxu0 0.0
    %465 = vmatpush1.msra.mxu0 0.0
    %466 = vmatprep.subr.mxu0 0.0
    %467 = vmatpush1.msra.mxu0 0.0
    %468 = vmatprep.subr.mxu0 0.0
    %469 = vmatpush1.msra.mxu0 0.0
    %470 = vmatprep.subr.mxu0 0.0
    %471 = vmatpush1.msra.mxu0 0.0
    %472 = vmatprep.subr.mxu0 0.0
    %473 = vmatpush1.msra.mxu0 0.0
    %474 = vmatprep.subr.mxu0 0.0
    %475 = vmatpush1.msra.mxu0 0.0
    %476 = vmatprep.subr.mxu0 0.0
    %477 = vmatpush1.msra.mxu0 0.0
    %478 = vmatprep.subr.mxu0 0.0
    %479 = vmatpush1.msra.mxu0 0.0
    %480 = vmatprep.subr.mxu0 0.0
    %481 = vmatpush1.msra.mxu0 0.0
    %482 = vmatprep.subr.mxu0 0.0
    %483 = vmatpush1.msra.mxu0 0.0
    %484 = vmatprep.subr.mxu0 0.0
    %485 = vmatpush1.msra.mxu0 0.0
    %486 = vmatprep.subr.mxu0 0.0
    %487 = vmatpush1.msra.mxu0 0.0
    %488 = vmatprep.subr.mxu0 0.0
    %489 = vmatpush1.msra.mxu0 0.0
    %490 = vmatprep.subr.mxu0 0.0
    %491 = vmatpush1.msra.mxu0 0.0
    %492 = vmatprep.subr.mxu0 0.0
    %493 = vmatpush1.msra.mxu0 0.0
    %494 = vmatprep.subr.mxu0 0.0
    %495 = vmatpush1.msra.mxu0 0.0
    %496 = vmatprep.subr.mxu0 0.0
    %497 = vmatpush1.msra.mxu0 0.0
    %498 = vmatprep.subr.mxu0 0.0
    %499 = vmatpush1.msra.mxu0 0.0
    %500 = vmatprep.subr.mxu0 0.0
    %501 = vmatpush1.msra.mxu0 0.0
    %502 = vmatprep.subr.mxu0 0.0
    %503 = vmatpush1.msra.mxu0 0.0
    %504 = vmatprep.subr.mxu0 0.0
    %505 = vmatpush1.msra.mxu0 0.0
    %506 = vmatprep.subr.mxu0 0.0
    %507 = vmatpush1.msra.mxu0 0.0
    %508 = vmatprep.mubr.f32.mxu0 0.0
    %509 = vmatmul.mubr.f32.gmra.mrb[0].mxu0 %v442
    %v510 = vpop.f32.mrb[0].mxu0
    %v511 = vadd.f32 %v438, %v510
    %v512 = vpop.f32.mrb[0].mxu0
    %513 = vdwg.mxu0
    %v515 = vlaneseq
    %v516 = vshrl.u32 %v515, 7
    %v517 = vsub.s32 0, %v516
    %v518 = vrot.slane %v200, %v517
    %520 = vmatprep.subr.mxu0 0.0
    %521 = vmatpush1.msra.mxu0 %v196
    %522 = vmatprep.subr.mxu0 0.0
    %523 = vmatpush1.msra.mxu0 %v197
    %524 = vmatprep.subr.mxu0 0.0
    %525 = vmatpush1.msra.mxu0 %v198
    %526 = vmatprep.subr.mxu0 0.0
    %527 = vmatpush1.msra.mxu0 %v199
    %528 = vmatprep.subr.mxu0 0.0
    %529 = vmatpush1.msra.mxu0 0.0
    %530 = vmatprep.subr.mxu0 0.0
    %531 = vmatpush1.msra.mxu0 0.0
    %532 = vmatprep.subr.mxu0 0.0
    %533 = vmatpush1.msra.mxu0 0.0
    %534 = vmatprep.subr.mxu0 0.0
    %535 = vmatpush1.msra.mxu0 0.0
    %536 = vmatprep.subr.mxu0 0.0
    %537 = vmatpush1.msra.mxu0 0.0
    %538 = vmatprep.subr.mxu0 0.0
    %539 = vmatpush1.msra.mxu0 0.0
    %540 = vmatprep.subr.mxu0 0.0
    %541 = vmatpush1.msra.mxu0 0.0
    %542 = vmatprep.subr.mxu0 0.0
    %543 = vmatpush1.msra.mxu0 0.0
    %544 = vmatprep.subr.mxu0 0.0
    %545 = vmatpush1.msra.mxu0 0.0
    %546 = vmatprep.subr.mxu0 0.0
    %547 = vmatpush1.msra.mxu0 0.0
    %548 = vmatprep.subr.mxu0 0.0
    %549 = vmatpush1.msra.mxu0 0.0
    %550 = vmatprep.subr.mxu0 0.0
    %551 = vmatpush1.msra.mxu0 0.0
    %552 = vmatprep.subr.mxu0 0.0
    %553 = vmatpush1.msra.mxu0 0.0
    %554 = vmatprep.subr.mxu0 0.0
    %555 = vmatpush1.msra.mxu0 0.0
    %556 = vmatprep.subr.mxu0 0.0
    %557 = vmatpush1.msra.mxu0 0.0
    %558 = vmatprep.subr.mxu0 0.0
    %559 = vmatpush1.msra.mxu0 0.0
    %560 = vmatprep.subr.mxu0 0.0
    %561 = vmatpush1.msra.mxu0 0.0
    %562 = vmatprep.subr.mxu0 0.0
    %563 = vmatpush1.msra.mxu0 0.0
    %564 = vmatprep.subr.mxu0 0.0
    %565 = vmatpush1.msra.mxu0 0.0
    %566 = vmatprep.subr.mxu0 0.0
    %567 = vmatpush1.msra.mxu0 0.0
    %568 = vmatprep.subr.mxu0 0.0
    %569 = vmatpush1.msra.mxu0 0.0
    %570 = vmatprep.subr.mxu0 0.0
    %571 = vmatpush1.msra.mxu0 0.0
    %572 = vmatprep.subr.mxu0 0.0
    %573 = vmatpush1.msra.mxu0 0.0
    %574 = vmatprep.subr.mxu0 0.0
    %575 = vmatpush1.msra.mxu0 0.0
    %576 = vmatprep.subr.mxu0 0.0
    %577 = vmatpush1.msra.mxu0 0.0
    %578 = vmatprep.subr.mxu0 0.0
    %579 = vmatpush1.msra.mxu0 0.0
    %580 = vmatprep.subr.mxu0 0.0
    %581 = vmatpush1.msra.mxu0 0.0
    %582 = vmatprep.subr.mxu0 0.0
    %583 = vmatpush1.msra.mxu0 0.0
    %584 = vmatprep.mubr.f32.mxu0 0.0
    %585 = vmatmul.mubr.f32.gmra.mrb[0].mxu0 %v442
    %v586 = vpop.f32.mrb[0].mxu0
    %v587 = vadd.f32 %v518, %v586
    %v588 = vpop.f32.mrb[0].mxu0
    %589 = vdwg.mxu0
    %v591 = vlaneseq
    %v592 = vshrl.u32 %v591, 7
    %v593 = vsub.s32 0, %v592
    %v594 = vrot.slane %v205, %v593
    %596 = vmatprep.subr.mxu0 0.0
    %597 = vmatpush1.msra.mxu0 %v201
    %598 = vmatprep.subr.mxu0 0.0
    %599 = vmatpush1.msra.mxu0 %v202
    %600 = vmatprep.subr.mxu0 0.0
    %601 = vmatpush1.msra.mxu0 %v203
    %602 = vmatprep.subr.mxu0 0.0
    %603 = vmatpush1.msra.mxu0 %v204
    %604 = vmatprep.subr.mxu0 0.0
    %605 = vmatpush1.msra.mxu0 0.0
    %606 = vmatprep.subr.mxu0 0.0
    %607 = vmatpush1.msra.mxu0 0.0
    %608 = vmatprep.subr.mxu0 0.0
    %609 = vmatpush1.msra.mxu0 0.0
    %610 = vmatprep.subr.mxu0 0.0
    %611 = vmatpush1.msra.mxu0 0.0
    %612 = vmatprep.subr.mxu0 0.0
    %613 = vmatpush1.msra.mxu0 0.0
    %614 = vmatprep.subr.mxu0 0.0
    %615 = vmatpush1.msra.mxu0 0.0
    %616 = vmatprep.subr.mxu0 0.0
    %617 = vmatpush1.msra.mxu0 0.0
    %618 = vmatprep.subr.mxu0 0.0
    %619 = vmatpush1.msra.mxu0 0.0
    %620 = vmatprep.subr.mxu0 0.0
    %621 = vmatpush1.msra.mxu0 0.0
    %622 = vmatprep.subr.mxu0 0.0
    %623 = vmatpush1.msra.mxu0 0.0
    %624 = vmatprep.subr.mxu0 0.0
    %625 = vmatpush1.msra.mxu0 0.0
    %626 = vmatprep.subr.mxu0 0.0
    %627 = vmatpush1.msra.mxu0 0.0
    %628 = vmatprep.subr.mxu0 0.0
    %629 = vmatpush1.msra.mxu0 0.0
    %630 = vmatprep.subr.mxu0 0.0
    %631 = vmatpush1.msra.mxu0 0.0
    %632 = vmatprep.subr.mxu0 0.0
    %633 = vmatpush1.msra.mxu0 0.0
    %634 = vmatprep.subr.mxu0 0.0
    %635 = vmatpush1.msra.mxu0 0.0
    %636 = vmatprep.subr.mxu0 0.0
    %637 = vmatpush1.msra.mxu0 0.0
    %638 = vmatprep.subr.mxu0 0.0
    %639 = vmatpush1.msra.mxu0 0.0
    %640 = vmatprep.subr.mxu0 0.0
    %641 = vmatpush1.msra.mxu0 0.0
    %642 = vmatprep.subr.mxu0 0.0
    %643 = vmatpush1.msra.mxu0 0.0
    %644 = vmatprep.subr.mxu0 0.0
    %645 = vmatpush1.msra.mxu0 0.0
    %646 = vmatprep.subr.mxu0 0.0
    %647 = vmatpush1.msra.mxu0 0.0
    %648 = vmatprep.subr.mxu0 0.0
    %649 = vmatpush1.msra.mxu0 0.0
    %650 = vmatprep.subr.mxu0 0.0
    %651 = vmatpush1.msra.mxu0 0.0
    %652 = vmatprep.subr.mxu0 0.0
    %653 = vmatpush1.msra.mxu0 0.0
    %654 = vmatprep.subr.mxu0 0.0
    %655 = vmatpush1.msra.mxu0 0.0
    %656 = vmatprep.subr.mxu0 0.0
    %657 = vmatpush1.msra.mxu0 0.0
    %658 = vmatprep.subr.mxu0 0.0
    %659 = vmatpush1.msra.mxu0 0.0
    %660 = vmatprep.mubr.f32.mxu0 0.0
    %661 = vmatmul.mubr.f32.gmra.mrb[0].mxu0 %v442
    %v662 = vpop.f32.mrb[0].mxu0
    %v663 = vadd.f32 %v594, %v662
    %v664 = vpop.f32.mrb[0].mxu0
    %665 = vdwg.mxu0
    %vm666 = vcmask 64512
    %v668 = vsel %vm666, %v511, 0
    %v671 = vsel %vm666, %v587, 0
    %673 = vmatprep.subr.mxu0 0.0
    %674 = vmatpush1.xpose.msra.mxu0 %v671
    %675 = vmatprep.subr.mxu0 0.0
    %676 = vmatpush1.xpose.msra.mxu0 0.0
    %677 = vmatprep.subr.mxu0 0.0
    %678 = vmatpush1.xpose.msra.mxu0 0.0
    %679 = vmatprep.subr.mxu0 0.0
    %680 = vmatpush1.xpose.msra.mxu0 0.0
    %681 = vmatprep.subr.mxu0 0.0
    %682 = vmatpush1.xpose.msra.mxu0 0.0
    %683 = vmatprep.subr.mxu0 0.0
    %684 = vmatpush1.xpose.msra.mxu0 0.0
    %685 = vmatprep.subr.mxu0 0.0
    %686 = vmatpush1.xpose.msra.mxu0 0.0
    %687 = vmatprep.subr.mxu0 0.0
    %688 = vmatpush1.xpose.msra.mxu0 0.0
    %689 = vmatprep.subr.mxu0 0.0
    %690 = vmatpush1.xpose.msra.mxu0 0.0
    %691 = vmatprep.subr.mxu0 0.0
    %692 = vmatpush1.xpose.msra.mxu0 0.0
    %693 = vmatprep.subr.mxu0 0.0
    %694 = vmatpush1.xpose.msra.mxu0 0.0
    %695 = vmatprep.subr.mxu0 0.0
    %696 = vmatpush1.xpose.msra.mxu0 0.0
    %697 = vmatprep.subr.mxu0 0.0
    %698 = vmatpush1.xpose.msra.mxu0 0.0
    %699 = vmatprep.subr.mxu0 0.0
    %700 = vmatpush1.xpose.msra.mxu0 0.0
    %701 = vmatprep.subr.mxu0 0.0
    %702 = vmatpush1.xpose.msra.mxu0 0.0
    %703 = vmatprep.subr.mxu0 0.0
    %704 = vmatpush1.xpose.msra.mxu0 0.0
    %705 = vmatprep.subr.mxu0 0.0
    %706 = vmatpush1.xpose.msra.mxu0 0.0
    %707 = vmatprep.subr.mxu0 0.0
    %708 = vmatpush1.xpose.msra.mxu0 0.0
    %709 = vmatprep.subr.mxu0 0.0
    %710 = vmatpush1.xpose.msra.mxu0 0.0
    %711 = vmatprep.subr.mxu0 0.0
    %712 = vmatpush1.xpose.msra.mxu0 0.0
    %713 = vmatprep.subr.mxu0 0.0
    %714 = vmatpush1.xpose.msra.mxu0 0.0
    %715 = vmatprep.subr.mxu0 0.0
    %716 = vmatpush1.xpose.msra.mxu0 0.0
    %717 = vmatprep.subr.mxu0 0.0
    %718 = vmatpush1.xpose.msra.mxu0 0.0
    %719 = vmatprep.subr.mxu0 0.0
    %720 = vmatpush1.xpose.msra.mxu0 0.0
    %721 = vmatprep.subr.mxu0 0.0
    %722 = vmatpush1.xpose.msra.mxu0 0.0
    %723 = vmatprep.subr.mxu0 0.0
    %724 = vmatpush1.xpose.msra.mxu0 0.0
    %725 = vmatprep.subr.mxu0 0.0
    %726 = vmatpush1.xpose.msra.mxu0 0.0
    %727 = vmatprep.subr.mxu0 0.0
    %728 = vmatpush1.xpose.msra.mxu0 0.0
    %729 = vmatprep.subr.mxu0 0.0
    %730 = vmatpush1.xpose.msra.mxu0 0.0
    %731 = vmatprep.subr.mxu0 0.0
    %732 = vmatpush1.xpose.msra.mxu0 0.0
    %733 = vmatprep.subr.mxu0 0.0
    %734 = vmatpush1.xpose.msra.mxu0 0.0
    %735 = vmatprep.subr.mxu0 0.0
    %736 = vmatpush1.xpose.msra.mxu0 0.0
    %737 = vmatprep.mubr.f32.mxu0 0.0
    %738 = vmatmul.mubr.f32.gmra.mrb[0].mxu0 %v668
    %v739 = vpop.f32.mrb[0].mxu0
    %v740 = vadd.f32 0.0, %v739
    %v741 = vpop.f32.mrb[0].mxu0
    %742 = vdwg.mxu0
    %v743 = vmul.f32 %v740, 0.35355338
    %vm744 = vcmask 55296
    %v745 = vsel %vm744, %v743, -inf
    %746 = vmax.xlane.f32.xlu0 %v745
    %v747 = vpop.xlane.xlu0 %746
    %v748 = vsub.f32 %v743, %v747
    %v749 = vmul.f32 %v748, 1.442695
    %v750 = vpow.pop %v749
    %v751 = vsel %vm744, %v750, 0.0
    %752 = vadd.xlane.f32.xlu0 %v751
    %v753 = vpop.xlane.xlu0 %752
    %v754 = vrcp.pop %v753
    %v755 = vmul.f32 %v750, %v754
    %v757 = vsel %vm285, %v755, 0
    %vm759 = vcmask 1046528
    %v761 = vsel %vm759, %v663, 0
    %763 = vmatprep.subr.mxu0 0.0
    %764 = vmatpush1.msra.mxu0 %v761
    %765 = vmatprep.subr.mxu0 0.0
    %766 = vmatpush1.msra.mxu0 0.0
    %767 = vmatprep.subr.mxu0 0.0
    %768 = vmatpush1.msra.mxu0 0.0
    %769 = vmatprep.subr.mxu0 0.0
    %770 = vmatpush1.msra.mxu0 0.0
    %771 = vmatprep.subr.mxu0 0.0
    %772 = vmatpush1.msra.mxu0 0.0
    %773 = vmatprep.subr.mxu0 0.0
    %774 = vmatpush1.msra.mxu0 0.0
    %775 = vmatprep.subr.mxu0 0.0
    %776 = vmatpush1.msra.mxu0 0.0
    %777 = vmatprep.subr.mxu0 0.0
    %778 = vmatpush1.msra.mxu0 0.0
    %779 = vmatprep.subr.mxu0 0.0
    %780 = vmatpush1.msra.mxu0 0.0
    %781 = vmatprep.subr.mxu0 0.0
    %782 = vmatpush1.msra.mxu0 0.0
    %783 = vmatprep.subr.mxu0 0.0
    %784 = vmatpush1.msra.mxu0 0.0
    %785 = vmatprep.subr.mxu0 0.0
    %786 = vmatpush1.msra.mxu0 0.0
    %787 = vmatprep.subr.mxu0 0.0
    %788 = vmatpush1.msra.mxu0 0.0
    %789 = vmatprep.subr.mxu0 0.0
    %790 = vmatpush1.msra.mxu0 0.0
    %791 = vmatprep.subr.mxu0 0.0
    %792 = vmatpush1.msra.mxu0 0.0
    %793 = vmatprep.subr.mxu0 0.0
    %794 = vmatpush1.msra.mxu0 0.0
    %795 = vmatprep.subr.mxu0 0.0
    %796 = vmatpush1.msra.mxu0 0.0
    %797 = vmatprep.subr.mxu0 0.0
    %798 = vmatpush1.msra.mxu0 0.0
    %799 = vmatprep.subr.mxu0 0.0
    %800 = vmatpush1.msra.mxu0 0.0
    %801 = vmatprep.subr.mxu0 0.0
    %802 = vmatpush1.msra.mxu0 0.0
    %803 = vmatprep.subr.mxu0 0.0
    %804 = vmatpush1.msra.mxu0 0.0
    %805 = vmatprep.subr.mxu0 0.0
    %806 = vmatpush1.msra.mxu0 0.0
    %807 = vmatprep.subr.mxu0 0.0
    %808 = vmatpush1.msra.mxu0 0.0
    %809 = vmatprep.subr.mxu0 0.0
    %810 = vmatpush1.msra.mxu0 0.0
    %811 = vmatprep.subr.mxu0 0.0
    %812 = vmatpush1.msra.mxu0 0.0
    %813 = vmatprep.subr.mxu0 0.0
    %814 = vmatpush1.msra.mxu0 0.0
    %815 = vmatprep.subr.mxu0 0.0
    %816 = vmatpush1.msra.mxu0 0.0
    %817 = vmatprep.subr.mxu0 0.0
    %818 = vmatpush1.msra.mxu0 0.0
    %819 = vmatprep.subr.mxu0 0.0
    %820 = vmatpush1.msra.mxu0 0.0
    %821 = vmatprep.subr.mxu0 0.0
    %822 = vmatpush1.msra.mxu0 0.0
    %823 = vmatprep.subr.mxu0 0.0
    %824 = vmatpush1.msra.mxu0 0.0
    %825 = vmatprep.subr.mxu0 0.0
    %826 = vmatpush1.msra.mxu0 0.0
    %827 = vmatprep.mubr.f32.mxu0 0.0
    %828 = vmatmul.mubr.f32.gmra.mrb[0].mxu0 %v757
    %v829 = vpop.f32.mrb[0].mxu0
    %v830 = vadd.f32 0.0, %v829
    %v831 = vpop.f32.mrb[0].mxu0
    %832 = vdwg.mxu0
    %833 = vrot.lane.b32.xlu0 %v511, 120
    %v834 = vpop.permute.xlu0 %833
    %835 = vrot.lane.b32.xlu0 %v587, 120
    %v836 = vpop.permute.xlu0 %835
    %v837 = vsel %vm666, %v834, 0
    %v839 = vsel %vm666, %v836, 0
    %841 = vmatprep.subr.mxu0 0.0
    %842 = vmatpush1.xpose.msra.mxu0 %v839
    %843 = vmatprep.subr.mxu0 0.0
    %844 = vmatpush1.xpose.msra.mxu0 0.0
    %845 = vmatprep.subr.mxu0 0.0
    %846 = vmatpush1.xpose.msra.mxu0 0.0
    %847 = vmatprep.subr.mxu0 0.0
    %848 = vmatpush1.xpose.msra.mxu0 0.0
    %849 = vmatprep.subr.mxu0 0.0
    %850 = vmatpush1.xpose.msra.mxu0 0.0
    %851 = vmatprep.subr.mxu0 0.0
    %852 = vmatpush1.xpose.msra.mxu0 0.0
    %853 = vmatprep.subr.mxu0 0.0
    %854 = vmatpush1.xpose.msra.mxu0 0.0
    %855 = vmatprep.subr.mxu0 0.0
    %856 = vmatpush1.xpose.msra.mxu0 0.0
    %857 = vmatprep.subr.mxu0 0.0
    %858 = vmatpush1.xpose.msra.mxu0 0.0
    %859 = vmatprep.subr.mxu0 0.0
    %860 = vmatpush1.xpose.msra.mxu0 0.0
    %861 = vmatprep.subr.mxu0 0.0
    %862 = vmatpush1.xpose.msra.mxu0 0.0
    %863 = vmatprep.subr.mxu0 0.0
    %864 = vmatpush1.xpose.msra.mxu0 0.0
    %865 = vmatprep.subr.mxu0 0.0
    %866 = vmatpush1.xpose.msra.mxu0 0.0
    %867 = vmatprep.subr.mxu0 0.0
    %868 = vmatpush1.xpose.msra.mxu0 0.0
    %869 = vmatprep.subr.mxu0 0.0
    %870 = vmatpush1.xpose.msra.mxu0 0.0
    %871 = vmatprep.subr.mxu0 0.0
    %872 = vmatpush1.xpose.msra.mxu0 0.0
    %873 = vmatprep.subr.mxu0 0.0
    %874 = vmatpush1.xpose.msra.mxu0 0.0
    %875 = vmatprep.subr.mxu0 0.0
    %876 = vmatpush1.xpose.msra.mxu0 0.0
    %877 = vmatprep.subr.mxu0 0.0
    %878 = vmatpush1.xpose.msra.mxu0 0.0
    %879 = vmatprep.subr.mxu0 0.0
    %880 = vmatpush1.xpose.msra.mxu0 0.0
    %881 = vmatprep.subr.mxu0 0.0
    %882 = vmatpush1.xpose.msra.mxu0 0.0
    %883 = vmatprep.subr.mxu0 0.0
    %884 = vmatpush1.xpose.msra.mxu0 0.0
    %885 = vmatprep.subr.mxu0 0.0
    %886 = vmatpush1.xpose.msra.mxu0 0.0
    %887 = vmatprep.subr.mxu0 0.0
    %888 = vmatpush1.xpose.msra.mxu0 0.0
    %889 = vmatprep.subr.mxu0 0.0
    %890 = vmatpush1.xpose.msra.mxu0 0.0
    %891 = vmatprep.subr.mxu0 0.0
    %892 = vmatpush1.xpose.msra.mxu0 0.0
    %893 = vmatprep.subr.mxu0 0.0
    %894 = vmatpush1.xpose.msra.mxu0 0.0
    %895 = vmatprep.subr.mxu0 0.0
    %896 = vmatpush1.xpose.msra.mxu0 0.0
    %897 = vmatprep.subr.mxu0 0.0
    %898 = vmatpush1.xpose.msra.mxu0 0.0
    %899 = vmatprep.subr.mxu0 0.0
    %900 = vmatpush1.xpose.msra.mxu0 0.0
    %901 = vmatprep.subr.mxu0 0.0
    %902 = vmatpush1.xpose.msra.mxu0 0.0
    %903 = vmatprep.subr.mxu0 0.0
    %904 = vmatpush1.xpose.msra.mxu0 0.0
    %905 = vmatprep.mubr.f32.mxu0 0.0
    %906 = vmatmul.mubr.f32.gmra.mrb[0].mxu0 %v837
    %v907 = vpop.f32.mrb[0].mxu0
    %v908 = vadd.f32 0.0, %v907
    %v909 = vpop.f32.mrb[0].mxu0
    %910 = vdwg.mxu0
    %v911 = vmul.f32 %v908, 0.35355338
    %v912 = vsel %vm744, %v911, -inf
    %913 = vmax.xlane.f32.xlu0 %v912
    %v914 = vpop.xlane.xlu0 %913
    %v915 = vsub.f32 %v911, %v914
    %v916 = vmul.f32 %v915, 1.442695
    %v917 = vpow.pop %v916
    %v918 = vsel %vm744, %v917, 0.0
    %919 = vadd.xlane.f32.xlu0 %v918
    %v920 = vpop.xlane.xlu0 %919
    %v921 = vrcp.pop %v920
    %v922 = vmul.f32 %v917, %v921
    %923 = vrot.lane.b32.xlu0 %v663, 120
    %v924 = vpop.permute.xlu0 %923
    %v926 = vsel %vm285, %v922, 0
    %v928 = vsel %vm759, %v924, 0
    %930 = vmatprep.subr.mxu0 0.0
    %931 = vmatpush1.msra.mxu0 %v928
    %932 = vmatprep.subr.mxu0 0.0
    %933 = vmatpush1.msra.mxu0 0.0
    %934 = vmatprep.subr.mxu0 0.0
    %935 = vmatpush1.msra.mxu0 0.0
    %936 = vmatprep.subr.mxu0 0.0
    %937 = vmatpush1.msra.mxu0 0.0
    %938 = vmatprep.subr.mxu0 0.0
    %939 = vmatpush1.msra.mxu0 0.0
    %940 = vmatprep.subr.mxu0 0.0
    %941 = vmatpush1.msra.mxu0 0.0
    %942 = vmatprep.subr.mxu0 0.0
    %943 = vmatpush1.msra.mxu0 0.0
    %944 = vmatprep.subr.mxu0 0.0
    %945 = vmatpush1.msra.mxu0 0.0
    %946 = vmatprep.subr.mxu0 0.0
    %947 = vmatpush1.msra.mxu0 0.0
    %948 = vmatprep.subr.mxu0 0.0
    %949 = vmatpush1.msra.mxu0 0.0
    %950 = vmatprep.subr.mxu0 0.0
    %951 = vmatpush1.msra.mxu0 0.0
    %952 = vmatprep.subr.mxu0 0.0
    %953 = vmatpush1.msra.mxu0 0.0
    %954 = vmatprep.subr.mxu0 0.0
    %955 = vmatpush1.msra.mxu0 0.0
    %956 = vmatprep.subr.mxu0 0.0
    %957 = vmatpush1.msra.mxu0 0.0
    %958 = vmatprep.subr.mxu0 0.0
    %959 = vmatpush1.msra.mxu0 0.0
    %960 = vmatprep.subr.mxu0 0.0
    %961 = vmatpush1.msra.mxu0 0.0
    %962 = vmatprep.subr.mxu0 0.0
    %963 = vmatpush1.msra.mxu0 0.0
    %964 = vmatprep.subr.mxu0 0.0
    %965 = vmatpush1.msra.mxu0 0.0
    %966 = vmatprep.subr.mxu0 0.0
    %967 = vmatpush1.msra.mxu0 0.0
    %968 = vmatprep.subr.mxu0 0.0
    %969 = vmatpush1.msra.mxu0 0.0
    %970 = vmatprep.subr.mxu0 0.0
    %971 = vmatpush1.msra.mxu0 0.0
    %972 = vmatprep.subr.mxu0 0.0
    %973 = vmatpush1.msra.mxu0 0.0
    %974 = vmatprep.subr.mxu0 0.0
    %975 = vmatpush1.msra.mxu0 0.0
    %976 = vmatprep.subr.mxu0 0.0
    %977 = vmatpush1.msra.mxu0 0.0
    %978 = vmatprep.subr.mxu0 0.0
    %979 = vmatpush1.msra.mxu0 0.0
    %980 = vmatprep.subr.mxu0 0.0
    %981 = vmatpush1.msra.mxu0 0.0
    %982 = vmatprep.subr.mxu0 0.0
    %983 = vmatpush1.msra.mxu0 0.0
    %984 = vmatprep.subr.mxu0 0.0
    %985 = vmatpush1.msra.mxu0 0.0
    %986 = vmatprep.subr.mxu0 0.0
    %987 = vmatpush1.msra.mxu0 0.0
    %988 = vmatprep.subr.mxu0 0.0
    %989 = vmatpush1.msra.mxu0 0.0
    %990 = vmatprep.subr.mxu0 0.0
    %991 = vmatpush1.msra.mxu0 0.0
    %992 = vmatprep.subr.mxu0 0.0
    %993 = vmatpush1.msra.mxu0 0.0
    %994 = vmatprep.mubr.f32.mxu0 0.0
    %995 = vmatmul.mubr.f32.gmra.mrb[0].mxu0 %v926
    %v996 = vpop.f32.mrb[0].mxu0
    %v997 = vadd.f32 0.0, %v996
    %v998 = vpop.f32.mrb[0].mxu0
    %999 = vdwg.mxu0
    %v1001 = vsel %vm666, %v997, 0
    %1003 = vmatprep.subr.mxu0 0.0
    %1004 = vmatpush1.msra.mxu0 %v207
    %1005 = vmatprep.subr.mxu0 0.0
    %1006 = vmatpush1.msra.mxu0 0.0
    %1007 = vmatprep.subr.mxu0 0.0
    %1008 = vmatpush1.msra.mxu0 0.0
    %1009 = vmatprep.subr.mxu0 0.0
    %1010 = vmatpush1.msra.mxu0 0.0
    %1011 = vmatprep.subr.mxu0 0.0
    %1012 = vmatpush1.msra.mxu0 0.0
    %1013 = vmatprep.subr.mxu0 0.0
    %1014 = vmatpush1.msra.mxu0 0.0
    %1015 = vmatprep.subr.mxu0 0.0
    %1016 = vmatpush1.msra.mxu0 0.0
    %1017 = vmatprep.subr.mxu0 0.0
    %1018 = vmatpush1.msra.mxu0 0.0
    %1019 = vmatprep.subr.mxu0 0.0
    %1020 = vmatpush1.msra.mxu0 0.0
    %1021 = vmatprep.subr.mxu0 0.0
    %1022 = vmatpush1.msra.mxu0 0.0
    %1023 = vmatprep.subr.mxu0 0.0
    %1024 = vmatpush1.msra.mxu0 0.0
    %1025 = vmatprep.subr.mxu0 0.0
    %1026 = vmatpush1.msra.mxu0 0.0
    %1027 = vmatprep.subr.mxu0 0.0
    %1028 = vmatpush1.msra.mxu0 0.0
    %1029 = vmatprep.subr.mxu0 0.0
    %1030 = vmatpush1.msra.mxu0 0.0
    %1031 = vmatprep.subr.mxu0 0.0
    %1032 = vmatpush1.msra.mxu0 0.0
    %1033 = vmatprep.subr.mxu0 0.0
    %1034 = vmatpush1.msra.mxu0 0.0
    %1035 = vmatprep.subr.mxu0 0.0
    %1036 = vmatpush1.msra.mxu0 0.0
    %1037 = vmatprep.subr.mxu0 0.0
    %1038 = vmatpush1.msra.mxu0 0.0
    %1039 = vmatprep.subr.mxu0 0.0
    %1040 = vmatpush1.msra.mxu0 0.0
    %1041 = vmatprep.subr.mxu0 0.0
    %1042 = vmatpush1.msra.mxu0 0.0
    %1043 = vmatprep.subr.mxu0 0.0
    %1044 = vmatpush1.msra.mxu0 0.0
    %1045 = vmatprep.subr.mxu0 0.0
    %1046 = vmatpush1.msra.mxu0 0.0
    %1047 = vmatprep.subr.mxu0 0.0
    %1048 = vmatpush1.msra.mxu0 0.0
    %1049 = vmatprep.subr.mxu0 0.0
    %1050 = vmatpush1.msra.mxu0 0.0
    %1051 = vmatprep.subr.mxu0 0.0
    %1052 = vmatpush1.msra.mxu0 0.0
    %1053 = vmatprep.subr.mxu0 0.0
    %1054 = vmatpush1.msra.mxu0 0.0
    %1055 = vmatprep.subr.mxu0 0.0
    %1056 = vmatpush1.msra.mxu0 0.0
    %1057 = vmatprep.subr.mxu0 0.0
    %1058 = vmatpush1.msra.mxu0 0.0
    %1059 = vmatprep.subr.mxu0 0.0
    %1060 = vmatpush1.msra.mxu0 0.0
    %1061 = vmatprep.subr.mxu0 0.0
    %1062 = vmatpush1.msra.mxu0 0.0
    %1063 = vmatprep.subr.mxu0 0.0
    %1064 = vmatpush1.msra.mxu0 0.0
    %1065 = vmatprep.subr.mxu0 0.0
    %1066 = vmatpush1.msra.mxu0 0.0
    %1067 = vmatprep.mubr.f32.mxu0 0.0
    %1068 = vmatmul.mubr.f32.gmra.mrb[0].mxu0 %v1001
    %v1069 = vpop.f32.mrb[0].mxu0
    %v1070 = vadd.f32 0.0, %v1069
    %v1071 = vpop.f32.mrb[0].mxu0
    %1072 = vdwg.mxu0
    %v1074 = vsel %vm666, %v830, 0
    %1076 = vmatprep.subr.mxu0 0.0
    %1077 = vmatpush1.msra.mxu0 %v206
    %1078 = vmatprep.subr.mxu0 0.0
    %1079 = vmatpush1.msra.mxu0 0.0
    %1080 = vmatprep.subr.mxu0 0.0
    %1081 = vmatpush1.msra.mxu0 0.0
    %1082 = vmatprep.subr.mxu0 0.0
    %1083 = vmatpush1.msra.mxu0 0.0
    %1084 = vmatprep.subr.mxu0 0.0
    %1085 = vmatpush1.msra.mxu0 0.0
    %1086 = vmatprep.subr.mxu0 0.0
    %1087 = vmatpush1.msra.mxu0 0.0
    %1088 = vmatprep.subr.mxu0 0.0
    %1089 = vmatpush1.msra.mxu0 0.0
    %1090 = vmatprep.subr.mxu0 0.0
    %1091 = vmatpush1.msra.mxu0 0.0
    %1092 = vmatprep.subr.mxu0 0.0
    %1093 = vmatpush1.msra.mxu0 0.0
    %1094 = vmatprep.subr.mxu0 0.0
    %1095 = vmatpush1.msra.mxu0 0.0
    %1096 = vmatprep.subr.mxu0 0.0
    %1097 = vmatpush1.msra.mxu0 0.0
    %1098 = vmatprep.subr.mxu0 0.0
    %1099 = vmatpush1.msra.mxu0 0.0
    %1100 = vmatprep.subr.mxu0 0.0
    %1101 = vmatpush1.msra.mxu0 0.0
    %1102 = vmatprep.subr.mxu0 0.0
    %1103 = vmatpush1.msra.mxu0 0.0
    %1104 = vmatprep.subr.mxu0 0.0
    %1105 = vmatpush1.msra.mxu0 0.0
    %1106 = vmatprep.subr.mxu0 0.0
    %1107 = vmatpush1.msra.mxu0 0.0
    %1108 = vmatprep.subr.mxu0 0.0
    %1109 = vmatpush1.msra.mxu0 0.0
    %1110 = vmatprep.subr.mxu0 0.0
    %1111 = vmatpush1.msra.mxu0 0.0
    %1112 = vmatprep.subr.mxu0 0.0
    %1113 = vmatpush1.msra.mxu0 0.0
    %1114 = vmatprep.subr.mxu0 0.0
    %1115 = vmatpush1.msra.mxu0 0.0
    %1116 = vmatprep.subr.mxu0 0.0
    %1117 = vmatpush1.msra.mxu0 0.0
    %1118 = vmatprep.subr.mxu0 0.0
    %1119 = vmatpush1.msra.mxu0 0.0
    %1120 = vmatprep.subr.mxu0 0.0
    %1121 = vmatpush1.msra.mxu0 0.0
    %1122 = vmatprep.subr.mxu0 0.0
    %1123 = vmatpush1.msra.mxu0 0.0
    %1124 = vmatprep.subr.mxu0 0.0
    %1125 = vmatpush1.msra.mxu0 0.0
    %1126 = vmatprep.subr.mxu0 0.0
    %1127 = vmatpush1.msra.mxu0 0.0
    %1128 = vmatprep.subr.mxu0 0.0
    %1129 = vmatpush1.msra.mxu0 0.0
    %1130 = vmatprep.subr.mxu0 0.0
    %1131 = vmatpush1.msra.mxu0 0.0
    %1132 = vmatprep.subr.mxu0 0.0
    %1133 = vmatpush1.msra.mxu0 0.0
    %1134 = vmatprep.subr.mxu0 0.0
    %1135 = vmatpush1.msra.mxu0 0.0
    %1136 = vmatprep.subr.mxu0 0.0
    %1137 = vmatpush1.msra.mxu0 0.0
    %1138 = vmatprep.subr.mxu0 0.0
    %1139 = vmatpush1.msra.mxu0 0.0
    %1140 = vmatprep.mubr.f32.mxu0 0.0
    %1141 = vmatmul.mubr.f32.gmra.mrb[0].mxu0 %v1074
    %v1142 = vpop.f32.mrb[0].mxu0
    %v1143 = vadd.f32 %v1070, %v1142
    %v1144 = vpop.f32.mrb[0].mxu0
    %1145 = vdwg.mxu0
    %1146 = vrot.lane.b32.xlu0 %v511, 112
    %v1147 = vpop.permute.xlu0 %1146
    %1148 = vrot.lane.b32.xlu0 %v587, 112
    %v1149 = vpop.permute.xlu0 %1148
    %v1150 = vsel %vm666, %v1147, 0
    %v1152 = vsel %vm666, %v1149, 0
    %1154 = vmatprep.subr.mxu0 0.0
    %1155 = vmatpush1.xpose.msra.mxu0 %v1152
    %1156 = vmatprep.subr.mxu0 0.0
    %1157 = vmatpush1.xpose.msra.mxu0 0.0
    %1158 = vmatprep.subr.mxu0 0.0
    %1159 = vmatpush1.xpose.msra.mxu0 0.0
    %1160 = vmatprep.subr.mxu0 0.0
    %1161 = vmatpush1.xpose.msra.mxu0 0.0
    %1162 = vmatprep.subr.mxu0 0.0
    %1163 = vmatpush1.xpose.msra.mxu0 0.0
    %1164 = vmatprep.subr.mxu0 0.0
    %1165 = vmatpush1.xpose.msra.mxu0 0.0
    %1166 = vmatprep.subr.mxu0 0.0
    %1167 = vmatpush1.xpose.msra.mxu0 0.0
    %1168 = vmatprep.subr.mxu0 0.0
    %1169 = vmatpush1.xpose.msra.mxu0 0.0
    %1170 = vmatprep.subr.mxu0 0.0
    %1171 = vmatpush1.xpose.msra.mxu0 0.0
    %1172 = vmatprep.subr.mxu0 0.0
    %1173 = vmatpush1.xpose.msra.mxu0 0.0
    %1174 = vmatprep.subr.mxu0 0.0
    %1175 = vmatpush1.xpose.msra.mxu0 0.0
    %1176 = vmatprep.subr.mxu0 0.0
    %1177 = vmatpush1.xpose.msra.mxu0 0.0
    %1178 = vmatprep.subr.mxu0 0.0
    %1179 = vmatpush1.xpose.msra.mxu0 0.0
    %1180 = vmatprep.subr.mxu0 0.0
    %1181 = vmatpush1.xpose.msra.mxu0 0.0
    %1182 = vmatprep.subr.mxu0 0.0
    %1183 = vmatpush1.xpose.msra.mxu0 0.0
    %1184 = vmatprep.subr.mxu0 0.0
    %1185 = vmatpush1.xpose.msra.mxu0 0.0
    %1186 = vmatprep.subr.mxu0 0.0
    %1187 = vmatpush1.xpose.msra.mxu0 0.0
    %1188 = vmatprep.subr.mxu0 0.0
    %1189 = vmatpush1.xpose.msra.mxu0 0.0
    %1190 = vmatprep.subr.mxu0 0.0
    %1191 = vmatpush1.xpose.msra.mxu0 0.0
    %1192 = vmatprep.subr.mxu0 0.0
    %1193 = vmatpush1.xpose.msra.mxu0 0.0
    %1194 = vmatprep.subr.mxu0 0.0
    %1195 = vmatpush1.xpose.msra.mxu0 0.0
    %1196 = vmatprep.subr.mxu0 0.0
    %1197 = vmatpush1.xpose.msra.mxu0 0.0
    %1198 = vmatprep.subr.mxu0 0.0
    %1199 = vmatpush1.xpose.msra.mxu0 0.0
    %1200 = vmatprep.subr.mxu0 0.0
    %1201 = vmatpush1.xpose.msra.mxu0 0.0
    %1202 = vmatprep.subr.mxu0 0.0
    %1203 = vmatpush1.xpose.msra.mxu0 0.0
    %1204 = vmatprep.subr.mxu0 0.0
    %1205 = vmatpush1.xpose.msra.mxu0 0.0
    %1206 = vmatprep.subr.mxu0 0.0
    %1207 = vmatpush1.xpose.msra.mxu0 0.0
    %1208 = vmatprep.subr.mxu0 0.0
    %1209 = vmatpush1.xpose.msra.mxu0 0.0
    %1210 = vmatprep.subr.mxu0 0.0
    %1211 = vmatpush1.xpose.msra.mxu0 0.0
    %1212 = vmatprep.subr.mxu0 0.0
    %1213 = vmatpush1.xpose.msra.mxu0 0.0
    %1214 = vmatprep.subr.mxu0 0.0
    %1215 = vmatpush1.xpose.msra.mxu0 0.0
    %1216 = vmatprep.subr.mxu0 0.0
    %1217 = vmatpush1.xpose.msra.mxu0 0.0
    %1218 = vmatprep.mubr.f32.mxu0 0.0
    %1219 = vmatmul.mubr.f32.gmra.mrb[0].mxu0 %v1150
    %v1220 = vpop.f32.mrb[0].mxu0
    %v1221 = vadd.f32 0.0, %v1220
    %v1222 = vpop.f32.mrb[0].mxu0
    %1223 = vdwg.mxu0
    %v1224 = vmul.f32 %v1221, 0.35355338
    %v1225 = vsel %vm744, %v1224, -inf
    %1226 = vmax.xlane.f32.xlu0 %v1225
    %v1227 = vpop.xlane.xlu0 %1226
    %v1228 = vsub.f32 %v1224, %v1227
    %v1229 = vmul.f32 %v1228, 1.442695
    %v1230 = vpow.pop %v1229
    %v1231 = vsel %vm744, %v1230, 0.0
    %1232 = vadd.xlane.f32.xlu0 %v1231
    %v1233 = vpop.xlane.xlu0 %1232
    %v1234 = vrcp.pop %v1233
    %v1235 = vmul.f32 %v1230, %v1234
    %1236 = vrot.lane.b32.xlu0 %v663, 112
    %v1237 = vpop.permute.xlu0 %1236
    %v1239 = vsel %vm285, %v1235, 0
    %v1241 = vsel %vm759, %v1237, 0
    %1243 = vmatprep.subr.mxu0 0.0
    %1244 = vmatpush1.msra.mxu0 %v1241
    %1245 = vmatprep.subr.mxu0 0.0
    %1246 = vmatpush1.msra.mxu0 0.0
    %1247 = vmatprep.subr.mxu0 0.0
    %1248 = vmatpush1.msra.mxu0 0.0
    %1249 = vmatprep.subr.mxu0 0.0
    %1250 = vmatpush1.msra.mxu0 0.0
    %1251 = vmatprep.subr.mxu0 0.0
    %1252 = vmatpush1.msra.mxu0 0.0
    %1253 = vmatprep.subr.mxu0 0.0
    %1254 = vmatpush1.msra.mxu0 0.0
    %1255 = vmatprep.subr.mxu0 0.0
    %1256 = vmatpush1.msra.mxu0 0.0
    %1257 = vmatprep.subr.mxu0 0.0
    %1258 = vmatpush1.msra.mxu0 0.0
    %1259 = vmatprep.subr.mxu0 0.0
    %1260 = vmatpush1.msra.mxu0 0.0
    %1261 = vmatprep.subr.mxu0 0.0
    %1262 = vmatpush1.msra.mxu0 0.0
    %1263 = vmatprep.subr.mxu0 0.0
    %1264 = vmatpush1.msra.mxu0 0.0
    %1265 = vmatprep.subr.mxu0 0.0
    %1266 = vmatpush1.msra.mxu0 0.0
    %1267 = vmatprep.subr.mxu0 0.0
    %1268 = vmatpush1.msra.mxu0 0.0
    %1269 = vmatprep.subr.mxu0 0.0
    %1270 = vmatpush1.msra.mxu0 0.0
    %1271 = vmatprep.subr.mxu0 0.0
    %1272 = vmatpush1.msra.mxu0 0.0
    %1273 = vmatprep.subr.mxu0 0.0
    %1274 = vmatpush1.msra.mxu0 0.0
    %1275 = vmatprep.subr.mxu0 0.0
    %1276 = vmatpush1.msra.mxu0 0.0
    %1277 = vmatprep.subr.mxu0 0.0
    %1278 = vmatpush1.msra.mxu0 0.0
    %1279 = vmatprep.subr.mxu0 0.0
    %1280 = vmatpush1.msra.mxu0 0.0
    %1281 = vmatprep.subr.mxu0 0.0
    %1282 = vmatpush1.msra.mxu0 0.0
    %1283 = vmatprep.subr.mxu0 0.0
    %1284 = vmatpush1.msra.mxu0 0.0
    %1285 = vmatprep.subr.mxu0 0.0
    %1286 = vmatpush1.msra.mxu0 0.0
    %1287 = vmatprep.subr.mxu0 0.0
    %1288 = vmatpush1.msra.mxu0 0.0
    %1289 = vmatprep.subr.mxu0 0.0
    %1290 = vmatpush1.msra.mxu0 0.0
    %1291 = vmatprep.subr.mxu0 0.0
    %1292 = vmatpush1.msra.mxu0 0.0
    %1293 = vmatprep.subr.mxu0 0.0
    %1294 = vmatpush1.msra.mxu0 0.0
    %1295 = vmatprep.subr.mxu0 0.0
    %1296 = vmatpush1.msra.mxu0 0.0
    %1297 = vmatprep.subr.mxu0 0.0
    %1298 = vmatpush1.msra.mxu0 0.0
    %1299 = vmatprep.subr.mxu0 0.0
    %1300 = vmatpush1.msra.mxu0 0.0
    %1301 = vmatprep.subr.mxu0 0.0
    %1302 = vmatpush1.msra.mxu0 0.0
    %1303 = vmatprep.subr.mxu0 0.0
    %1304 = vmatpush1.msra.mxu0 0.0
    %1305 = vmatprep.subr.mxu0 0.0
    %1306 = vmatpush1.msra.mxu0 0.0
    %1307 = vmatprep.mubr.f32.mxu0 0.0
    %1308 = vmatmul.mubr.f32.gmra.mrb[0].mxu0 %v1239
    %v1309 = vpop.f32.mrb[0].mxu0
    %v1310 = vadd.f32 0.0, %v1309
    %v1311 = vpop.f32.mrb[0].mxu0
    %1312 = vdwg.mxu0
    %v1314 = vsel %vm666, %v1310, 0
    %1316 = vmatprep.subr.mxu0 0.0
    %1317 = vmatpush1.msra.mxu0 %v208
    %1318 = vmatprep.subr.mxu0 0.0
    %1319 = vmatpush1.msra.mxu0 0.0
    %1320 = vmatprep.subr.mxu0 0.0
    %1321 = vmatpush1.msra.mxu0 0.0
    %1322 = vmatprep.subr.mxu0 0.0
    %1323 = vmatpush1.msra.mxu0 0.0
    %1324 = vmatprep.subr.mxu0 0.0
    %1325 = vmatpush1.msra.mxu0 0.0
    %1326 = vmatprep.subr.mxu0 0.0
    %1327 = vmatpush1.msra.mxu0 0.0
    %1328 = vmatprep.subr.mxu0 0.0
    %1329 = vmatpush1.msra.mxu0 0.0
    %1330 = vmatprep.subr.mxu0 0.0
    %1331 = vmatpush1.msra.mxu0 0.0
    %1332 = vmatprep.subr.mxu0 0.0
    %1333 = vmatpush1.msra.mxu0 0.0
    %1334 = vmatprep.subr.mxu0 0.0
    %1335 = vmatpush1.msra.mxu0 0.0
    %1336 = vmatprep.subr.mxu0 0.0
    %1337 = vmatpush1.msra.mxu0 0.0
    %1338 = vmatprep.subr.mxu0 0.0
    %1339 = vmatpush1.msra.mxu0 0.0
    %1340 = vmatprep.subr.mxu0 0.0
    %1341 = vmatpush1.msra.mxu0 0.0
    %1342 = vmatprep.subr.mxu0 0.0
    %1343 = vmatpush1.msra.mxu0 0.0
    %1344 = vmatprep.subr.mxu0 0.0
    %1345 = vmatpush1.msra.mxu0 0.0
    %1346 = vmatprep.subr.mxu0 0.0
    %1347 = vmatpush1.msra.mxu0 0.0
    %1348 = vmatprep.subr.mxu0 0.0
    %1349 = vmatpush1.msra.mxu0 0.0
    %1350 = vmatprep.subr.mxu0 0.0
    %1351 = vmatpush1.msra.mxu0 0.0
    %1352 = vmatprep.subr.mxu0 0.0
    %1353 = vmatpush1.msra.mxu0 0.0
    %1354 = vmatprep.subr.mxu0 0.0
    %1355 = vmatpush1.msra.mxu0 0.0
    %1356 = vmatprep.subr.mxu0 0.0
    %1357 = vmatpush1.msra.mxu0 0.0
    %1358 = vmatprep.subr.mxu0 0.0
    %1359 = vmatpush1.msra.mxu0 0.0
    %1360 = vmatprep.subr.mxu0 0.0
    %1361 = vmatpush1.msra.mxu0 0.0
    %1362 = vmatprep.subr.mxu0 0.0
    %1363 = vmatpush1.msra.mxu0 0.0
    %1364 = vmatprep.subr.mxu0 0.0
    %1365 = vmatpush1.msra.mxu0 0.0
    %1366 = vmatprep.subr.mxu0 0.0
    %1367 = vmatpush1.msra.mxu0 0.0
    %1368 = vmatprep.subr.mxu0 0.0
    %1369 = vmatpush1.msra.mxu0 0.0
    %1370 = vmatprep.subr.mxu0 0.0
    %1371 = vmatpush1.msra.mxu0 0.0
    %1372 = vmatprep.subr.mxu0 0.0
    %1373 = vmatpush1.msra.mxu0 0.0
    %1374 = vmatprep.subr.mxu0 0.0
    %1375 = vmatpush1.msra.mxu0 0.0
    %1376 = vmatprep.subr.mxu0 0.0
    %1377 = vmatpush1.msra.mxu0 0.0
    %1378 = vmatprep.subr.mxu0 0.0
    %1379 = vmatpush1.msra.mxu0 0.0
    %1380 = vmatprep.mubr.f32.mxu0 0.0
    %1381 = vmatmul.mubr.f32.gmra.mrb[0].mxu0 %v1314
    %v1382 = vpop.f32.mrb[0].mxu0
    %v1383 = vadd.f32 0.0, %v1382
    %v1384 = vpop.f32.mrb[0].mxu0
    %1385 = vdwg.mxu0
    %v1386 = vadd.f32 %v1143, %v1383
    %1387 = vrot.lane.b32.xlu0 %v511, 104
    %v1388 = vpop.permute.xlu0 %1387
    %1389 = vrot.lane.b32.xlu0 %v587, 104
    %v1390 = vpop.permute.xlu0 %1389
    %v1391 = vsel %vm666, %v1388, 0
    %v1393 = vsel %vm666, %v1390, 0
    %1395 = vmatprep.subr.mxu0 0.0
    %1396 = vmatpush1.xpose.msra.mxu0 %v1393
    %1397 = vmatprep.subr.mxu0 0.0
    %1398 = vmatpush1.xpose.msra.mxu0 0.0
    %1399 = vmatprep.subr.mxu0 0.0
    %1400 = vmatpush1.xpose.msra.mxu0 0.0
    %1401 = vmatprep.subr.mxu0 0.0
    %1402 = vmatpush1.xpose.msra.mxu0 0.0
    %1403 = vmatprep.subr.mxu0 0.0
    %1404 = vmatpush1.xpose.msra.mxu0 0.0
    %1405 = vmatprep.subr.mxu0 0.0
    %1406 = vmatpush1.xpose.msra.mxu0 0.0
    %1407 = vmatprep.subr.mxu0 0.0
    %1408 = vmatpush1.xpose.msra.mxu0 0.0
    %1409 = vmatprep.subr.mxu0 0.0
    %1410 = vmatpush1.xpose.msra.mxu0 0.0
    %1411 = vmatprep.subr.mxu0 0.0
    %1412 = vmatpush1.xpose.msra.mxu0 0.0
    %1413 = vmatprep.subr.mxu0 0.0
    %1414 = vmatpush1.xpose.msra.mxu0 0.0
    %1415 = vmatprep.subr.mxu0 0.0
    %1416 = vmatpush1.xpose.msra.mxu0 0.0
    %1417 = vmatprep.subr.mxu0 0.0
    %1418 = vmatpush1.xpose.msra.mxu0 0.0
    %1419 = vmatprep.subr.mxu0 0.0
    %1420 = vmatpush1.xpose.msra.mxu0 0.0
    %1421 = vmatprep.subr.mxu0 0.0
    %1422 = vmatpush1.xpose.msra.mxu0 0.0
    %1423 = vmatprep.subr.mxu0 0.0
    %1424 = vmatpush1.xpose.msra.mxu0 0.0
    %1425 = vmatprep.subr.mxu0 0.0
    %1426 = vmatpush1.xpose.msra.mxu0 0.0
    %1427 = vmatprep.subr.mxu0 0.0
    %1428 = vmatpush1.xpose.msra.mxu0 0.0
    %1429 = vmatprep.subr.mxu0 0.0
    %1430 = vmatpush1.xpose.msra.mxu0 0.0
    %1431 = vmatprep.subr.mxu0 0.0
    %1432 = vmatpush1.xpose.msra.mxu0 0.0
    %1433 = vmatprep.subr.mxu0 0.0
    %1434 = vmatpush1.xpose.msra.mxu0 0.0
    %1435 = vmatprep.subr.mxu0 0.0
    %1436 = vmatpush1.xpose.msra.mxu0 0.0
    %1437 = vmatprep.subr.mxu0 0.0
    %1438 = vmatpush1.xpose.msra.mxu0 0.0
    %1439 = vmatprep.subr.mxu0 0.0
    %1440 = vmatpush1.xpose.msra.mxu0 0.0
    %1441 = vmatprep.subr.mxu0 0.0
    %1442 = vmatpush1.xpose.msra.mxu0 0.0
    %1443 = vmatprep.subr.mxu0 0.0
    %1444 = vmatpush1.xpose.msra.mxu0 0.0
    %1445 = vmatprep.subr.mxu0 0.0
    %1446 = vmatpush1.xpose.msra.mxu0 0.0
    %1447 = vmatprep.subr.mxu0 0.0
    %1448 = vmatpush1.xpose.msra.mxu0 0.0
    %1449 = vmatprep.subr.mxu0 0.0
    %1450 = vmatpush1.xpose.msra.mxu0 0.0
    %1451 = vmatprep.subr.mxu0 0.0
    %1452 = vmatpush1.xpose.msra.mxu0 0.0
    %1453 = vmatprep.subr.mxu0 0.0
    %1454 = vmatpush1.xpose.msra.mxu0 0.0
    %1455 = vmatprep.subr.mxu0 0.0
    %1456 = vmatpush1.xpose.msra.mxu0 0.0
    %1457 = vmatprep.subr.mxu0 0.0
    %1458 = vmatpush1.xpose.msra.mxu0 0.0
    %1459 = vmatprep.mubr.f32.mxu0 0.0
    %1460 = vmatmul.mubr.f32.gmra.mrb[0].mxu0 %v1391
    %v1461 = vpop.f32.mrb[0].mxu0
    %v1462 = vadd.f32 0.0, %v1461
    %v1463 = vpop.f32.mrb[0].mxu0
    %1464 = vdwg.mxu0
    %v1465 = vmul.f32 %v1462, 0.35355338
    %v1466 = vsel %vm744, %v1465, -inf
    %1467 = vmax.xlane.f32.xlu0 %v1466
    %v1468 = vpop.xlane.xlu0 %1467
    %v1469 = vsub.f32 %v1465, %v1468
    %v1470 = vmul.f32 %v1469, 1.442695
    %v1471 = vpow.pop %v1470
    %v1472 = vsel %vm744, %v1471, 0.0
    %1473 = vadd.xlane.f32.xlu0 %v1472
    %v1474 = vpop.xlane.xlu0 %1473
    %v1475 = vrcp.pop %v1474
    %v1476 = vmul.f32 %v1471, %v1475
    %1477 = vrot.lane.b32.xlu0 %v663, 104
    %v1478 = vpop.permute.xlu0 %1477
    %v1480 = vsel %vm285, %v1476, 0
    %v1482 = vsel %vm759, %v1478, 0
    %1484 = vmatprep.subr.mxu0 0.0
    %1485 = vmatpush1.msra.mxu0 %v1482
    %1486 = vmatprep.subr.mxu0 0.0
    %1487 = vmatpush1.msra.mxu0 0.0
    %1488 = vmatprep.subr.mxu0 0.0
    %1489 = vmatpush1.msra.mxu0 0.0
    %1490 = vmatprep.subr.mxu0 0.0
    %1491 = vmatpush1.msra.mxu0 0.0
    %1492 = vmatprep.subr.mxu0 0.0
    %1493 = vmatpush1.msra.mxu0 0.0
    %1494 = vmatprep.subr.mxu0 0.0
    %1495 = vmatpush1.msra.mxu0 0.0
    %1496 = vmatprep.subr.mxu0 0.0
    %1497 = vmatpush1.msra.mxu0 0.0
    %1498 = vmatprep.subr.mxu0 0.0
    %1499 = vmatpush1.msra.mxu0 0.0
    %1500 = vmatprep.subr.mxu0 0.0
    %1501 = vmatpush1.msra.mxu0 0.0
    %1502 = vmatprep.subr.mxu0 0.0
    %1503 = vmatpush1.msra.mxu0 0.0
    %1504 = vmatprep.subr.mxu0 0.0
    %1505 = vmatpush1.msra.mxu0 0.0
    %1506 = vmatprep.subr.mxu0 0.0
    %1507 = vmatpush1.msra.mxu0 0.0
    %1508 = vmatprep.subr.mxu0 0.0
    %1509 = vmatpush1.msra.mxu0 0.0
    %1510 = vmatprep.subr.mxu0 0.0
    %1511 = vmatpush1.msra.mxu0 0.0
    %1512 = vmatprep.subr.mxu0 0.0
    %1513 = vmatpush1.msra.mxu0 0.0
    %1514 = vmatprep.subr.mxu0 0.0
    %1515 = vmatpush1.msra.mxu0 0.0
    %1516 = vmatprep.subr.mxu0 0.0
    %1517 = vmatpush1.msra.mxu0 0.0
    %1518 = vmatprep.subr.mxu0 0.0
    %1519 = vmatpush1.msra.mxu0 0.0
    %1520 = vmatprep.subr.mxu0 0.0
    %1521 = vmatpush1.msra.mxu0 0.0
    %1522 = vmatprep.subr.mxu0 0.0
    %1523 = vmatpush1.msra.mxu0 0.0
    %1524 = vmatprep.subr.mxu0 0.0
    %1525 = vmatpush1.msra.mxu0 0.0
    %1526 = vmatprep.subr.mxu0 0.0
    %1527 = vmatpush1.msra.mxu0 0.0
    %1528 = vmatprep.subr.mxu0 0.0
    %1529 = vmatpush1.msra.mxu0 0.0
    %1530 = vmatprep.subr.mxu0 0.0
    %1531 = vmatpush1.msra.mxu0 0.0
    %1532 = vmatprep.subr.mxu0 0.0
    %1533 = vmatpush1.msra.mxu0 0.0
    %1534 = vmatprep.subr.mxu0 0.0
    %1535 = vmatpush1.msra.mxu0 0.0
    %1536 = vmatprep.subr.mxu0 0.0
    %1537 = vmatpush1.msra.mxu0 0.0
    %1538 = vmatprep.subr.mxu0 0.0
    %1539 = vmatpush1.msra.mxu0 0.0
    %1540 = vmatprep.subr.mxu0 0.0
    %1541 = vmatpush1.msra.mxu0 0.0
    %1542 = vmatprep.subr.mxu0 0.0
    %1543 = vmatpush1.msra.mxu0 0.0
    %1544 = vmatprep.subr.mxu0 0.0
    %1545 = vmatpush1.msra.mxu0 0.0
    %1546 = vmatprep.subr.mxu0 0.0
    %1547 = vmatpush1.msra.mxu0 0.0
    %1548 = vmatprep.mubr.f32.mxu0 0.0
    %1549 = vmatmul.mubr.f32.gmra.mrb[0].mxu0 %v1480
    %v1550 = vpop.f32.mrb[0].mxu0
    %v1551 = vadd.f32 0.0, %v1550
    %v1552 = vpop.f32.mrb[0].mxu0
    %1553 = vdwg.mxu0
    %v1555 = vsel %vm666, %v1551, 0
    %1557 = vmatprep.subr.mxu0 0.0
    %1558 = vmatpush1.msra.mxu0 %v209
    %1559 = vmatprep.subr.mxu0 0.0
    %1560 = vmatpush1.msra.mxu0 0.0
    %1561 = vmatprep.subr.mxu0 0.0
    %1562 = vmatpush1.msra.mxu0 0.0
    %1563 = vmatprep.subr.mxu0 0.0
    %1564 = vmatpush1.msra.mxu0 0.0
    %1565 = vmatprep.subr.mxu0 0.0
    %1566 = vmatpush1.msra.mxu0 0.0
    %1567 = vmatprep.subr.mxu0 0.0
    %1568 = vmatpush1.msra.mxu0 0.0
    %1569 = vmatprep.subr.mxu0 0.0
    %1570 = vmatpush1.msra.mxu0 0.0
    %1571 = vmatprep.subr.mxu0 0.0
    %1572 = vmatpush1.msra.mxu0 0.0
    %1573 = vmatprep.subr.mxu0 0.0
    %1574 = vmatpush1.msra.mxu0 0.0
    %1575 = vmatprep.subr.mxu0 0.0
    %1576 = vmatpush1.msra.mxu0 0.0
    %1577 = vmatprep.subr.mxu0 0.0
    %1578 = vmatpush1.msra.mxu0 0.0
    %1579 = vmatprep.subr.mxu0 0.0
    %1580 = vmatpush1.msra.mxu0 0.0
    %1581 = vmatprep.subr.mxu0 0.0
    %1582 = vmatpush1.msra.mxu0 0.0
    %1583 = vmatprep.subr.mxu0 0.0
    %1584 = vmatpush1.msra.mxu0 0.0
    %1585 = vmatprep.subr.mxu0 0.0
    %1586 = vmatpush1.msra.mxu0 0.0
    %1587 = vmatprep.subr.mxu0 0.0
    %1588 = vmatpush1.msra.mxu0 0.0
    %1589 = vmatprep.subr.mxu0 0.0
    %1590 = vmatpush1.msra.mxu0 0.0
    %1591 = vmatprep.subr.mxu0 0.0
    %1592 = vmatpush1.msra.mxu0 0.0
    %1593 = vmatprep.subr.mxu0 0.0
    %1594 = vmatpush1.msra.mxu0 0.0
    %1595 = vmatprep.subr.mxu0 0.0
    %1596 = vmatpush1.msra.mxu0 0.0
    %1597 = vmatprep.subr.mxu0 0.0
    %1598 = vmatpush1.msra.mxu0 0.0
    %1599 = vmatprep.subr.mxu0 0.0
    %1600 = vmatpush1.msra.mxu0 0.0
    %1601 = vmatprep.subr.mxu0 0.0
    %1602 = vmatpush1.msra.mxu0 0.0
    %1603 = vmatprep.subr.mxu0 0.0
    %1604 = vmatpush1.msra.mxu0 0.0
    %1605 = vmatprep.subr.mxu0 0.0
    %1606 = vmatpush1.msra.mxu0 0.0
    %1607 = vmatprep.subr.mxu0 0.0
    %1608 = vmatpush1.msra.mxu0 0.0
    %1609 = vmatprep.subr.mxu0 0.0
    %1610 = vmatpush1.msra.mxu0 0.0
    %1611 = vmatprep.subr.mxu0 0.0
    %1612 = vmatpush1.msra.mxu0 0.0
    %1613 = vmatprep.subr.mxu0 0.0
    %1614 = vmatpush1.msra.mxu0 0.0
    %1615 = vmatprep.subr.mxu0 0.0
    %1616 = vmatpush1.msra.mxu0 0.0
    %1617 = vmatprep.subr.mxu0 0.0
    %1618 = vmatpush1.msra.mxu0 0.0
    %1619 = vmatprep.subr.mxu0 0.0
    %1620 = vmatpush1.msra.mxu0 0.0
    %1621 = vmatprep.mubr.f32.mxu0 0.0
    %1622 = vmatmul.mubr.f32.gmra.mrb[0].mxu0 %v1555
    %v1623 = vpop.f32.mrb[0].mxu0
    %v1624 = vadd.f32 0.0, %v1623
    %v1625 = vpop.f32.mrb[0].mxu0
    %1626 = vdwg.mxu0
    %v1627 = vadd.f32 %v1386, %v1624
    %v1628 = vadd.f32 %v431, %v1627
    %v1630 = vlaneseq
    %v1631 = vshrl.u32 %v1630, 7
    %v1632 = vsub.s32 0, %v1631
    %v1633 = vrot.slane %v210, %v1632
    %v1635 = vadd.f32 %v1628, %v1633
    %vm1636 = vcmask 260096
    %v1637 = vsel %vm1636, %v1635, 0.0
    %1638 = vadd.xlane.f32.xlu0 %v1637
    %v1639 = vpop.xlane.xlu0 %1638
    %v1640 = vrcp.pop 32.0
    %v1641 = vmul.f32 %v1639, %v1640
    %v1642 = vsub.f32 %v1635, %v1641
    %v1643 = vmul.f32 %v1642, %v1642
    %v1644 = vsel %vm1636, %v1643, 0.0
    %1645 = vadd.xlane.f32.xlu0 %v1644
    %v1646 = vpop.xlane.xlu0 %1645
    %v1647 = vmul.f32 %v1646, %v1640
    %v1648 = vadd.f32 %v1647, 1e-05
    %v1649 = vrsqrt.pop %v1648
    %v1650 = vmul.f32 %v1642, %v1649
    %v1652 = vlaneseq
    %v1653 = vshrl.u32 %v1652, 7
    %v1654 = vsub.s32 0, %v1653
    %v1655 = vrot.slane %v211, %v1654
    %v1657 = vmul.f32 %v1650, %v1655
    %v1659 = vlaneseq
    %v1660 = vshrl.u32 %v1659, 7
    %v1661 = vsub.s32 0, %v1660
    %v1662 = vrot.slane %v212, %v1661
    %v1664 = vadd.f32 %v1657, %v1662
    %v1666 = vlaneseq
    %v1667 = vshrl.u32 %v1666, 7
    %v1668 = vsub.s32 0, %v1667
    %v1669 = vrot.slane %v217, %v1668
    %v1672 = vsel %vm440, %v1664, 0
    %1674 = vmatprep.subr.mxu0 0.0
    %1675 = vmatpush1.msra.mxu0 %v213
    %1676 = vmatprep.subr.mxu0 0.0
    %1677 = vmatpush1.msra.mxu0 %v214
    %1678 = vmatprep.subr.mxu0 0.0
    %1679 = vmatpush1.msra.mxu0 %v215
    %1680 = vmatprep.subr.mxu0 0.0
    %1681 = vmatpush1.msra.mxu0 %v216
    %1682 = vmatprep.subr.mxu0 0.0
    %1683 = vmatpush1.msra.mxu0 0.0
    %1684 = vmatprep.subr.mxu0 0.0
    %1685 = vmatpush1.msra.mxu0 0.0
    %1686 = vmatprep.subr.mxu0 0.0
    %1687 = vmatpush1.msra.mxu0 0.0
    %1688 = vmatprep.subr.mxu0 0.0
    %1689 = vmatpush1.msra.mxu0 0.0
    %1690 = vmatprep.subr.mxu0 0.0
    %1691 = vmatpush1.msra.mxu0 0.0
    %1692 = vmatprep.subr.mxu0 0.0
    %1693 = vmatpush1.msra.mxu0 0.0
    %1694 = vmatprep.subr.mxu0 0.0
    %1695 = vmatpush1.msra.mxu0 0.0
    %1696 = vmatprep.subr.mxu0 0.0
    %1697 = vmatpush1.msra.mxu0 0.0
    %1698 = vmatprep.subr.mxu0 0.0
    %1699 = vmatpush1.msra.mxu0 0.0
    %1700 = vmatprep.subr.mxu0 0.0
    %1701 = vmatpush1.msra.mxu0 0.0
    %1702 = vmatprep.subr.mxu0 0.0
    %1703 = vmatpush1.msra.mxu0 0.0
    %1704 = vmatprep.subr.mxu0 0.0
    %1705 = vmatpush1.msra.mxu0 0.0
    %1706 = vmatprep.subr.mxu0 0.0
    %1707 = vmatpush1.msra.mxu0 0.0
    %1708 = vmatprep.subr.mxu0 0.0
    %1709 = vmatpush1.msra.mxu0 0.0
    %1710 = vmatprep.subr.mxu0 0.0
    %1711 = vmatpush1.msra.mxu0 0.0
    %1712 = vmatprep.subr.mxu0 0.0
    %1713 = vmatpush1.msra.mxu0 0.0
    %1714 = vmatprep.subr.mxu0 0.0
    %1715 = vmatpush1.msra.mxu0 0.0
    %1716 = vmatprep.subr.mxu0 0.0
    %1717 = vmatpush1.msra.mxu0 0.0
    %1718 = vmatprep.subr.mxu0 0.0
    %1719 = vmatpush1.msra.mxu0 0.0
    %1720 = vmatprep.subr.mxu0 0.0
    %1721 = vmatpush1.msra.mxu0 0.0
    %1722 = vmatprep.subr.mxu0 0.0
    %1723 = vmatpush1.msra.mxu0 0.0
    %1724 = vmatprep.subr.mxu0 0.0
    %1725 = vmatpush1.msra.mxu0 0.0
    %1726 = vmatprep.subr.mxu0 0.0
    %1727 = vmatpush1.msra.mxu0 0.0
    %1728 = vmatprep.subr.mxu0 0.0
    %1729 = vmatpush1.msra.mxu0 0.0
    %1730 = vmatprep.subr.mxu0 0.0
    %1731 = vmatpush1.msra.mxu0 0.0
    %1732 = vmatprep.subr.mxu0 0.0
    %1733 = vmatpush1.msra.mxu0 0.0
    %1734 = vmatprep.subr.mxu0 0.0
    %1735 = vmatpush1.msra.mxu0 0.0
    %1736 = vmatprep.subr.mxu0 0.0
    %1737 = vmatpush1.msra.mxu0 0.0
    %1738 = vmatprep.mubr.f32.mxu0 0.0
    %1739 = vmatmul.mubr.f32.gmra.mrb[0].mxu0 %v1672
    %v1740 = vpop.f32.mrb[0].mxu0
    %v1741 = vadd.f32 %v1669, %v1740
    %v1742 = vpop.f32.mrb[0].mxu0
    %1743 = vdwg.mxu0
    %v1744 = vmax.f32 %v1741, 0.0
    %v1746 = vlaneseq
    %v1747 = vshrl.u32 %v1746, 7
    %v1748 = vsub.s32 0, %v1747
    %v1749 = vrot.slane %v226, %v1748
    %vm1751 = vcmask 523264
    %v1753 = vsel %vm1751, %v1744, 0
    %1755 = vmatprep.subr.mxu0 0.0
    %1756 = vmatpush1.msra.mxu0 %v218
    %1757 = vmatprep.subr.mxu0 0.0
    %1758 = vmatpush1.msra.mxu0 %v219
    %1759 = vmatprep.subr.mxu0 0.0
    %1760 = vmatpush1.msra.mxu0 %v220
    %1761 = vmatprep.subr.mxu0 0.0
    %1762 = vmatpush1.msra.mxu0 %v221
    %1763 = vmatprep.subr.mxu0 0.0
    %1764 = vmatpush1.msra.mxu0 %v222
    %1765 = vmatprep.subr.mxu0 0.0
    %1766 = vmatpush1.msra.mxu0 %v223
    %1767 = vmatprep.subr.mxu0 0.0
    %1768 = vmatpush1.msra.mxu0 %v224
    %1769 = vmatprep.subr.mxu0 0.0
    %1770 = vmatpush1.msra.mxu0 %v225
    %1771 = vmatprep.subr.mxu0 0.0
    %1772 = vmatpush1.msra.mxu0 0.0
    %1773 = vmatprep.subr.mxu0 0.0
    %1774 = vmatpush1.msra.mxu0 0.0
    %1775 = vmatprep.subr.mxu0 0.0
    %1776 = vmatpush1.msra.mxu0 0.0
    %1777 = vmatprep.subr.mxu0 0.0
    %1778 = vmatpush1.msra.mxu0 0.0
    %1779 = vmatprep.subr.mxu0 0.0
    %1780 = vmatpush1.msra.mxu0 0.0
    %1781 = vmatprep.subr.mxu0 0.0
    %1782 = vmatpush1.msra.mxu0 0.0
    %1783 = vmatprep.subr.mxu0 0.0
    %1784 = vmatpush1.msra.mxu0 0.0
    %1785 = vmatprep.subr.mxu0 0.0
    %1786 = vmatpush1.msra.mxu0 0.0
    %1787 = vmatprep.subr.mxu0 0.0
    %1788 = vmatpush1.msra.mxu0 0.0
    %1789 = vmatprep.subr.mxu0 0.0
    %1790 = vmatpush1.msra.mxu0 0.0
    %1791 = vmatprep.subr.mxu0 0.0
    %1792 = vmatpush1.msra.mxu0 0.0
    %1793 = vmatprep.subr.mxu0 0.0
    %1794 = vmatpush1.msra.mxu0 0.0
    %1795 = vmatprep.subr.mxu0 0.0
    %1796 = vmatpush1.msra.mxu0 0.0
    %1797 = vmatprep.subr.mxu0 0.0
    %1798 = vmatpush1.msra.mxu0 0.0
    %1799 = vmatprep.subr.mxu0 0.0
    %1800 = vmatpush1.msra.mxu0 0.0
    %1801 = vmatprep.subr.mxu0 0.0
    %1802 = vmatpush1.msra.mxu0 0.0
    %1803 = vmatprep.subr.mxu0 0.0
    %1804 = vmatpush1.msra.mxu0 0.0
    %1805 = vmatprep.subr.mxu0 0.0
    %1806 = vmatpush1.msra.mxu0 0.0
    %1807 = vmatprep.subr.mxu0 0.0
    %1808 = vmatpush1.msra.mxu0 0.0
    %1809 = vmatprep.subr.mxu0 0.0
    %1810 = vmatpush1.msra.mxu0 0.0
    %1811 = vmatprep.subr.mxu0 0.0
    %1812 = vmatpush1.msra.mxu0 0.0
    %1813 = vmatprep.subr.mxu0 0.0
    %1814 = vmatpush1.msra.mxu0 0.0
    %1815 = vmatprep.subr.mxu0 0.0
    %1816 = vmatpush1.msra.mxu0 0.0
    %1817 = vmatprep.subr.mxu0 0.0
    %1818 = vmatpush1.msra.mxu0 0.0
    %1819 = vmatprep.mubr.f32.mxu0 0.0
    %1820 = vmatmul.mubr.f32.gmra.mrb[0].mxu0 %v1753
    %v1821 = vpop.f32.mrb[0].mxu0
    %v1822 = vadd.f32 %v1749, %v1821
    %v1823 = vpop.f32.mrb[0].mxu0
    %1824 = vdwg.mxu0
    %v1825 = vadd.f32 %v1664, %v1822
    %v1826 = vsel %vm1636, %v1825, 0.0
    %1827 = vadd.xlane.f32.xlu0 %v1826
    %v1828 = vpop.xlane.xlu0 %1827
    %v1829 = vmul.f32 %v1828, %v1640
    %v1830 = vsub.f32 %v1825, %v1829
    %v1831 = vmul.f32 %v1830, %v1830
    %v1832 = vsel %vm1636, %v1831, 0.0
    %1833 = vadd.xlane.f32.xlu0 %v1832
    %v1834 = vpop.xlane.xlu0 %1833
    %v1835 = vmul.f32 %v1834, %v1640
    %v1836 = vadd.f32 %v1835, 1e-05
    %v1837 = vrsqrt.pop %v1836
    %v1838 = vmul.f32 %v1830, %v1837
    %v1840 = vlaneseq
    %v1841 = vshrl.u32 %v1840, 7
    %v1842 = vsub.s32 0, %v1841
    %v1843 = vrot.slane %v227, %v1842
    %v1845 = vmul.f32 %v1838, %v1843
    %v1847 = vlaneseq
    %v1848 = vshrl.u32 %v1847, 7
    %v1849 = vsub.s32 0, %v1848
    %v1850 = vrot.slane %v228, %v1849
    %v1852 = vadd.f32 %v1845, %v1850
    %v1854 = vlaneseq
    %v1855 = vshrl.u32 %v1854, 7
    %v1856 = vsub.s32 0, %v1855
    %v1857 = vrot.slane %v235, %v1856
    %v1860 = vsel %vm440, %v1852, 0
    %1862 = vmatprep.subr.mxu0 0.0
    %1863 = vmatpush1.msra.mxu0 %v230
    %1864 = vmatprep.subr.mxu0 0.0
    %1865 = vmatpush1.msra.mxu0 %v231
    %1866 = vmatprep.subr.mxu0 0.0
    %1867 = vmatpush1.msra.mxu0 %v232
    %1868 = vmatprep.subr.mxu0 0.0
    %1869 = vmatpush1.msra.mxu0 %v233
    %1870 = vmatprep.subr.mxu0 0.0
    %1871 = vmatpush1.msra.mxu0 0.0
    %1872 = vmatprep.subr.mxu0 0.0
    %1873 = vmatpush1.msra.mxu0 0.0
    %1874 = vmatprep.subr.mxu0 0.0
    %1875 = vmatpush1.msra.mxu0 0.0
    %1876 = vmatprep.subr.mxu0 0.0
    %1877 = vmatpush1.msra.mxu0 0.0
    %1878 = vmatprep.subr.mxu0 0.0
    %1879 = vmatpush1.msra.mxu0 0.0
    %1880 = vmatprep.subr.mxu0 0.0
    %1881 = vmatpush1.msra.mxu0 0.0
    %1882 = vmatprep.subr.mxu0 0.0
    %1883 = vmatpush1.msra.mxu0 0.0
    %1884 = vmatprep.subr.mxu0 0.0
    %1885 = vmatpush1.msra.mxu0 0.0
    %1886 = vmatprep.subr.mxu0 0.0
    %1887 = vmatpush1.msra.mxu0 0.0
    %1888 = vmatprep.subr.mxu0 0.0
    %1889 = vmatpush1.msra.mxu0 0.0
    %1890 = vmatprep.subr.mxu0 0.0
    %1891 = vmatpush1.msra.mxu0 0.0
    %1892 = vmatprep.subr.mxu0 0.0
    %1893 = vmatpush1.msra.mxu0 0.0
    %1894 = vmatprep.subr.mxu0 0.0
    %1895 = vmatpush1.msra.mxu0 0.0
    %1896 = vmatprep.subr.mxu0 0.0
    %1897 = vmatpush1.msra.mxu0 0.0
    %1898 = vmatprep.subr.mxu0 0.0
    %1899 = vmatpush1.msra.mxu0 0.0
    %1900 = vmatprep.subr.mxu0 0.0
    %1901 = vmatpush1.msra.mxu0 0.0
    %1902 = vmatprep.subr.mxu0 0.0
    %1903 = vmatpush1.msra.mxu0 0.0
    %1904 = vmatprep.subr.mxu0 0.0
    %1905 = vmatpush1.msra.mxu0 0.0
    %1906 = vmatprep.subr.mxu0 0.0
    %1907 = vmatpush1.msra.mxu0 0.0
    %1908 = vmatprep.subr.mxu0 0.0
    %1909 = vmatpush1.msra.mxu0 0.0
    %1910 = vmatprep.subr.mxu0 0.0
    %1911 = vmatpush1.msra.mxu0 0.0
    %1912 = vmatprep.subr.mxu0 0.0
    %1913 = vmatpush1.msra.mxu0 0.0
    %1914 = vmatprep.subr.mxu0 0.0
    %1915 = vmatpush1.msra.mxu0 0.0
    %1916 = vmatprep.subr.mxu0 0.0
    %1917 = vmatpush1.msra.mxu0 0.0
    %1918 = vmatprep.subr.mxu0 0.0
    %1919 = vmatpush1.msra.mxu0 0.0
    %1920 = vmatprep.subr.mxu0 0.0
    %1921 = vmatpush1.msra.mxu0 0.0
    %1922 = vmatprep.subr.mxu0 0.0
    %1923 = vmatpush1.msra.mxu0 0.0
    %1924 = vmatprep.subr.mxu0 0.0
    %1925 = vmatpush1.msra.mxu0 0.0
    %1926 = vmatprep.mubr.f32.mxu0 0.0
    %1927 = vmatmul.mubr.f32.gmra.mrb[0].mxu0 %v1860
    %v1928 = vpop.f32.mrb[0].mxu0
    %v1929 = vadd.f32 %v1857, %v1928
    %v1930 = vpop.f32.mrb[0].mxu0
    %1931 = vdwg.mxu0
    %v1933 = vlaneseq
    %v1934 = vshrl.u32 %v1933, 7
    %v1935 = vsub.s32 0, %v1934
    %v1936 = vrot.slane %v242, %v1935
    %1938 = vmatprep.subr.mxu0 0.0
    %1939 = vmatpush1.msra.mxu0 %v237
    %1940 = vmatprep.subr.mxu0 0.0
    %1941 = vmatpush1.msra.mxu0 %v238
    %1942 = vmatprep.subr.mxu0 0.0
    %1943 = vmatpush1.msra.mxu0 %v239
    %1944 = vmatprep.subr.mxu0 0.0
    %1945 = vmatpush1.msra.mxu0 %v240
    %1946 = vmatprep.subr.mxu0 0.0
    %1947 = vmatpush1.msra.mxu0 0.0
    %1948 = vmatprep.subr.mxu0 0.0
    %1949 = vmatpush1.msra.mxu0 0.0
    %1950 = vmatprep.subr.mxu0 0.0
    %1951 = vmatpush1.msra.mxu0 0.0
    %1952 = vmatprep.subr.mxu0 0.0
    %1953 = vmatpush1.msra.mxu0 0.0
    %1954 = vmatprep.subr.mxu0 0.0
    %1955 = vmatpush1.msra.mxu0 0.0
    %1956 = vmatprep.subr.mxu0 0.0
    %1957 = vmatpush1.msra.mxu0 0.0
    %1958 = vmatprep.subr.mxu0 0.0
    %1959 = vmatpush1.msra.mxu0 0.0
    %1960 = vmatprep.subr.mxu0 0.0
    %1961 = vmatpush1.msra.mxu0 0.0
    %1962 = vmatprep.subr.mxu0 0.0
    %1963 = vmatpush1.msra.mxu0 0.0
    %1964 = vmatprep.subr.mxu0 0.0
    %1965 = vmatpush1.msra.mxu0 0.0
    %1966 = vmatprep.subr.mxu0 0.0
    %1967 = vmatpush1.msra.mxu0 0.0
    %1968 = vmatprep.subr.mxu0 0.0
    %1969 = vmatpush1.msra.mxu0 0.0
    %1970 = vmatprep.subr.mxu0 0.0
    %1971 = vmatpush1.msra.mxu0 0.0
    %1972 = vmatprep.subr.mxu0 0.0
    %1973 = vmatpush1.msra.mxu0 0.0
    %1974 = vmatprep.subr.mxu0 0.0
    %1975 = vmatpush1.msra.mxu0 0.0
    %1976 = vmatprep.subr.mxu0 0.0
    %1977 = vmatpush1.msra.mxu0 0.0
    %1978 = vmatprep.subr.mxu0 0.0
    %1979 = vmatpush1.msra.mxu0 0.0
    %1980 = vmatprep.subr.mxu0 0.0
    %1981 = vmatpush1.msra.mxu0 0.0
    %1982 = vmatprep.subr.mxu0 0.0
    %1983 = vmatpush1.msra.mxu0 0.0
    %1984 = vmatprep.subr.mxu0 0.0
    %1985 = vmatpush1.msra.mxu0 0.0
    %1986 = vmatprep.subr.mxu0 0.0
    %1987 = vmatpush1.msra.mxu0 0.0
    %1988 = vmatprep.subr.mxu0 0.0
    %1989 = vmatpush1.msra.mxu0 0.0
    %1990 = vmatprep.subr.mxu0 0.0
    %1991 = vmatpush1.msra.mxu0 0.0
    %1992 = vmatprep.subr.mxu0 0.0
    %1993 = vmatpush1.msra.mxu0 0.0
    %1994 = vmatprep.subr.mxu0 0.0
    %1995 = vmatpush1.msra.mxu0 0.0
    %1996 = vmatprep.subr.mxu0 0.0
    %1997 = vmatpush1.msra.mxu0 0.0
    %1998 = vmatprep.subr.mxu0 0.0
    %1999 = vmatpush1.msra.mxu0 0.0
    %2000 = vmatprep.subr.mxu0 0.0
    %2001 = vmatpush1.msra.mxu0 0.0
    %2002 = vmatprep.mubr.f32.mxu0 0.0
    %2003 = vmatmul.mubr.f32.gmra.mrb[0].mxu0 %v1860
    %v2004 = vpop.f32.mrb[0].mxu0
    %v2005 = vadd.f32 %v1936, %v2004
    %v2006 = vpop.f32.mrb[0].mxu0
    %2007 = vdwg.mxu0
    %v2009 = vlaneseq
    %v2010 = vshrl.u32 %v2009, 7
    %v2011 = vsub.s32 0, %v2010
    %v2012 = vrot.slane %v249, %v2011
    %2014 = vmatprep.subr.mxu0 0.0
    %2015 = vmatpush1.msra.mxu0 %v244
    %2016 = vmatprep.subr.mxu0 0.0
    %2017 = vmatpush1.msra.mxu0 %v245
    %2018 = vmatprep.subr.mxu0 0.0
    %2019 = vmatpush1.msra.mxu0 %v246
    %2020 = vmatprep.subr.mxu0 0.0
    %2021 = vmatpush1.msra.mxu0 %v247
    %2022 = vmatprep.subr.mxu0 0.0
    %2023 = vmatpush1.msra.mxu0 0.0
    %2024 = vmatprep.subr.mxu0 0.0
    %2025 = vmatpush1.msra.mxu0 0.0
    %2026 = vmatprep.subr.mxu0 0.0
    %2027 = vmatpush1.msra.mxu0 0.0
    %2028 = vmatprep.subr.mxu0 0.0
    %2029 = vmatpush1.msra.mxu0 0.0
    %2030 = vmatprep.subr.mxu0 0.0
    %2031 = vmatpush1.msra.mxu0 0.0
    %2032 = vmatprep.subr.mxu0 0.0
    %2033 = vmatpush1.msra.mxu0 0.0
    %2034 = vmatprep.subr.mxu0 0.0
    %2035 = vmatpush1.msra.mxu0 0.0
    %2036 = vmatprep.subr.mxu0 0.0
    %2037 = vmatpush1.msra.mxu0 0.0
    %2038 = vmatprep.subr.mxu0 0.0
    %2039 = vmatpush1.msra.mxu0 0.0
    %2040 = vmatprep.subr.mxu0 0.0
    %2041 = vmatpush1.msra.mxu0 0.0
    %2042 = vmatprep.subr.mxu0 0.0
    %2043 = vmatpush1.msra.mxu0 0.0
    %2044 = vmatprep.subr.mxu0 0.0
    %2045 = vmatpush1.msra.mxu0 0.0
    %2046 = vmatprep.subr.mxu0 0.0
    %2047 = vmatpush1.msra.mxu0 0.0
    %2048 = vmatprep.subr.mxu0 0.0
    %2049 = vmatpush1.msra.mxu0 0.0
    %2050 = vmatprep.subr.mxu0 0.0
    %2051 = vmatpush1.msra.mxu0 0.0
    %2052 = vmatprep.subr.mxu0 0.0
    %2053 = vmatpush1.msra.mxu0 0.0
    %2054 = vmatprep.subr.mxu0 0.0
    %2055 = vmatpush1.msra.mxu0 0.0
    %2056 = vmatprep.subr.mxu0 0.0
    %2057 = vmatpush1.msra.mxu0 0.0
    %2058 = vmatprep.subr.mxu0 0.0
    %2059 = vmatpush1.msra.mxu0 0.0
    %2060 = vmatprep.subr.mxu0 0.0
    %2061 = vmatpush1.msra.mxu0 0.0
    %2062 = vmatprep.subr.mxu0 0.0
    %2063 = vmatpush1.msra.mxu0 0.0
    %2064 = vmatprep.subr.mxu0 0.0
    %2065 = vmatpush1.msra.mxu0 0.0
    %2066 = vmatprep.subr.mxu0 0.0
    %2067 = vmatpush1.msra.mxu0 0.0
    %2068 = vmatprep.subr.mxu0 0.0
    %2069 = vmatpush1.msra.mxu0 0.0
    %2070 = vmatprep.subr.mxu0 0.0
    %2071 = vmatpush1.msra.mxu0 0.0
    %2072 = vmatprep.subr.mxu0 0.0
    %2073 = vmatpush1.msra.mxu0 0.0
    %2074 = vmatprep.subr.mxu0 0.0
    %2075 = vmatpush1.msra.mxu0 0.0
    %2076 = vmatprep.subr.mxu0 0.0
    %2077 = vmatpush1.msra.mxu0 0.0
    %2078 = vmatprep.mubr.f32.mxu0 0.0
    %2079 = vmatmul.mubr.f32.gmra.mrb[0].mxu0 %v1860
    %v2080 = vpop.f32.mrb[0].mxu0
    %v2081 = vadd.f32 %v2012, %v2080
    %v2082 = vpop.f32.mrb[0].mxu0
    %2083 = vdwg.mxu0
    %v2085 = vsel %vm666, %v1929, 0
    %v2088 = vsel %vm666, %v2005, 0
    %2090 = vmatprep.subr.mxu0 0.0
    %2091 = vmatpush1.xpose.msra.mxu0 %v2088
    %2092 = vmatprep.subr.mxu0 0.0
    %2093 = vmatpush1.xpose.msra.mxu0 0.0
    %2094 = vmatprep.subr.mxu0 0.0
    %2095 = vmatpush1.xpose.msra.mxu0 0.0
    %2096 = vmatprep.subr.mxu0 0.0
    %2097 = vmatpush1.xpose.msra.mxu0 0.0
    %2098 = vmatprep.subr.mxu0 0.0
    %2099 = vmatpush1.xpose.msra.mxu0 0.0
    %2100 = vmatprep.subr.mxu0 0.0
    %2101 = vmatpush1.xpose.msra.mxu0 0.0
    %2102 = vmatprep.subr.mxu0 0.0
    %2103 = vmatpush1.xpose.msra.mxu0 0.0
    %2104 = vmatprep.subr.mxu0 0.0
    %2105 = vmatpush1.xpose.msra.mxu0 0.0
    %2106 = vmatprep.subr.mxu0 0.0
    %2107 = vmatpush1.xpose.msra.mxu0 0.0
    %2108 = vmatprep.subr.mxu0 0.0
    %2109 = vmatpush1.xpose.msra.mxu0 0.0
    %2110 = vmatprep.subr.mxu0 0.0
    %2111 = vmatpush1.xpose.msra.mxu0 0.0
    %2112 = vmatprep.subr.mxu0 0.0
    %2113 = vmatpush1.xpose.msra.mxu0 0.0
    %2114 = vmatprep.subr.mxu0 0.0
    %2115 = vmatpush1.xpose.msra.mxu0 0.0
    %2116 = vmatprep.subr.mxu0 0.0
    %2117 = vmatpush1.xpose.msra.mxu0 0.0
    %2118 = vmatprep.subr.mxu0 0.0
    %2119 = vmatpush1.xpose.msra.mxu0 0.0
    %2120 = vmatprep.subr.mxu0 0.0
    %2121 = vmatpush1.xpose.msra.mxu0 0.0
    %2122 = vmatprep.subr.mxu0 0.0
    %2123 = vmatpush1.xpose.msra.mxu0 0.0
    %2124 = vmatprep.subr.mxu0 0.0
    %2125 = vmatpush1.xpose.msra.mxu0 0.0
    %2126 = vmatprep.subr.mxu0 0.0
    %2127 = vmatpush1.xpose.msra.mxu0 0.0
    %2128 = vmatprep.subr.mxu0 0.0
    %2129 = vmatpush1.xpose.msra.mxu0 0.0
    %2130 = vmatprep.subr.mxu0 0.0
    %2131 = vmatpush1.xpose.msra.mxu0 0.0
    %2132 = vmatprep.subr.mxu0 0.0
    %2133 = vmatpush1.xpose.msra.mxu0 0.0
    %2134 = vmatprep.subr.mxu0 0.0
    %2135 = vmatpush1.xpose.msra.mxu0 0.0
    %2136 = vmatprep.subr.mxu0 0.0
    %2137 = vmatpush1.xpose.msra.mxu0 0.0
    %2138 = vmatprep.subr.mxu0 0.0
    %2139 = vmatpush1.xpose.msra.mxu0 0.0
    %2140 = vmatprep.subr.mxu0 0.0
    %2141 = vmatpush1.xpose.msra.mxu0 0.0
    %2142 = vmatprep.subr.mxu0 0.0
    %2143 = vmatpush1.xpose.msra.mxu0 0.0
    %2144 = vmatprep.subr.mxu0 0.0
    %2145 = vmatpush1.xpose.msra.mxu0 0.0
    %2146 = vmatprep.subr.mxu0 0.0
    %2147 = vmatpush1.xpose.msra.mxu0 0.0
    %2148 = vmatprep.subr.mxu0 0.0
    %2149 = vmatpush1.xpose.msra.mxu0 0.0
    %2150 = vmatprep.subr.mxu0 0.0
    %2151 = vmatpush1.xpose.msra.mxu0 0.0
    %2152 = vmatprep.subr.mxu0 0.0
    %2153 = vmatpush1.xpose.msra.mxu0 0.0
    %2154 = vmatprep.mubr.f32.mxu0 0.0
    %2155 = vmatmul.mubr.f32.gmra.mrb[0].mxu0 %v2085
    %v2156 = vpop.f32.mrb[0].mxu0
    %v2157 = vadd.f32 0.0, %v2156
    %v2158 = vpop.f32.mrb[0].mxu0
    %2159 = vdwg.mxu0
    %v2160 = vmul.f32 %v2157, 0.35355338
    %v2161 = vsel %vm744, %v2160, -inf
    %2162 = vmax.xlane.f32.xlu0 %v2161
    %v2163 = vpop.xlane.xlu0 %2162
    %v2164 = vsub.f32 %v2160, %v2163
    %v2165 = vmul.f32 %v2164, 1.442695
    %v2166 = vpow.pop %v2165
    %v2167 = vsel %vm744, %v2166, 0.0
    %2168 = vadd.xlane.f32.xlu0 %v2167
    %v2169 = vpop.xlane.xlu0 %2168
    %v2170 = vrcp.pop %v2169
    %v2171 = vmul.f32 %v2166, %v2170
    %v2173 = vsel %vm285, %v2171, 0
    %v2176 = vsel %vm759, %v2081, 0
    %2178 = vmatprep.subr.mxu0 0.0
    %2179 = vmatpush1.msra.mxu0 %v2176
    %2180 = vmatprep.subr.mxu0 0.0
    %2181 = vmatpush1.msra.mxu0 0.0
    %2182 = vmatprep.subr.mxu0 0.0
    %2183 = vmatpush1.msra.mxu0 0.0
    %2184 = vmatprep.subr.mxu0 0.0
    %2185 = vmatpush1.msra.mxu0 0.0
    %2186 = vmatprep.subr.mxu0 0.0
    %2187 = vmatpush1.msra.mxu0 0.0
    %2188 = vmatprep.subr.mxu0 0.0
    %2189 = vmatpush1.msra.mxu0 0.0
    %2190 = vmatprep.subr.mxu0 0.0
    %2191 = vmatpush1.msra.mxu0 0.0
    %2192 = vmatprep.subr.mxu0 0.0
    %2193 = vmatpush1.msra.mxu0 0.0
    %2194 = vmatprep.subr.mxu0 0.0
    %2195 = vmatpush1.msra.mxu0 0.0
    %2196 = vmatprep.subr.mxu0 0.0
    %2197 = vmatpush1.msra.mxu0 0.0
    %2198 = vmatprep.subr.mxu0 0.0
    %2199 = vmatpush1.msra.mxu0 0.0
    %2200 = vmatprep.subr.mxu0 0.0
    %2201 = vmatpush1.msra.mxu0 0.0
    %2202 = vmatprep.subr.mxu0 0.0
    %2203 = vmatpush1.msra.mxu0 0.0
    %2204 = vmatprep.subr.mxu0 0.0
    %2205 = vmatpush1.msra.mxu0 0.0
    %2206 = vmatprep.subr.mxu0 0.0
    %2207 = vmatpush1.msra.mxu0 0.0
    %2208 = vmatprep.subr.mxu0 0.0
    %2209 = vmatpush1.msra.mxu0 0.0
    %2210 = vmatprep.subr.mxu0 0.0
    %2211 = vmatpush1.msra.mxu0 0.0
    %2212 = vmatprep.subr.mxu0 0.0
    %2213 = vmatpush1.msra.mxu0 0.0
    %2214 = vmatprep.subr.mxu0 0.0
    %2215 = vmatpush1.msra.mxu0 0.0
    %2216 = vmatprep.subr.mxu0 0.0
    %2217 = vmatpush1.msra.mxu0 0.0
    %2218 = vmatprep.subr.mxu0 0.0
    %2219 = vmatpush1.msra.mxu0 0.0
    %2220 = vmatprep.subr.mxu0 0.0
    %2221 = vmatpush1.msra.mxu0 0.0
    %2222 = vmatprep.subr.mxu0 0.0
    %2223 = vmatpush1.msra.mxu0 0.0
    %2224 = vmatprep.subr.mxu0 0.0
    %2225 = vmatpush1.msra.mxu0 0.0
    %2226 = vmatprep.subr.mxu0 0.0
    %2227 = vmatpush1.msra.mxu0 0.0
    %2228 = vmatprep.subr.mxu0 0.0
    %2229 = vmatpush1.msra.mxu0 0.0
    %2230 = vmatprep.subr.mxu0 0.0
    %2231 = vmatpush1.msra.mxu0 0.0
    %2232 = vmatprep.subr.mxu0 0.0
    %2233 = vmatpush1.msra.mxu0 0.0
    %2234 = vmatprep.subr.mxu0 0.0
    %2235 = vmatpush1.msra.mxu0 0.0
    %2236 = vmatprep.subr.mxu0 0.0
    %2237 = vmatpush1.msra.mxu0 0.0
    %2238 = vmatprep.subr.mxu0 0.0
    %2239 = vmatpush1.msra.mxu0 0.0
    %2240 = vmatprep.subr.mxu0 0.0
    %2241 = vmatpush1.msra.mxu0 0.0
    %2242 = vmatprep.mubr.f32.mxu0 0.0
    %2243 = vmatmul.mubr.f32.gmra.mrb[0].mxu0 %v2173
    %v2244 = vpop.f32.mrb[0].mxu0
    %v2245 = vadd.f32 0.0, %v2244
    %v2246 = vpop.f32.mrb[0].mxu0
    %2247 = vdwg.mxu0
    %2248 = vrot.lane.b32.xlu0 %v1929, 120
    %v2249 = vpop.permute.xlu0 %2248
    %2250 = vrot.lane.b32.xlu0 %v2005, 120
    %v2251 = vpop.permute.xlu0 %2250
    %v2252 = vsel %vm666, %v2249, 0
    %v2254 = vsel %vm666, %v2251, 0
    %2256 = vmatprep.subr.mxu0 0.0
    %2257 = vmatpush1.xpose.msra.mxu0 %v2254
    %2258 = vmatprep.subr.mxu0 0.0
    %2259 = vmatpush1.xpose.msra.mxu0 0.0
    %2260 = vmatprep.subr.mxu0 0.0
    %2261 = vmatpush1.xpose.msra.mxu0 0.0
    %2262 = vmatprep.subr.mxu0 0.0
    %2263 = vmatpush1.xpose.msra.mxu0 0.0
    %2264 = vmatprep.subr.mxu0 0.0
    %2265 = vmatpush1.xpose.msra.mxu0 0.0
    %2266 = vmatprep.subr.mxu0 0.0
    %2267 = vmatpush1.xpose.msra.mxu0 0.0
    %2268 = vmatprep.subr.mxu0 0.0
    %2269 = vmatpush1.xpose.msra.mxu0 0.0
    %2270 = vmatprep.subr.mxu0 0.0
    %2271 = vmatpush1.xpose.msra.mxu0 0.0
    %2272 = vmatprep.subr.mxu0 0.0
    %2273 = vmatpush1.xpose.msra.mxu0 0.0
    %2274 = vmatprep.subr.mxu0 0.0
    %2275 = vmatpush1.xpose.msra.mxu0 0.0
    %2276 = vmatprep.subr.mxu0 0.0
    %2277 = vmatpush1.xpose.msra.mxu0 0.0
    %2278 = vmatprep.subr.mxu0 0.0
    %2279 = vmatpush1.xpose.msra.mxu0 0.0
    %2280 = vmatprep.subr.mxu0 0.0
    %2281 = vmatpush1.xpose.msra.mxu0 0.0
    %2282 = vmatprep.subr.mxu0 0.0
    %2283 = vmatpush1.xpose.msra.mxu0 0.0
    %2284 = vmatprep.subr.mxu0 0.0
    %2285 = vmatpush1.xpose.msra.mxu0 0.0
    %2286 = vmatprep.subr.mxu0 0.0
    %2287 = vmatpush1.xpose.msra.mxu0 0.0
    %2288 = vmatprep.subr.mxu0 0.0
    %2289 = vmatpush1.xpose.msra.mxu0 0.0
    %2290 = vmatprep.subr.mxu0 0.0
    %2291 = vmatpush1.xpose.msra.mxu0 0.0
    %2292 = vmatprep.subr.mxu0 0.0
    %2293 = vmatpush1.xpose.msra.mxu0 0.0
    %2294 = vmatprep.subr.mxu0 0.0
    %2295 = vmatpush1.xpose.msra.mxu0 0.0
    %2296 = vmatprep.subr.mxu0 0.0
    %2297 = vmatpush1.xpose.msra.mxu0 0.0
    %2298 = vmatprep.subr.mxu0 0.0
    %2299 = vmatpush1.xpose.msra.mxu0 0.0
    %2300 = vmatprep.subr.mxu0 0.0
    %2301 = vmatpush1.xpose.msra.mxu0 0.0
    %2302 = vmatprep.subr.mxu0 0.0
    %2303 = vmatpush1.xpose.msra.mxu0 0.0
    %2304 = vmatprep.subr.mxu0 0.0
    %2305 = vmatpush1.xpose.msra.mxu0 0.0
    %2306 = vmatprep.subr.mxu0 0.0
    %2307 = vmatpush1.xpose.msra.mxu0 0.0
    %2308 = vmatprep.subr.mxu0 0.0
    %2309 = vmatpush1.xpose.msra.mxu0 0.0
    %2310 = vmatprep.subr.mxu0 0.0
    %2311 = vmatpush1.xpose.msra.mxu0 0.0
    %2312 = vmatprep.subr.mxu0 0.0
    %2313 = vmatpush1.xpose.msra.mxu0 0.0
    %2314 = vmatprep.subr.mxu0 0.0
    %2315 = vmatpush1.xpose.msra.mxu0 0.0
    %2316 = vmatprep.subr.mxu0 0.0
    %2317 = vmatpush1.xpose.msra.mxu0 0.0
    %2318 = vmatprep.subr.mxu0 0.0
    %2319 = vmatpush1.xpose.msra.mxu0 0.0
    %2320 = vmatprep.mubr.f32.mxu0 0.0
    %2321 = vmatmul.mubr.f32.gmra.mrb[0].mxu0 %v2252
    %v2322 = vpop.f32.mrb[0].mxu0
    %v2323 = vadd.f32 0.0, %v2322
    %v2324 = vpop.f32.mrb[0].mxu0
    %2325 = vdwg.mxu0
    %v2326 = vmul.f32 %v2323, 0.35355338
    %v2327 = vsel %vm744, %v2326, -inf
    %2328 = vmax.xlane.f32.xlu0 %v2327
    %v2329 = vpop.xlane.xlu0 %2328
    %v2330 = vsub.f32 %v2326, %v2329
    %v2331 = vmul.f32 %v2330, 1.442695
    %v2332 = vpow.pop %v2331
    %v2333 = vsel %vm744, %v2332, 0.0
    %2334 = vadd.xlane.f32.xlu0 %v2333
    %v2335 = vpop.xlane.xlu0 %2334
    %v2336 = vrcp.pop %v2335
    %v2337 = vmul.f32 %v2332, %v2336
    %2338 = vrot.lane.b32.xlu0 %v2081, 120
    %v2339 = vpop.permute.xlu0 %2338
    %v2341 = vsel %vm285, %v2337, 0
    %v2343 = vsel %vm759, %v2339, 0
    %2345 = vmatprep.subr.mxu0 0.0
    %2346 = vmatpush1.msra.mxu0 %v2343
    %2347 = vmatprep.subr.mxu0 0.0
    %2348 = vmatpush1.msra.mxu0 0.0
    %2349 = vmatprep.subr.mxu0 0.0
    %2350 = vmatpush1.msra.mxu0 0.0
    %2351 = vmatprep.subr.mxu0 0.0
    %2352 = vmatpush1.msra.mxu0 0.0
    %2353 = vmatprep.subr.mxu0 0.0
    %2354 = vmatpush1.msra.mxu0 0.0
    %2355 = vmatprep.subr.mxu0 0.0
    %2356 = vmatpush1.msra.mxu0 0.0
    %2357 = vmatprep.subr.mxu0 0.0
    %2358 = vmatpush1.msra.mxu0 0.0
    %2359 = vmatprep.subr.mxu0 0.0
    %2360 = vmatpush1.msra.mxu0 0.0
    %2361 = vmatprep.subr.mxu0 0.0
    %2362 = vmatpush1.msra.mxu0 0.0
    %2363 = vmatprep.subr.mxu0 0.0
    %2364 = vmatpush1.msra.mxu0 0.0
    %2365 = vmatprep.subr.mxu0 0.0
    %2366 = vmatpush1.msra.mxu0 0.0
    %2367 = vmatprep.subr.mxu0 0.0
    %2368 = vmatpush1.msra.mxu0 0.0
    %2369 = vmatprep.subr.mxu0 0.0
    %2370 = vmatpush1.msra.mxu0 0.0
    %2371 = vmatprep.subr.mxu0 0.0
    %2372 = vmatpush1.msra.mxu0 0.0
    %2373 = vmatprep.subr.mxu0 0.0
    %2374 = vmatpush1.msra.mxu0 0.0
    %2375 = vmatprep.subr.mxu0 0.0
    %2376 = vmatpush1.msra.mxu0 0.0
    %2377 = vmatprep.subr.mxu0 0.0
    %2378 = vmatpush1.msra.mxu0 0.0
    %2379 = vmatprep.subr.mxu0 0.0
    %2380 = vmatpush1.msra.mxu0 0.0
    %2381 = vmatprep.subr.mxu0 0.0
    %2382 = vmatpush1.msra.mxu0 0.0
    %2383 = vmatprep.subr.mxu0 0.0
    %2384 = vmatpush1.msra.mxu0 0.0
    %2385 = vmatprep.subr.mxu0 0.0
    %2386 = vmatpush1.msra.mxu0 0.0
    %2387 = vmatprep.subr.mxu0 0.0
    %2388 = vmatpush1.msra.mxu0 0.0
    %2389 = vmatprep.subr.mxu0 0.0
    %2390 = vmatpush1.msra.mxu0 0.0
    %2391 = vmatprep.subr.mxu0 0.0
    %2392 = vmatpush1.msra.mxu0 0.0
    %2393 = vmatprep.subr.mxu0 0.0
    %2394 = vmatpush1.msra.mxu0 0.0
    %2395 = vmatprep.subr.mxu0 0.0
    %2396 = vmatpush1.msra.mxu0 0.0
    %2397 = vmatprep.subr.mxu0 0.0
    %2398 = vmatpush1.msra.mxu0 0.0
    %2399 = vmatprep.subr.mxu0 0.0
    %2400 = vmatpush1.msra.mxu0 0.0
    %2401 = vmatprep.subr.mxu0 0.0
    %2402 = vmatpush1.msra.mxu0 0.0
    %2403 = vmatprep.subr.mxu0 0.0
    %2404 = vmatpush1.msra.mxu0 0.0
    %2405 = vmatprep.subr.mxu0 0.0
    %2406 = vmatpush1.msra.mxu0 0.0
    %2407 = vmatprep.subr.mxu0 0.0
    %2408 = vmatpush1.msra.mxu0 0.0
    %2409 = vmatprep.mubr.f32.mxu0 0.0
    %2410 = vmatmul.mubr.f32.gmra.mrb[0].mxu0 %v2341
    %v2411 = vpop.f32.mrb[0].mxu0
    %v2412 = vadd.f32 0.0, %v2411
    %v2413 = vpop.f32.mrb[0].mxu0
    %2414 = vdwg.mxu0
    %v2416 = vsel %vm666, %v2412, 0
    %2418 = vmatprep.subr.mxu0 0.0
    %2419 = vmatpush1.msra.mxu0 %v252
    %2420 = vmatprep.subr.mxu0 0.0
    %2421 = vmatpush1.msra.mxu0 0.0
    %2422 = vmatprep.subr.mxu0 0.0
    %2423 = vmatpush1.msra.mxu0 0.0
    %2424 = vmatprep.subr.mxu0 0.0
    %2425 = vmatpush1.msra.mxu0 0.0
    %2426 = vmatprep.subr.mxu0 0.0
    %2427 = vmatpush1.msra.mxu0 0.0
    %2428 = vmatprep.subr.mxu0 0.0
    %2429 = vmatpush1.msra.mxu0 0.0
    %2430 = vmatprep.subr.mxu0 0.0
    %2431 = vmatpush1.msra.mxu0 0.0
    %2432 = vmatprep.subr.mxu0 0.0
    %2433 = vmatpush1.msra.mxu0 0.0
    %2434 = vmatprep.subr.mxu0 0.0
    %2435 = vmatpush1.msra.mxu0 0.0
    %2436 = vmatprep.subr.mxu0 0.0
    %2437 = vmatpush1.msra.mxu0 0.0
    %2438 = vmatprep.subr.mxu0 0.0
    %2439 = vmatpush1.msra.mxu0 0.0
    %2440 = vmatprep.subr.mxu0 0.0
    %2441 = vmatpush1.msra.mxu0 0.0
    %2442 = vmatprep.subr.mxu0 0.0
    %2443 = vmatpush1.msra.mxu0 0.0
    %2444 = vmatprep.subr.mxu0 0.0
    %2445 = vmatpush1.msra.mxu0 0.0
    %2446 = vmatprep.subr.mxu0 0.0
    %2447 = vmatpush1.msra.mxu0 0.0
    %2448 = vmatprep.subr.mxu0 0.0
    %2449 = vmatpush1.msra.mxu0 0.0
    %2450 = vmatprep.subr.mxu0 0.0
    %2451 = vmatpush1.msra.mxu0 0.0
    %2452 = vmatprep.subr.mxu0 0.0
    %2453 = vmatpush1.msra.mxu0 0.0
    %2454 = vmatprep.subr.mxu0 0.0
    %2455 = vmatpush1.msra.mxu0 0.0
    %2456 = vmatprep.subr.mxu0 0.0
    %2457 = vmatpush1.msra.mxu0 0.0
    %2458 = vmatprep.subr.mxu0 0.0
    %2459 = vmatpush1.msra.mxu0 0.0
    %2460 = vmatprep.subr.mxu0 0.0
    %2461 = vmatpush1.msra.mxu0 0.0
    %2462 = vmatprep.subr.mxu0 0.0
    %2463 = vmatpush1.msra.mxu0 0.0
    %2464 = vmatprep.subr.mxu0 0.0
    %2465 = vmatpush1.msra.mxu0 0.0
    %2466 = vmatprep.subr.mxu0 0.0
    %2467 = vmatpush1.msra.mxu0 0.0
    %2468 = vmatprep.subr.mxu0 0.0
    %2469 = vmatpush1.msra.mxu0 0.0
    %2470 = vmatprep.subr.mxu0 0.0
    %2471 = vmatpush1.msra.mxu0 0.0
    %2472 = vmatprep.subr.mxu0 0.0
    %2473 = vmatpush1.msra.mxu0 0.0
    %2474 = vmatprep.subr.mxu0 0.0
    %2475 = vmatpush1.msra.mxu0 0.0
    %2476 = vmatprep.subr.mxu0 0.0
    %2477 = vmatpush1.msra.mxu0 0.0
    %2478 = vmatprep.subr.mxu0 0.0
    %2479 = vmatpush1.msra.mxu0 0.0
    %2480 = vmatprep.subr.mxu0 0.0
    %2481 = vmatpush1.msra.mxu0 0.0
    %2482 = vmatprep.mubr.f32.mxu0 0.0
    %2483 = vmatmul.mubr.f32.gmra.mrb[0].mxu0 %v2416
    %v2484 = vpop.f32.mrb[0].mxu0
    %v2485 = vadd.f32 0.0, %v2484
    %v2486 = vpop.f32.mrb[0].mxu0
    %2487 = vdwg.mxu0
    %v2489 = vsel %vm666, %v2245, 0
    %2491 = vmatprep.subr.mxu0 0.0
    %2492 = vmatpush1.msra.mxu0 %v251
    %2493 = vmatprep.subr.mxu0 0.0
    %2494 = vmatpush1.msra.mxu0 0.0
    %2495 = vmatprep.subr.mxu0 0.0
    %2496 = vmatpush1.msra.mxu0 0.0
    %2497 = vmatprep.subr.mxu0 0.0
    %2498 = vmatpush1.msra.mxu0 0.0
    %2499 = vmatprep.subr.mxu0 0.0
    %2500 = vmatpush1.msra.mxu0 0.0
    %2501 = vmatprep.subr.mxu0 0.0
    %2502 = vmatpush1.msra.mxu0 0.0
    %2503 = vmatprep.subr.mxu0 0.0
    %2504 = vmatpush1.msra.mxu0 0.0
    %2505 = vmatprep.subr.mxu0 0.0
    %2506 = vmatpush1.msra.mxu0 0.0
    %2507 = vmatprep.subr.mxu0 0.0
    %2508 = vmatpush1.msra.mxu0 0.0
    %2509 = vmatprep.subr.mxu0 0.0
    %2510 = vmatpush1.msra.mxu0 0.0
    %2511 = vmatprep.subr.mxu0 0.0
    %2512 = vmatpush1.msra.mxu0 0.0
    %2513 = vmatprep.subr.mxu0 0.0
    %2514 = vmatpush1.msra.mxu0 0.0
    %2515 = vmatprep.subr.mxu0 0.0
    %2516 = vmatpush1.msra.mxu0 0.0
    %2517 = vmatprep.subr.mxu0 0.0
    %2518 = vmatpush1.msra.mxu0 0.0
    %2519 = vmatprep.subr.mxu0 0.0
    %2520 = vmatpush1.msra.mxu0 0.0
    %2521 = vmatprep.subr.mxu0 0.0
    %2522 = vmatpush1.msra.mxu0 0.0
    %2523 = vmatprep.subr.mxu0 0.0
    %2524 = vmatpush1.msra.mxu0 0.0
    %2525 = vmatprep.subr.mxu0 0.0
    %2526 = vmatpush1.msra.mxu0 0.0
    %2527 = vmatprep.subr.mxu0 0.0
    %2528 = vmatpush1.msra.mxu0 0.0
    %2529 = vmatprep.subr.mxu0 0.0
    %2530 = vmatpush1.msra.mxu0 0.0
    %2531 = vmatprep.subr.mxu0 0.0
    %2532 = vmatpush1.msra.mxu0 0.0
    %2533 = vmatprep.subr.mxu0 0.0
    %2534 = vmatpush1.msra.mxu0 0.0
    %2535 = vmatprep.subr.mxu0 0.0
    %2536 = vmatpush1.msra.mxu0 0.0
    %2537 = vmatprep.subr.mxu0 0.0
    %2538 = vmatpush1.msra.mxu0 0.0
    %2539 = vmatprep.subr.mxu0 0.0
    %2540 = vmatpush1.msra.mxu0 0.0
    %2541 = vmatprep.subr.mxu0 0.0
    %2542 = vmatpush1.msra.mxu0 0.0
    %2543 = vmatprep.subr.mxu0 0.0
    %2544 = vmatpush1.msra.mxu0 0.0
    %2545 = vmatprep.subr.mxu0 0.0
    %2546 = vmatpush1.msra.mxu0 0.0
    %2547 = vmatprep.subr.mxu0 0.0
    %2548 = vmatpush1.msra.mxu0 0.0
    %2549 = vmatprep.subr.mxu0 0.0
    %2550 = vmatpush1.msra.mxu0 0.0
    %2551 = vmatprep.subr.mxu0 0.0
    %2552 = vmatpush1.msra.mxu0 0.0
    %2553 = vmatprep.subr.mxu0 0.0
    %2554 = vmatpush1.msra.mxu0 0.0
    %2555 = vmatprep.mubr.f32.mxu0 0.0
    %2556 = vmatmul.mubr.f32.gmra.mrb[0].mxu0 %v2489
    %v2557 = vpop.f32.mrb[0].mxu0
    %v2558 = vadd.f32 %v2485, %v2557
    %v2559 = vpop.f32.mrb[0].mxu0
    %2560 = vdwg.mxu0
    %2561 = vrot.lane.b32.xlu0 %v1929, 112
    %v2562 = vpop.permute.xlu0 %2561
    %2563 = vrot.lane.b32.xlu0 %v2005, 112
    %v2564 = vpop.permute.xlu0 %2563
    %v2565 = vsel %vm666, %v2562, 0
    %v2567 = vsel %vm666, %v2564, 0
    %2569 = vmatprep.subr.mxu0 0.0
    %2570 = vmatpush1.xpose.msra.mxu0 %v2567
    %2571 = vmatprep.subr.mxu0 0.0
    %2572 = vmatpush1.xpose.msra.mxu0 0.0
    %2573 = vmatprep.subr.mxu0 0.0
    %2574 = vmatpush1.xpose.msra.mxu0 0.0
    %2575 = vmatprep.subr.mxu0 0.0
    %2576 = vmatpush1.xpose.msra.mxu0 0.0
    %2577 = vmatprep.subr.mxu0 0.0
    %2578 = vmatpush1.xpose.msra.mxu0 0.0
    %2579 = vmatprep.subr.mxu0 0.0
    %2580 = vmatpush1.xpose.msra.mxu0 0.0
    %2581 = vmatprep.subr.mxu0 0.0
    %2582 = vmatpush1.xpose.msra.mxu0 0.0
    %2583 = vmatprep.subr.mxu0 0.0
    %2584 = vmatpush1.xpose.msra.mxu0 0.0
    %2585 = vmatprep.subr.mxu0 0.0
    %2586 = vmatpush1.xpose.msra.mxu0 0.0
    %2587 = vmatprep.subr.mxu0 0.0
    %2588 = vmatpush1.xpose.msra.mxu0 0.0
    %2589 = vmatprep.subr.mxu0 0.0
    %2590 = vmatpush1.xpose.msra.mxu0 0.0
    %2591 = vmatprep.subr.mxu0 0.0
    %2592 = vmatpush1.xpose.msra.mxu0 0.0
    %2593 = vmatprep.subr.mxu0 0.0
    %2594 = vmatpush1.xpose.msra.mxu0 0.0
    %2595 = vmatprep.subr.mxu0 0.0
    %2596 = vmatpush1.xpose.msra.mxu0 0.0
    %2597 = vmatprep.subr.mxu0 0.0
    %2598 = vmatpush1.xpose.msra.mxu0 0.0
    %2599 = vmatprep.subr.mxu0 0.0
    %2600 = vmatpush1.xpose.msra.mxu0 0.0
    %2601 = vmatprep.subr.mxu0 0.0
    %2602 = vmatpush1.xpose.msra.mxu0 0.0
    %2603 = vmatprep.subr.mxu0 0.0
    %2604 = vmatpush1.xpose.msra.mxu0 0.0
    %2605 = vmatprep.subr.mxu0 0.0
    %2606 = vmatpush1.xpose.msra.mxu0 0.0
    %2607 = vmatprep.subr.mxu0 0.0
    %2608 = vmatpush1.xpose.msra.mxu0 0.0
    %2609 = vmatprep.subr.mxu0 0.0
    %2610 = vmatpush1.xpose.msra.mxu0 0.0
    %2611 = vmatprep.subr.mxu0 0.0
    %2612 = vmatpush1.xpose.msra.mxu0 0.0
    %2613 = vmatprep.subr.mxu0 0.0
    %2614 = vmatpush1.xpose.msra.mxu0 0.0
    %2615 = vmatprep.subr.mxu0 0.0
    %2616 = vmatpush1.xpose.msra.mxu0 0.0
    %2617 = vmatprep.subr.mxu0 0.0
    %2618 = vmatpush1.xpose.msra.mxu0 0.0
    %2619 = vmatprep.subr.mxu0 0.0
    %2620 = vmatpush1.xpose.msra.mxu0 0.0
    %2621 = vmatprep.subr.mxu0 0.0
    %2622 = vmatpush1.xpose.msra.mxu0 0.0
    %2623 = vmatprep.subr.mxu0 0.0
    %2624 = vmatpush1.xpose.msra.mxu0 0.0
    %2625 = vmatprep.subr.mxu0 0.0
    %2626 = vmatpush1.xpose.msra.mxu0 0.0
    %2627 = vmatprep.subr.mxu0 0.0
    %2628 = vmatpush1.xpose.msra.mxu0 0.0
    %2629 = vmatprep.subr.mxu0 0.0
    %2630 = vmatpush1.xpose.msra.mxu0 0.0
    %2631 = vmatprep.subr.mxu0 0.0
    %2632 = vmatpush1.xpose.msra.mxu0 0.0
    %2633 = vmatprep.mubr.f32.mxu0 0.0
    %2634 = vmatmul.mubr.f32.gmra.mrb[0].mxu0 %v2565
    %v2635 = vpop.f32.mrb[0].mxu0
    %v2636 = vadd.f32 0.0, %v2635
    %v2637 = vpop.f32.mrb[0].mxu0
    %2638 = vdwg.mxu0
    %v2639 = vmul.f32 %v2636, 0.35355338
    %v2640 = vsel %vm744, %v2639, -inf
    %2641 = vmax.xlane.f32.xlu0 %v2640
    %v2642 = vpop.xlane.xlu0 %2641
    %v2643 = vsub.f32 %v2639, %v2642
    %v2644 = vmul.f32 %v2643, 1.442695
    %v2645 = vpow.pop %v2644
    %v2646 = vsel %vm744, %v2645, 0.0
    %2647 = vadd.xlane.f32.xlu0 %v2646
    %v2648 = vpop.xlane.xlu0 %2647
    %v2649 = vrcp.pop %v2648
    %v2650 = vmul.f32 %v2645, %v2649
    %2651 = vrot.lane.b32.xlu0 %v2081, 112
    %v2652 = vpop.permute.xlu0 %2651
    %v2654 = vsel %vm285, %v2650, 0
    %v2656 = vsel %vm759, %v2652, 0
    %2658 = vmatprep.subr.mxu0 0.0
    %2659 = vmatpush1.msra.mxu0 %v2656
    %2660 = vmatprep.subr.mxu0 0.0
    %2661 = vmatpush1.msra.mxu0 0.0
    %2662 = vmatprep.subr.mxu0 0.0
    %2663 = vmatpush1.msra.mxu0 0.0
    %2664 = vmatprep.subr.mxu0 0.0
    %2665 = vmatpush1.msra.mxu0 0.0
    %2666 = vmatprep.subr.mxu0 0.0
    %2667 = vmatpush1.msra.mxu0 0.0
    %2668 = vmatprep.subr.mxu0 0.0
    %2669 = vmatpush1.msra.mxu0 0.0
    %2670 = vmatprep.subr.mxu0 0.0
    %2671 = vmatpush1.msra.mxu0 0.0
    %2672 = vmatprep.subr.mxu0 0.0
    %2673 = vmatpush1.msra.mxu0 0.0
    %2674 = vmatprep.subr.mxu0 0.0
    %2675 = vmatpush1.msra.mxu0 0.0
    %2676 = vmatprep.subr.mxu0 0.0
    %2677 = vmatpush1.msra.mxu0 0.0
    %2678 = vmatprep.subr.mxu0 0.0
    %2679 = vmatpush1.msra.mxu0 0.0
    %2680 = vmatprep.subr.mxu0 0.0
    %2681 = vmatpush1.msra.mxu0 0.0
    %2682 = vmatprep.subr.mxu0 0.0
    %2683 = vmatpush1.msra.mxu0 0.0
    %2684 = vmatprep.subr.mxu0 0.0
    %2685 = vmatpush1.msra.mxu0 0.0
    %2686 = vmatprep.subr.mxu0 0.0
    %2687 = vmatpush1.msra.mxu0 0.0
    %2688 = vmatprep.subr.mxu0 0.0
    %2689 = vmatpush1.msra.mxu0 0.0
    %2690 = vmatprep.subr.mxu0 0.0
    %2691 = vmatpush1.msra.mxu0 0.0
    %2692 = vmatprep.subr.mxu0 0.0
    %2693 = vmatpush1.msra.mxu0 0.0
    %2694 = vmatprep.subr.mxu0 0.0
    %2695 = vmatpush1.msra.mxu0 0.0
    %2696 = vmatprep.subr.mxu0 0.0
    %2697 = vmatpush1.msra.mxu0 0.0
    %2698 = vmatprep.subr.mxu0 0.0
    %2699 = vmatpush1.msra.mxu0 0.0
    %2700 = vmatprep.subr.mxu0 0.0
    %2701 = vmatpush1.msra.mxu0 0.0
    %2702 = vmatprep.subr.mxu0 0.0
    %2703 = vmatpush1.msra.mxu0 0.0
    %2704 = vmatprep.subr.mxu0 0.0
    %2705 = vmatpush1.msra.mxu0 0.0
    %2706 = vmatprep.subr.mxu0 0.0
    %2707 = vmatpush1.msra.mxu0 0.0
    %2708 = vmatprep.subr.mxu0 0.0
    %2709 = vmatpush1.msra.mxu0 0.0
    %2710 = vmatprep.subr.mxu0 0.0
    %2711 = vmatpush1.msra.mxu0 0.0
    %2712 = vmatprep.subr.mxu0 0.0
    %2713 = vmatpush1.msra.mxu0 0.0
    %2714 = vmatprep.subr.mxu0 0.0
    %2715 = vmatpush1.msra.mxu0 0.0
    %2716 = vmatprep.subr.mxu0 0.0
    %2717 = vmatpush1.msra.mxu0 0.0
    %2718 = vmatprep.subr.mxu0 0.0
    %2719 = vmatpush1.msra.mxu0 0.0
    %2720 = vmatprep.subr.mxu0 0.0
    %2721 = vmatpush1.msra.mxu0 0.0
    %2722 = vmatprep.mubr.f32.mxu0 0.0
    %2723 = vmatmul.mubr.f32.gmra.mrb[0].mxu0 %v2654
    %v2724 = vpop.f32.mrb[0].mxu0
    %v2725 = vadd.f32 0.0, %v2724
    %v2726 = vpop.f32.mrb[0].mxu0
    %2727 = vdwg.mxu0
    %v2729 = vsel %vm666, %v2725, 0
    %2731 = vmatprep.subr.mxu0 0.0
    %2732 = vmatpush1.msra.mxu0 %v253
    %2733 = vmatprep.subr.mxu0 0.0
    %2734 = vmatpush1.msra.mxu0 0.0
    %2735 = vmatprep.subr.mxu0 0.0
    %2736 = vmatpush1.msra.mxu0 0.0
    %2737 = vmatprep.subr.mxu0 0.0
    %2738 = vmatpush1.msra.mxu0 0.0
    %2739 = vmatprep.subr.mxu0 0.0
    %2740 = vmatpush1.msra.mxu0 0.0
    %2741 = vmatprep.subr.mxu0 0.0
    %2742 = vmatpush1.msra.mxu0 0.0
    %2743 = vmatprep.subr.mxu0 0.0
    %2744 = vmatpush1.msra.mxu0 0.0
    %2745 = vmatprep.subr.mxu0 0.0
    %2746 = vmatpush1.msra.mxu0 0.0
    %2747 = vmatprep.subr.mxu0 0.0
    %2748 = vmatpush1.msra.mxu0 0.0
    %2749 = vmatprep.subr.mxu0 0.0
    %2750 = vmatpush1.msra.mxu0 0.0
    %2751 = vmatprep.subr.mxu0 0.0
    %2752 = vmatpush1.msra.mxu0 0.0
    %2753 = vmatprep.subr.mxu0 0.0
    %2754 = vmatpush1.msra.mxu0 0.0
    %2755 = vmatprep.subr.mxu0 0.0
    %2756 = vmatpush1.msra.mxu0 0.0
    %2757 = vmatprep.subr.mxu0 0.0
    %2758 = vmatpush1.msra.mxu0 0.0
    %2759 = vmatprep.subr.mxu0 0.0
    %2760 = vmatpush1.msra.mxu0 0.0
    %2761 = vmatprep.subr.mxu0 0.0
    %2762 = vmatpush1.msra.mxu0 0.0
    %2763 = vmatprep.subr.mxu0 0.0
    %2764 = vmatpush1.msra.mxu0 0.0
    %2765 = vmatprep.subr.mxu0 0.0
    %2766 = vmatpush1.msra.mxu0 0.0
    %2767 = vmatprep.subr.mxu0 0.0
    %2768 = vmatpush1.msra.mxu0 0.0
    %2769 = vmatprep.subr.mxu0 0.0
    %2770 = vmatpush1.msra.mxu0 0.0
    %2771 = vmatprep.subr.mxu0 0.0
    %2772 = vmatpush1.msra.mxu0 0.0
    %2773 = vmatprep.subr.mxu0 0.0
    %2774 = vmatpush1.msra.mxu0 0.0
    %2775 = vmatprep.subr.mxu0 0.0
    %2776 = vmatpush1.msra.mxu0 0.0
    %2777 = vmatprep.subr.mxu0 0.0
    %2778 = vmatpush1.msra.mxu0 0.0
    %2779 = vmatprep.subr.mxu0 0.0
    %2780 = vmatpush1.msra.mxu0 0.0
    %2781 = vmatprep.subr.mxu0 0.0
    %2782 = vmatpush1.msra.mxu0 0.0
    %2783 = vmatprep.subr.mxu0 0.0
    %2784 = vmatpush1.msra.mxu0 0.0
    %2785 = vmatprep.subr.mxu0 0.0
    %2786 = vmatpush1.msra.mxu0 0.0
    %2787 = vmatprep.subr.mxu0 0.0
    %2788 = vmatpush1.msra.mxu0 0.0
    %2789 = vmatprep.subr.mxu0 0.0
    %2790 = vmatpush1.msra.mxu0 0.0
    %2791 = vmatprep.subr.mxu0 0.0
    %2792 = vmatpush1.msra.mxu0 0.0
    %2793 = vmatprep.subr.mxu0 0.0
    %2794 = vmatpush1.msra.mxu0 0.0
    %2795 = vmatprep.mubr.f32.mxu0 0.0
    %2796 = vmatmul.mubr.f32.gmra.mrb[0].mxu0 %v2729
    %v2797 = vpop.f32.mrb[0].mxu0
    %v2798 = vadd.f32 0.0, %v2797
    %v2799 = vpop.f32.mrb[0].mxu0
    %2800 = vdwg.mxu0
    %v2801 = vadd.f32 %v2558, %v2798
    %2802 = vrot.lane.b32.xlu0 %v1929, 104
    %v2803 = vpop.permute.xlu0 %2802
    %2804 = vrot.lane.b32.xlu0 %v2005, 104
    %v2805 = vpop.permute.xlu0 %2804
    %v2806 = vsel %vm666, %v2803, 0
    %v2808 = vsel %vm666, %v2805, 0
    %2810 = vmatprep.subr.mxu0 0.0
    %2811 = vmatpush1.xpose.msra.mxu0 %v2808
    %2812 = vmatprep.subr.mxu0 0.0
    %2813 = vmatpush1.xpose.msra.mxu0 0.0
    %2814 = vmatprep.subr.mxu0 0.0
    %2815 = vmatpush1.xpose.msra.mxu0 0.0
    %2816 = vmatprep.subr.mxu0 0.0
    %2817 = vmatpush1.xpose.msra.mxu0 0.0
    %2818 = vmatprep.subr.mxu0 0.0
    %2819 = vmatpush1.xpose.msra.mxu0 0.0
    %2820 = vmatprep.subr.mxu0 0.0
    %2821 = vmatpush1.xpose.msra.mxu0 0.0
    %2822 = vmatprep.subr.mxu0 0.0
    %2823 = vmatpush1.xpose.msra.mxu0 0.0
    %2824 = vmatprep.subr.mxu0 0.0
    %2825 = vmatpush1.xpose.msra.mxu0 0.0
    %2826 = vmatprep.subr.mxu0 0.0
    %2827 = vmatpush1.xpose.msra.mxu0 0.0
    %2828 = vmatprep.subr.mxu0 0.0
    %2829 = vmatpush1.xpose.msra.mxu0 0.0
    %2830 = vmatprep.subr.mxu0 0.0
    %2831 = vmatpush1.xpose.msra.mxu0 0.0
    %2832 = vmatprep.subr.mxu0 0.0
    %2833 = vmatpush1.xpose.msra.mxu0 0.0
    %2834 = vmatprep.subr.mxu0 0.0
    %2835 = vmatpush1.xpose.msra.mxu0 0.0
    %2836 = vmatprep.subr.mxu0 0.0
    %2837 = vmatpush1.xpose.msra.mxu0 0.0
    %2838 = vmatprep.subr.mxu0 0.0
    %2839 = vmatpush1.xpose.msra.mxu0 0.0
    %2840 = vmatprep.subr.mxu0 0.0
    %2841 = vmatpush1.xpose.msra.mxu0 0.0
    %2842 = vmatprep.subr.mxu0 0.0
    %2843 = vmatpush1.xpose.msra.mxu0 0.0
    %2844 = vmatprep.subr.mxu0 0.0
    %2845 = vmatpush1.xpose.msra.mxu0 0.0
    %2846 = vmatprep.subr.mxu0 0.0
    %2847 = vmatpush1.xpose.msra.mxu0 0.0
    %2848 = vmatprep.subr.mxu0 0.0
    %2849 = vmatpush1.xpose.msra.mxu0 0.0
    %2850 = vmatprep.subr.mxu0 0.0
    %2851 = vmatpush1.xpose.msra.mxu0 0.0
    %2852 = vmatprep.subr.mxu0 0.0
    %2853 = vmatpush1.xpose.msra.mxu0 0.0
    %2854 = vmatprep.subr.mxu0 0.0
    %2855 = vmatpush1.xpose.msra.mxu0 0.0
    %2856 = vmatprep.subr.mxu0 0.0
    %2857 = vmatpush1.xpose.msra.mxu0 0.0
    %2858 = vmatprep.subr.mxu0 0.0
    %2859 = vmatpush1.xpose.msra.mxu0 0.0
    %2860 = vmatprep.subr.mxu0 0.0
    %2861 = vmatpush1.xpose.msra.mxu0 0.0
    %2862 = vmatprep.subr.mxu0 0.0
    %2863 = vmatpush1.xpose.msra.mxu0 0.0
    %2864 = vmatprep.subr.mxu0 0.0
    %2865 = vmatpush1.xpose.msra.mxu0 0.0
    %2866 = vmatprep.subr.mxu0 0.0
    %2867 = vmatpush1.xpose.msra.mxu0 0.0
    %2868 = vmatprep.subr.mxu0 0.0
    %2869 = vmatpush1.xpose.msra.mxu0 0.0
    %2870 = vmatprep.subr.mxu0 0.0
    %2871 = vmatpush1.xpose.msra.mxu0 0.0
    %2872 = vmatprep.subr.mxu0 0.0
    %2873 = vmatpush1.xpose.msra.mxu0 0.0
    %2874 = vmatprep.mubr.f32.mxu0 0.0
    %2875 = vmatmul.mubr.f32.gmra.mrb[0].mxu0 %v2806
    %v2876 = vpop.f32.mrb[0].mxu0
    %v2877 = vadd.f32 0.0, %v2876
    %v2878 = vpop.f32.mrb[0].mxu0
    %2879 = vdwg.mxu0
    %v2880 = vmul.f32 %v2877, 0.35355338
    %v2881 = vsel %vm744, %v2880, -inf
    %2882 = vmax.xlane.f32.xlu0 %v2881
    %v2883 = vpop.xlane.xlu0 %2882
    %v2884 = vsub.f32 %v2880, %v2883
    %v2885 = vmul.f32 %v2884, 1.442695
    %v2886 = vpow.pop %v2885
    %v2887 = vsel %vm744, %v2886, 0.0
    %2888 = vadd.xlane.f32.xlu0 %v2887
    %v2889 = vpop.xlane.xlu0 %2888
    %v2890 = vrcp.pop %v2889
    %v2891 = vmul.f32 %v2886, %v2890
    %2892 = vrot.lane.b32.xlu0 %v2081, 104
    %v2893 = vpop.permute.xlu0 %2892
    %v2895 = vsel %vm285, %v2891, 0
    %v2897 = vsel %vm759, %v2893, 0
    %2899 = vmatprep.subr.mxu0 0.0
    %2900 = vmatpush1.msra.mxu0 %v2897
    %2901 = vmatprep.subr.mxu0 0.0
    %2902 = vmatpush1.msra.mxu0 0.0
    %2903 = vmatprep.subr.mxu0 0.0
    %2904 = vmatpush1.msra.mxu0 0.0
    %2905 = vmatprep.subr.mxu0 0.0
    %2906 = vmatpush1.msra.mxu0 0.0
    %2907 = vmatprep.subr.mxu0 0.0
    %2908 = vmatpush1.msra.mxu0 0.0
    %2909 = vmatprep.subr.mxu0 0.0
    %2910 = vmatpush1.msra.mxu0 0.0
    %2911 = vmatprep.subr.mxu0 0.0
    %2912 = vmatpush1.msra.mxu0 0.0
    %2913 = vmatprep.subr.mxu0 0.0
    %2914 = vmatpush1.msra.mxu0 0.0
    %2915 = vmatprep.subr.mxu0 0.0
    %2916 = vmatpush1.msra.mxu0 0.0
    %2917 = vmatprep.subr.mxu0 0.0
    %2918 = vmatpush1.msra.mxu0 0.0
    %2919 = vmatprep.subr.mxu0 0.0
    %2920 = vmatpush1.msra.mxu0 0.0
    %2921 = vmatprep.subr.mxu0 0.0
    %2922 = vmatpush1.msra.mxu0 0.0
    %2923 = vmatprep.subr.mxu0 0.0
    %2924 = vmatpush1.msra.mxu0 0.0
    %2925 = vmatprep.subr.mxu0 0.0
    %2926 = vmatpush1.msra.mxu0 0.0
    %2927 = vmatprep.subr.mxu0 0.0
    %2928 = vmatpush1.msra.mxu0 0.0
    %2929 = vmatprep.subr.mxu0 0.0
    %2930 = vmatpush1.msra.mxu0 0.0
    %2931 = vmatprep.subr.mxu0 0.0
    %2932 = vmatpush1.msra.mxu0 0.0
    %2933 = vmatprep.subr.mxu0 0.0
    %2934 = vmatpush1.msra.mxu0 0.0
    %2935 = vmatprep.subr.mxu0 0.0
    %2936 = vmatpush1.msra.mxu0 0.0
    %2937 = vmatprep.subr.mxu0 0.0
    %2938 = vmatpush1.msra.mxu0 0.0
    %2939 = vmatprep.subr.mxu0 0.0
    %2940 = vmatpush1.msra.mxu0 0.0
    %2941 = vmatprep.subr.mxu0 0.0
    %2942 = vmatpush1.msra.mxu0 0.0
    %2943 = vmatprep.subr.mxu0 0.0
    %2944 = vmatpush1.msra.mxu0 0.0
    %2945 = vmatprep.subr.mxu0 0.0
    %2946 = vmatpush1.msra.mxu0 0.0
    %2947 = vmatprep.subr.mxu0 0.0
    %2948 = vmatpush1.msra.mxu0 0.0
    %2949 = vmatprep.subr.mxu0 0.0
    %2950 = vmatpush1.msra.mxu0 0.0
    %2951 = vmatprep.subr.mxu0 0.0
    %2952 = vmatpush1.msra.mxu0 0.0
    %2953 = vmatprep.subr.mxu0 0.0
    %2954 = vmatpush1.msra.mxu0 0.0
    %2955 = vmatprep.subr.mxu0 0.0
    %2956 = vmatpush1.msra.mxu0 0.0
    %2957 = vmatprep.subr.mxu0 0.0
    %2958 = vmatpush1.msra.mxu0 0.0
    %2959 = vmatprep.subr.mxu0 0.0
    %2960 = vmatpush1.msra.mxu0 0.0
    %2961 = vmatprep.subr.mxu0 0.0
    %2962 = vmatpush1.msra.mxu0 0.0
    %2963 = vmatprep.mubr.f32.mxu0 0.0
    %2964 = vmatmul.mubr.f32.gmra.mrb[0].mxu0 %v2895
    %v2965 = vpop.f32.mrb[0].mxu0
    %v2966 = vadd.f32 0.0, %v2965
    %v2967 = vpop.f32.mrb[0].mxu0
    %2968 = vdwg.mxu0
    %v2970 = vsel %vm666, %v2966, 0
    %2972 = vmatprep.subr.mxu0 0.0
    %2973 = vmatpush1.msra.mxu0 %v254
    %2974 = vmatprep.subr.mxu0 0.0
    %2975 = vmatpush1.msra.mxu0 0.0
    %2976 = vmatprep.subr.mxu0 0.0
    %2977 = vmatpush1.msra.mxu0 0.0
    %2978 = vmatprep.subr.mxu0 0.0
    %2979 = vmatpush1.msra.mxu0 0.0
    %2980 = vmatprep.subr.mxu0 0.0
    %2981 = vmatpush1.msra.mxu0 0.0
    %2982 = vmatprep.subr.mxu0 0.0
    %2983 = vmatpush1.msra.mxu0 0.0
    %2984 = vmatprep.subr.mxu0 0.0
    %2985 = vmatpush1.msra.mxu0 0.0
    %2986 = vmatprep.subr.mxu0 0.0
    %2987 = vmatpush1.msra.mxu0 0.0
    %2988 = vmatprep.subr.mxu0 0.0
    %2989 = vmatpush1.msra.mxu0 0.0
    %2990 = vmatprep.subr.mxu0 0.0
    %2991 = vmatpush1.msra.mxu0 0.0
    %2992 = vmatprep.subr.mxu0 0.0
    %2993 = vmatpush1.msra.mxu0 0.0
    %2994 = vmatprep.subr.mxu0 0.0
    %2995 = vmatpush1.msra.mxu0 0.0
    %2996 = vmatprep.subr.mxu0 0.0
    %2997 = vmatpush1.msra.mxu0 0.0
    %2998 = vmatprep.subr.mxu0 0.0
    %2999 = vmatpush1.msra.mxu0 0.0
    %3000 = vmatprep.subr.mxu0 0.0
    %3001 = vmatpush1.msra.mxu0 0.0
    %3002 = vmatprep.subr.mxu0 0.0
    %3003 = vmatpush1.msra.mxu0 0.0
    %3004 = vmatprep.subr.mxu0 0.0
    %3005 = vmatpush1.msra.mxu0 0.0
    %3006 = vmatprep.subr.mxu0 0.0
    %3007 = vmatpush1.msra.mxu0 0.0
    %3008 = vmatprep.subr.mxu0 0.0
    %3009 = vmatpush1.msra.mxu0 0.0
    %3010 = vmatprep.subr.mxu0 0.0
    %3011 = vmatpush1.msra.mxu0 0.0
    %3012 = vmatprep.subr.mxu0 0.0
    %3013 = vmatpush1.msra.mxu0 0.0
    %3014 = vmatprep.subr.mxu0 0.0
    %3015 = vmatpush1.msra.mxu0 0.0
    %3016 = vmatprep.subr.mxu0 0.0
    %3017 = vmatpush1.msra.mxu0 0.0
    %3018 = vmatprep.subr.mxu0 0.0
    %3019 = vmatpush1.msra.mxu0 0.0
    %3020 = vmatprep.subr.mxu0 0.0
    %3021 = vmatpush1.msra.mxu0 0.0
    %3022 = vmatprep.subr.mxu0 0.0
    %3023 = vmatpush1.msra.mxu0 0.0
    %3024 = vmatprep.subr.mxu0 0.0
    %3025 = vmatpush1.msra.mxu0 0.0
    %3026 = vmatprep.subr.mxu0 0.0
    %3027 = vmatpush1.msra.mxu0 0.0
    %3028 = vmatprep.subr.mxu0 0.0
    %3029 = vmatpush1.msra.mxu0 0.0
    %3030 = vmatprep.subr.mxu0 0.0
    %3031 = vmatpush1.msra.mxu0 0.0
    %3032 = vmatprep.subr.mxu0 0.0
    %3033 = vmatpush1.msra.mxu0 0.0
    %3034 = vmatprep.subr.mxu0 0.0
    %3035 = vmatpush1.msra.mxu0 0.0
    %3036 = vmatprep.mubr.f32.mxu0 0.0
    %3037 = vmatmul.mubr.f32.gmra.mrb[0].mxu0 %v2970
    %v3038 = vpop.f32.mrb[0].mxu0
    %v3039 = vadd.f32 0.0, %v3038
    %v3040 = vpop.f32.mrb[0].mxu0
    %3041 = vdwg.mxu0
    %v3042 = vadd.f32 %v2801, %v3039
    %v3043 = vadd.f32 %v1852, %v3042
    %v3045 = vlaneseq
    %v3046 = vshrl.u32 %v3045, 7
    %v3047 = vsub.s32 0, %v3046
    %v3048 = vrot.slane %v256, %v3047
    %v3050 = vadd.f32 %v3043, %v3048
    %v3051 = vsel %vm1636, %v3050, 0.0
    %3052 = vadd.xlane.f32.xlu0 %v3051
    %v3053 = vpop.xlane.xlu0 %3052
    %v3054 = vmul.f32 %v3053, %v1640
    %v3055 = vsub.f32 %v3050, %v3054
    %v3056 = vmul.f32 %v3055, %v3055
    %v3057 = vsel %vm1636, %v3056, 0.0
    %3058 = vadd.xlane.f32.xlu0 %v3057
    %v3059 = vpop.xlane.xlu0 %3058
    %v3060 = vmul.f32 %v3059, %v1640
    %v3061 = vadd.f32 %v3060, 1e-05
    %v3062 = vrsqrt.pop %v3061
    %v3063 = vmul.f32 %v3055, %v3062
    %v3065 = vlaneseq
    %v3066 = vshrl.u32 %v3065, 7
    %v3067 = vsub.s32 0, %v3066
    %v3068 = vrot.slane %v258, %v3067
    %v3070 = vmul.f32 %v3063, %v3068
    %v3072 = vlaneseq
    %v3073 = vshrl.u32 %v3072, 7
    %v3074 = vsub.s32 0, %v3073
    %v3075 = vrot.slane %v260, %v3074
    %v3077 = vadd.f32 %v3070, %v3075
    %v3079 = vlaneseq
    %v3080 = vshrl.u32 %v3079, 7
    %v3081 = vsub.s32 0, %v3080
    %v3082 = vrot.slane %v267, %v3081
    %v3085 = vsel %vm440, %v3077, 0
    %3087 = vmatprep.subr.mxu0 0.0
    %3088 = vmatpush1.msra.mxu0 %v262
    %3089 = vmatprep.subr.mxu0 0.0
    %3090 = vmatpush1.msra.mxu0 %v263
    %3091 = vmatprep.subr.mxu0 0.0
    %3092 = vmatpush1.msra.mxu0 %v264
    %3093 = vmatprep.subr.mxu0 0.0
    %3094 = vmatpush1.msra.mxu0 %v265
    %3095 = vmatprep.subr.mxu0 0.0
    %3096 = vmatpush1.msra.mxu0 0.0
    %3097 = vmatprep.subr.mxu0 0.0
    %3098 = vmatpush1.msra.mxu0 0.0
    %3099 = vmatprep.subr.mxu0 0.0
    %3100 = vmatpush1.msra.mxu0 0.0
    %3101 = vmatprep.subr.mxu0 0.0
    %3102 = vmatpush1.msra.mxu0 0.0
    %3103 = vmatprep.subr.mxu0 0.0
    %3104 = vmatpush1.msra.mxu0 0.0
    %3105 = vmatprep.subr.mxu0 0.0
    %3106 = vmatpush1.msra.mxu0 0.0
    %3107 = vmatprep.subr.mxu0 0.0
    %3108 = vmatpush1.msra.mxu0 0.0
    %3109 = vmatprep.subr.mxu0 0.0
    %3110 = vmatpush1.msra.mxu0 0.0
    %3111 = vmatprep.subr.mxu0 0.0
    %3112 = vmatpush1.msra.mxu0 0.0
    %3113 = vmatprep.subr.mxu0 0.0
    %3114 = vmatpush1.msra.mxu0 0.0
    %3115 = vmatprep.subr.mxu0 0.0
    %3116 = vmatpush1.msra.mxu0 0.0
    %3117 = vmatprep.subr.mxu0 0.0
    %3118 = vmatpush1.msra.mxu0 0.0
    %3119 = vmatprep.subr.mxu0 0.0
    %3120 = vmatpush1.msra.mxu0 0.0
    %3121 = vmatprep.subr.mxu0 0.0
    %3122 = vmatpush1.msra.mxu0 0.0
    %3123 = vmatprep.subr.mxu0 0.0
    %3124 = vmatpush1.msra.mxu0 0.0
    %3125 = vmatprep.subr.mxu0 0.0
    %3126 = vmatpush1.msra.mxu0 0.0
    %3127 = vmatprep.subr.mxu0 0.0
    %3128 = vmatpush1.msra.mxu0 0.0
    %3129 = vmatprep.subr.mxu0 0.0
    %3130 = vmatpush1.msra.mxu0 0.0
    %3131 = vmatprep.subr.mxu0 0.0
    %3132 = vmatpush1.msra.mxu0 0.0
    %3133 = vmatprep.subr.mxu0 0.0
    %3134 = vmatpush1.msra.mxu0 0.0
    %3135 = vmatprep.subr.mxu0 0.0
    %3136 = vmatpush1.msra.mxu0 0.0
    %3137 = vmatprep.subr.mxu0 0.0
    %3138 = vmatpush1.msra.mxu0 0.0
    %3139 = vmatprep.subr.mxu0 0.0
    %3140 = vmatpush1.msra.mxu0 0.0
    %3141 = vmatprep.subr.mxu0 0.0
    %3142 = vmatpush1.msra.mxu0 0.0
    %3143 = vmatprep.subr.mxu0 0.0
    %3144 = vmatpush1.msra.mxu0 0.0
    %3145 = vmatprep.subr.mxu0 0.0
    %3146 = vmatpush1.msra.mxu0 0.0
    %3147 = vmatprep.subr.mxu0 0.0
    %3148 = vmatpush1.msra.mxu0 0.0
    %3149 = vmatprep.subr.mxu0 0.0
    %3150 = vmatpush1.msra.mxu0 0.0
    %3151 = vmatprep.mubr.f32.mxu0 0.0
    %3152 = vmatmul.mubr.f32.gmra.mrb[0].mxu0 %v3085
    %v3153 = vpop.f32.mrb[0].mxu0
    %v3154 = vadd.f32 %v3082, %v3153
    %v3155 = vpop.f32.mrb[0].mxu0
    %3156 = vdwg.mxu0
    %v3157 = vmax.f32 %v3154, 0.0
    %v3159 = vlaneseq
    %v3160 = vshrl.u32 %v3159, 7
    %v3161 = vsub.s32 0, %v3160
    %v3162 = vrot.slane %v278, %v3161
    %v3165 = vsel %vm1751, %v3157, 0
    %3167 = vmatprep.subr.mxu0 0.0
    %3168 = vmatpush1.msra.mxu0 %v269
    %3169 = vmatprep.subr.mxu0 0.0
    %3170 = vmatpush1.msra.mxu0 %v270
    %3171 = vmatprep.subr.mxu0 0.0
    %3172 = vmatpush1.msra.mxu0 %v271
    %3173 = vmatprep.subr.mxu0 0.0
    %3174 = vmatpush1.msra.mxu0 %v272
    %3175 = vmatprep.subr.mxu0 0.0
    %3176 = vmatpush1.msra.mxu0 %v273
    %3177 = vmatprep.subr.mxu0 0.0
    %3178 = vmatpush1.msra.mxu0 %v274
    %3179 = vmatprep.subr.mxu0 0.0
    %3180 = vmatpush1.msra.mxu0 %v275
    %3181 = vmatprep.subr.mxu0 0.0
    %3182 = vmatpush1.msra.mxu0 %v276
    %3183 = vmatprep.subr.mxu0 0.0
    %3184 = vmatpush1.msra.mxu0 0.0
    %3185 = vmatprep.subr.mxu0 0.0
    %3186 = vmatpush1.msra.mxu0 0.0
    %3187 = vmatprep.subr.mxu0 0.0
    %3188 = vmatpush1.msra.mxu0 0.0
    %3189 = vmatprep.subr.mxu0 0.0
    %3190 = vmatpush1.msra.mxu0 0.0
    %3191 = vmatprep.subr.mxu0 0.0
    %3192 = vmatpush1.msra.mxu0 0.0
    %3193 = vmatprep.subr.mxu0 0.0
    %3194 = vmatpush1.msra.mxu0 0.0
    %3195 = vmatprep.subr.mxu0 0.0
    %3196 = vmatpush1.msra.mxu0 0.0
    %3197 = vmatprep.subr.mxu0 0.0
    %3198 = vmatpush1.msra.mxu0 0.0
    %3199 = vmatprep.subr.mxu0 0.0
    %3200 = vmatpush1.msra.mxu0 0.0
    %3201 = vmatprep.subr.mxu0 0.0
    %3202 = vmatpush1.msra.mxu0 0.0
    %3203 = vmatprep.subr.mxu0 0.0
    %3204 = vmatpush1.msra.mxu0 0.0
    %3205 = vmatprep.subr.mxu0 0.0
    %3206 = vmatpush1.msra.mxu0 0.0
    %3207 = vmatprep.subr.mxu0 0.0
    %3208 = vmatpush1.msra.mxu0 0.0
    %3209 = vmatprep.subr.mxu0 0.0
    %3210 = vmatpush1.msra.mxu0 0.0
    %3211 = vmatprep.subr.mxu0 0.0
    %3212 = vmatpush1.msra.mxu0 0.0
    %3213 = vmatprep.subr.mxu0 0.0
    %3214 = vmatpush1.msra.mxu0 0.0
    %3215 = vmatprep.subr.mxu0 0.0
    %3216 = vmatpush1.msra.mxu0 0.0
    %3217 = vmatprep.subr.mxu0 0.0
    %3218 = vmatpush1.msra.mxu0 0.0
    %3219 = vmatprep.subr.mxu0 0.0
    %3220 = vmatpush1.msra.mxu0 0.0
    %3221 = vmatprep.subr.mxu0 0.0
    %3222 = vmatpush1.msra.mxu0 0.0
    %3223 = vmatprep.subr.mxu0 0.0
    %3224 = vmatpush1.msra.mxu0 0.0
    %3225 = vmatprep.subr.mxu0 0.0
    %3226 = vmatpush1.msra.mxu0 0.0
    %3227 = vmatprep.subr.mxu0 0.0
    %3228 = vmatpush1.msra.mxu0 0.0
    %3229 = vmatprep.subr.mxu0 0.0
    %3230 = vmatpush1.msra.mxu0 0.0
    %3231 = vmatprep.mubr.f32.mxu0 0.0
    %3232 = vmatmul.mubr.f32.gmra.mrb[0].mxu0 %v3165
    %v3233 = vpop.f32.mrb[0].mxu0
    %v3234 = vadd.f32 %v3162, %v3233
    %v3235 = vpop.f32.mrb[0].mxu0
    %3236 = vdwg.mxu0
    %v3237 = vadd.f32 %v3077, %v3234
    %v3238 = vsel %vm1636, %v3237, 0.0
    %3239 = vadd.xlane.f32.xlu0 %v3238
    %v3240 = vpop.xlane.xlu0 %3239
    %v3241 = vmul.f32 %v3240, %v1640
    %v3242 = vsub.f32 %v3237, %v3241
    %v3243 = vmul.f32 %v3242, %v3242
    %v3244 = vsel %vm1636, %v3243, 0.0
    %3245 = vadd.xlane.f32.xlu0 %v3244
    %v3246 = vpop.xlane.xlu0 %3245
    %v3247 = vmul.f32 %v3246, %v1640
    %v3248 = vadd.f32 %v3247, 1e-05
    %v3249 = vrsqrt.pop %v3248
    %v3250 = vmul.f32 %v3242, %v3249
    %v3252 = vlaneseq
    %v3253 = vshrl.u32 %v3252, 7
    %v3254 = vsub.s32 0, %v3253
    %v3255 = vrot.slane %v280, %v3254
    %v3257 = vmul.f32 %v3250, %v3255
    %v3259 = vlaneseq
    %v3260 = vshrl.u32 %v3259, 7
    %v3261 = vsub.s32 0, %v3260
    %v3262 = vrot.slane %v282, %v3261
    %v3264 = vadd.f32 %v3257, %v3262
    %v3265 = vsel %vm1636, %v3264, 0.0
    %3266 = vadd.xlane.f32.xlu0 %v3265
    %v3267 = vpop.xlane.xlu0 %3266
    %v3268 = vmul.f32 %v3267, %v1640
    %v3269 = vsub.f32 %v3264, %v3268
    %v3270 = vmul.f32 %v3269, %v3269
    %v3271 = vsel %vm1636, %v3270, 0.0
    %3272 = vadd.xlane.f32.xlu0 %v3271
    %v3273 = vpop.xlane.xlu0 %3272
    %v3274 = vmul.f32 %v3273, %v1640
    %v3275 = vadd.f32 %v3274, 1e-05
    %v3276 = vrsqrt.pop %v3275
    %v3277 = vmul.f32 %v3269, %v3276
    %v3279 = vlaneseq
    %v3280 = vshrl.u32 %v3279, 7
    %v3281 = vsub.s32 0, %v3280
    %v3282 = vrot.slane %v184, %v3281
    %v3284 = vmul.f32 %v3277, %v3282
    %v3286 = vlaneseq
    %v3287 = vshrl.u32 %v3286, 7
    %v3288 = vsub.s32 0, %v3287
    %v3289 = vrot.slane %v185, %v3288
    %v3291 = vadd.f32 %v3284, %v3289
    %3293 = vset.pattern.permute.xlu0 0
    %3294 = vperm.xlu0 %3293, %v190
    %v3295 = vpop.permute.xlu0 %3294
    %3297 = vxpose.xlu0.b32.start [1/16] %v186, 128
    %3298 = vxpose.xlu0.b32.cont [2/16] %v187, 128
    %3299 = vxpose.xlu0.b32.cont [3/16] %v188, 128
    %3300 = vxpose.xlu0.b32.cont [4/16] %v189, 128
    %3301 = vxpose.xlu0.b32.cont [5/16] 0.0, 128
    %3302 = vxpose.xlu0.b32.cont [6/16] 0.0, 128
    %3303 = vxpose.xlu0.b32.cont [7/16] 0.0, 128
    %3304 = vxpose.xlu0.b32.cont [8/16] 0.0, 128
    %3305 = vxpose.xlu0.b32.cont [9/16] 0.0, 128
    %3306 = vxpose.xlu0.b32.cont [10/16] 0.0, 128
    %3307 = vxpose.xlu0.b32.cont [11/16] 0.0, 128
    %3308 = vxpose.xlu0.b32.cont [12/16] 0.0, 128
    %3309 = vxpose.xlu0.b32.cont [13/16] 0.0, 128
    %3310 = vxpose.xlu0.b32.cont [14/16] 0.0, 128
    %3311 = vxpose.xlu0.b32.cont [15/16] 0.0, 128
    %3312 = vxpose.xlu0.b32.end [16/16] 0.0, 128
    %v3313 = vpop.trf.xlu0
    %v3314 = vpop.trf.xlu0
    %v3315 = vpop.trf.xlu0
    %v3316 = vpop.trf.xlu0
    %v3317 = vpop.trf.xlu0
    %v3318 = vpop.trf.xlu0
    %v3319 = vpop.trf.xlu0
    %v3320 = vpop.trf.xlu0
    %v3321 = vpop.trf.xlu0
    %v3322 = vpop.trf.xlu0
    %v3323 = vpop.trf.xlu0
    %v3324 = vpop.trf.xlu0
    %v3325 = vpop.trf.xlu0
    %v3326 = vpop.trf.xlu0
    %v3327 = vpop.trf.xlu0
    %v3328 = vpop.trf.xlu0
    %v3330 = vsel %vm440, %v3313, 0
    %v3333 = vsel %vm440, %v3291, 0
    %3335 = vmatprep.subr.mxu0 0.0
    %3336 = vmatpush1.xpose.msra.mxu0 %v3333
    %3337 = vmatprep.subr.mxu0 0.0
    %3338 = vmatpush1.xpose.msra.mxu0 0.0
    %3339 = vmatprep.subr.mxu0 0.0
    %3340 = vmatpush1.xpose.msra.mxu0 0.0
    %3341 = vmatprep.subr.mxu0 0.0
    %3342 = vmatpush1.xpose.msra.mxu0 0.0
    %3343 = vmatprep.subr.mxu0 0.0
    %3344 = vmatpush1.xpose.msra.mxu0 0.0
    %3345 = vmatprep.subr.mxu0 0.0
    %3346 = vmatpush1.xpose.msra.mxu0 0.0
    %3347 = vmatprep.subr.mxu0 0.0
    %3348 = vmatpush1.xpose.msra.mxu0 0.0
    %3349 = vmatprep.subr.mxu0 0.0
    %3350 = vmatpush1.xpose.msra.mxu0 0.0
    %3351 = vmatprep.subr.mxu0 0.0
    %3352 = vmatpush1.xpose.msra.mxu0 0.0
    %3353 = vmatprep.subr.mxu0 0.0
    %3354 = vmatpush1.xpose.msra.mxu0 0.0
    %3355 = vmatprep.subr.mxu0 0.0
    %3356 = vmatpush1.xpose.msra.mxu0 0.0
    %3357 = vmatprep.subr.mxu0 0.0
    %3358 = vmatpush1.xpose.msra.mxu0 0.0
    %3359 = vmatprep.subr.mxu0 0.0
    %3360 = vmatpush1.xpose.msra.mxu0 0.0
    %3361 = vmatprep.subr.mxu0 0.0
    %3362 = vmatpush1.xpose.msra.mxu0 0.0
    %3363 = vmatprep.subr.mxu0 0.0
    %3364 = vmatpush1.xpose.msra.mxu0 0.0
    %3365 = vmatprep.subr.mxu0 0.0
    %3366 = vmatpush1.xpose.msra.mxu0 0.0
    %3367 = vmatprep.subr.mxu0 0.0
    %3368 = vmatpush1.xpose.msra.mxu0 0.0
    %3369 = vmatprep.subr.mxu0 0.0
    %3370 = vmatpush1.xpose.msra.mxu0 0.0
    %3371 = vmatprep.subr.mxu0 0.0
    %3372 = vmatpush1.xpose.msra.mxu0 0.0
    %3373 = vmatprep.subr.mxu0 0.0
    %3374 = vmatpush1.xpose.msra.mxu0 0.0
    %3375 = vmatprep.subr.mxu0 0.0
    %3376 = vmatpush1.xpose.msra.mxu0 0.0
    %3377 = vmatprep.subr.mxu0 0.0
    %3378 = vmatpush1.xpose.msra.mxu0 0.0
    %3379 = vmatprep.subr.mxu0 0.0
    %3380 = vmatpush1.xpose.msra.mxu0 0.0
    %3381 = vmatprep.subr.mxu0 0.0
    %3382 = vmatpush1.xpose.msra.mxu0 0.0
    %3383 = vmatprep.subr.mxu0 0.0
    %3384 = vmatpush1.xpose.msra.mxu0 0.0
    %3385 = vmatprep.subr.mxu0 0.0
    %3386 = vmatpush1.xpose.msra.mxu0 0.0
    %3387 = vmatprep.subr.mxu0 0.0
    %3388 = vmatpush1.xpose.msra.mxu0 0.0
    %3389 = vmatprep.subr.mxu0 0.0
    %3390 = vmatpush1.xpose.msra.mxu0 0.0
    %3391 = vmatprep.subr.mxu0 0.0
    %3392 = vmatpush1.xpose.msra.mxu0 0.0
    %3393 = vmatprep.subr.mxu0 0.0
    %3394 = vmatpush1.xpose.msra.mxu0 0.0
    %3395 = vmatprep.subr.mxu0 0.0
    %3396 = vmatpush1.xpose.msra.mxu0 0.0
    %3397 = vmatprep.subr.mxu0 0.0
    %3398 = vmatpush1.xpose.msra.mxu0 0.0
    %3399 = vmatprep.mubr.f32.mxu0 0.0
    %3400 = vmatmul.mubr.f32.gmra.mrb[0].mxu0 %v3330
    %v3401 = vpop.f32.mrb[0].mxu0
    %v3402 = vadd.f32 %v3295, %v3401
    %v3403 = vpop.f32.mrb[0].mxu0
    %3404 = vdwg.mxu0
    %v3405 = vmul.f32 %v3402, %v318
    %v3406 = vadd.f32 %v3405, %v296
    %3407 = vst.msk [vmem:[%s23] sm:$0xff] %vm285, %v3406
    %s3408 = scalar_lea.vmem %s0, 16
    %v3409 = vld [vmem:[%s3408] sm:$0xff]
    %v3410 = vld [vmem:[%s3408 + $0x8] sm:$0xff]
    %v3411 = vsel %vm285, %v3409, 0.0
    %v3412 = vsel %vm285, %v3410, 0.0
    %v3413 = vadd.f32 %v3411, %v3412
    %v3414 = vrot.slane %v3413, 4
    %v3415 = vadd.f32 %v3413, %v3414
    %v3416 = vrot.slane %v3415, 2
    %v3417 = vadd.f32 %v3415, %v3416
    %v3418 = vrot.slane %v3417, 1
    %v3419 = vadd.f32 %v3417, %v3418
    %v3420 = vmul.f32 %v3419, %v295
    %v3421 = vsub.f32 %v3409, %v3420
    %v3422 = vsub.f32 %v3410, %v3420
    %v3423 = vmul.f32 %v3421, %v3421
    %v3424 = vmul.f32 %v3422, %v3422
    %v3425 = vsel %vm285, %v3423, 0.0
    %v3426 = vsel %vm285, %v3424, 0.0
    %v3427 = vadd.f32 %v3425, %v3426
    %v3428 = vrot.slane %v3427, 4
    %v3429 = vadd.f32 %v3427, %v3428
    %v3430 = vrot.slane %v3429, 2
    %v3431 = vadd.f32 %v3429, %v3430
    %v3432 = vrot.slane %v3431, 1
    %v3433 = vadd.f32 %v3431, %v3432
    %v3434 = vmul.f32 %v3433, %v295
    %v3435 = vadd.f32 %v3434, 1e-05
    %v3436 = vrsqrt.pop %v3435
    %v3437 = vmul.f32 %v3435, %v3436
    %vm3438 = vcmp.eq.f32.partialorder %v3435, inf
    %v3439 = vsel %vm3438, %v3435, %v3437
    %vm3440 = vcmp.eq.f32.partialorder %v3435, 0.0
    %v3441 = vand.u32 %v3435, 2147483648
    %v3442 = vsel %vm3440, %v3441, %v3439
    %v3443 = vrcp.pop %v3442
    %v3444 = vmul.f32 %v3421, %v3443
    %v3445 = vmul.f32 %v3422, %v3443
    %3446 = vxpose.xlu0.b32.start [1/16] %v3444, 128
    %3447 = vxpose.xlu0.b32.cont [2/16] %v3445, 128
    %3448 = vxpose.xlu0.b32.cont [3/16] 0.0, 128
    %3449 = vxpose.xlu0.b32.cont [4/16] 0.0, 128
    %3450 = vxpose.xlu0.b32.cont [5/16] 0.0, 128
    %3451 = vxpose.xlu0.b32.cont [6/16] 0.0, 128
    %3452 = vxpose.xlu0.b32.cont [7/16] 0.0, 128
    %3453 = vxpose.xlu0.b32.cont [8/16] 0.0, 128
    %3454 = vxpose.xlu0.b32.cont [9/16] 0.0, 128
    %3455 = vxpose.xlu0.b32.cont [10/16] 0.0, 128
    %3456 = vxpose.xlu0.b32.cont [11/16] 0.0, 128
    %3457 = vxpose.xlu0.b32.cont [12/16] 0.0, 128
    %3458 = vxpose.xlu0.b32.cont [13/16] 0.0, 128
    %3459 = vxpose.xlu0.b32.cont [14/16] 0.0, 128
    %3460 = vxpose.xlu0.b32.cont [15/16] 0.0, 128
    %3461 = vxpose.xlu0.b32.end [16/16] 0.0, 128
    %v3462 = vpop.trf.xlu0
    %v3463 = vpop.trf.xlu0
    %v3464 = vpop.trf.xlu0
    %v3465 = vpop.trf.xlu0
    %v3466 = vpop.trf.xlu0
    %v3467 = vpop.trf.xlu0
    %v3468 = vpop.trf.xlu0
    %v3469 = vpop.trf.xlu0
    %v3470 = vpop.trf.xlu0
    %v3471 = vpop.trf.xlu0
    %v3472 = vpop.trf.xlu0
    %v3473 = vpop.trf.xlu0
    %v3474 = vpop.trf.xlu0
    %v3475 = vpop.trf.xlu0
    %v3476 = vpop.trf.xlu0
    %v3477 = vpop.trf.xlu0
    %v3479 = vsel %vm360, %v3462, 0
    %3481 = vmatprep.subr.mxu0 0.0
    %3482 = vmatpush1.msra.mxu0 %v181
    %3483 = vmatprep.subr.mxu0 0.0
    %3484 = vmatpush1.msra.mxu0 %v182
    %3485 = vmatprep.subr.mxu0 0.0
    %3486 = vmatpush1.msra.mxu0 0.0
    %3487 = vmatprep.subr.mxu0 0.0
    %3488 = vmatpush1.msra.mxu0 0.0
    %3489 = vmatprep.subr.mxu0 0.0
    %3490 = vmatpush1.msra.mxu0 0.0
    %3491 = vmatprep.subr.mxu0 0.0
    %3492 = vmatpush1.msra.mxu0 0.0
    %3493 = vmatprep.subr.mxu0 0.0
    %3494 = vmatpush1.msra.mxu0 0.0
    %3495 = vmatprep.subr.mxu0 0.0
    %3496 = vmatpush1.msra.mxu0 0.0
    %3497 = vmatprep.subr.mxu0 0.0
    %3498 = vmatpush1.msra.mxu0 0.0
    %3499 = vmatprep.subr.mxu0 0.0
    %3500 = vmatpush1.msra.mxu0 0.0
    %3501 = vmatprep.subr.mxu0 0.0
    %3502 = vmatpush1.msra.mxu0 0.0
    %3503 = vmatprep.subr.mxu0 0.0
    %3504 = vmatpush1.msra.mxu0 0.0
    %3505 = vmatprep.subr.mxu0 0.0
    %3506 = vmatpush1.msra.mxu0 0.0
    %3507 = vmatprep.subr.mxu0 0.0
    %3508 = vmatpush1.msra.mxu0 0.0
    %3509 = vmatprep.subr.mxu0 0.0
    %3510 = vmatpush1.msra.mxu0 0.0
    %3511 = vmatprep.subr.mxu0 0.0
    %3512 = vmatpush1.msra.mxu0 0.0
    %3513 = vmatprep.subr.mxu0 0.0
    %3514 = vmatpush1.msra.mxu0 0.0
    %3515 = vmatprep.subr.mxu0 0.0
    %3516 = vmatpush1.msra.mxu0 0.0
    %3517 = vmatprep.subr.mxu0 0.0
    %3518 = vmatpush1.msra.mxu0 0.0
    %3519 = vmatprep.subr.mxu0 0.0
    %3520 = vmatpush1.msra.mxu0 0.0
    %3521 = vmatprep.subr.mxu0 0.0
    %3522 = vmatpush1.msra.mxu0 0.0
    %3523 = vmatprep.subr.mxu0 0.0
    %3524 = vmatpush1.msra.mxu0 0.0
    %3525 = vmatprep.subr.mxu0 0.0
    %3526 = vmatpush1.msra.mxu0 0.0
    %3527 = vmatprep.subr.mxu0 0.0
    %3528 = vmatpush1.msra.mxu0 0.0
    %3529 = vmatprep.subr.mxu0 0.0
    %3530 = vmatpush1.msra.mxu0 0.0
    %3531 = vmatprep.subr.mxu0 0.0
    %3532 = vmatpush1.msra.mxu0 0.0
    %3533 = vmatprep.subr.mxu0 0.0
    %3534 = vmatpush1.msra.mxu0 0.0
    %3535 = vmatprep.subr.mxu0 0.0
    %3536 = vmatpush1.msra.mxu0 0.0
    %3537 = vmatprep.subr.mxu0 0.0
    %3538 = vmatpush1.msra.mxu0 0.0
    %3539 = vmatprep.subr.mxu0 0.0
    %3540 = vmatpush1.msra.mxu0 0.0
    %3541 = vmatprep.subr.mxu0 0.0
    %3542 = vmatpush1.msra.mxu0 0.0
    %3543 = vmatprep.subr.mxu0 0.0
    %3544 = vmatpush1.msra.mxu0 0.0
    %3545 = vmatprep.mubr.f32.mxu0 0.0
    %3546 = vmatmul.mubr.f32.gmra.mrb[0].mxu0 %v3479
    %v3547 = vpop.f32.mrb[0].mxu0
    %v3548 = vadd.f32 %v326, %v3547
    %v3549 = vpop.f32.mrb[0].mxu0
    %3550 = vdwg.mxu0
    %v3552 = vsel %vm440, %v3548, 0
    %3554 = vmatprep.subr.mxu0 0.0
    %3555 = vmatpush1.msra.mxu0 %v191
    %3556 = vmatprep.subr.mxu0 0.0
    %3557 = vmatpush1.msra.mxu0 %v192
    %3558 = vmatprep.subr.mxu0 0.0
    %3559 = vmatpush1.msra.mxu0 %v193
    %3560 = vmatprep.subr.mxu0 0.0
    %3561 = vmatpush1.msra.mxu0 %v194
    %3562 = vmatprep.subr.mxu0 0.0
    %3563 = vmatpush1.msra.mxu0 0.0
    %3564 = vmatprep.subr.mxu0 0.0
    %3565 = vmatpush1.msra.mxu0 0.0
    %3566 = vmatprep.subr.mxu0 0.0
    %3567 = vmatpush1.msra.mxu0 0.0
    %3568 = vmatprep.subr.mxu0 0.0
    %3569 = vmatpush1.msra.mxu0 0.0
    %3570 = vmatprep.subr.mxu0 0.0
    %3571 = vmatpush1.msra.mxu0 0.0
    %3572 = vmatprep.subr.mxu0 0.0
    %3573 = vmatpush1.msra.mxu0 0.0
    %3574 = vmatprep.subr.mxu0 0.0
    %3575 = vmatpush1.msra.mxu0 0.0
    %3576 = vmatprep.subr.mxu0 0.0
    %3577 = vmatpush1.msra.mxu0 0.0
    %3578 = vmatprep.subr.mxu0 0.0
    %3579 = vmatpush1.msra.mxu0 0.0
    %3580 = vmatprep.subr.mxu0 0.0
    %3581 = vmatpush1.msra.mxu0 0.0
    %3582 = vmatprep.subr.mxu0 0.0
    %3583 = vmatpush1.msra.mxu0 0.0
    %3584 = vmatprep.subr.mxu0 0.0
    %3585 = vmatpush1.msra.mxu0 0.0
    %3586 = vmatprep.subr.mxu0 0.0
    %3587 = vmatpush1.msra.mxu0 0.0
    %3588 = vmatprep.subr.mxu0 0.0
    %3589 = vmatpush1.msra.mxu0 0.0
    %3590 = vmatprep.subr.mxu0 0.0
    %3591 = vmatpush1.msra.mxu0 0.0
    %3592 = vmatprep.subr.mxu0 0.0
    %3593 = vmatpush1.msra.mxu0 0.0
    %3594 = vmatprep.subr.mxu0 0.0
    %3595 = vmatpush1.msra.mxu0 0.0
    %3596 = vmatprep.subr.mxu0 0.0
    %3597 = vmatpush1.msra.mxu0 0.0
    %3598 = vmatprep.subr.mxu0 0.0
    %3599 = vmatpush1.msra.mxu0 0.0
    %3600 = vmatprep.subr.mxu0 0.0
    %3601 = vmatpush1.msra.mxu0 0.0
    %3602 = vmatprep.subr.mxu0 0.0
    %3603 = vmatpush1.msra.mxu0 0.0
    %3604 = vmatprep.subr.mxu0 0.0
    %3605 = vmatpush1.msra.mxu0 0.0
    %3606 = vmatprep.subr.mxu0 0.0
    %3607 = vmatpush1.msra.mxu0 0.0
    %3608 = vmatprep.subr.mxu0 0.0
    %3609 = vmatpush1.msra.mxu0 0.0
    %3610 = vmatprep.subr.mxu0 0.0
    %3611 = vmatpush1.msra.mxu0 0.0
    %3612 = vmatprep.subr.mxu0 0.0
    %3613 = vmatpush1.msra.mxu0 0.0
    %3614 = vmatprep.subr.mxu0 0.0
    %3615 = vmatpush1.msra.mxu0 0.0
    %3616 = vmatprep.subr.mxu0 0.0
    %3617 = vmatpush1.msra.mxu0 0.0
    %3618 = vmatprep.mubr.f32.mxu0 0.0
    %3619 = vmatmul.mubr.f32.gmra.mrb[0].mxu0 %v3552
    %v3620 = vpop.f32.mrb[0].mxu0
    %v3621 = vadd.f32 %v438, %v3620
    %v3622 = vpop.f32.mrb[0].mxu0
    %3623 = vdwg.mxu0
    %3624 = vmatprep.subr.mxu0 0.0
    %3625 = vmatpush1.msra.mxu0 %v196
    %3626 = vmatprep.subr.mxu0 0.0
    %3627 = vmatpush1.msra.mxu0 %v197
    %3628 = vmatprep.subr.mxu0 0.0
    %3629 = vmatpush1.msra.mxu0 %v198
    %3630 = vmatprep.subr.mxu0 0.0
    %3631 = vmatpush1.msra.mxu0 %v199
    %3632 = vmatprep.subr.mxu0 0.0
    %3633 = vmatpush1.msra.mxu0 0.0
    %3634 = vmatprep.subr.mxu0 0.0
    %3635 = vmatpush1.msra.mxu0 0.0
    %3636 = vmatprep.subr.mxu0 0.0
    %3637 = vmatpush1.msra.mxu0 0.0
    %3638 = vmatprep.subr.mxu0 0.0
    %3639 = vmatpush1.msra.mxu0 0.0
    %3640 = vmatprep.subr.mxu0 0.0
    %3641 = vmatpush1.msra.mxu0 0.0
    %3642 = vmatprep.subr.mxu0 0.0
    %3643 = vmatpush1.msra.mxu0 0.0
    %3644 = vmatprep.subr.mxu0 0.0
    %3645 = vmatpush1.msra.mxu0 0.0
    %3646 = vmatprep.subr.mxu0 0.0
    %3647 = vmatpush1.msra.mxu0 0.0
    %3648 = vmatprep.subr.mxu0 0.0
    %3649 = vmatpush1.msra.mxu0 0.0
    %3650 = vmatprep.subr.mxu0 0.0
    %3651 = vmatpush1.msra.mxu0 0.0
    %3652 = vmatprep.subr.mxu0 0.0
    %3653 = vmatpush1.msra.mxu0 0.0
    %3654 = vmatprep.subr.mxu0 0.0
    %3655 = vmatpush1.msra.mxu0 0.0
    %3656 = vmatprep.subr.mxu0 0.0
    %3657 = vmatpush1.msra.mxu0 0.0
    %3658 = vmatprep.subr.mxu0 0.0
    %3659 = vmatpush1.msra.mxu0 0.0
    %3660 = vmatprep.subr.mxu0 0.0
    %3661 = vmatpush1.msra.mxu0 0.0
    %3662 = vmatprep.subr.mxu0 0.0
    %3663 = vmatpush1.msra.mxu0 0.0
    %3664 = vmatprep.subr.mxu0 0.0
    %3665 = vmatpush1.msra.mxu0 0.0
    %3666 = vmatprep.subr.mxu0 0.0
    %3667 = vmatpush1.msra.mxu0 0.0
    %3668 = vmatprep.subr.mxu0 0.0
    %3669 = vmatpush1.msra.mxu0 0.0
    %3670 = vmatprep.subr.mxu0 0.0
    %3671 = vmatpush1.msra.mxu0 0.0
    %3672 = vmatprep.subr.mxu0 0.0
    %3673 = vmatpush1.msra.mxu0 0.0
    %3674 = vmatprep.subr.mxu0 0.0
    %3675 = vmatpush1.msra.mxu0 0.0
    %3676 = vmatprep.subr.mxu0 0.0
    %3677 = vmatpush1.msra.mxu0 0.0
    %3678 = vmatprep.subr.mxu0 0.0
    %3679 = vmatpush1.msra.mxu0 0.0
    %3680 = vmatprep.subr.mxu0 0.0
    %3681 = vmatpush1.msra.mxu0 0.0
    %3682 = vmatprep.subr.mxu0 0.0
    %3683 = vmatpush1.msra.mxu0 0.0
    %3684 = vmatprep.subr.mxu0 0.0
    %3685 = vmatpush1.msra.mxu0 0.0
    %3686 = vmatprep.subr.mxu0 0.0
    %3687 = vmatpush1.msra.mxu0 0.0
    %3688 = vmatprep.mubr.f32.mxu0 0.0
    %3689 = vmatmul.mubr.f32.gmra.mrb[0].mxu0 %v3552
    %v3690 = vpop.f32.mrb[0].mxu0
    %v3691 = vadd.f32 %v518, %v3690
    %v3692 = vpop.f32.mrb[0].mxu0
    %3693 = vdwg.mxu0
    %3694 = vmatprep.subr.mxu0 0.0
    %3695 = vmatpush1.msra.mxu0 %v201
    %3696 = vmatprep.subr.mxu0 0.0
    %3697 = vmatpush1.msra.mxu0 %v202
    %3698 = vmatprep.subr.mxu0 0.0
    %3699 = vmatpush1.msra.mxu0 %v203
    %3700 = vmatprep.subr.mxu0 0.0
    %3701 = vmatpush1.msra.mxu0 %v204
    %3702 = vmatprep.subr.mxu0 0.0
    %3703 = vmatpush1.msra.mxu0 0.0
    %3704 = vmatprep.subr.mxu0 0.0
    %3705 = vmatpush1.msra.mxu0 0.0
    %3706 = vmatprep.subr.mxu0 0.0
    %3707 = vmatpush1.msra.mxu0 0.0
    %3708 = vmatprep.subr.mxu0 0.0
    %3709 = vmatpush1.msra.mxu0 0.0
    %3710 = vmatprep.subr.mxu0 0.0
    %3711 = vmatpush1.msra.mxu0 0.0
    %3712 = vmatprep.subr.mxu0 0.0
    %3713 = vmatpush1.msra.mxu0 0.0
    %3714 = vmatprep.subr.mxu0 0.0
    %3715 = vmatpush1.msra.mxu0 0.0
    %3716 = vmatprep.subr.mxu0 0.0
    %3717 = vmatpush1.msra.mxu0 0.0
    %3718 = vmatprep.subr.mxu0 0.0
    %3719 = vmatpush1.msra.mxu0 0.0
    %3720 = vmatprep.subr.mxu0 0.0
    %3721 = vmatpush1.msra.mxu0 0.0
    %3722 = vmatprep.subr.mxu0 0.0
    %3723 = vmatpush1.msra.mxu0 0.0
    %3724 = vmatprep.subr.mxu0 0.0
    %3725 = vmatpush1.msra.mxu0 0.0
    %3726 = vmatprep.subr.mxu0 0.0
    %3727 = vmatpush1.msra.mxu0 0.0
    %3728 = vmatprep.subr.mxu0 0.0
    %3729 = vmatpush1.msra.mxu0 0.0
    %3730 = vmatprep.subr.mxu0 0.0
    %3731 = vmatpush1.msra.mxu0 0.0
    %3732 = vmatprep.subr.mxu0 0.0
    %3733 = vmatpush1.msra.mxu0 0.0
    %3734 = vmatprep.subr.mxu0 0.0
    %3735 = vmatpush1.msra.mxu0 0.0
    %3736 = vmatprep.subr.mxu0 0.0
    %3737 = vmatpush1.msra.mxu0 0.0
    %3738 = vmatprep.subr.mxu0 0.0
    %3739 = vmatpush1.msra.mxu0 0.0
    %3740 = vmatprep.subr.mxu0 0.0
    %3741 = vmatpush1.msra.mxu0 0.0
    %3742 = vmatprep.subr.mxu0 0.0
    %3743 = vmatpush1.msra.mxu0 0.0
    %3744 = vmatprep.subr.mxu0 0.0
    %3745 = vmatpush1.msra.mxu0 0.0
    %3746 = vmatprep.subr.mxu0 0.0
    %3747 = vmatpush1.msra.mxu0 0.0
    %3748 = vmatprep.subr.mxu0 0.0
    %3749 = vmatpush1.msra.mxu0 0.0
    %3750 = vmatprep.subr.mxu0 0.0
    %3751 = vmatpush1.msra.mxu0 0.0
    %3752 = vmatprep.subr.mxu0 0.0
    %3753 = vmatpush1.msra.mxu0 0.0
    %3754 = vmatprep.subr.mxu0 0.0
    %3755 = vmatpush1.msra.mxu0 0.0
    %3756 = vmatprep.subr.mxu0 0.0
    %3757 = vmatpush1.msra.mxu0 0.0
    %3758 = vmatprep.mubr.f32.mxu0 0.0
    %3759 = vmatmul.mubr.f32.gmra.mrb[0].mxu0 %v3552
    %v3760 = vpop.f32.mrb[0].mxu0
    %v3761 = vadd.f32 %v594, %v3760
    %v3762 = vpop.f32.mrb[0].mxu0
    %3763 = vdwg.mxu0
    %v3765 = vsel %vm666, %v3621, 0
    %v3768 = vsel %vm666, %v3691, 0
    %3770 = vmatprep.subr.mxu0 0.0
    %3771 = vmatpush1.xpose.msra.mxu0 %v3768
    %3772 = vmatprep.subr.mxu0 0.0
    %3773 = vmatpush1.xpose.msra.mxu0 0.0
    %3774 = vmatprep.subr.mxu0 0.0
    %3775 = vmatpush1.xpose.msra.mxu0 0.0
    %3776 = vmatprep.subr.mxu0 0.0
    %3777 = vmatpush1.xpose.msra.mxu0 0.0
    %3778 = vmatprep.subr.mxu0 0.0
    %3779 = vmatpush1.xpose.msra.mxu0 0.0
    %3780 = vmatprep.subr.mxu0 0.0
    %3781 = vmatpush1.xpose.msra.mxu0 0.0
    %3782 = vmatprep.subr.mxu0 0.0
    %3783 = vmatpush1.xpose.msra.mxu0 0.0
    %3784 = vmatprep.subr.mxu0 0.0
    %3785 = vmatpush1.xpose.msra.mxu0 0.0
    %3786 = vmatprep.subr.mxu0 0.0
    %3787 = vmatpush1.xpose.msra.mxu0 0.0
    %3788 = vmatprep.subr.mxu0 0.0
    %3789 = vmatpush1.xpose.msra.mxu0 0.0
    %3790 = vmatprep.subr.mxu0 0.0
    %3791 = vmatpush1.xpose.msra.mxu0 0.0
    %3792 = vmatprep.subr.mxu0 0.0
    %3793 = vmatpush1.xpose.msra.mxu0 0.0
    %3794 = vmatprep.subr.mxu0 0.0
    %3795 = vmatpush1.xpose.msra.mxu0 0.0
    %3796 = vmatprep.subr.mxu0 0.0
    %3797 = vmatpush1.xpose.msra.mxu0 0.0
    %3798 = vmatprep.subr.mxu0 0.0
    %3799 = vmatpush1.xpose.msra.mxu0 0.0
    %3800 = vmatprep.subr.mxu0 0.0
    %3801 = vmatpush1.xpose.msra.mxu0 0.0
    %3802 = vmatprep.subr.mxu0 0.0
    %3803 = vmatpush1.xpose.msra.mxu0 0.0
    %3804 = vmatprep.subr.mxu0 0.0
    %3805 = vmatpush1.xpose.msra.mxu0 0.0
    %3806 = vmatprep.subr.mxu0 0.0
    %3807 = vmatpush1.xpose.msra.mxu0 0.0
    %3808 = vmatprep.subr.mxu0 0.0
    %3809 = vmatpush1.xpose.msra.mxu0 0.0
    %3810 = vmatprep.subr.mxu0 0.0
    %3811 = vmatpush1.xpose.msra.mxu0 0.0
    %3812 = vmatprep.subr.mxu0 0.0
    %3813 = vmatpush1.xpose.msra.mxu0 0.0
    %3814 = vmatprep.subr.mxu0 0.0
    %3815 = vmatpush1.xpose.msra.mxu0 0.0
    %3816 = vmatprep.subr.mxu0 0.0
    %3817 = vmatpush1.xpose.msra.mxu0 0.0
    %3818 = vmatprep.subr.mxu0 0.0
    %3819 = vmatpush1.xpose.msra.mxu0 0.0
    %3820 = vmatprep.subr.mxu0 0.0
    %3821 = vmatpush1.xpose.msra.mxu0 0.0
    %3822 = vmatprep.subr.mxu0 0.0
    %3823 = vmatpush1.xpose.msra.mxu0 0.0
    %3824 = vmatprep.subr.mxu0 0.0
    %3825 = vmatpush1.xpose.msra.mxu0 0.0
    %3826 = vmatprep.subr.mxu0 0.0
    %3827 = vmatpush1.xpose.msra.mxu0 0.0
    %3828 = vmatprep.subr.mxu0 0.0
    %3829 = vmatpush1.xpose.msra.mxu0 0.0
    %3830 = vmatprep.subr.mxu0 0.0
    %3831 = vmatpush1.xpose.msra.mxu0 0.0
    %3832 = vmatprep.subr.mxu0 0.0
    %3833 = vmatpush1.xpose.msra.mxu0 0.0
    %3834 = vmatprep.mubr.f32.mxu0 0.0
    %3835 = vmatmul.mubr.f32.gmra.mrb[0].mxu0 %v3765
    %v3836 = vpop.f32.mrb[0].mxu0
    %v3837 = vadd.f32 0.0, %v3836
    %v3838 = vpop.f32.mrb[0].mxu0
    %3839 = vdwg.mxu0
    %v3840 = vmul.f32 %v3837, 0.35355338
    %v3841 = vsel %vm744, %v3840, -inf
    %3842 = vmax.xlane.f32.xlu0 %v3841
    %v3843 = vpop.xlane.xlu0 %3842
    %v3844 = vsub.f32 %v3840, %v3843
    %v3845 = vmul.f32 %v3844, 1.442695
    %v3846 = vpow.pop %v3845
    %v3847 = vsel %vm744, %v3846, 0.0
    %3848 = vadd.xlane.f32.xlu0 %v3847
    %v3849 = vpop.xlane.xlu0 %3848
    %v3850 = vrcp.pop %v3849
    %v3851 = vmul.f32 %v3846, %v3850
    %v3853 = vsel %vm285, %v3851, 0
    %v3856 = vsel %vm759, %v3761, 0
    %3858 = vmatprep.subr.mxu0 0.0
    %3859 = vmatpush1.msra.mxu0 %v3856
    %3860 = vmatprep.subr.mxu0 0.0
    %3861 = vmatpush1.msra.mxu0 0.0
    %3862 = vmatprep.subr.mxu0 0.0
    %3863 = vmatpush1.msra.mxu0 0.0
    %3864 = vmatprep.subr.mxu0 0.0
    %3865 = vmatpush1.msra.mxu0 0.0
    %3866 = vmatprep.subr.mxu0 0.0
    %3867 = vmatpush1.msra.mxu0 0.0
    %3868 = vmatprep.subr.mxu0 0.0
    %3869 = vmatpush1.msra.mxu0 0.0
    %3870 = vmatprep.subr.mxu0 0.0
    %3871 = vmatpush1.msra.mxu0 0.0
    %3872 = vmatprep.subr.mxu0 0.0
    %3873 = vmatpush1.msra.mxu0 0.0
    %3874 = vmatprep.subr.mxu0 0.0
    %3875 = vmatpush1.msra.mxu0 0.0
    %3876 = vmatprep.subr.mxu0 0.0
    %3877 = vmatpush1.msra.mxu0 0.0
    %3878 = vmatprep.subr.mxu0 0.0
    %3879 = vmatpush1.msra.mxu0 0.0
    %3880 = vmatprep.subr.mxu0 0.0
    %3881 = vmatpush1.msra.mxu0 0.0
    %3882 = vmatprep.subr.mxu0 0.0
    %3883 = vmatpush1.msra.mxu0 0.0
    %3884 = vmatprep.subr.mxu0 0.0
    %3885 = vmatpush1.msra.mxu0 0.0
    %3886 = vmatprep.subr.mxu0 0.0
    %3887 = vmatpush1.msra.mxu0 0.0
    %3888 = vmatprep.subr.mxu0 0.0
    %3889 = vmatpush1.msra.mxu0 0.0
    %3890 = vmatprep.subr.mxu0 0.0
    %3891 = vmatpush1.msra.mxu0 0.0
    %3892 = vmatprep.subr.mxu0 0.0
    %3893 = vmatpush1.msra.mxu0 0.0
    %3894 = vmatprep.subr.mxu0 0.0
    %3895 = vmatpush1.msra.mxu0 0.0
    %3896 = vmatprep.subr.mxu0 0.0
    %3897 = vmatpush1.msra.mxu0 0.0
    %3898 = vmatprep.subr.mxu0 0.0
    %3899 = vmatpush1.msra.mxu0 0.0
    %3900 = vmatprep.subr.mxu0 0.0
    %3901 = vmatpush1.msra.mxu0 0.0
    %3902 = vmatprep.subr.mxu0 0.0
    %3903 = vmatpush1.msra.mxu0 0.0
    %3904 = vmatprep.subr.mxu0 0.0
    %3905 = vmatpush1.msra.mxu0 0.0
    %3906 = vmatprep.subr.mxu0 0.0
    %3907 = vmatpush1.msra.mxu0 0.0
    %3908 = vmatprep.subr.mxu0 0.0
    %3909 = vmatpush1.msra.mxu0 0.0
    %3910 = vmatprep.subr.mxu0 0.0
    %3911 = vmatpush1.msra.mxu0 0.0
    %3912 = vmatprep.subr.mxu0 0.0
    %3913 = vmatpush1.msra.mxu0 0.0
    %3914 = vmatprep.subr.mxu0 0.0
    %3915 = vmatpush1.msra.mxu0 0.0
    %3916 = vmatprep.subr.mxu0 0.0
    %3917 = vmatpush1.msra.mxu0 0.0
    %3918 = vmatprep.subr.mxu0 0.0
    %3919 = vmatpush1.msra.mxu0 0.0
    %3920 = vmatprep.subr.mxu0 0.0
    %3921 = vmatpush1.msra.mxu0 0.0
    %3922 = vmatprep.mubr.f32.mxu0 0.0
    %3923 = vmatmul.mubr.f32.gmra.mrb[0].mxu0 %v3853
    %v3924 = vpop.f32.mrb[0].mxu0
    %v3925 = vadd.f32 0.0, %v3924
    %v3926 = vpop.f32.mrb[0].mxu0
    %3927 = vdwg.mxu0
    %3928 = vrot.lane.b32.xlu0 %v3621, 120
    %v3929 = vpop.permute.xlu0 %3928
    %3930 = vrot.lane.b32.xlu0 %v3691, 120
    %v3931 = vpop.permute.xlu0 %3930
    %v3932 = vsel %vm666, %v3929, 0
    %v3934 = vsel %vm666, %v3931, 0
    %3936 = vmatprep.subr.mxu0 0.0
    %3937 = vmatpush1.xpose.msra.mxu0 %v3934
    %3938 = vmatprep.subr.mxu0 0.0
    %3939 = vmatpush1.xpose.msra.mxu0 0.0
    %3940 = vmatprep.subr.mxu0 0.0
    %3941 = vmatpush1.xpose.msra.mxu0 0.0
    %3942 = vmatprep.subr.mxu0 0.0
    %3943 = vmatpush1.xpose.msra.mxu0 0.0
    %3944 = vmatprep.subr.mxu0 0.0
    %3945 = vmatpush1.xpose.msra.mxu0 0.0
    %3946 = vmatprep.subr.mxu0 0.0
    %3947 = vmatpush1.xpose.msra.mxu0 0.0
    %3948 = vmatprep.subr.mxu0 0.0
    %3949 = vmatpush1.xpose.msra.mxu0 0.0
    %3950 = vmatprep.subr.mxu0 0.0
    %3951 = vmatpush1.xpose.msra.mxu0 0.0
    %3952 = vmatprep.subr.mxu0 0.0
    %3953 = vmatpush1.xpose.msra.mxu0 0.0
    %3954 = vmatprep.subr.mxu0 0.0
    %3955 = vmatpush1.xpose.msra.mxu0 0.0
    %3956 = vmatprep.subr.mxu0 0.0
    %3957 = vmatpush1.xpose.msra.mxu0 0.0
    %3958 = vmatprep.subr.mxu0 0.0
    %3959 = vmatpush1.xpose.msra.mxu0 0.0
    %3960 = vmatprep.subr.mxu0 0.0
    %3961 = vmatpush1.xpose.msra.mxu0 0.0
    %3962 = vmatprep.subr.mxu0 0.0
    %3963 = vmatpush1.xpose.msra.mxu0 0.0
    %3964 = vmatprep.subr.mxu0 0.0
    %3965 = vmatpush1.xpose.msra.mxu0 0.0
    %3966 = vmatprep.subr.mxu0 0.0
    %3967 = vmatpush1.xpose.msra.mxu0 0.0
    %3968 = vmatprep.subr.mxu0 0.0
    %3969 = vmatpush1.xpose.msra.mxu0 0.0
    %3970 = vmatprep.subr.mxu0 0.0
    %3971 = vmatpush1.xpose.msra.mxu0 0.0
    %3972 = vmatprep.subr.mxu0 0.0
    %3973 = vmatpush1.xpose.msra.mxu0 0.0
    %3974 = vmatprep.subr.mxu0 0.0
    %3975 = vmatpush1.xpose.msra.mxu0 0.0
    %3976 = vmatprep.subr.mxu0 0.0
    %3977 = vmatpush1.xpose.msra.mxu0 0.0
    %3978 = vmatprep.subr.mxu0 0.0
    %3979 = vmatpush1.xpose.msra.mxu0 0.0
    %3980 = vmatprep.subr.mxu0 0.0
    %3981 = vmatpush1.xpose.msra.mxu0 0.0
    %3982 = vmatprep.subr.mxu0 0.0
    %3983 = vmatpush1.xpose.msra.mxu0 0.0
    %3984 = vmatprep.subr.mxu0 0.0
    %3985 = vmatpush1.xpose.msra.mxu0 0.0
    %3986 = vmatprep.subr.mxu0 0.0
    %3987 = vmatpush1.xpose.msra.mxu0 0.0
    %3988 = vmatprep.subr.mxu0 0.0
    %3989 = vmatpush1.xpose.msra.mxu0 0.0
    %3990 = vmatprep.subr.mxu0 0.0
    %3991 = vmatpush1.xpose.msra.mxu0 0.0
    %3992 = vmatprep.subr.mxu0 0.0
    %3993 = vmatpush1.xpose.msra.mxu0 0.0
    %3994 = vmatprep.subr.mxu0 0.0
    %3995 = vmatpush1.xpose.msra.mxu0 0.0
    %3996 = vmatprep.subr.mxu0 0.0
    %3997 = vmatpush1.xpose.msra.mxu0 0.0
    %3998 = vmatprep.subr.mxu0 0.0
    %3999 = vmatpush1.xpose.msra.mxu0 0.0
    %4000 = vmatprep.mubr.f32.mxu0 0.0
    %4001 = vmatmul.mubr.f32.gmra.mrb[0].mxu0 %v3932
    %v4002 = vpop.f32.mrb[0].mxu0
    %v4003 = vadd.f32 0.0, %v4002
    %v4004 = vpop.f32.mrb[0].mxu0
    %4005 = vdwg.mxu0
    %v4006 = vmul.f32 %v4003, 0.35355338
    %v4007 = vsel %vm744, %v4006, -inf
    %4008 = vmax.xlane.f32.xlu0 %v4007
    %v4009 = vpop.xlane.xlu0 %4008
    %v4010 = vsub.f32 %v4006, %v4009
    %v4011 = vmul.f32 %v4010, 1.442695
    %v4012 = vpow.pop %v4011
    %v4013 = vsel %vm744, %v4012, 0.0
    %4014 = vadd.xlane.f32.xlu0 %v4013
    %v4015 = vpop.xlane.xlu0 %4014
    %v4016 = vrcp.pop %v4015
    %v4017 = vmul.f32 %v4012, %v4016
    %4018 = vrot.lane.b32.xlu0 %v3761, 120
    %v4019 = vpop.permute.xlu0 %4018
    %v4021 = vsel %vm285, %v4017, 0
    %v4023 = vsel %vm759, %v4019, 0
    %4025 = vmatprep.subr.mxu0 0.0
    %4026 = vmatpush1.msra.mxu0 %v4023
    %4027 = vmatprep.subr.mxu0 0.0
    %4028 = vmatpush1.msra.mxu0 0.0
    %4029 = vmatprep.subr.mxu0 0.0
    %4030 = vmatpush1.msra.mxu0 0.0
    %4031 = vmatprep.subr.mxu0 0.0
    %4032 = vmatpush1.msra.mxu0 0.0
    %4033 = vmatprep.subr.mxu0 0.0
    %4034 = vmatpush1.msra.mxu0 0.0
    %4035 = vmatprep.subr.mxu0 0.0
    %4036 = vmatpush1.msra.mxu0 0.0
    %4037 = vmatprep.subr.mxu0 0.0
    %4038 = vmatpush1.msra.mxu0 0.0
    %4039 = vmatprep.subr.mxu0 0.0
    %4040 = vmatpush1.msra.mxu0 0.0
    %4041 = vmatprep.subr.mxu0 0.0
    %4042 = vmatpush1.msra.mxu0 0.0
    %4043 = vmatprep.subr.mxu0 0.0
    %4044 = vmatpush1.msra.mxu0 0.0
    %4045 = vmatprep.subr.mxu0 0.0
    %4046 = vmatpush1.msra.mxu0 0.0
    %4047 = vmatprep.subr.mxu0 0.0
    %4048 = vmatpush1.msra.mxu0 0.0
    %4049 = vmatprep.subr.mxu0 0.0
    %4050 = vmatpush1.msra.mxu0 0.0
    %4051 = vmatprep.subr.mxu0 0.0
    %4052 = vmatpush1.msra.mxu0 0.0
    %4053 = vmatprep.subr.mxu0 0.0
    %4054 = vmatpush1.msra.mxu0 0.0
    %4055 = vmatprep.subr.mxu0 0.0
    %4056 = vmatpush1.msra.mxu0 0.0
    %4057 = vmatprep.subr.mxu0 0.0
    %4058 = vmatpush1.msra.mxu0 0.0
    %4059 = vmatprep.subr.mxu0 0.0
    %4060 = vmatpush1.msra.mxu0 0.0
    %4061 = vmatprep.subr.mxu0 0.0
    %4062 = vmatpush1.msra.mxu0 0.0
    %4063 = vmatprep.subr.mxu0 0.0
    %4064 = vmatpush1.msra.mxu0 0.0
    %4065 = vmatprep.subr.mxu0 0.0
    %4066 = vmatpush1.msra.mxu0 0.0
    %4067 = vmatprep.subr.mxu0 0.0
    %4068 = vmatpush1.msra.mxu0 0.0
    %4069 = vmatprep.subr.mxu0 0.0
    %4070 = vmatpush1.msra.mxu0 0.0
    %4071 = vmatprep.subr.mxu0 0.0
    %4072 = vmatpush1.msra.mxu0 0.0
    %4073 = vmatprep.subr.mxu0 0.0
    %4074 = vmatpush1.msra.mxu0 0.0
    %4075 = vmatprep.subr.mxu0 0.0
    %4076 = vmatpush1.msra.mxu0 0.0
    %4077 = vmatprep.subr.mxu0 0.0
    %4078 = vmatpush1.msra.mxu0 0.0
    %4079 = vmatprep.subr.mxu0 0.0
    %4080 = vmatpush1.msra.mxu0 0.0
    %4081 = vmatprep.subr.mxu0 0.0
    %4082 = vmatpush1.msra.mxu0 0.0
    %4083 = vmatprep.subr.mxu0 0.0
    %4084 = vmatpush1.msra.mxu0 0.0
    %4085 = vmatprep.subr.mxu0 0.0
    %4086 = vmatpush1.msra.mxu0 0.0
    %4087 = vmatprep.subr.mxu0 0.0
    %4088 = vmatpush1.msra.mxu0 0.0
    %4089 = vmatprep.mubr.f32.mxu0 0.0
    %4090 = vmatmul.mubr.f32.gmra.mrb[0].mxu0 %v4021
    %v4091 = vpop.f32.mrb[0].mxu0
    %v4092 = vadd.f32 0.0, %v4091
    %v4093 = vpop.f32.mrb[0].mxu0
    %4094 = vdwg.mxu0
    %v4096 = vsel %vm666, %v4092, 0
    %4098 = vmatprep.subr.mxu0 0.0
    %4099 = vmatpush1.msra.mxu0 %v207
    %4100 = vmatprep.subr.mxu0 0.0
    %4101 = vmatpush1.msra.mxu0 0.0
    %4102 = vmatprep.subr.mxu0 0.0
    %4103 = vmatpush1.msra.mxu0 0.0
    %4104 = vmatprep.subr.mxu0 0.0
    %4105 = vmatpush1.msra.mxu0 0.0
    %4106 = vmatprep.subr.mxu0 0.0
    %4107 = vmatpush1.msra.mxu0 0.0
    %4108 = vmatprep.subr.mxu0 0.0
    %4109 = vmatpush1.msra.mxu0 0.0
    %4110 = vmatprep.subr.mxu0 0.0
    %4111 = vmatpush1.msra.mxu0 0.0
    %4112 = vmatprep.subr.mxu0 0.0
    %4113 = vmatpush1.msra.mxu0 0.0
    %4114 = vmatprep.subr.mxu0 0.0
    %4115 = vmatpush1.msra.mxu0 0.0
    %4116 = vmatprep.subr.mxu0 0.0
    %4117 = vmatpush1.msra.mxu0 0.0
    %4118 = vmatprep.subr.mxu0 0.0
    %4119 = vmatpush1.msra.mxu0 0.0
    %4120 = vmatprep.subr.mxu0 0.0
    %4121 = vmatpush1.msra.mxu0 0.0
    %4122 = vmatprep.subr.mxu0 0.0
    %4123 = vmatpush1.msra.mxu0 0.0
    %4124 = vmatprep.subr.mxu0 0.0
    %4125 = vmatpush1.msra.mxu0 0.0
    %4126 = vmatprep.subr.mxu0 0.0
    %4127 = vmatpush1.msra.mxu0 0.0
    %4128 = vmatprep.subr.mxu0 0.0
    %4129 = vmatpush1.msra.mxu0 0.0
    %4130 = vmatprep.subr.mxu0 0.0
    %4131 = vmatpush1.msra.mxu0 0.0
    %4132 = vmatprep.subr.mxu0 0.0
    %4133 = vmatpush1.msra.mxu0 0.0
    %4134 = vmatprep.subr.mxu0 0.0
    %4135 = vmatpush1.msra.mxu0 0.0
    %4136 = vmatprep.subr.mxu0 0.0
    %4137 = vmatpush1.msra.mxu0 0.0
    %4138 = vmatprep.subr.mxu0 0.0
    %4139 = vmatpush1.msra.mxu0 0.0
    %4140 = vmatprep.subr.mxu0 0.0
    %4141 = vmatpush1.msra.mxu0 0.0
    %4142 = vmatprep.subr.mxu0 0.0
    %4143 = vmatpush1.msra.mxu0 0.0
    %4144 = vmatprep.subr.mxu0 0.0
    %4145 = vmatpush1.msra.mxu0 0.0
    %4146 = vmatprep.subr.mxu0 0.0
    %4147 = vmatpush1.msra.mxu0 0.0
    %4148 = vmatprep.subr.mxu0 0.0
    %4149 = vmatpush1.msra.mxu0 0.0
    %4150 = vmatprep.subr.mxu0 0.0
    %4151 = vmatpush1.msra.mxu0 0.0
    %4152 = vmatprep.subr.mxu0 0.0
    %4153 = vmatpush1.msra.mxu0 0.0
    %4154 = vmatprep.subr.mxu0 0.0
    %4155 = vmatpush1.msra.mxu0 0.0
    %4156 = vmatprep.subr.mxu0 0.0
    %4157 = vmatpush1.msra.mxu0 0.0
    %4158 = vmatprep.subr.mxu0 0.0
    %4159 = vmatpush1.msra.mxu0 0.0
    %4160 = vmatprep.subr.mxu0 0.0
    %4161 = vmatpush1.msra.mxu0 0.0
    %4162 = vmatprep.mubr.f32.mxu0 0.0
    %4163 = vmatmul.mubr.f32.gmra.mrb[0].mxu0 %v4096
    %v4164 = vpop.f32.mrb[0].mxu0
    %v4165 = vadd.f32 0.0, %v4164
    %v4166 = vpop.f32.mrb[0].mxu0
    %4167 = vdwg.mxu0
    %v4169 = vsel %vm666, %v3925, 0
    %4171 = vmatprep.subr.mxu0 0.0
    %4172 = vmatpush1.msra.mxu0 %v206
    %4173 = vmatprep.subr.mxu0 0.0
    %4174 = vmatpush1.msra.mxu0 0.0
    %4175 = vmatprep.subr.mxu0 0.0
    %4176 = vmatpush1.msra.mxu0 0.0
    %4177 = vmatprep.subr.mxu0 0.0
    %4178 = vmatpush1.msra.mxu0 0.0
    %4179 = vmatprep.subr.mxu0 0.0
    %4180 = vmatpush1.msra.mxu0 0.0
    %4181 = vmatprep.subr.mxu0 0.0
    %4182 = vmatpush1.msra.mxu0 0.0
    %4183 = vmatprep.subr.mxu0 0.0
    %4184 = vmatpush1.msra.mxu0 0.0
    %4185 = vmatprep.subr.mxu0 0.0
    %4186 = vmatpush1.msra.mxu0 0.0
    %4187 = vmatprep.subr.mxu0 0.0
    %4188 = vmatpush1.msra.mxu0 0.0
    %4189 = vmatprep.subr.mxu0 0.0
    %4190 = vmatpush1.msra.mxu0 0.0
    %4191 = vmatprep.subr.mxu0 0.0
    %4192 = vmatpush1.msra.mxu0 0.0
    %4193 = vmatprep.subr.mxu0 0.0
    %4194 = vmatpush1.msra.mxu0 0.0
    %4195 = vmatprep.subr.mxu0 0.0
    %4196 = vmatpush1.msra.mxu0 0.0
    %4197 = vmatprep.subr.mxu0 0.0
    %4198 = vmatpush1.msra.mxu0 0.0
    %4199 = vmatprep.subr.mxu0 0.0
    %4200 = vmatpush1.msra.mxu0 0.0
    %4201 = vmatprep.subr.mxu0 0.0
    %4202 = vmatpush1.msra.mxu0 0.0
    %4203 = vmatprep.subr.mxu0 0.0
    %4204 = vmatpush1.msra.mxu0 0.0
    %4205 = vmatprep.subr.mxu0 0.0
    %4206 = vmatpush1.msra.mxu0 0.0
    %4207 = vmatprep.subr.mxu0 0.0
    %4208 = vmatpush1.msra.mxu0 0.0
    %4209 = vmatprep.subr.mxu0 0.0
    %4210 = vmatpush1.msra.mxu0 0.0
    %4211 = vmatprep.subr.mxu0 0.0
    %4212 = vmatpush1.msra.mxu0 0.0
    %4213 = vmatprep.subr.mxu0 0.0
    %4214 = vmatpush1.msra.mxu0 0.0
    %4215 = vmatprep.subr.mxu0 0.0
    %4216 = vmatpush1.msra.mxu0 0.0
    %4217 = vmatprep.subr.mxu0 0.0
    %4218 = vmatpush1.msra.mxu0 0.0
    %4219 = vmatprep.subr.mxu0 0.0
    %4220 = vmatpush1.msra.mxu0 0.0
    %4221 = vmatprep.subr.mxu0 0.0
    %4222 = vmatpush1.msra.mxu0 0.0
    %4223 = vmatprep.subr.mxu0 0.0
    %4224 = vmatpush1.msra.mxu0 0.0
    %4225 = vmatprep.subr.mxu0 0.0
    %4226 = vmatpush1.msra.mxu0 0.0
    %4227 = vmatprep.subr.mxu0 0.0
    %4228 = vmatpush1.msra.mxu0 0.0
    %4229 = vmatprep.subr.mxu0 0.0
    %4230 = vmatpush1.msra.mxu0 0.0
    %4231 = vmatprep.subr.mxu0 0.0
    %4232 = vmatpush1.msra.mxu0 0.0
    %4233 = vmatprep.subr.mxu0 0.0
    %4234 = vmatpush1.msra.mxu0 0.0
    %4235 = vmatprep.mubr.f32.mxu0 0.0
    %4236 = vmatmul.mubr.f32.gmra.mrb[0].mxu0 %v4169
    %v4237 = vpop.f32.mrb[0].mxu0
    %v4238 = vadd.f32 %v4165, %v4237
    %v4239 = vpop.f32.mrb[0].mxu0
    %4240 = vdwg.mxu0
    %4241 = vrot.lane.b32.xlu0 %v3621, 112
    %v4242 = vpop.permute.xlu0 %4241
    %4243 = vrot.lane.b32.xlu0 %v3691, 112
    %v4244 = vpop.permute.xlu0 %4243
    %v4245 = vsel %vm666, %v4242, 0
    %v4247 = vsel %vm666, %v4244, 0
    %4249 = vmatprep.subr.mxu0 0.0
    %4250 = vmatpush1.xpose.msra.mxu0 %v4247
    %4251 = vmatprep.subr.mxu0 0.0
    %4252 = vmatpush1.xpose.msra.mxu0 0.0
    %4253 = vmatprep.subr.mxu0 0.0
    %4254 = vmatpush1.xpose.msra.mxu0 0.0
    %4255 = vmatprep.subr.mxu0 0.0
    %4256 = vmatpush1.xpose.msra.mxu0 0.0
    %4257 = vmatprep.subr.mxu0 0.0
    %4258 = vmatpush1.xpose.msra.mxu0 0.0
    %4259 = vmatprep.subr.mxu0 0.0
    %4260 = vmatpush1.xpose.msra.mxu0 0.0
    %4261 = vmatprep.subr.mxu0 0.0
    %4262 = vmatpush1.xpose.msra.mxu0 0.0
    %4263 = vmatprep.subr.mxu0 0.0
    %4264 = vmatpush1.xpose.msra.mxu0 0.0
    %4265 = vmatprep.subr.mxu0 0.0
    %4266 = vmatpush1.xpose.msra.mxu0 0.0
    %4267 = vmatprep.subr.mxu0 0.0
    %4268 = vmatpush1.xpose.msra.mxu0 0.0
    %4269 = vmatprep.subr.mxu0 0.0
    %4270 = vmatpush1.xpose.msra.mxu0 0.0
    %4271 = vmatprep.subr.mxu0 0.0
    %4272 = vmatpush1.xpose.msra.mxu0 0.0
    %4273 = vmatprep.subr.mxu0 0.0
    %4274 = vmatpush1.xpose.msra.mxu0 0.0
    %4275 = vmatprep.subr.mxu0 0.0
    %4276 = vmatpush1.xpose.msra.mxu0 0.0
    %4277 = vmatprep.subr.mxu0 0.0
    %4278 = vmatpush1.xpose.msra.mxu0 0.0
    %4279 = vmatprep.subr.mxu0 0.0
    %4280 = vmatpush1.xpose.msra.mxu0 0.0
    %4281 = vmatprep.subr.mxu0 0.0
    %4282 = vmatpush1.xpose.msra.mxu0 0.0
    %4283 = vmatprep.subr.mxu0 0.0
    %4284 = vmatpush1.xpose.msra.mxu0 0.0
    %4285 = vmatprep.subr.mxu0 0.0
    %4286 = vmatpush1.xpose.msra.mxu0 0.0
    %4287 = vmatprep.subr.mxu0 0.0
    %4288 = vmatpush1.xpose.msra.mxu0 0.0
    %4289 = vmatprep.subr.mxu0 0.0
    %4290 = vmatpush1.xpose.msra.mxu0 0.0
    %4291 = vmatprep.subr.mxu0 0.0
    %4292 = vmatpush1.xpose.msra.mxu0 0.0
    %4293 = vmatprep.subr.mxu0 0.0
    %4294 = vmatpush1.xpose.msra.mxu0 0.0
    %4295 = vmatprep.subr.mxu0 0.0
    %4296 = vmatpush1.xpose.msra.mxu0 0.0
    %4297 = vmatprep.subr.mxu0 0.0
    %4298 = vmatpush1.xpose.msra.mxu0 0.0
    %4299 = vmatprep.subr.mxu0 0.0
    %4300 = vmatpush1.xpose.msra.mxu0 0.0
    %4301 = vmatprep.subr.mxu0 0.0
    %4302 = vmatpush1.xpose.msra.mxu0 0.0
    %4303 = vmatprep.subr.mxu0 0.0
    %4304 = vmatpush1.xpose.msra.mxu0 0.0
    %4305 = vmatprep.subr.mxu0 0.0
    %4306 = vmatpush1.xpose.msra.mxu0 0.0
    %4307 = vmatprep.subr.mxu0 0.0
    %4308 = vmatpush1.xpose.msra.mxu0 0.0
    %4309 = vmatprep.subr.mxu0 0.0
    %4310 = vmatpush1.xpose.msra.mxu0 0.0
    %4311 = vmatprep.subr.mxu0 0.0
    %4312 = vmatpush1.xpose.msra.mxu0 0.0
    %4313 = vmatprep.mubr.f32.mxu0 0.0
    %4314 = vmatmul.mubr.f32.gmra.mrb[0].mxu0 %v4245
    %v4315 = vpop.f32.mrb[0].mxu0
    %v4316 = vadd.f32 0.0, %v4315
    %v4317 = vpop.f32.mrb[0].mxu0
    %4318 = vdwg.mxu0
    %v4319 = vmul.f32 %v4316, 0.35355338
    %v4320 = vsel %vm744, %v4319, -inf
    %4321 = vmax.xlane.f32.xlu0 %v4320
    %v4322 = vpop.xlane.xlu0 %4321
    %v4323 = vsub.f32 %v4319, %v4322
    %v4324 = vmul.f32 %v4323, 1.442695
    %v4325 = vpow.pop %v4324
    %v4326 = vsel %vm744, %v4325, 0.0
    %4327 = vadd.xlane.f32.xlu0 %v4326
    %v4328 = vpop.xlane.xlu0 %4327
    %v4329 = vrcp.pop %v4328
    %v4330 = vmul.f32 %v4325, %v4329
    %4331 = vrot.lane.b32.xlu0 %v3761, 112
    %v4332 = vpop.permute.xlu0 %4331
    %v4334 = vsel %vm285, %v4330, 0
    %v4336 = vsel %vm759, %v4332, 0
    %4338 = vmatprep.subr.mxu0 0.0
    %4339 = vmatpush1.msra.mxu0 %v4336
    %4340 = vmatprep.subr.mxu0 0.0
    %4341 = vmatpush1.msra.mxu0 0.0
    %4342 = vmatprep.subr.mxu0 0.0
    %4343 = vmatpush1.msra.mxu0 0.0
    %4344 = vmatprep.subr.mxu0 0.0
    %4345 = vmatpush1.msra.mxu0 0.0
    %4346 = vmatprep.subr.mxu0 0.0
    %4347 = vmatpush1.msra.mxu0 0.0
    %4348 = vmatprep.subr.mxu0 0.0
    %4349 = vmatpush1.msra.mxu0 0.0
    %4350 = vmatprep.subr.mxu0 0.0
    %4351 = vmatpush1.msra.mxu0 0.0
    %4352 = vmatprep.subr.mxu0 0.0
    %4353 = vmatpush1.msra.mxu0 0.0
    %4354 = vmatprep.subr.mxu0 0.0
    %4355 = vmatpush1.msra.mxu0 0.0
    %4356 = vmatprep.subr.mxu0 0.0
    %4357 = vmatpush1.msra.mxu0 0.0
    %4358 = vmatprep.subr.mxu0 0.0
    %4359 = vmatpush1.msra.mxu0 0.0
    %4360 = vmatprep.subr.mxu0 0.0
    %4361 = vmatpush1.msra.mxu0 0.0
    %4362 = vmatprep.subr.mxu0 0.0
    %4363 = vmatpush1.msra.mxu0 0.0
    %4364 = vmatprep.subr.mxu0 0.0
    %4365 = vmatpush1.msra.mxu0 0.0
    %4366 = vmatprep.subr.mxu0 0.0
    %4367 = vmatpush1.msra.mxu0 0.0
    %4368 = vmatprep.subr.mxu0 0.0
    %4369 = vmatpush1.msra.mxu0 0.0
    %4370 = vmatprep.subr.mxu0 0.0
    %4371 = vmatpush1.msra.mxu0 0.0
    %4372 = vmatprep.subr.mxu0 0.0
    %4373 = vmatpush1.msra.mxu0 0.0
    %4374 = vmatprep.subr.mxu0 0.0
    %4375 = vmatpush1.msra.mxu0 0.0
    %4376 = vmatprep.subr.mxu0 0.0
    %4377 = vmatpush1.msra.mxu0 0.0
    %4378 = vmatprep.subr.mxu0 0.0
    %4379 = vmatpush1.msra.mxu0 0.0
    %4380 = vmatprep.subr.mxu0 0.0
    %4381 = vmatpush1.msra.mxu0 0.0
    %4382 = vmatprep.subr.mxu0 0.0
    %4383 = vmatpush1.msra.mxu0 0.0
    %4384 = vmatprep.subr.mxu0 0.0
    %4385 = vmatpush1.msra.mxu0 0.0
    %4386 = vmatprep.subr.mxu0 0.0
    %4387 = vmatpush1.msra.mxu0 0.0
    %4388 = vmatprep.subr.mxu0 0.0
    %4389 = vmatpush1.msra.mxu0 0.0
    %4390 = vmatprep.subr.mxu0 0.0
    %4391 = vmatpush1.msra.mxu0 0.0
    %4392 = vmatprep.subr.mxu0 0.0
    %4393 = vmatpush1.msra.mxu0 0.0
    %4394 = vmatprep.subr.mxu0 0.0
    %4395 = vmatpush1.msra.mxu0 0.0
    %4396 = vmatprep.subr.mxu0 0.0
    %4397 = vmatpush1.msra.mxu0 0.0
    %4398 = vmatprep.subr.mxu0 0.0
    %4399 = vmatpush1.msra.mxu0 0.0
    %4400 = vmatprep.subr.mxu0 0.0
    %4401 = vmatpush1.msra.mxu0 0.0
    %4402 = vmatprep.mubr.f32.mxu0 0.0
    %4403 = vmatmul.mubr.f32.gmra.mrb[0].mxu0 %v4334
    %v4404 = vpop.f32.mrb[0].mxu0
    %v4405 = vadd.f32 0.0, %v4404
    %v4406 = vpop.f32.mrb[0].mxu0
    %4407 = vdwg.mxu0
    %v4409 = vsel %vm666, %v4405, 0
    %4411 = vmatprep.subr.mxu0 0.0
    %4412 = vmatpush1.msra.mxu0 %v208
    %4413 = vmatprep.subr.mxu0 0.0
    %4414 = vmatpush1.msra.mxu0 0.0
    %4415 = vmatprep.subr.mxu0 0.0
    %4416 = vmatpush1.msra.mxu0 0.0
    %4417 = vmatprep.subr.mxu0 0.0
    %4418 = vmatpush1.msra.mxu0 0.0
    %4419 = vmatprep.subr.mxu0 0.0
    %4420 = vmatpush1.msra.mxu0 0.0
    %4421 = vmatprep.subr.mxu0 0.0
    %4422 = vmatpush1.msra.mxu0 0.0
    %4423 = vmatprep.subr.mxu0 0.0
    %4424 = vmatpush1.msra.mxu0 0.0
    %4425 = vmatprep.subr.mxu0 0.0
    %4426 = vmatpush1.msra.mxu0 0.0
    %4427 = vmatprep.subr.mxu0 0.0
    %4428 = vmatpush1.msra.mxu0 0.0
    %4429 = vmatprep.subr.mxu0 0.0
    %4430 = vmatpush1.msra.mxu0 0.0
    %4431 = vmatprep.subr.mxu0 0.0
    %4432 = vmatpush1.msra.mxu0 0.0
    %4433 = vmatprep.subr.mxu0 0.0
    %4434 = vmatpush1.msra.mxu0 0.0
    %4435 = vmatprep.subr.mxu0 0.0
    %4436 = vmatpush1.msra.mxu0 0.0
    %4437 = vmatprep.subr.mxu0 0.0
    %4438 = vmatpush1.msra.mxu0 0.0
    %4439 = vmatprep.subr.mxu0 0.0
    %4440 = vmatpush1.msra.mxu0 0.0
    %4441 = vmatprep.subr.mxu0 0.0
    %4442 = vmatpush1.msra.mxu0 0.0
    %4443 = vmatprep.subr.mxu0 0.0
    %4444 = vmatpush1.msra.mxu0 0.0
    %4445 = vmatprep.subr.mxu0 0.0
    %4446 = vmatpush1.msra.mxu0 0.0
    %4447 = vmatprep.subr.mxu0 0.0
    %4448 = vmatpush1.msra.mxu0 0.0
    %4449 = vmatprep.subr.mxu0 0.0
    %4450 = vmatpush1.msra.mxu0 0.0
    %4451 = vmatprep.subr.mxu0 0.0
    %4452 = vmatpush1.msra.mxu0 0.0
    %4453 = vmatprep.subr.mxu0 0.0
    %4454 = vmatpush1.msra.mxu0 0.0
    %4455 = vmatprep.subr.mxu0 0.0
    %4456 = vmatpush1.msra.mxu0 0.0
    %4457 = vmatprep.subr.mxu0 0.0
    %4458 = vmatpush1.msra.mxu0 0.0
    %4459 = vmatprep.subr.mxu0 0.0
    %4460 = vmatpush1.msra.mxu0 0.0
    %4461 = vmatprep.subr.mxu0 0.0
    %4462 = vmatpush1.msra.mxu0 0.0
    %4463 = vmatprep.subr.mxu0 0.0
    %4464 = vmatpush1.msra.mxu0 0.0
    %4465 = vmatprep.subr.mxu0 0.0
    %4466 = vmatpush1.msra.mxu0 0.0
    %4467 = vmatprep.subr.mxu0 0.0
    %4468 = vmatpush1.msra.mxu0 0.0
    %4469 = vmatprep.subr.mxu0 0.0
    %4470 = vmatpush1.msra.mxu0 0.0
    %4471 = vmatprep.subr.mxu0 0.0
    %4472 = vmatpush1.msra.mxu0 0.0
    %4473 = vmatprep.subr.mxu0 0.0
    %4474 = vmatpush1.msra.mxu0 0.0
    %4475 = vmatprep.mubr.f32.mxu0 0.0
    %4476 = vmatmul.mubr.f32.gmra.mrb[0].mxu0 %v4409
    %v4477 = vpop.f32.mrb[0].mxu0
    %v4478 = vadd.f32 0.0, %v4477
    %v4479 = vpop.f32.mrb[0].mxu0
    %4480 = vdwg.mxu0
    %v4481 = vadd.f32 %v4238, %v4478
    %4482 = vrot.lane.b32.xlu0 %v3621, 104
    %v4483 = vpop.permute.xlu0 %4482
    %4484 = vrot.lane.b32.xlu0 %v3691, 104
    %v4485 = vpop.permute.xlu0 %4484
    %v4486 = vsel %vm666, %v4483, 0
    %v4488 = vsel %vm666, %v4485, 0
    %4490 = vmatprep.subr.mxu0 0.0
    %4491 = vmatpush1.xpose.msra.mxu0 %v4488
    %4492 = vmatprep.subr.mxu0 0.0
    %4493 = vmatpush1.xpose.msra.mxu0 0.0
    %4494 = vmatprep.subr.mxu0 0.0
    %4495 = vmatpush1.xpose.msra.mxu0 0.0
    %4496 = vmatprep.subr.mxu0 0.0
    %4497 = vmatpush1.xpose.msra.mxu0 0.0
    %4498 = vmatprep.subr.mxu0 0.0
    %4499 = vmatpush1.xpose.msra.mxu0 0.0
    %4500 = vmatprep.subr.mxu0 0.0
    %4501 = vmatpush1.xpose.msra.mxu0 0.0
    %4502 = vmatprep.subr.mxu0 0.0
    %4503 = vmatpush1.xpose.msra.mxu0 0.0
    %4504 = vmatprep.subr.mxu0 0.0
    %4505 = vmatpush1.xpose.msra.mxu0 0.0
    %4506 = vmatprep.subr.mxu0 0.0
    %4507 = vmatpush1.xpose.msra.mxu0 0.0
    %4508 = vmatprep.subr.mxu0 0.0
    %4509 = vmatpush1.xpose.msra.mxu0 0.0
    %4510 = vmatprep.subr.mxu0 0.0
    %4511 = vmatpush1.xpose.msra.mxu0 0.0
    %4512 = vmatprep.subr.mxu0 0.0
    %4513 = vmatpush1.xpose.msra.mxu0 0.0
    %4514 = vmatprep.subr.mxu0 0.0
    %4515 = vmatpush1.xpose.msra.mxu0 0.0
    %4516 = vmatprep.subr.mxu0 0.0
    %4517 = vmatpush1.xpose.msra.mxu0 0.0
    %4518 = vmatprep.subr.mxu0 0.0
    %4519 = vmatpush1.xpose.msra.mxu0 0.0
    %4520 = vmatprep.subr.mxu0 0.0
    %4521 = vmatpush1.xpose.msra.mxu0 0.0
    %4522 = vmatprep.subr.mxu0 0.0
    %4523 = vmatpush1.xpose.msra.mxu0 0.0
    %4524 = vmatprep.subr.mxu0 0.0
    %4525 = vmatpush1.xpose.msra.mxu0 0.0
    %4526 = vmatprep.subr.mxu0 0.0
    %4527 = vmatpush1.xpose.msra.mxu0 0.0
    %4528 = vmatprep.subr.mxu0 0.0
    %4529 = vmatpush1.xpose.msra.mxu0 0.0
    %4530 = vmatprep.subr.mxu0 0.0
    %4531 = vmatpush1.xpose.msra.mxu0 0.0
    %4532 = vmatprep.subr.mxu0 0.0
    %4533 = vmatpush1.xpose.msra.mxu0 0.0
    %4534 = vmatprep.subr.mxu0 0.0
    %4535 = vmatpush1.xpose.msra.mxu0 0.0
    %4536 = vmatprep.subr.mxu0 0.0
    %4537 = vmatpush1.xpose.msra.mxu0 0.0
    %4538 = vmatprep.subr.mxu0 0.0
    %4539 = vmatpush1.xpose.msra.mxu0 0.0
    %4540 = vmatprep.subr.mxu0 0.0
    %4541 = vmatpush1.xpose.msra.mxu0 0.0
    %4542 = vmatprep.subr.mxu0 0.0
    %4543 = vmatpush1.xpose.msra.mxu0 0.0
    %4544 = vmatprep.subr.mxu0 0.0
    %4545 = vmatpush1.xpose.msra.mxu0 0.0
    %4546 = vmatprep.subr.mxu0 0.0
    %4547 = vmatpush1.xpose.msra.mxu0 0.0
    %4548 = vmatprep.subr.mxu0 0.0
    %4549 = vmatpush1.xpose.msra.mxu0 0.0
    %4550 = vmatprep.subr.mxu0 0.0
    %4551 = vmatpush1.xpose.msra.mxu0 0.0
    %4552 = vmatprep.subr.mxu0 0.0
    %4553 = vmatpush1.xpose.msra.mxu0 0.0
    %4554 = vmatprep.mubr.f32.mxu0 0.0
    %4555 = vmatmul.mubr.f32.gmra.mrb[0].mxu0 %v4486
    %v4556 = vpop.f32.mrb[0].mxu0
    %v4557 = vadd.f32 0.0, %v4556
    %v4558 = vpop.f32.mrb[0].mxu0
    %4559 = vdwg.mxu0
    %v4560 = vmul.f32 %v4557, 0.35355338
    %v4561 = vsel %vm744, %v4560, -inf
    %4562 = vmax.xlane.f32.xlu0 %v4561
    %v4563 = vpop.xlane.xlu0 %4562
    %v4564 = vsub.f32 %v4560, %v4563
    %v4565 = vmul.f32 %v4564, 1.442695
    %v4566 = vpow.pop %v4565
    %v4567 = vsel %vm744, %v4566, 0.0
    %4568 = vadd.xlane.f32.xlu0 %v4567
    %v4569 = vpop.xlane.xlu0 %4568
    %v4570 = vrcp.pop %v4569
    %v4571 = vmul.f32 %v4566, %v4570
    %4572 = vrot.lane.b32.xlu0 %v3761, 104
    %v4573 = vpop.permute.xlu0 %4572
    %v4575 = vsel %vm285, %v4571, 0
    %v4577 = vsel %vm759, %v4573, 0
    %4579 = vmatprep.subr.mxu0 0.0
    %4580 = vmatpush1.msra.mxu0 %v4577
    %4581 = vmatprep.subr.mxu0 0.0
    %4582 = vmatpush1.msra.mxu0 0.0
    %4583 = vmatprep.subr.mxu0 0.0
    %4584 = vmatpush1.msra.mxu0 0.0
    %4585 = vmatprep.subr.mxu0 0.0
    %4586 = vmatpush1.msra.mxu0 0.0
    %4587 = vmatprep.subr.mxu0 0.0
    %4588 = vmatpush1.msra.mxu0 0.0
    %4589 = vmatprep.subr.mxu0 0.0
    %4590 = vmatpush1.msra.mxu0 0.0
    %4591 = vmatprep.subr.mxu0 0.0
    %4592 = vmatpush1.msra.mxu0 0.0
    %4593 = vmatprep.subr.mxu0 0.0
    %4594 = vmatpush1.msra.mxu0 0.0
    %4595 = vmatprep.subr.mxu0 0.0
    %4596 = vmatpush1.msra.mxu0 0.0
    %4597 = vmatprep.subr.mxu0 0.0
    %4598 = vmatpush1.msra.mxu0 0.0
    %4599 = vmatprep.subr.mxu0 0.0
    %4600 = vmatpush1.msra.mxu0 0.0
    %4601 = vmatprep.subr.mxu0 0.0
    %4602 = vmatpush1.msra.mxu0 0.0
    %4603 = vmatprep.subr.mxu0 0.0
    %4604 = vmatpush1.msra.mxu0 0.0
    %4605 = vmatprep.subr.mxu0 0.0
    %4606 = vmatpush1.msra.mxu0 0.0
    %4607 = vmatprep.subr.mxu0 0.0
    %4608 = vmatpush1.msra.mxu0 0.0
    %4609 = vmatprep.subr.mxu0 0.0
    %4610 = vmatpush1.msra.mxu0 0.0
    %4611 = vmatprep.subr.mxu0 0.0
    %4612 = vmatpush1.msra.mxu0 0.0
    %4613 = vmatprep.subr.mxu0 0.0
    %4614 = vmatpush1.msra.mxu0 0.0
    %4615 = vmatprep.subr.mxu0 0.0
    %4616 = vmatpush1.msra.mxu0 0.0
    %4617 = vmatprep.subr.mxu0 0.0
    %4618 = vmatpush1.msra.mxu0 0.0
    %4619 = vmatprep.subr.mxu0 0.0
    %4620 = vmatpush1.msra.mxu0 0.0
    %4621 = vmatprep.subr.mxu0 0.0
    %4622 = vmatpush1.msra.mxu0 0.0
    %4623 = vmatprep.subr.mxu0 0.0
    %4624 = vmatpush1.msra.mxu0 0.0
    %4625 = vmatprep.subr.mxu0 0.0
    %4626 = vmatpush1.msra.mxu0 0.0
    %4627 = vmatprep.subr.mxu0 0.0
    %4628 = vmatpush1.msra.mxu0 0.0
    %4629 = vmatprep.subr.mxu0 0.0
    %4630 = vmatpush1.msra.mxu0 0.0
    %4631 = vmatprep.subr.mxu0 0.0
    %4632 = vmatpush1.msra.mxu0 0.0
    %4633 = vmatprep.subr.mxu0 0.0
    %4634 = vmatpush1.msra.mxu0 0.0
    %4635 = vmatprep.subr.mxu0 0.0
    %4636 = vmatpush1.msra.mxu0 0.0
    %4637 = vmatprep.subr.mxu0 0.0
    %4638 = vmatpush1.msra.mxu0 0.0
    %4639 = vmatprep.subr.mxu0 0.0
    %4640 = vmatpush1.msra.mxu0 0.0
    %4641 = vmatprep.subr.mxu0 0.0
    %4642 = vmatpush1.msra.mxu0 0.0
    %4643 = vmatprep.mubr.f32.mxu0 0.0
    %4644 = vmatmul.mubr.f32.gmra.mrb[0].mxu0 %v4575
    %v4645 = vpop.f32.mrb[0].mxu0
    %v4646 = vadd.f32 0.0, %v4645
    %v4647 = vpop.f32.mrb[0].mxu0
    %4648 = vdwg.mxu0
    %v4650 = vsel %vm666, %v4646, 0
    %4652 = vmatprep.subr.mxu0 0.0
    %4653 = vmatpush1.msra.mxu0 %v209
    %4654 = vmatprep.subr.mxu0 0.0
    %4655 = vmatpush1.msra.mxu0 0.0
    %4656 = vmatprep.subr.mxu0 0.0
    %4657 = vmatpush1.msra.mxu0 0.0
    %4658 = vmatprep.subr.mxu0 0.0
    %4659 = vmatpush1.msra.mxu0 0.0
    %4660 = vmatprep.subr.mxu0 0.0
    %4661 = vmatpush1.msra.mxu0 0.0
    %4662 = vmatprep.subr.mxu0 0.0
    %4663 = vmatpush1.msra.mxu0 0.0
    %4664 = vmatprep.subr.mxu0 0.0
    %4665 = vmatpush1.msra.mxu0 0.0
    %4666 = vmatprep.subr.mxu0 0.0
    %4667 = vmatpush1.msra.mxu0 0.0
    %4668 = vmatprep.subr.mxu0 0.0
    %4669 = vmatpush1.msra.mxu0 0.0
    %4670 = vmatprep.subr.mxu0 0.0
    %4671 = vmatpush1.msra.mxu0 0.0
    %4672 = vmatprep.subr.mxu0 0.0
    %4673 = vmatpush1.msra.mxu0 0.0
    %4674 = vmatprep.subr.mxu0 0.0
    %4675 = vmatpush1.msra.mxu0 0.0
    %4676 = vmatprep.subr.mxu0 0.0
    %4677 = vmatpush1.msra.mxu0 0.0
    %4678 = vmatprep.subr.mxu0 0.0
    %4679 = vmatpush1.msra.mxu0 0.0
    %4680 = vmatprep.subr.mxu0 0.0
    %4681 = vmatpush1.msra.mxu0 0.0
    %4682 = vmatprep.subr.mxu0 0.0
    %4683 = vmatpush1.msra.mxu0 0.0
    %4684 = vmatprep.subr.mxu0 0.0
    %4685 = vmatpush1.msra.mxu0 0.0
    %4686 = vmatprep.subr.mxu0 0.0
    %4687 = vmatpush1.msra.mxu0 0.0
    %4688 = vmatprep.subr.mxu0 0.0
    %4689 = vmatpush1.msra.mxu0 0.0
    %4690 = vmatprep.subr.mxu0 0.0
    %4691 = vmatpush1.msra.mxu0 0.0
    %4692 = vmatprep.subr.mxu0 0.0
    %4693 = vmatpush1.msra.mxu0 0.0
    %4694 = vmatprep.subr.mxu0 0.0
    %4695 = vmatpush1.msra.mxu0 0.0
    %4696 = vmatprep.subr.mxu0 0.0
    %4697 = vmatpush1.msra.mxu0 0.0
    %4698 = vmatprep.subr.mxu0 0.0
    %4699 = vmatpush1.msra.mxu0 0.0
    %4700 = vmatprep.subr.mxu0 0.0
    %4701 = vmatpush1.msra.mxu0 0.0
    %4702 = vmatprep.subr.mxu0 0.0
    %4703 = vmatpush1.msra.mxu0 0.0
    %4704 = vmatprep.subr.mxu0 0.0
    %4705 = vmatpush1.msra.mxu0 0.0
    %4706 = vmatprep.subr.mxu0 0.0
    %4707 = vmatpush1.msra.mxu0 0.0
    %4708 = vmatprep.subr.mxu0 0.0
    %4709 = vmatpush1.msra.mxu0 0.0
    %4710 = vmatprep.subr.mxu0 0.0
    %4711 = vmatpush1.msra.mxu0 0.0
    %4712 = vmatprep.subr.mxu0 0.0
    %4713 = vmatpush1.msra.mxu0 0.0
    %4714 = vmatprep.subr.mxu0 0.0
    %4715 = vmatpush1.msra.mxu0 0.0
    %4716 = vmatprep.mubr.f32.mxu0 0.0
    %4717 = vmatmul.mubr.f32.gmra.mrb[0].mxu0 %v4650
    %v4718 = vpop.f32.mrb[0].mxu0
    %v4719 = vadd.f32 0.0, %v4718
    %v4720 = vpop.f32.mrb[0].mxu0
    %4721 = vdwg.mxu0
    %v4722 = vadd.f32 %v4481, %v4719
    %v4723 = vadd.f32 %v3548, %v4722
    %v4724 = vadd.f32 %v4723, %v1633
    %v4725 = vsel %vm1636, %v4724, 0.0
    %4726 = vadd.xlane.f32.xlu0 %v4725
    %v4727 = vpop.xlane.xlu0 %4726
    %v4728 = vmul.f32 %v4727, %v1640
    %v4729 = vsub.f32 %v4724, %v4728
    %v4730 = vmul.f32 %v4729, %v4729
    %v4731 = vsel %vm1636, %v4730, 0.0
    %4732 = vadd.xlane.f32.xlu0 %v4731
    %v4733 = vpop.xlane.xlu0 %4732
    %v4734 = vmul.f32 %v4733, %v1640
    %v4735 = vadd.f32 %v4734, 1e-05
    %v4736 = vrsqrt.pop %v4735
    %v4737 = vmul.f32 %v4729, %v4736
    %v4738 = vmul.f32 %v4737, %v1655
    %v4739 = vadd.f32 %v4738, %v1662
    %v4741 = vsel %vm440, %v4739, 0
    %4743 = vmatprep.subr.mxu0 0.0
    %4744 = vmatpush1.msra.mxu0 %v213
    %4745 = vmatprep.subr.mxu0 0.0
    %4746 = vmatpush1.msra.mxu0 %v214
    %4747 = vmatprep.subr.mxu0 0.0
    %4748 = vmatpush1.msra.mxu0 %v215
    %4749 = vmatprep.subr.mxu0 0.0
    %4750 = vmatpush1.msra.mxu0 %v216
    %4751 = vmatprep.subr.mxu0 0.0
    %4752 = vmatpush1.msra.mxu0 0.0
    %4753 = vmatprep.subr.mxu0 0.0
    %4754 = vmatpush1.msra.mxu0 0.0
    %4755 = vmatprep.subr.mxu0 0.0
    %4756 = vmatpush1.msra.mxu0 0.0
    %4757 = vmatprep.subr.mxu0 0.0
    %4758 = vmatpush1.msra.mxu0 0.0
    %4759 = vmatprep.subr.mxu0 0.0
    %4760 = vmatpush1.msra.mxu0 0.0
    %4761 = vmatprep.subr.mxu0 0.0
    %4762 = vmatpush1.msra.mxu0 0.0
    %4763 = vmatprep.subr.mxu0 0.0
    %4764 = vmatpush1.msra.mxu0 0.0
    %4765 = vmatprep.subr.mxu0 0.0
    %4766 = vmatpush1.msra.mxu0 0.0
    %4767 = vmatprep.subr.mxu0 0.0
    %4768 = vmatpush1.msra.mxu0 0.0
    %4769 = vmatprep.subr.mxu0 0.0
    %4770 = vmatpush1.msra.mxu0 0.0
    %4771 = vmatprep.subr.mxu0 0.0
    %4772 = vmatpush1.msra.mxu0 0.0
    %4773 = vmatprep.subr.mxu0 0.0
    %4774 = vmatpush1.msra.mxu0 0.0
    %4775 = vmatprep.subr.mxu0 0.0
    %4776 = vmatpush1.msra.mxu0 0.0
    %4777 = vmatprep.subr.mxu0 0.0
    %4778 = vmatpush1.msra.mxu0 0.0
    %4779 = vmatprep.subr.mxu0 0.0
    %4780 = vmatpush1.msra.mxu0 0.0
    %4781 = vmatprep.subr.mxu0 0.0
    %4782 = vmatpush1.msra.mxu0 0.0
    %4783 = vmatprep.subr.mxu0 0.0
    %4784 = vmatpush1.msra.mxu0 0.0
    %4785 = vmatprep.subr.mxu0 0.0
    %4786 = vmatpush1.msra.mxu0 0.0
    %4787 = vmatprep.subr.mxu0 0.0
    %4788 = vmatpush1.msra.mxu0 0.0
    %4789 = vmatprep.subr.mxu0 0.0
    %4790 = vmatpush1.msra.mxu0 0.0
    %4791 = vmatprep.subr.mxu0 0.0
    %4792 = vmatpush1.msra.mxu0 0.0
    %4793 = vmatprep.subr.mxu0 0.0
    %4794 = vmatpush1.msra.mxu0 0.0
    %4795 = vmatprep.subr.mxu0 0.0
    %4796 = vmatpush1.msra.mxu0 0.0
    %4797 = vmatprep.subr.mxu0 0.0
    %4798 = vmatpush1.msra.mxu0 0.0
    %4799 = vmatprep.subr.mxu0 0.0
    %4800 = vmatpush1.msra.mxu0 0.0
    %4801 = vmatprep.subr.mxu0 0.0
    %4802 = vmatpush1.msra.mxu0 0.0
    %4803 = vmatprep.subr.mxu0 0.0
    %4804 = vmatpush1.msra.mxu0 0.0
    %4805 = vmatprep.subr.mxu0 0.0
    %4806 = vmatpush1.msra.mxu0 0.0
    %4807 = vmatprep.mubr.f32.mxu0 0.0
    %4808 = vmatmul.mubr.f32.gmra.mrb[0].mxu0 %v4741
    %v4809 = vpop.f32.mrb[0].mxu0
    %v4810 = vadd.f32 %v1669, %v4809
    %v4811 = vpop.f32.mrb[0].mxu0
    %4812 = vdwg.mxu0
    %v4813 = vmax.f32 %v4810, 0.0
    %v4815 = vsel %vm1751, %v4813, 0
    %4817 = vmatprep.subr.mxu0 0.0
    %4818 = vmatpush1.msra.mxu0 %v218
    %4819 = vmatprep.subr.mxu0 0.0
    %4820 = vmatpush1.msra.mxu0 %v219
    %4821 = vmatprep.subr.mxu0 0.0
    %4822 = vmatpush1.msra.mxu0 %v220
    %4823 = vmatprep.subr.mxu0 0.0
    %4824 = vmatpush1.msra.mxu0 %v221
    %4825 = vmatprep.subr.mxu0 0.0
    %4826 = vmatpush1.msra.mxu0 %v222
    %4827 = vmatprep.subr.mxu0 0.0
    %4828 = vmatpush1.msra.mxu0 %v223
    %4829 = vmatprep.subr.mxu0 0.0
    %4830 = vmatpush1.msra.mxu0 %v224
    %4831 = vmatprep.subr.mxu0 0.0
    %4832 = vmatpush1.msra.mxu0 %v225
    %4833 = vmatprep.subr.mxu0 0.0
    %4834 = vmatpush1.msra.mxu0 0.0
    %4835 = vmatprep.subr.mxu0 0.0
    %4836 = vmatpush1.msra.mxu0 0.0
    %4837 = vmatprep.subr.mxu0 0.0
    %4838 = vmatpush1.msra.mxu0 0.0
    %4839 = vmatprep.subr.mxu0 0.0
    %4840 = vmatpush1.msra.mxu0 0.0
    %4841 = vmatprep.subr.mxu0 0.0
    %4842 = vmatpush1.msra.mxu0 0.0
    %4843 = vmatprep.subr.mxu0 0.0
    %4844 = vmatpush1.msra.mxu0 0.0
    %4845 = vmatprep.subr.mxu0 0.0
    %4846 = vmatpush1.msra.mxu0 0.0
    %4847 = vmatprep.subr.mxu0 0.0
    %4848 = vmatpush1.msra.mxu0 0.0
    %4849 = vmatprep.subr.mxu0 0.0
    %4850 = vmatpush1.msra.mxu0 0.0
    %4851 = vmatprep.subr.mxu0 0.0
    %4852 = vmatpush1.msra.mxu0 0.0
    %4853 = vmatprep.subr.mxu0 0.0
    %4854 = vmatpush1.msra.mxu0 0.0
    %4855 = vmatprep.subr.mxu0 0.0
    %4856 = vmatpush1.msra.mxu0 0.0
    %4857 = vmatprep.subr.mxu0 0.0
    %4858 = vmatpush1.msra.mxu0 0.0
    %4859 = vmatprep.subr.mxu0 0.0
    %4860 = vmatpush1.msra.mxu0 0.0
    %4861 = vmatprep.subr.mxu0 0.0
    %4862 = vmatpush1.msra.mxu0 0.0
    %4863 = vmatprep.subr.mxu0 0.0
    %4864 = vmatpush1.msra.mxu0 0.0
    %4865 = vmatprep.subr.mxu0 0.0
    %4866 = vmatpush1.msra.mxu0 0.0
    %4867 = vmatprep.subr.mxu0 0.0
    %4868 = vmatpush1.msra.mxu0 0.0
    %4869 = vmatprep.subr.mxu0 0.0
    %4870 = vmatpush1.msra.mxu0 0.0
    %4871 = vmatprep.subr.mxu0 0.0
    %4872 = vmatpush1.msra.mxu0 0.0
    %4873 = vmatprep.subr.mxu0 0.0
    %4874 = vmatpush1.msra.mxu0 0.0
    %4875 = vmatprep.subr.mxu0 0.0
    %4876 = vmatpush1.msra.mxu0 0.0
    %4877 = vmatprep.subr.mxu0 0.0
    %4878 = vmatpush1.msra.mxu0 0.0
    %4879 = vmatprep.subr.mxu0 0.0
    %4880 = vmatpush1.msra.mxu0 0.0
    %4881 = vmatprep.mubr.f32.mxu0 0.0
    %4882 = vmatmul.mubr.f32.gmra.mrb[0].mxu0 %v4815
    %v4883 = vpop.f32.mrb[0].mxu0
    %v4884 = vadd.f32 %v1749, %v4883
    %v4885 = vpop.f32.mrb[0].mxu0
    %4886 = vdwg.mxu0
    %v4887 = vadd.f32 %v4739, %v4884
    %v4888 = vsel %vm1636, %v4887, 0.0
    %4889 = vadd.xlane.f32.xlu0 %v4888
    %v4890 = vpop.xlane.xlu0 %4889
    %v4891 = vmul.f32 %v4890, %v1640
    %v4892 = vsub.f32 %v4887, %v4891
    %v4893 = vmul.f32 %v4892, %v4892
    %v4894 = vsel %vm1636, %v4893, 0.0
    %4895 = vadd.xlane.f32.xlu0 %v4894
    %v4896 = vpop.xlane.xlu0 %4895
    %v4897 = vmul.f32 %v4896, %v1640
    %v4898 = vadd.f32 %v4897, 1e-05
    %v4899 = vrsqrt.pop %v4898
    %v4900 = vmul.f32 %v4892, %v4899
    %v4901 = vmul.f32 %v4900, %v1843
    %v4902 = vadd.f32 %v4901, %v1850
    %v4904 = vsel %vm440, %v4902, 0
    %4906 = vmatprep.subr.mxu0 0.0
    %4907 = vmatpush1.msra.mxu0 %v230
    %4908 = vmatprep.subr.mxu0 0.0
    %4909 = vmatpush1.msra.mxu0 %v231
    %4910 = vmatprep.subr.mxu0 0.0
    %4911 = vmatpush1.msra.mxu0 %v232
    %4912 = vmatprep.subr.mxu0 0.0
    %4913 = vmatpush1.msra.mxu0 %v233
    %4914 = vmatprep.subr.mxu0 0.0
    %4915 = vmatpush1.msra.mxu0 0.0
    %4916 = vmatprep.subr.mxu0 0.0
    %4917 = vmatpush1.msra.mxu0 0.0
    %4918 = vmatprep.subr.mxu0 0.0
    %4919 = vmatpush1.msra.mxu0 0.0
    %4920 = vmatprep.subr.mxu0 0.0
    %4921 = vmatpush1.msra.mxu0 0.0
    %4922 = vmatprep.subr.mxu0 0.0
    %4923 = vmatpush1.msra.mxu0 0.0
    %4924 = vmatprep.subr.mxu0 0.0
    %4925 = vmatpush1.msra.mxu0 0.0
    %4926 = vmatprep.subr.mxu0 0.0
    %4927 = vmatpush1.msra.mxu0 0.0
    %4928 = vmatprep.subr.mxu0 0.0
    %4929 = vmatpush1.msra.mxu0 0.0
    %4930 = vmatprep.subr.mxu0 0.0
    %4931 = vmatpush1.msra.mxu0 0.0
    %4932 = vmatprep.subr.mxu0 0.0
    %4933 = vmatpush1.msra.mxu0 0.0
    %4934 = vmatprep.subr.mxu0 0.0
    %4935 = vmatpush1.msra.mxu0 0.0
    %4936 = vmatprep.subr.mxu0 0.0
    %4937 = vmatpush1.msra.mxu0 0.0
    %4938 = vmatprep.subr.mxu0 0.0
    %4939 = vmatpush1.msra.mxu0 0.0
    %4940 = vmatprep.subr.mxu0 0.0
    %4941 = vmatpush1.msra.mxu0 0.0
    %4942 = vmatprep.subr.mxu0 0.0
    %4943 = vmatpush1.msra.mxu0 0.0
    %4944 = vmatprep.subr.mxu0 0.0
    %4945 = vmatpush1.msra.mxu0 0.0
    %4946 = vmatprep.subr.mxu0 0.0
    %4947 = vmatpush1.msra.mxu0 0.0
    %4948 = vmatprep.subr.mxu0 0.0
    %4949 = vmatpush1.msra.mxu0 0.0
    %4950 = vmatprep.subr.mxu0 0.0
    %4951 = vmatpush1.msra.mxu0 0.0
    %4952 = vmatprep.subr.mxu0 0.0
    %4953 = vmatpush1.msra.mxu0 0.0
    %4954 = vmatprep.subr.mxu0 0.0
    %4955 = vmatpush1.msra.mxu0 0.0
    %4956 = vmatprep.subr.mxu0 0.0
    %4957 = vmatpush1.msra.mxu0 0.0
    %4958 = vmatprep.subr.mxu0 0.0
    %4959 = vmatpush1.msra.mxu0 0.0
    %4960 = vmatprep.subr.mxu0 0.0
    %4961 = vmatpush1.msra.mxu0 0.0
    %4962 = vmatprep.subr.mxu0 0.0
    %4963 = vmatpush1.msra.mxu0 0.0
    %4964 = vmatprep.subr.mxu0 0.0
    %4965 = vmatpush1.msra.mxu0 0.0
    %4966 = vmatprep.subr.mxu0 0.0
    %4967 = vmatpush1.msra.mxu0 0.0
    %4968 = vmatprep.subr.mxu0 0.0
    %4969 = vmatpush1.msra.mxu0 0.0
    %4970 = vmatprep.mubr.f32.mxu0 0.0
    %4971 = vmatmul.mubr.f32.gmra.mrb[0].mxu0 %v4904
    %v4972 = vpop.f32.mrb[0].mxu0
    %v4973 = vadd.f32 %v1857, %v4972
    %v4974 = vpop.f32.mrb[0].mxu0
    %4975 = vdwg.mxu0
    %4976 = vmatprep.subr.mxu0 0.0
    %4977 = vmatpush1.msra.mxu0 %v237
    %4978 = vmatprep.subr.mxu0 0.0
    %4979 = vmatpush1.msra.mxu0 %v238
    %4980 = vmatprep.subr.mxu0 0.0
    %4981 = vmatpush1.msra.mxu0 %v239
    %4982 = vmatprep.subr.mxu0 0.0
    %4983 = vmatpush1.msra.mxu0 %v240
    %4984 = vmatprep.subr.mxu0 0.0
    %4985 = vmatpush1.msra.mxu0 0.0
    %4986 = vmatprep.subr.mxu0 0.0
    %4987 = vmatpush1.msra.mxu0 0.0
    %4988 = vmatprep.subr.mxu0 0.0
    %4989 = vmatpush1.msra.mxu0 0.0
    %4990 = vmatprep.subr.mxu0 0.0
    %4991 = vmatpush1.msra.mxu0 0.0
    %4992 = vmatprep.subr.mxu0 0.0
    %4993 = vmatpush1.msra.mxu0 0.0
    %4994 = vmatprep.subr.mxu0 0.0
    %4995 = vmatpush1.msra.mxu0 0.0
    %4996 = vmatprep.subr.mxu0 0.0
    %4997 = vmatpush1.msra.mxu0 0.0
    %4998 = vmatprep.subr.mxu0 0.0
    %4999 = vmatpush1.msra.mxu0 0.0
    %5000 = vmatprep.subr.mxu0 0.0
    %5001 = vmatpush1.msra.mxu0 0.0
    %5002 = vmatprep.subr.mxu0 0.0
    %5003 = vmatpush1.msra.mxu0 0.0
    %5004 = vmatprep.subr.mxu0 0.0
    %5005 = vmatpush1.msra.mxu0 0.0
    %5006 = vmatprep.subr.mxu0 0.0
    %5007 = vmatpush1.msra.mxu0 0.0
    %5008 = vmatprep.subr.mxu0 0.0
    %5009 = vmatpush1.msra.mxu0 0.0
    %5010 = vmatprep.subr.mxu0 0.0
    %5011 = vmatpush1.msra.mxu0 0.0
    %5012 = vmatprep.subr.mxu0 0.0
    %5013 = vmatpush1.msra.mxu0 0.0
    %5014 = vmatprep.subr.mxu0 0.0
    %5015 = vmatpush1.msra.mxu0 0.0
    %5016 = vmatprep.subr.mxu0 0.0
    %5017 = vmatpush1.msra.mxu0 0.0
    %5018 = vmatprep.subr.mxu0 0.0
    %5019 = vmatpush1.msra.mxu0 0.0
    %5020 = vmatprep.subr.mxu0 0.0
    %5021 = vmatpush1.msra.mxu0 0.0
    %5022 = vmatprep.subr.mxu0 0.0
    %5023 = vmatpush1.msra.mxu0 0.0
    %5024 = vmatprep.subr.mxu0 0.0
    %5025 = vmatpush1.msra.mxu0 0.0
    %5026 = vmatprep.subr.mxu0 0.0
    %5027 = vmatpush1.msra.mxu0 0.0
    %5028 = vmatprep.subr.mxu0 0.0
    %5029 = vmatpush1.msra.mxu0 0.0
    %5030 = vmatprep.subr.mxu0 0.0
    %5031 = vmatpush1.msra.mxu0 0.0
    %5032 = vmatprep.subr.mxu0 0.0
    %5033 = vmatpush1.msra.mxu0 0.0
    %5034 = vmatprep.subr.mxu0 0.0
    %5035 = vmatpush1.msra.mxu0 0.0
    %5036 = vmatprep.subr.mxu0 0.0
    %5037 = vmatpush1.msra.mxu0 0.0
    %5038 = vmatprep.subr.mxu0 0.0
    %5039 = vmatpush1.msra.mxu0 0.0
    %5040 = vmatprep.mubr.f32.mxu0 0.0
    %5041 = vmatmul.mubr.f32.gmra.mrb[0].mxu0 %v4904
    %v5042 = vpop.f32.mrb[0].mxu0
    %v5043 = vadd.f32 %v1936, %v5042
    %v5044 = vpop.f32.mrb[0].mxu0
    %5045 = vdwg.mxu0
    %5046 = vmatprep.subr.mxu0 0.0
    %5047 = vmatpush1.msra.mxu0 %v244
    %5048 = vmatprep.subr.mxu0 0.0
    %5049 = vmatpush1.msra.mxu0 %v245
    %5050 = vmatprep.subr.mxu0 0.0
    %5051 = vmatpush1.msra.mxu0 %v246
    %5052 = vmatprep.subr.mxu0 0.0
    %5053 = vmatpush1.msra.mxu0 %v247
    %5054 = vmatprep.subr.mxu0 0.0
    %5055 = vmatpush1.msra.mxu0 0.0
    %5056 = vmatprep.subr.mxu0 0.0
    %5057 = vmatpush1.msra.mxu0 0.0
    %5058 = vmatprep.subr.mxu0 0.0
    %5059 = vmatpush1.msra.mxu0 0.0
    %5060 = vmatprep.subr.mxu0 0.0
    %5061 = vmatpush1.msra.mxu0 0.0
    %5062 = vmatprep.subr.mxu0 0.0
    %5063 = vmatpush1.msra.mxu0 0.0
    %5064 = vmatprep.subr.mxu0 0.0
    %5065 = vmatpush1.msra.mxu0 0.0
    %5066 = vmatprep.subr.mxu0 0.0
    %5067 = vmatpush1.msra.mxu0 0.0
    %5068 = vmatprep.subr.mxu0 0.0
    %5069 = vmatpush1.msra.mxu0 0.0
    %5070 = vmatprep.subr.mxu0 0.0
    %5071 = vmatpush1.msra.mxu0 0.0
    %5072 = vmatprep.subr.mxu0 0.0
    %5073 = vmatpush1.msra.mxu0 0.0
    %5074 = vmatprep.subr.mxu0 0.0
    %5075 = vmatpush1.msra.mxu0 0.0
    %5076 = vmatprep.subr.mxu0 0.0
    %5077 = vmatpush1.msra.mxu0 0.0
    %5078 = vmatprep.subr.mxu0 0.0
    %5079 = vmatpush1.msra.mxu0 0.0
    %5080 = vmatprep.subr.mxu0 0.0
    %5081 = vmatpush1.msra.mxu0 0.0
    %5082 = vmatprep.subr.mxu0 0.0
    %5083 = vmatpush1.msra.mxu0 0.0
    %5084 = vmatprep.subr.mxu0 0.0
    %5085 = vmatpush1.msra.mxu0 0.0
    %5086 = vmatprep.subr.mxu0 0.0
    %5087 = vmatpush1.msra.mxu0 0.0
    %5088 = vmatprep.subr.mxu0 0.0
    %5089 = vmatpush1.msra.mxu0 0.0
    %5090 = vmatprep.subr.mxu0 0.0
    %5091 = vmatpush1.msra.mxu0 0.0
    %5092 = vmatprep.subr.mxu0 0.0
    %5093 = vmatpush1.msra.mxu0 0.0
    %5094 = vmatprep.subr.mxu0 0.0
    %5095 = vmatpush1.msra.mxu0 0.0
    %5096 = vmatprep.subr.mxu0 0.0
    %5097 = vmatpush1.msra.mxu0 0.0
    %5098 = vmatprep.subr.mxu0 0.0
    %5099 = vmatpush1.msra.mxu0 0.0
    %5100 = vmatprep.subr.mxu0 0.0
    %5101 = vmatpush1.msra.mxu0 0.0
    %5102 = vmatprep.subr.mxu0 0.0
    %5103 = vmatpush1.msra.mxu0 0.0
    %5104 = vmatprep.subr.mxu0 0.0
    %5105 = vmatpush1.msra.mxu0 0.0
    %5106 = vmatprep.subr.mxu0 0.0
    %5107 = vmatpush1.msra.mxu0 0.0
    %5108 = vmatprep.subr.mxu0 0.0
    %5109 = vmatpush1.msra.mxu0 0.0
    %5110 = vmatprep.mubr.f32.mxu0 0.0
    %5111 = vmatmul.mubr.f32.gmra.mrb[0].mxu0 %v4904
    %v5112 = vpop.f32.mrb[0].mxu0
    %v5113 = vadd.f32 %v2012, %v5112
    %v5114 = vpop.f32.mrb[0].mxu0
    %5115 = vdwg.mxu0
    %v5117 = vsel %vm666, %v4973, 0
    %v5120 = vsel %vm666, %v5043, 0
    %5122 = vmatprep.subr.mxu0 0.0
    %5123 = vmatpush1.xpose.msra.mxu0 %v5120
    %5124 = vmatprep.subr.mxu0 0.0
    %5125 = vmatpush1.xpose.msra.mxu0 0.0
    %5126 = vmatprep.subr.mxu0 0.0
    %5127 = vmatpush1.xpose.msra.mxu0 0.0
    %5128 = vmatprep.subr.mxu0 0.0
    %5129 = vmatpush1.xpose.msra.mxu0 0.0
    %5130 = vmatprep.subr.mxu0 0.0
    %5131 = vmatpush1.xpose.msra.mxu0 0.0
    %5132 = vmatprep.subr.mxu0 0.0
    %5133 = vmatpush1.xpose.msra.mxu0 0.0
    %5134 = vmatprep.subr.mxu0 0.0
    %5135 = vmatpush1.xpose.msra.mxu0 0.0
    %5136 = vmatprep.subr.mxu0 0.0
    %5137 = vmatpush1.xpose.msra.mxu0 0.0
    %5138 = vmatprep.subr.mxu0 0.0
    %5139 = vmatpush1.xpose.msra.mxu0 0.0
    %5140 = vmatprep.subr.mxu0 0.0
    %5141 = vmatpush1.xpose.msra.mxu0 0.0
    %5142 = vmatprep.subr.mxu0 0.0
    %5143 = vmatpush1.xpose.msra.mxu0 0.0
    %5144 = vmatprep.subr.mxu0 0.0
    %5145 = vmatpush1.xpose.msra.mxu0 0.0
    %5146 = vmatprep.subr.mxu0 0.0
    %5147 = vmatpush1.xpose.msra.mxu0 0.0
    %5148 = vmatprep.subr.mxu0 0.0
    %5149 = vmatpush1.xpose.msra.mxu0 0.0
    %5150 = vmatprep.subr.mxu0 0.0
    %5151 = vmatpush1.xpose.msra.mxu0 0.0
    %5152 = vmatprep.subr.mxu0 0.0
    %5153 = vmatpush1.xpose.msra.mxu0 0.0
    %5154 = vmatprep.subr.mxu0 0.0
    %5155 = vmatpush1.xpose.msra.mxu0 0.0
    %5156 = vmatprep.subr.mxu0 0.0
    %5157 = vmatpush1.xpose.msra.mxu0 0.0
    %5158 = vmatprep.subr.mxu0 0.0
    %5159 = vmatpush1.xpose.msra.mxu0 0.0
    %5160 = vmatprep.subr.mxu0 0.0
    %5161 = vmatpush1.xpose.msra.mxu0 0.0
    %5162 = vmatprep.subr.mxu0 0.0
    %5163 = vmatpush1.xpose.msra.mxu0 0.0
    %5164 = vmatprep.subr.mxu0 0.0
    %5165 = vmatpush1.xpose.msra.mxu0 0.0
    %5166 = vmatprep.subr.mxu0 0.0
    %5167 = vmatpush1.xpose.msra.mxu0 0.0
    %5168 = vmatprep.subr.mxu0 0.0
    %5169 = vmatpush1.xpose.msra.mxu0 0.0
    %5170 = vmatprep.subr.mxu0 0.0
    %5171 = vmatpush1.xpose.msra.mxu0 0.0
    %5172 = vmatprep.subr.mxu0 0.0
    %5173 = vmatpush1.xpose.msra.mxu0 0.0
    %5174 = vmatprep.subr.mxu0 0.0
    %5175 = vmatpush1.xpose.msra.mxu0 0.0
    %5176 = vmatprep.subr.mxu0 0.0
    %5177 = vmatpush1.xpose.msra.mxu0 0.0
    %5178 = vmatprep.subr.mxu0 0.0
    %5179 = vmatpush1.xpose.msra.mxu0 0.0
    %5180 = vmatprep.subr.mxu0 0.0
    %5181 = vmatpush1.xpose.msra.mxu0 0.0
    %5182 = vmatprep.subr.mxu0 0.0
    %5183 = vmatpush1.xpose.msra.mxu0 0.0
    %5184 = vmatprep.subr.mxu0 0.0
    %5185 = vmatpush1.xpose.msra.mxu0 0.0
    %5186 = vmatprep.mubr.f32.mxu0 0.0
    %5187 = vmatmul.mubr.f32.gmra.mrb[0].mxu0 %v5117
    %v5188 = vpop.f32.mrb[0].mxu0
    %v5189 = vadd.f32 0.0, %v5188
    %v5190 = vpop.f32.mrb[0].mxu0
    %5191 = vdwg.mxu0
    %v5192 = vmul.f32 %v5189, 0.35355338
    %v5193 = vsel %vm744, %v5192, -inf
    %5194 = vmax.xlane.f32.xlu0 %v5193
    %v5195 = vpop.xlane.xlu0 %5194
    %v5196 = vsub.f32 %v5192, %v5195
    %v5197 = vmul.f32 %v5196, 1.442695
    %v5198 = vpow.pop %v5197
    %v5199 = vsel %vm744, %v5198, 0.0
    %5200 = vadd.xlane.f32.xlu0 %v5199
    %v5201 = vpop.xlane.xlu0 %5200
    %v5202 = vrcp.pop %v5201
    %v5203 = vmul.f32 %v5198, %v5202
    %v5205 = vsel %vm285, %v5203, 0
    %v5208 = vsel %vm759, %v5113, 0
    %5210 = vmatprep.subr.mxu0 0.0
    %5211 = vmatpush1.msra.mxu0 %v5208
    %5212 = vmatprep.subr.mxu0 0.0
    %5213 = vmatpush1.msra.mxu0 0.0
    %5214 = vmatprep.subr.mxu0 0.0
    %5215 = vmatpush1.msra.mxu0 0.0
    %5216 = vmatprep.subr.mxu0 0.0
    %5217 = vmatpush1.msra.mxu0 0.0
    %5218 = vmatprep.subr.mxu0 0.0
    %5219 = vmatpush1.msra.mxu0 0.0
    %5220 = vmatprep.subr.mxu0 0.0
    %5221 = vmatpush1.msra.mxu0 0.0
    %5222 = vmatprep.subr.mxu0 0.0
    %5223 = vmatpush1.msra.mxu0 0.0
    %5224 = vmatprep.subr.mxu0 0.0
    %5225 = vmatpush1.msra.mxu0 0.0
    %5226 = vmatprep.subr.mxu0 0.0
    %5227 = vmatpush1.msra.mxu0 0.0
    %5228 = vmatprep.subr.mxu0 0.0
    %5229 = vmatpush1.msra.mxu0 0.0
    %5230 = vmatprep.subr.mxu0 0.0
    %5231 = vmatpush1.msra.mxu0 0.0
    %5232 = vmatprep.subr.mxu0 0.0
    %5233 = vmatpush1.msra.mxu0 0.0
    %5234 = vmatprep.subr.mxu0 0.0
    %5235 = vmatpush1.msra.mxu0 0.0
    %5236 = vmatprep.subr.mxu0 0.0
    %5237 = vmatpush1.msra.mxu0 0.0
    %5238 = vmatprep.subr.mxu0 0.0
    %5239 = vmatpush1.msra.mxu0 0.0
    %5240 = vmatprep.subr.mxu0 0.0
    %5241 = vmatpush1.msra.mxu0 0.0
    %5242 = vmatprep.subr.mxu0 0.0
    %5243 = vmatpush1.msra.mxu0 0.0
    %5244 = vmatprep.subr.mxu0 0.0
    %5245 = vmatpush1.msra.mxu0 0.0
    %5246 = vmatprep.subr.mxu0 0.0
    %5247 = vmatpush1.msra.mxu0 0.0
    %5248 = vmatprep.subr.mxu0 0.0
    %5249 = vmatpush1.msra.mxu0 0.0
    %5250 = vmatprep.subr.mxu0 0.0
    %5251 = vmatpush1.msra.mxu0 0.0
    %5252 = vmatprep.subr.mxu0 0.0
    %5253 = vmatpush1.msra.mxu0 0.0
    %5254 = vmatprep.subr.mxu0 0.0
    %5255 = vmatpush1.msra.mxu0 0.0
    %5256 = vmatprep.subr.mxu0 0.0
    %5257 = vmatpush1.msra.mxu0 0.0
    %5258 = vmatprep.subr.mxu0 0.0
    %5259 = vmatpush1.msra.mxu0 0.0
    %5260 = vmatprep.subr.mxu0 0.0
    %5261 = vmatpush1.msra.mxu0 0.0
    %5262 = vmatprep.subr.mxu0 0.0
    %5263 = vmatpush1.msra.mxu0 0.0
    %5264 = vmatprep.subr.mxu0 0.0
    %5265 = vmatpush1.msra.mxu0 0.0
    %5266 = vmatprep.subr.mxu0 0.0
    %5267 = vmatpush1.msra.mxu0 0.0
    %5268 = vmatprep.subr.mxu0 0.0
    %5269 = vmatpush1.msra.mxu0 0.0
    %5270 = vmatprep.subr.mxu0 0.0
    %5271 = vmatpush1.msra.mxu0 0.0
    %5272 = vmatprep.subr.mxu0 0.0
    %5273 = vmatpush1.msra.mxu0 0.0
    %5274 = vmatprep.mubr.f32.mxu0 0.0
    %5275 = vmatmul.mubr.f32.gmra.mrb[0].mxu0 %v5205
    %v5276 = vpop.f32.mrb[0].mxu0
    %v5277 = vadd.f32 0.0, %v5276
    %v5278 = vpop.f32.mrb[0].mxu0
    %5279 = vdwg.mxu0
    %5280 = vrot.lane.b32.xlu0 %v4973, 120
    %v5281 = vpop.permute.xlu0 %5280
    %5282 = vrot.lane.b32.xlu0 %v5043, 120
    %v5283 = vpop.permute.xlu0 %5282
    %v5284 = vsel %vm666, %v5281, 0
    %v5286 = vsel %vm666, %v5283, 0
    %5288 = vmatprep.subr.mxu0 0.0
    %5289 = vmatpush1.xpose.msra.mxu0 %v5286
    %5290 = vmatprep.subr.mxu0 0.0
    %5291 = vmatpush1.xpose.msra.mxu0 0.0
    %5292 = vmatprep.subr.mxu0 0.0
    %5293 = vmatpush1.xpose.msra.mxu0 0.0
    %5294 = vmatprep.subr.mxu0 0.0
    %5295 = vmatpush1.xpose.msra.mxu0 0.0
    %5296 = vmatprep.subr.mxu0 0.0
    %5297 = vmatpush1.xpose.msra.mxu0 0.0
    %5298 = vmatprep.subr.mxu0 0.0
    %5299 = vmatpush1.xpose.msra.mxu0 0.0
    %5300 = vmatprep.subr.mxu0 0.0
    %5301 = vmatpush1.xpose.msra.mxu0 0.0
    %5302 = vmatprep.subr.mxu0 0.0
    %5303 = vmatpush1.xpose.msra.mxu0 0.0
    %5304 = vmatprep.subr.mxu0 0.0
    %5305 = vmatpush1.xpose.msra.mxu0 0.0
    %5306 = vmatprep.subr.mxu0 0.0
    %5307 = vmatpush1.xpose.msra.mxu0 0.0
    %5308 = vmatprep.subr.mxu0 0.0
    %5309 = vmatpush1.xpose.msra.mxu0 0.0
    %5310 = vmatprep.subr.mxu0 0.0
    %5311 = vmatpush1.xpose.msra.mxu0 0.0
    %5312 = vmatprep.subr.mxu0 0.0
    %5313 = vmatpush1.xpose.msra.mxu0 0.0
    %5314 = vmatprep.subr.mxu0 0.0
    %5315 = vmatpush1.xpose.msra.mxu0 0.0
    %5316 = vmatprep.subr.mxu0 0.0
    %5317 = vmatpush1.xpose.msra.mxu0 0.0
    %5318 = vmatprep.subr.mxu0 0.0
    %5319 = vmatpush1.xpose.msra.mxu0 0.0
    %5320 = vmatprep.subr.mxu0 0.0
    %5321 = vmatpush1.xpose.msra.mxu0 0.0
    %5322 = vmatprep.subr.mxu0 0.0
    %5323 = vmatpush1.xpose.msra.mxu0 0.0
    %5324 = vmatprep.subr.mxu0 0.0
    %5325 = vmatpush1.xpose.msra.mxu0 0.0
    %5326 = vmatprep.subr.mxu0 0.0
    %5327 = vmatpush1.xpose.msra.mxu0 0.0
    %5328 = vmatprep.subr.mxu0 0.0
    %5329 = vmatpush1.xpose.msra.mxu0 0.0
    %5330 = vmatprep.subr.mxu0 0.0
    %5331 = vmatpush1.xpose.msra.mxu0 0.0
    %5332 = vmatprep.subr.mxu0 0.0
    %5333 = vmatpush1.xpose.msra.mxu0 0.0
    %5334 = vmatprep.subr.mxu0 0.0
    %5335 = vmatpush1.xpose.msra.mxu0 0.0
    %5336 = vmatprep.subr.mxu0 0.0
    %5337 = vmatpush1.xpose.msra.mxu0 0.0
    %5338 = vmatprep.subr.mxu0 0.0
    %5339 = vmatpush1.xpose.msra.mxu0 0.0
    %5340 = vmatprep.subr.mxu0 0.0
    %5341 = vmatpush1.xpose.msra.mxu0 0.0
    %5342 = vmatprep.subr.mxu0 0.0
    %5343 = vmatpush1.xpose.msra.mxu0 0.0
    %5344 = vmatprep.subr.mxu0 0.0
    %5345 = vmatpush1.xpose.msra.mxu0 0.0
    %5346 = vmatprep.subr.mxu0 0.0
    %5347 = vmatpush1.xpose.msra.mxu0 0.0
    %5348 = vmatprep.subr.mxu0 0.0
    %5349 = vmatpush1.xpose.msra.mxu0 0.0
    %5350 = vmatprep.subr.mxu0 0.0
    %5351 = vmatpush1.xpose.msra.mxu0 0.0
    %5352 = vmatprep.mubr.f32.mxu0 0.0
    %5353 = vmatmul.mubr.f32.gmra.mrb[0].mxu0 %v5284
    %v5354 = vpop.f32.mrb[0].mxu0
    %v5355 = vadd.f32 0.0, %v5354
    %v5356 = vpop.f32.mrb[0].mxu0
    %5357 = vdwg.mxu0
    %v5358 = vmul.f32 %v5355, 0.35355338
    %v5359 = vsel %vm744, %v5358, -inf
    %5360 = vmax.xlane.f32.xlu0 %v5359
    %v5361 = vpop.xlane.xlu0 %5360
    %v5362 = vsub.f32 %v5358, %v5361
    %v5363 = vmul.f32 %v5362, 1.442695
    %v5364 = vpow.pop %v5363
    %v5365 = vsel %vm744, %v5364, 0.0
    %5366 = vadd.xlane.f32.xlu0 %v5365
    %v5367 = vpop.xlane.xlu0 %5366
    %v5368 = vrcp.pop %v5367
    %v5369 = vmul.f32 %v5364, %v5368
    %5370 = vrot.lane.b32.xlu0 %v5113, 120
    %v5371 = vpop.permute.xlu0 %5370
    %v5373 = vsel %vm285, %v5369, 0
    %v5375 = vsel %vm759, %v5371, 0
    %5377 = vmatprep.subr.mxu0 0.0
    %5378 = vmatpush1.msra.mxu0 %v5375
    %5379 = vmatprep.subr.mxu0 0.0
    %5380 = vmatpush1.msra.mxu0 0.0
    %5381 = vmatprep.subr.mxu0 0.0
    %5382 = vmatpush1.msra.mxu0 0.0
    %5383 = vmatprep.subr.mxu0 0.0
    %5384 = vmatpush1.msra.mxu0 0.0
    %5385 = vmatprep.subr.mxu0 0.0
    %5386 = vmatpush1.msra.mxu0 0.0
    %5387 = vmatprep.subr.mxu0 0.0
    %5388 = vmatpush1.msra.mxu0 0.0
    %5389 = vmatprep.subr.mxu0 0.0
    %5390 = vmatpush1.msra.mxu0 0.0
    %5391 = vmatprep.subr.mxu0 0.0
    %5392 = vmatpush1.msra.mxu0 0.0
    %5393 = vmatprep.subr.mxu0 0.0
    %5394 = vmatpush1.msra.mxu0 0.0
    %5395 = vmatprep.subr.mxu0 0.0
    %5396 = vmatpush1.msra.mxu0 0.0
    %5397 = vmatprep.subr.mxu0 0.0
    %5398 = vmatpush1.msra.mxu0 0.0
    %5399 = vmatprep.subr.mxu0 0.0
    %5400 = vmatpush1.msra.mxu0 0.0
    %5401 = vmatprep.subr.mxu0 0.0
    %5402 = vmatpush1.msra.mxu0 0.0
    %5403 = vmatprep.subr.mxu0 0.0
    %5404 = vmatpush1.msra.mxu0 0.0
    %5405 = vmatprep.subr.mxu0 0.0
    %5406 = vmatpush1.msra.mxu0 0.0
    %5407 = vmatprep.subr.mxu0 0.0
    %5408 = vmatpush1.msra.mxu0 0.0
    %5409 = vmatprep.subr.mxu0 0.0
    %5410 = vmatpush1.msra.mxu0 0.0
    %5411 = vmatprep.subr.mxu0 0.0
    %5412 = vmatpush1.msra.mxu0 0.0
    %5413 = vmatprep.subr.mxu0 0.0
    %5414 = vmatpush1.msra.mxu0 0.0
    %5415 = vmatprep.subr.mxu0 0.0
    %5416 = vmatpush1.msra.mxu0 0.0
    %5417 = vmatprep.subr.mxu0 0.0
    %5418 = vmatpush1.msra.mxu0 0.0
    %5419 = vmatprep.subr.mxu0 0.0
    %5420 = vmatpush1.msra.mxu0 0.0
    %5421 = vmatprep.subr.mxu0 0.0
    %5422 = vmatpush1.msra.mxu0 0.0
    %5423 = vmatprep.subr.mxu0 0.0
    %5424 = vmatpush1.msra.mxu0 0.0
    %5425 = vmatprep.subr.mxu0 0.0
    %5426 = vmatpush1.msra.mxu0 0.0
    %5427 = vmatprep.subr.mxu0 0.0
    %5428 = vmatpush1.msra.mxu0 0.0
    %5429 = vmatprep.subr.mxu0 0.0
    %5430 = vmatpush1.msra.mxu0 0.0
    %5431 = vmatprep.subr.mxu0 0.0
    %5432 = vmatpush1.msra.mxu0 0.0
    %5433 = vmatprep.subr.mxu0 0.0
    %5434 = vmatpush1.msra.mxu0 0.0
    %5435 = vmatprep.subr.mxu0 0.0
    %5436 = vmatpush1.msra.mxu0 0.0
    %5437 = vmatprep.subr.mxu0 0.0
    %5438 = vmatpush1.msra.mxu0 0.0
    %5439 = vmatprep.subr.mxu0 0.0
    %5440 = vmatpush1.msra.mxu0 0.0
    %5441 = vmatprep.mubr.f32.mxu0 0.0
    %5442 = vmatmul.mubr.f32.gmra.mrb[0].mxu0 %v5373
    %v5443 = vpop.f32.mrb[0].mxu0
    %v5444 = vadd.f32 0.0, %v5443
    %v5445 = vpop.f32.mrb[0].mxu0
    %5446 = vdwg.mxu0
    %v5448 = vsel %vm666, %v5444, 0
    %5450 = vmatprep.subr.mxu0 0.0
    %5451 = vmatpush1.msra.mxu0 %v252
    %5452 = vmatprep.subr.mxu0 0.0
    %5453 = vmatpush1.msra.mxu0 0.0
    %5454 = vmatprep.subr.mxu0 0.0
    %5455 = vmatpush1.msra.mxu0 0.0
    %5456 = vmatprep.subr.mxu0 0.0
    %5457 = vmatpush1.msra.mxu0 0.0
    %5458 = vmatprep.subr.mxu0 0.0
    %5459 = vmatpush1.msra.mxu0 0.0
    %5460 = vmatprep.subr.mxu0 0.0
    %5461 = vmatpush1.msra.mxu0 0.0
    %5462 = vmatprep.subr.mxu0 0.0
    %5463 = vmatpush1.msra.mxu0 0.0
    %5464 = vmatprep.subr.mxu0 0.0
    %5465 = vmatpush1.msra.mxu0 0.0
    %5466 = vmatprep.subr.mxu0 0.0
    %5467 = vmatpush1.msra.mxu0 0.0
    %5468 = vmatprep.subr.mxu0 0.0
    %5469 = vmatpush1.msra.mxu0 0.0
    %5470 = vmatprep.subr.mxu0 0.0
    %5471 = vmatpush1.msra.mxu0 0.0
    %5472 = vmatprep.subr.mxu0 0.0
    %5473 = vmatpush1.msra.mxu0 0.0
    %5474 = vmatprep.subr.mxu0 0.0
    %5475 = vmatpush1.msra.mxu0 0.0
    %5476 = vmatprep.subr.mxu0 0.0
    %5477 = vmatpush1.msra.mxu0 0.0
    %5478 = vmatprep.subr.mxu0 0.0
    %5479 = vmatpush1.msra.mxu0 0.0
    %5480 = vmatprep.subr.mxu0 0.0
    %5481 = vmatpush1.msra.mxu0 0.0
    %5482 = vmatprep.subr.mxu0 0.0
    %5483 = vmatpush1.msra.mxu0 0.0
    %5484 = vmatprep.subr.mxu0 0.0
    %5485 = vmatpush1.msra.mxu0 0.0
    %5486 = vmatprep.subr.mxu0 0.0
    %5487 = vmatpush1.msra.mxu0 0.0
    %5488 = vmatprep.subr.mxu0 0.0
    %5489 = vmatpush1.msra.mxu0 0.0
    %5490 = vmatprep.subr.mxu0 0.0
    %5491 = vmatpush1.msra.mxu0 0.0
    %5492 = vmatprep.subr.mxu0 0.0
    %5493 = vmatpush1.msra.mxu0 0.0
    %5494 = vmatprep.subr.mxu0 0.0
    %5495 = vmatpush1.msra.mxu0 0.0
    %5496 = vmatprep.subr.mxu0 0.0
    %5497 = vmatpush1.msra.mxu0 0.0
    %5498 = vmatprep.subr.mxu0 0.0
    %5499 = vmatpush1.msra.mxu0 0.0
    %5500 = vmatprep.subr.mxu0 0.0
    %5501 = vmatpush1.msra.mxu0 0.0
    %5502 = vmatprep.subr.mxu0 0.0
    %5503 = vmatpush1.msra.mxu0 0.0
    %5504 = vmatprep.subr.mxu0 0.0
    %5505 = vmatpush1.msra.mxu0 0.0
    %5506 = vmatprep.subr.mxu0 0.0
    %5507 = vmatpush1.msra.mxu0 0.0
    %5508 = vmatprep.subr.mxu0 0.0
    %5509 = vmatpush1.msra.mxu0 0.0
    %5510 = vmatprep.subr.mxu0 0.0
    %5511 = vmatpush1.msra.mxu0 0.0
    %5512 = vmatprep.subr.mxu0 0.0
    %5513 = vmatpush1.msra.mxu0 0.0
    %5514 = vmatprep.mubr.f32.mxu0 0.0
    %5515 = vmatmul.mubr.f32.gmra.mrb[0].mxu0 %v5448
    %v5516 = vpop.f32.mrb[0].mxu0
    %v5517 = vadd.f32 0.0, %v5516
    %v5518 = vpop.f32.mrb[0].mxu0
    %5519 = vdwg.mxu0
    %v5521 = vsel %vm666, %v5277, 0
    %5523 = vmatprep.subr.mxu0 0.0
    %5524 = vmatpush1.msra.mxu0 %v251
    %5525 = vmatprep.subr.mxu0 0.0
    %5526 = vmatpush1.msra.mxu0 0.0
    %5527 = vmatprep.subr.mxu0 0.0
    %5528 = vmatpush1.msra.mxu0 0.0
    %5529 = vmatprep.subr.mxu0 0.0
    %5530 = vmatpush1.msra.mxu0 0.0
    %5531 = vmatprep.subr.mxu0 0.0
    %5532 = vmatpush1.msra.mxu0 0.0
    %5533 = vmatprep.subr.mxu0 0.0
    %5534 = vmatpush1.msra.mxu0 0.0
    %5535 = vmatprep.subr.mxu0 0.0
    %5536 = vmatpush1.msra.mxu0 0.0
    %5537 = vmatprep.subr.mxu0 0.0
    %5538 = vmatpush1.msra.mxu0 0.0
    %5539 = vmatprep.subr.mxu0 0.0
    %5540 = vmatpush1.msra.mxu0 0.0
    %5541 = vmatprep.subr.mxu0 0.0
    %5542 = vmatpush1.msra.mxu0 0.0
    %5543 = vmatprep.subr.mxu0 0.0
    %5544 = vmatpush1.msra.mxu0 0.0
    %5545 = vmatprep.subr.mxu0 0.0
    %5546 = vmatpush1.msra.mxu0 0.0
    %5547 = vmatprep.subr.mxu0 0.0
    %5548 = vmatpush1.msra.mxu0 0.0
    %5549 = vmatprep.subr.mxu0 0.0
    %5550 = vmatpush1.msra.mxu0 0.0
    %5551 = vmatprep.subr.mxu0 0.0
    %5552 = vmatpush1.msra.mxu0 0.0
    %5553 = vmatprep.subr.mxu0 0.0
    %5554 = vmatpush1.msra.mxu0 0.0
    %5555 = vmatprep.subr.mxu0 0.0
    %5556 = vmatpush1.msra.mxu0 0.0
    %5557 = vmatprep.subr.mxu0 0.0
    %5558 = vmatpush1.msra.mxu0 0.0
    %5559 = vmatprep.subr.mxu0 0.0
    %5560 = vmatpush1.msra.mxu0 0.0
    %5561 = vmatprep.subr.mxu0 0.0
    %5562 = vmatpush1.msra.mxu0 0.0
    %5563 = vmatprep.subr.mxu0 0.0
    %5564 = vmatpush1.msra.mxu0 0.0
    %5565 = vmatprep.subr.mxu0 0.0
    %5566 = vmatpush1.msra.mxu0 0.0
    %5567 = vmatprep.subr.mxu0 0.0
    %5568 = vmatpush1.msra.mxu0 0.0
    %5569 = vmatprep.subr.mxu0 0.0
    %5570 = vmatpush1.msra.mxu0 0.0
    %5571 = vmatprep.subr.mxu0 0.0
    %5572 = vmatpush1.msra.mxu0 0.0
    %5573 = vmatprep.subr.mxu0 0.0
    %5574 = vmatpush1.msra.mxu0 0.0
    %5575 = vmatprep.subr.mxu0 0.0
    %5576 = vmatpush1.msra.mxu0 0.0
    %5577 = vmatprep.subr.mxu0 0.0
    %5578 = vmatpush1.msra.mxu0 0.0
    %5579 = vmatprep.subr.mxu0 0.0
    %5580 = vmatpush1.msra.mxu0 0.0
    %5581 = vmatprep.subr.mxu0 0.0
    %5582 = vmatpush1.msra.mxu0 0.0
    %5583 = vmatprep.subr.mxu0 0.0
    %5584 = vmatpush1.msra.mxu0 0.0
    %5585 = vmatprep.subr.mxu0 0.0
    %5586 = vmatpush1.msra.mxu0 0.0
    %5587 = vmatprep.mubr.f32.mxu0 0.0
    %5588 = vmatmul.mubr.f32.gmra.mrb[0].mxu0 %v5521
    %v5589 = vpop.f32.mrb[0].mxu0
    %v5590 = vadd.f32 %v5517, %v5589
    %v5591 = vpop.f32.mrb[0].mxu0
    %5592 = vdwg.mxu0
    %5593 = vrot.lane.b32.xlu0 %v4973, 112
    %v5594 = vpop.permute.xlu0 %5593
    %5595 = vrot.lane.b32.xlu0 %v5043, 112
    %v5596 = vpop.permute.xlu0 %5595
    %v5597 = vsel %vm666, %v5594, 0
    %v5599 = vsel %vm666, %v5596, 0
    %5601 = vmatprep.subr.mxu0 0.0
    %5602 = vmatpush1.xpose.msra.mxu0 %v5599
    %5603 = vmatprep.subr.mxu0 0.0
    %5604 = vmatpush1.xpose.msra.mxu0 0.0
    %5605 = vmatprep.subr.mxu0 0.0
    %5606 = vmatpush1.xpose.msra.mxu0 0.0
    %5607 = vmatprep.subr.mxu0 0.0
    %5608 = vmatpush1.xpose.msra.mxu0 0.0
    %5609 = vmatprep.subr.mxu0 0.0
    %5610 = vmatpush1.xpose.msra.mxu0 0.0
    %5611 = vmatprep.subr.mxu0 0.0
    %5612 = vmatpush1.xpose.msra.mxu0 0.0
    %5613 = vmatprep.subr.mxu0 0.0
    %5614 = vmatpush1.xpose.msra.mxu0 0.0
    %5615 = vmatprep.subr.mxu0 0.0
    %5616 = vmatpush1.xpose.msra.mxu0 0.0
    %5617 = vmatprep.subr.mxu0 0.0
    %5618 = vmatpush1.xpose.msra.mxu0 0.0
    %5619 = vmatprep.subr.mxu0 0.0
    %5620 = vmatpush1.xpose.msra.mxu0 0.0
    %5621 = vmatprep.subr.mxu0 0.0
    %5622 = vmatpush1.xpose.msra.mxu0 0.0
    %5623 = vmatprep.subr.mxu0 0.0
    %5624 = vmatpush1.xpose.msra.mxu0 0.0
    %5625 = vmatprep.subr.mxu0 0.0
    %5626 = vmatpush1.xpose.msra.mxu0 0.0
    %5627 = vmatprep.subr.mxu0 0.0
    %5628 = vmatpush1.xpose.msra.mxu0 0.0
    %5629 = vmatprep.subr.mxu0 0.0
    %5630 = vmatpush1.xpose.msra.mxu0 0.0
    %5631 = vmatprep.subr.mxu0 0.0
    %5632 = vmatpush1.xpose.msra.mxu0 0.0
    %5633 = vmatprep.subr.mxu0 0.0
    %5634 = vmatpush1.xpose.msra.mxu0 0.0
    %5635 = vmatprep.subr.mxu0 0.0
    %5636 = vmatpush1.xpose.msra.mxu0 0.0
    %5637 = vmatprep.subr.mxu0 0.0
    %5638 = vmatpush1.xpose.msra.mxu0 0.0
    %5639 = vmatprep.subr.mxu0 0.0
    %5640 = vmatpush1.xpose.msra.mxu0 0.0
    %5641 = vmatprep.subr.mxu0 0.0
    %5642 = vmatpush1.xpose.msra.mxu0 0.0
    %5643 = vmatprep.subr.mxu0 0.0
    %5644 = vmatpush1.xpose.msra.mxu0 0.0
    %5645 = vmatprep.subr.mxu0 0.0
    %5646 = vmatpush1.xpose.msra.mxu0 0.0
    %5647 = vmatprep.subr.mxu0 0.0
    %5648 = vmatpush1.xpose.msra.mxu0 0.0
    %5649 = vmatprep.subr.mxu0 0.0
    %5650 = vmatpush1.xpose.msra.mxu0 0.0
    %5651 = vmatprep.subr.mxu0 0.0
    %5652 = vmatpush1.xpose.msra.mxu0 0.0
    %5653 = vmatprep.subr.mxu0 0.0
    %5654 = vmatpush1.xpose.msra.mxu0 0.0
    %5655 = vmatprep.subr.mxu0 0.0
    %5656 = vmatpush1.xpose.msra.mxu0 0.0
    %5657 = vmatprep.subr.mxu0 0.0
    %5658 = vmatpush1.xpose.msra.mxu0 0.0
    %5659 = vmatprep.subr.mxu0 0.0
    %5660 = vmatpush1.xpose.msra.mxu0 0.0
    %5661 = vmatprep.subr.mxu0 0.0
    %5662 = vmatpush1.xpose.msra.mxu0 0.0
    %5663 = vmatprep.subr.mxu0 0.0
    %5664 = vmatpush1.xpose.msra.mxu0 0.0
    %5665 = vmatprep.mubr.f32.mxu0 0.0
    %5666 = vmatmul.mubr.f32.gmra.mrb[0].mxu0 %v5597
    %v5667 = vpop.f32.mrb[0].mxu0
    %v5668 = vadd.f32 0.0, %v5667
    %v5669 = vpop.f32.mrb[0].mxu0
    %5670 = vdwg.mxu0
    %v5671 = vmul.f32 %v5668, 0.35355338
    %v5672 = vsel %vm744, %v5671, -inf
    %5673 = vmax.xlane.f32.xlu0 %v5672
    %v5674 = vpop.xlane.xlu0 %5673
    %v5675 = vsub.f32 %v5671, %v5674
    %v5676 = vmul.f32 %v5675, 1.442695
    %v5677 = vpow.pop %v5676
    %v5678 = vsel %vm744, %v5677, 0.0
    %5679 = vadd.xlane.f32.xlu0 %v5678
    %v5680 = vpop.xlane.xlu0 %5679
    %v5681 = vrcp.pop %v5680
    %v5682 = vmul.f32 %v5677, %v5681
    %5683 = vrot.lane.b32.xlu0 %v5113, 112
    %v5684 = vpop.permute.xlu0 %5683
    %v5686 = vsel %vm285, %v5682, 0
    %v5688 = vsel %vm759, %v5684, 0
    %5690 = vmatprep.subr.mxu0 0.0
    %5691 = vmatpush1.msra.mxu0 %v5688
    %5692 = vmatprep.subr.mxu0 0.0
    %5693 = vmatpush1.msra.mxu0 0.0
    %5694 = vmatprep.subr.mxu0 0.0
    %5695 = vmatpush1.msra.mxu0 0.0
    %5696 = vmatprep.subr.mxu0 0.0
    %5697 = vmatpush1.msra.mxu0 0.0
    %5698 = vmatprep.subr.mxu0 0.0
    %5699 = vmatpush1.msra.mxu0 0.0
    %5700 = vmatprep.subr.mxu0 0.0
    %5701 = vmatpush1.msra.mxu0 0.0
    %5702 = vmatprep.subr.mxu0 0.0
    %5703 = vmatpush1.msra.mxu0 0.0
    %5704 = vmatprep.subr.mxu0 0.0
    %5705 = vmatpush1.msra.mxu0 0.0
    %5706 = vmatprep.subr.mxu0 0.0
    %5707 = vmatpush1.msra.mxu0 0.0
    %5708 = vmatprep.subr.mxu0 0.0
    %5709 = vmatpush1.msra.mxu0 0.0
    %5710 = vmatprep.subr.mxu0 0.0
    %5711 = vmatpush1.msra.mxu0 0.0
    %5712 = vmatprep.subr.mxu0 0.0
    %5713 = vmatpush1.msra.mxu0 0.0
    %5714 = vmatprep.subr.mxu0 0.0
    %5715 = vmatpush1.msra.mxu0 0.0
    %5716 = vmatprep.subr.mxu0 0.0
    %5717 = vmatpush1.msra.mxu0 0.0
    %5718 = vmatprep.subr.mxu0 0.0
    %5719 = vmatpush1.msra.mxu0 0.0
    %5720 = vmatprep.subr.mxu0 0.0
    %5721 = vmatpush1.msra.mxu0 0.0
    %5722 = vmatprep.subr.mxu0 0.0
    %5723 = vmatpush1.msra.mxu0 0.0
    %5724 = vmatprep.subr.mxu0 0.0
    %5725 = vmatpush1.msra.mxu0 0.0
    %5726 = vmatprep.subr.mxu0 0.0
    %5727 = vmatpush1.msra.mxu0 0.0
    %5728 = vmatprep.subr.mxu0 0.0
    %5729 = vmatpush1.msra.mxu0 0.0
    %5730 = vmatprep.subr.mxu0 0.0
    %5731 = vmatpush1.msra.mxu0 0.0
    %5732 = vmatprep.subr.mxu0 0.0
    %5733 = vmatpush1.msra.mxu0 0.0
    %5734 = vmatprep.subr.mxu0 0.0
    %5735 = vmatpush1.msra.mxu0 0.0
    %5736 = vmatprep.subr.mxu0 0.0
    %5737 = vmatpush1.msra.mxu0 0.0
    %5738 = vmatprep.subr.mxu0 0.0
    %5739 = vmatpush1.msra.mxu0 0.0
    %5740 = vmatprep.subr.mxu0 0.0
    %5741 = vmatpush1.msra.mxu0 0.0
    %5742 = vmatprep.subr.mxu0 0.0
    %5743 = vmatpush1.msra.mxu0 0.0
    %5744 = vmatprep.subr.mxu0 0.0
    %5745 = vmatpush1.msra.mxu0 0.0
    %5746 = vmatprep.subr.mxu0 0.0
    %5747 = vmatpush1.msra.mxu0 0.0
    %5748 = vmatprep.subr.mxu0 0.0
    %5749 = vmatpush1.msra.mxu0 0.0
    %5750 = vmatprep.subr.mxu0 0.0
    %5751 = vmatpush1.msra.mxu0 0.0
    %5752 = vmatprep.subr.mxu0 0.0
    %5753 = vmatpush1.msra.mxu0 0.0
    %5754 = vmatprep.mubr.f32.mxu0 0.0
    %5755 = vmatmul.mubr.f32.gmra.mrb[0].mxu0 %v5686
    %v5756 = vpop.f32.mrb[0].mxu0
    %v5757 = vadd.f32 0.0, %v5756
    %v5758 = vpop.f32.mrb[0].mxu0
    %5759 = vdwg.mxu0
    %v5761 = vsel %vm666, %v5757, 0
    %5763 = vmatprep.subr.mxu0 0.0
    %5764 = vmatpush1.msra.mxu0 %v253
    %5765 = vmatprep.subr.mxu0 0.0
    %5766 = vmatpush1.msra.mxu0 0.0
    %5767 = vmatprep.subr.mxu0 0.0
    %5768 = vmatpush1.msra.mxu0 0.0
    %5769 = vmatprep.subr.mxu0 0.0
    %5770 = vmatpush1.msra.mxu0 0.0
    %5771 = vmatprep.subr.mxu0 0.0
    %5772 = vmatpush1.msra.mxu0 0.0
    %5773 = vmatprep.subr.mxu0 0.0
    %5774 = vmatpush1.msra.mxu0 0.0
    %5775 = vmatprep.subr.mxu0 0.0
    %5776 = vmatpush1.msra.mxu0 0.0
    %5777 = vmatprep.subr.mxu0 0.0
    %5778 = vmatpush1.msra.mxu0 0.0
    %5779 = vmatprep.subr.mxu0 0.0
    %5780 = vmatpush1.msra.mxu0 0.0
    %5781 = vmatprep.subr.mxu0 0.0
    %5782 = vmatpush1.msra.mxu0 0.0
    %5783 = vmatprep.subr.mxu0 0.0
    %5784 = vmatpush1.msra.mxu0 0.0
    %5785 = vmatprep.subr.mxu0 0.0
    %5786 = vmatpush1.msra.mxu0 0.0
    %5787 = vmatprep.subr.mxu0 0.0
    %5788 = vmatpush1.msra.mxu0 0.0
    %5789 = vmatprep.subr.mxu0 0.0
    %5790 = vmatpush1.msra.mxu0 0.0
    %5791 = vmatprep.subr.mxu0 0.0
    %5792 = vmatpush1.msra.mxu0 0.0
    %5793 = vmatprep.subr.mxu0 0.0
    %5794 = vmatpush1.msra.mxu0 0.0
    %5795 = vmatprep.subr.mxu0 0.0
    %5796 = vmatpush1.msra.mxu0 0.0
    %5797 = vmatprep.subr.mxu0 0.0
    %5798 = vmatpush1.msra.mxu0 0.0
    %5799 = vmatprep.subr.mxu0 0.0
    %5800 = vmatpush1.msra.mxu0 0.0
    %5801 = vmatprep.subr.mxu0 0.0
    %5802 = vmatpush1.msra.mxu0 0.0
    %5803 = vmatprep.subr.mxu0 0.0
    %5804 = vmatpush1.msra.mxu0 0.0
    %5805 = vmatprep.subr.mxu0 0.0
    %5806 = vmatpush1.msra.mxu0 0.0
    %5807 = vmatprep.subr.mxu0 0.0
    %5808 = vmatpush1.msra.mxu0 0.0
    %5809 = vmatprep.subr.mxu0 0.0
    %5810 = vmatpush1.msra.mxu0 0.0
    %5811 = vmatprep.subr.mxu0 0.0
    %5812 = vmatpush1.msra.mxu0 0.0
    %5813 = vmatprep.subr.mxu0 0.0
    %5814 = vmatpush1.msra.mxu0 0.0
    %5815 = vmatprep.subr.mxu0 0.0
    %5816 = vmatpush1.msra.mxu0 0.0
    %5817 = vmatprep.subr.mxu0 0.0
    %5818 = vmatpush1.msra.mxu0 0.0
    %5819 = vmatprep.subr.mxu0 0.0
    %5820 = vmatpush1.msra.mxu0 0.0
    %5821 = vmatprep.subr.mxu0 0.0
    %5822 = vmatpush1.msra.mxu0 0.0
    %5823 = vmatprep.subr.mxu0 0.0
    %5824 = vmatpush1.msra.mxu0 0.0
    %5825 = vmatprep.subr.mxu0 0.0
    %5826 = vmatpush1.msra.mxu0 0.0
    %5827 = vmatprep.mubr.f32.mxu0 0.0
    %5828 = vmatmul.mubr.f32.gmra.mrb[0].mxu0 %v5761
    %v5829 = vpop.f32.mrb[0].mxu0
    %v5830 = vadd.f32 0.0, %v5829
    %v5831 = vpop.f32.mrb[0].mxu0
    %5832 = vdwg.mxu0
    %v5833 = vadd.f32 %v5590, %v5830
    %5834 = vrot.lane.b32.xlu0 %v4973, 104
    %v5835 = vpop.permute.xlu0 %5834
    %5836 = vrot.lane.b32.xlu0 %v5043, 104
    %v5837 = vpop.permute.xlu0 %5836
    %v5838 = vsel %vm666, %v5835, 0
    %v5840 = vsel %vm666, %v5837, 0
    %5842 = vmatprep.subr.mxu0 0.0
    %5843 = vmatpush1.xpose.msra.mxu0 %v5840
    %5844 = vmatprep.subr.mxu0 0.0
    %5845 = vmatpush1.xpose.msra.mxu0 0.0
    %5846 = vmatprep.subr.mxu0 0.0
    %5847 = vmatpush1.xpose.msra.mxu0 0.0
    %5848 = vmatprep.subr.mxu0 0.0
    %5849 = vmatpush1.xpose.msra.mxu0 0.0
    %5850 = vmatprep.subr.mxu0 0.0
    %5851 = vmatpush1.xpose.msra.mxu0 0.0
    %5852 = vmatprep.subr.mxu0 0.0
    %5853 = vmatpush1.xpose.msra.mxu0 0.0
    %5854 = vmatprep.subr.mxu0 0.0
    %5855 = vmatpush1.xpose.msra.mxu0 0.0
    %5856 = vmatprep.subr.mxu0 0.0
    %5857 = vmatpush1.xpose.msra.mxu0 0.0
    %5858 = vmatprep.subr.mxu0 0.0
    %5859 = vmatpush1.xpose.msra.mxu0 0.0
    %5860 = vmatprep.subr.mxu0 0.0
    %5861 = vmatpush1.xpose.msra.mxu0 0.0
    %5862 = vmatprep.subr.mxu0 0.0
    %5863 = vmatpush1.xpose.msra.mxu0 0.0
    %5864 = vmatprep.subr.mxu0 0.0
    %5865 = vmatpush1.xpose.msra.mxu0 0.0
    %5866 = vmatprep.subr.mxu0 0.0
    %5867 = vmatpush1.xpose.msra.mxu0 0.0
    %5868 = vmatprep.subr.mxu0 0.0
    %5869 = vmatpush1.xpose.msra.mxu0 0.0
    %5870 = vmatprep.subr.mxu0 0.0
    %5871 = vmatpush1.xpose.msra.mxu0 0.0
    %5872 = vmatprep.subr.mxu0 0.0
    %5873 = vmatpush1.xpose.msra.mxu0 0.0
    %5874 = vmatprep.subr.mxu0 0.0
    %5875 = vmatpush1.xpose.msra.mxu0 0.0
    %5876 = vmatprep.subr.mxu0 0.0
    %5877 = vmatpush1.xpose.msra.mxu0 0.0
    %5878 = vmatprep.subr.mxu0 0.0
    %5879 = vmatpush1.xpose.msra.mxu0 0.0
    %5880 = vmatprep.subr.mxu0 0.0
    %5881 = vmatpush1.xpose.msra.mxu0 0.0
    %5882 = vmatprep.subr.mxu0 0.0
    %5883 = vmatpush1.xpose.msra.mxu0 0.0
    %5884 = vmatprep.subr.mxu0 0.0
    %5885 = vmatpush1.xpose.msra.mxu0 0.0
    %5886 = vmatprep.subr.mxu0 0.0
    %5887 = vmatpush1.xpose.msra.mxu0 0.0
    %5888 = vmatprep.subr.mxu0 0.0
    %5889 = vmatpush1.xpose.msra.mxu0 0.0
    %5890 = vmatprep.subr.mxu0 0.0
    %5891 = vmatpush1.xpose.msra.mxu0 0.0
    %5892 = vmatprep.subr.mxu0 0.0
    %5893 = vmatpush1.xpose.msra.mxu0 0.0
    %5894 = vmatprep.subr.mxu0 0.0
    %5895 = vmatpush1.xpose.msra.mxu0 0.0
    %5896 = vmatprep.subr.mxu0 0.0
    %5897 = vmatpush1.xpose.msra.mxu0 0.0
    %5898 = vmatprep.subr.mxu0 0.0
    %5899 = vmatpush1.xpose.msra.mxu0 0.0
    %5900 = vmatprep.subr.mxu0 0.0
    %5901 = vmatpush1.xpose.msra.mxu0 0.0
    %5902 = vmatprep.subr.mxu0 0.0
    %5903 = vmatpush1.xpose.msra.mxu0 0.0
    %5904 = vmatprep.subr.mxu0 0.0
    %5905 = vmatpush1.xpose.msra.mxu0 0.0
    %5906 = vmatprep.mubr.f32.mxu0 0.0
    %5907 = vmatmul.mubr.f32.gmra.mrb[0].mxu0 %v5838
    %v5908 = vpop.f32.mrb[0].mxu0
    %v5909 = vadd.f32 0.0, %v5908
    %v5910 = vpop.f32.mrb[0].mxu0
    %5911 = vdwg.mxu0
    %v5912 = vmul.f32 %v5909, 0.35355338
    %v5913 = vsel %vm744, %v5912, -inf
    %5914 = vmax.xlane.f32.xlu0 %v5913
    %v5915 = vpop.xlane.xlu0 %5914
    %v5916 = vsub.f32 %v5912, %v5915
    %v5917 = vmul.f32 %v5916, 1.442695
    %v5918 = vpow.pop %v5917
    %v5919 = vsel %vm744, %v5918, 0.0
    %5920 = vadd.xlane.f32.xlu0 %v5919
    %v5921 = vpop.xlane.xlu0 %5920
    %v5922 = vrcp.pop %v5921
    %v5923 = vmul.f32 %v5918, %v5922
    %5924 = vrot.lane.b32.xlu0 %v5113, 104
    %v5925 = vpop.permute.xlu0 %5924
    %v5927 = vsel %vm285, %v5923, 0
    %v5929 = vsel %vm759, %v5925, 0
    %5931 = vmatprep.subr.mxu0 0.0
    %5932 = vmatpush1.msra.mxu0 %v5929
    %5933 = vmatprep.subr.mxu0 0.0
    %5934 = vmatpush1.msra.mxu0 0.0
    %5935 = vmatprep.subr.mxu0 0.0
    %5936 = vmatpush1.msra.mxu0 0.0
    %5937 = vmatprep.subr.mxu0 0.0
    %5938 = vmatpush1.msra.mxu0 0.0
    %5939 = vmatprep.subr.mxu0 0.0
    %5940 = vmatpush1.msra.mxu0 0.0
    %5941 = vmatprep.subr.mxu0 0.0
    %5942 = vmatpush1.msra.mxu0 0.0
    %5943 = vmatprep.subr.mxu0 0.0
    %5944 = vmatpush1.msra.mxu0 0.0
    %5945 = vmatprep.subr.mxu0 0.0
    %5946 = vmatpush1.msra.mxu0 0.0
    %5947 = vmatprep.subr.mxu0 0.0
    %5948 = vmatpush1.msra.mxu0 0.0
    %5949 = vmatprep.subr.mxu0 0.0
    %5950 = vmatpush1.msra.mxu0 0.0
    %5951 = vmatprep.subr.mxu0 0.0
    %5952 = vmatpush1.msra.mxu0 0.0
    %5953 = vmatprep.subr.mxu0 0.0
    %5954 = vmatpush1.msra.mxu0 0.0
    %5955 = vmatprep.subr.mxu0 0.0
    %5956 = vmatpush1.msra.mxu0 0.0
    %5957 = vmatprep.subr.mxu0 0.0
    %5958 = vmatpush1.msra.mxu0 0.0
    %5959 = vmatprep.subr.mxu0 0.0
    %5960 = vmatpush1.msra.mxu0 0.0
    %5961 = vmatprep.subr.mxu0 0.0
    %5962 = vmatpush1.msra.mxu0 0.0
    %5963 = vmatprep.subr.mxu0 0.0
    %5964 = vmatpush1.msra.mxu0 0.0
    %5965 = vmatprep.subr.mxu0 0.0
    %5966 = vmatpush1.msra.mxu0 0.0
    %5967 = vmatprep.subr.mxu0 0.0
    %5968 = vmatpush1.msra.mxu0 0.0
    %5969 = vmatprep.subr.mxu0 0.0
    %5970 = vmatpush1.msra.mxu0 0.0
    %5971 = vmatprep.subr.mxu0 0.0
    %5972 = vmatpush1.msra.mxu0 0.0
    %5973 = vmatprep.subr.mxu0 0.0
    %5974 = vmatpush1.msra.mxu0 0.0
    %5975 = vmatprep.subr.mxu0 0.0
    %5976 = vmatpush1.msra.mxu0 0.0
    %5977 = vmatprep.subr.mxu0 0.0
    %5978 = vmatpush1.msra.mxu0 0.0
    %5979 = vmatprep.subr.mxu0 0.0
    %5980 = vmatpush1.msra.mxu0 0.0
    %5981 = vmatprep.subr.mxu0 0.0
    %5982 = vmatpush1.msra.mxu0 0.0
    %5983 = vmatprep.subr.mxu0 0.0
    %5984 = vmatpush1.msra.mxu0 0.0
    %5985 = vmatprep.subr.mxu0 0.0
    %5986 = vmatpush1.msra.mxu0 0.0
    %5987 = vmatprep.subr.mxu0 0.0
    %5988 = vmatpush1.msra.mxu0 0.0
    %5989 = vmatprep.subr.mxu0 0.0
    %5990 = vmatpush1.msra.mxu0 0.0
    %5991 = vmatprep.subr.mxu0 0.0
    %5992 = vmatpush1.msra.mxu0 0.0
    %5993 = vmatprep.subr.mxu0 0.0
    %5994 = vmatpush1.msra.mxu0 0.0
    %5995 = vmatprep.mubr.f32.mxu0 0.0
    %5996 = vmatmul.mubr.f32.gmra.mrb[0].mxu0 %v5927
    %v5997 = vpop.f32.mrb[0].mxu0
    %v5998 = vadd.f32 0.0, %v5997
    %v5999 = vpop.f32.mrb[0].mxu0
    %6000 = vdwg.mxu0
    %v6002 = vsel %vm666, %v5998, 0
    %6004 = vmatprep.subr.mxu0 0.0
    %6005 = vmatpush1.msra.mxu0 %v254
    %6006 = vmatprep.subr.mxu0 0.0
    %6007 = vmatpush1.msra.mxu0 0.0
    %6008 = vmatprep.subr.mxu0 0.0
    %6009 = vmatpush1.msra.mxu0 0.0
    %6010 = vmatprep.subr.mxu0 0.0
    %6011 = vmatpush1.msra.mxu0 0.0
    %6012 = vmatprep.subr.mxu0 0.0
    %6013 = vmatpush1.msra.mxu0 0.0
    %6014 = vmatprep.subr.mxu0 0.0
    %6015 = vmatpush1.msra.mxu0 0.0
    %6016 = vmatprep.subr.mxu0 0.0
    %6017 = vmatpush1.msra.mxu0 0.0
    %6018 = vmatprep.subr.mxu0 0.0
    %6019 = vmatpush1.msra.mxu0 0.0
    %6020 = vmatprep.subr.mxu0 0.0
    %6021 = vmatpush1.msra.mxu0 0.0
    %6022 = vmatprep.subr.mxu0 0.0
    %6023 = vmatpush1.msra.mxu0 0.0
    %6024 = vmatprep.subr.mxu0 0.0
    %6025 = vmatpush1.msra.mxu0 0.0
    %6026 = vmatprep.subr.mxu0 0.0
    %6027 = vmatpush1.msra.mxu0 0.0
    %6028 = vmatprep.subr.mxu0 0.0
    %6029 = vmatpush1.msra.mxu0 0.0
    %6030 = vmatprep.subr.mxu0 0.0
    %6031 = vmatpush1.msra.mxu0 0.0
    %6032 = vmatprep.subr.mxu0 0.0
    %6033 = vmatpush1.msra.mxu0 0.0
    %6034 = vmatprep.subr.mxu0 0.0
    %6035 = vmatpush1.msra.mxu0 0.0
    %6036 = vmatprep.subr.mxu0 0.0
    %6037 = vmatpush1.msra.mxu0 0.0
    %6038 = vmatprep.subr.mxu0 0.0
    %6039 = vmatpush1.msra.mxu0 0.0
    %6040 = vmatprep.subr.mxu0 0.0
    %6041 = vmatpush1.msra.mxu0 0.0
    %6042 = vmatprep.subr.mxu0 0.0
    %6043 = vmatpush1.msra.mxu0 0.0
    %6044 = vmatprep.subr.mxu0 0.0
    %6045 = vmatpush1.msra.mxu0 0.0
    %6046 = vmatprep.subr.mxu0 0.0
    %6047 = vmatpush1.msra.mxu0 0.0
    %6048 = vmatprep.subr.mxu0 0.0
    %6049 = vmatpush1.msra.mxu0 0.0
    %6050 = vmatprep.subr.mxu0 0.0
    %6051 = vmatpush1.msra.mxu0 0.0
    %6052 = vmatprep.subr.mxu0 0.0
    %6053 = vmatpush1.msra.mxu0 0.0
    %6054 = vmatprep.subr.mxu0 0.0
    %6055 = vmatpush1.msra.mxu0 0.0
    %6056 = vmatprep.subr.mxu0 0.0
    %6057 = vmatpush1.msra.mxu0 0.0
    %6058 = vmatprep.subr.mxu0 0.0
    %6059 = vmatpush1.msra.mxu0 0.0
    %6060 = vmatprep.subr.mxu0 0.0
    %6061 = vmatpush1.msra.mxu0 0.0
    %6062 = vmatprep.subr.mxu0 0.0
    %6063 = vmatpush1.msra.mxu0 0.0
    %6064 = vmatprep.subr.mxu0 0.0
    %6065 = vmatpush1.msra.mxu0 0.0
    %6066 = vmatprep.subr.mxu0 0.0
    %6067 = vmatpush1.msra.mxu0 0.0
    %6068 = vmatprep.mubr.f32.mxu0 0.0
    %6069 = vmatmul.mubr.f32.gmra.mrb[0].mxu0 %v6002
    %v6070 = vpop.f32.mrb[0].mxu0
    %v6071 = vadd.f32 0.0, %v6070
    %v6072 = vpop.f32.mrb[0].mxu0
    %6073 = vdwg.mxu0
    %v6074 = vadd.f32 %v5833, %v6071
    %v6075 = vadd.f32 %v4902, %v6074
    %v6076 = vadd.f32 %v6075, %v3048
    %v6077 = vsel %vm1636, %v6076, 0.0
    %6078 = vadd.xlane.f32.xlu0 %v6077
    %v6079 = vpop.xlane.xlu0 %6078
    %v6080 = vmul.f32 %v6079, %v1640
    %v6081 = vsub.f32 %v6076, %v6080
    %v6082 = vmul.f32 %v6081, %v6081
    %v6083 = vsel %vm1636, %v6082, 0.0
    %6084 = vadd.xlane.f32.xlu0 %v6083
    %v6085 = vpop.xlane.xlu0 %6084
    %v6086 = vmul.f32 %v6085, %v1640
    %v6087 = vadd.f32 %v6086, 1e-05
    %v6088 = vrsqrt.pop %v6087
    %v6089 = vmul.f32 %v6081, %v6088
    %v6090 = vmul.f32 %v6089, %v3068
    %v6091 = vadd.f32 %v6090, %v3075
    %v6093 = vsel %vm440, %v6091, 0
    %6095 = vmatprep.subr.mxu0 0.0
    %6096 = vmatpush1.msra.mxu0 %v262
    %6097 = vmatprep.subr.mxu0 0.0
    %6098 = vmatpush1.msra.mxu0 %v263
    %6099 = vmatprep.subr.mxu0 0.0
    %6100 = vmatpush1.msra.mxu0 %v264
    %6101 = vmatprep.subr.mxu0 0.0
    %6102 = vmatpush1.msra.mxu0 %v265
    %6103 = vmatprep.subr.mxu0 0.0
    %6104 = vmatpush1.msra.mxu0 0.0
    %6105 = vmatprep.subr.mxu0 0.0
    %6106 = vmatpush1.msra.mxu0 0.0
    %6107 = vmatprep.subr.mxu0 0.0
    %6108 = vmatpush1.msra.mxu0 0.0
    %6109 = vmatprep.subr.mxu0 0.0
    %6110 = vmatpush1.msra.mxu0 0.0
    %6111 = vmatprep.subr.mxu0 0.0
    %6112 = vmatpush1.msra.mxu0 0.0
    %6113 = vmatprep.subr.mxu0 0.0
    %6114 = vmatpush1.msra.mxu0 0.0
    %6115 = vmatprep.subr.mxu0 0.0
    %6116 = vmatpush1.msra.mxu0 0.0
    %6117 = vmatprep.subr.mxu0 0.0
    %6118 = vmatpush1.msra.mxu0 0.0
    %6119 = vmatprep.subr.mxu0 0.0
    %6120 = vmatpush1.msra.mxu0 0.0
    %6121 = vmatprep.subr.mxu0 0.0
    %6122 = vmatpush1.msra.mxu0 0.0
    %6123 = vmatprep.subr.mxu0 0.0
    %6124 = vmatpush1.msra.mxu0 0.0
    %6125 = vmatprep.subr.mxu0 0.0
    %6126 = vmatpush1.msra.mxu0 0.0
    %6127 = vmatprep.subr.mxu0 0.0
    %6128 = vmatpush1.msra.mxu0 0.0
    %6129 = vmatprep.subr.mxu0 0.0
    %6130 = vmatpush1.msra.mxu0 0.0
    %6131 = vmatprep.subr.mxu0 0.0
    %6132 = vmatpush1.msra.mxu0 0.0
    %6133 = vmatprep.subr.mxu0 0.0
    %6134 = vmatpush1.msra.mxu0 0.0
    %6135 = vmatprep.subr.mxu0 0.0
    %6136 = vmatpush1.msra.mxu0 0.0
    %6137 = vmatprep.subr.mxu0 0.0
    %6138 = vmatpush1.msra.mxu0 0.0
    %6139 = vmatprep.subr.mxu0 0.0
    %6140 = vmatpush1.msra.mxu0 0.0
    %6141 = vmatprep.subr.mxu0 0.0
    %6142 = vmatpush1.msra.mxu0 0.0
    %6143 = vmatprep.subr.mxu0 0.0
    %6144 = vmatpush1.msra.mxu0 0.0
    %6145 = vmatprep.subr.mxu0 0.0
    %6146 = vmatpush1.msra.mxu0 0.0
    %6147 = vmatprep.subr.mxu0 0.0
    %6148 = vmatpush1.msra.mxu0 0.0
    %6149 = vmatprep.subr.mxu0 0.0
    %6150 = vmatpush1.msra.mxu0 0.0
    %6151 = vmatprep.subr.mxu0 0.0
    %6152 = vmatpush1.msra.mxu0 0.0
    %6153 = vmatprep.subr.mxu0 0.0
    %6154 = vmatpush1.msra.mxu0 0.0
    %6155 = vmatprep.subr.mxu0 0.0
    %6156 = vmatpush1.msra.mxu0 0.0
    %6157 = vmatprep.subr.mxu0 0.0
    %6158 = vmatpush1.msra.mxu0 0.0
    %6159 = vmatprep.mubr.f32.mxu0 0.0
    %6160 = vmatmul.mubr.f32.gmra.mrb[0].mxu0 %v6093
    %v6161 = vpop.f32.mrb[0].mxu0
    %v6162 = vadd.f32 %v3082, %v6161
    %v6163 = vpop.f32.mrb[0].mxu0
    %6164 = vdwg.mxu0
    %v6165 = vmax.f32 %v6162, 0.0
    %v6167 = vsel %vm1751, %v6165, 0
    %6169 = vmatprep.subr.mxu0 0.0
    %6170 = vmatpush1.msra.mxu0 %v269
    %6171 = vmatprep.subr.mxu0 0.0
    %6172 = vmatpush1.msra.mxu0 %v270
    %6173 = vmatprep.subr.mxu0 0.0
    %6174 = vmatpush1.msra.mxu0 %v271
    %6175 = vmatprep.subr.mxu0 0.0
    %6176 = vmatpush1.msra.mxu0 %v272
    %6177 = vmatprep.subr.mxu0 0.0
    %6178 = vmatpush1.msra.mxu0 %v273
    %6179 = vmatprep.subr.mxu0 0.0
    %6180 = vmatpush1.msra.mxu0 %v274
    %6181 = vmatprep.subr.mxu0 0.0
    %6182 = vmatpush1.msra.mxu0 %v275
    %6183 = vmatprep.subr.mxu0 0.0
    %6184 = vmatpush1.msra.mxu0 %v276
    %6185 = vmatprep.subr.mxu0 0.0
    %6186 = vmatpush1.msra.mxu0 0.0
    %6187 = vmatprep.subr.mxu0 0.0
    %6188 = vmatpush1.msra.mxu0 0.0
    %6189 = vmatprep.subr.mxu0 0.0
    %6190 = vmatpush1.msra.mxu0 0.0
    %6191 = vmatprep.subr.mxu0 0.0
    %6192 = vmatpush1.msra.mxu0 0.0
    %6193 = vmatprep.subr.mxu0 0.0
    %6194 = vmatpush1.msra.mxu0 0.0
    %6195 = vmatprep.subr.mxu0 0.0
    %6196 = vmatpush1.msra.mxu0 0.0
    %6197 = vmatprep.subr.mxu0 0.0
    %6198 = vmatpush1.msra.mxu0 0.0
    %6199 = vmatprep.subr.mxu0 0.0
    %6200 = vmatpush1.msra.mxu0 0.0
    %6201 = vmatprep.subr.mxu0 0.0
    %6202 = vmatpush1.msra.mxu0 0.0
    %6203 = vmatprep.subr.mxu0 0.0
    %6204 = vmatpush1.msra.mxu0 0.0
    %6205 = vmatprep.subr.mxu0 0.0
    %6206 = vmatpush1.msra.mxu0 0.0
    %6207 = vmatprep.subr.mxu0 0.0
    %6208 = vmatpush1.msra.mxu0 0.0
    %6209 = vmatprep.subr.mxu0 0.0
    %6210 = vmatpush1.msra.mxu0 0.0
    %6211 = vmatprep.subr.mxu0 0.0
    %6212 = vmatpush1.msra.mxu0 0.0
    %6213 = vmatprep.subr.mxu0 0.0
    %6214 = vmatpush1.msra.mxu0 0.0
    %6215 = vmatprep.subr.mxu0 0.0
    %6216 = vmatpush1.msra.mxu0 0.0
    %6217 = vmatprep.subr.mxu0 0.0
    %6218 = vmatpush1.msra.mxu0 0.0
    %6219 = vmatprep.subr.mxu0 0.0
    %6220 = vmatpush1.msra.mxu0 0.0
    %6221 = vmatprep.subr.mxu0 0.0
    %6222 = vmatpush1.msra.mxu0 0.0
    %6223 = vmatprep.subr.mxu0 0.0
    %6224 = vmatpush1.msra.mxu0 0.0
    %6225 = vmatprep.subr.mxu0 0.0
    %6226 = vmatpush1.msra.mxu0 0.0
    %6227 = vmatprep.subr.mxu0 0.0
    %6228 = vmatpush1.msra.mxu0 0.0
    %6229 = vmatprep.subr.mxu0 0.0
    %6230 = vmatpush1.msra.mxu0 0.0
    %6231 = vmatprep.subr.mxu0 0.0
    %6232 = vmatpush1.msra.mxu0 0.0
    %6233 = vmatprep.mubr.f32.mxu0 0.0
    %6234 = vmatmul.mubr.f32.gmra.mrb[0].mxu0 %v6167
    %v6235 = vpop.f32.mrb[0].mxu0
    %v6236 = vadd.f32 %v3162, %v6235
    %v6237 = vpop.f32.mrb[0].mxu0
    %6238 = vdwg.mxu0
    %v6239 = vadd.f32 %v6091, %v6236
    %v6240 = vsel %vm1636, %v6239, 0.0
    %6241 = vadd.xlane.f32.xlu0 %v6240
    %v6242 = vpop.xlane.xlu0 %6241
    %v6243 = vmul.f32 %v6242, %v1640
    %v6244 = vsub.f32 %v6239, %v6243
    %v6245 = vmul.f32 %v6244, %v6244
    %v6246 = vsel %vm1636, %v6245, 0.0
    %6247 = vadd.xlane.f32.xlu0 %v6246
    %v6248 = vpop.xlane.xlu0 %6247
    %v6249 = vmul.f32 %v6248, %v1640
    %v6250 = vadd.f32 %v6249, 1e-05
    %v6251 = vrsqrt.pop %v6250
    %v6252 = vmul.f32 %v6244, %v6251
    %v6253 = vmul.f32 %v6252, %v3255
    %v6254 = vadd.f32 %v6253, %v3262
    %v6255 = vsel %vm1636, %v6254, 0.0
    %6256 = vadd.xlane.f32.xlu0 %v6255
    %v6257 = vpop.xlane.xlu0 %6256
    %v6258 = vmul.f32 %v6257, %v1640
    %v6259 = vsub.f32 %v6254, %v6258
    %v6260 = vmul.f32 %v6259, %v6259
    %v6261 = vsel %vm1636, %v6260, 0.0
    %6262 = vadd.xlane.f32.xlu0 %v6261
    %v6263 = vpop.xlane.xlu0 %6262
    %v6264 = vmul.f32 %v6263, %v1640
    %v6265 = vadd.f32 %v6264, 1e-05
    %v6266 = vrsqrt.pop %v6265
    %v6267 = vmul.f32 %v6259, %v6266
    %v6268 = vmul.f32 %v6267, %v3282
    %v6269 = vadd.f32 %v6268, %v3289
    %v6271 = vsel %vm440, %v6269, 0
    %6273 = vmatprep.subr.mxu0 0.0
    %6274 = vmatpush1.xpose.msra.mxu0 %v6271
    %6275 = vmatprep.subr.mxu0 0.0
    %6276 = vmatpush1.xpose.msra.mxu0 0.0
    %6277 = vmatprep.subr.mxu0 0.0
    %6278 = vmatpush1.xpose.msra.mxu0 0.0
    %6279 = vmatprep.subr.mxu0 0.0
    %6280 = vmatpush1.xpose.msra.mxu0 0.0
    %6281 = vmatprep.subr.mxu0 0.0
    %6282 = vmatpush1.xpose.msra.mxu0 0.0
    %6283 = vmatprep.subr.mxu0 0.0
    %6284 = vmatpush1.xpose.msra.mxu0 0.0
    %6285 = vmatprep.subr.mxu0 0.0
    %6286 = vmatpush1.xpose.msra.mxu0 0.0
    %6287 = vmatprep.subr.mxu0 0.0
    %6288 = vmatpush1.xpose.msra.mxu0 0.0
    %6289 = vmatprep.subr.mxu0 0.0
    %6290 = vmatpush1.xpose.msra.mxu0 0.0
    %6291 = vmatprep.subr.mxu0 0.0
    %6292 = vmatpush1.xpose.msra.mxu0 0.0
    %6293 = vmatprep.subr.mxu0 0.0
    %6294 = vmatpush1.xpose.msra.mxu0 0.0
    %6295 = vmatprep.subr.mxu0 0.0
    %6296 = vmatpush1.xpose.msra.mxu0 0.0
    %6297 = vmatprep.subr.mxu0 0.0
    %6298 = vmatpush1.xpose.msra.mxu0 0.0
    %6299 = vmatprep.subr.mxu0 0.0
    %6300 = vmatpush1.xpose.msra.mxu0 0.0
    %6301 = vmatprep.subr.mxu0 0.0
    %6302 = vmatpush1.xpose.msra.mxu0 0.0
    %6303 = vmatprep.subr.mxu0 0.0
    %6304 = vmatpush1.xpose.msra.mxu0 0.0
    %6305 = vmatprep.subr.mxu0 0.0
    %6306 = vmatpush1.xpose.msra.mxu0 0.0
    %6307 = vmatprep.subr.mxu0 0.0
    %6308 = vmatpush1.xpose.msra.mxu0 0.0
    %6309 = vmatprep.subr.mxu0 0.0
    %6310 = vmatpush1.xpose.msra.mxu0 0.0
    %6311 = vmatprep.subr.mxu0 0.0
    %6312 = vmatpush1.xpose.msra.mxu0 0.0
    %6313 = vmatprep.subr.mxu0 0.0
    %6314 = vmatpush1.xpose.msra.mxu0 0.0
    %6315 = vmatprep.subr.mxu0 0.0
    %6316 = vmatpush1.xpose.msra.mxu0 0.0
    %6317 = vmatprep.subr.mxu0 0.0
    %6318 = vmatpush1.xpose.msra.mxu0 0.0
    %6319 = vmatprep.subr.mxu0 0.0
    %6320 = vmatpush1.xpose.msra.mxu0 0.0
    %6321 = vmatprep.subr.mxu0 0.0
    %6322 = vmatpush1.xpose.msra.mxu0 0.0
    %6323 = vmatprep.subr.mxu0 0.0
    %6324 = vmatpush1.xpose.msra.mxu0 0.0
    %6325 = vmatprep.subr.mxu0 0.0
    %6326 = vmatpush1.xpose.msra.mxu0 0.0
    %6327 = vmatprep.subr.mxu0 0.0
    %6328 = vmatpush1.xpose.msra.mxu0 0.0
    %6329 = vmatprep.subr.mxu0 0.0
    %6330 = vmatpush1.xpose.msra.mxu0 0.0
    %6331 = vmatprep.subr.mxu0 0.0
    %6332 = vmatpush1.xpose.msra.mxu0 0.0
    %6333 = vmatprep.subr.mxu0 0.0
    %6334 = vmatpush1.xpose.msra.mxu0 0.0
    %6335 = vmatprep.subr.mxu0 0.0
    %6336 = vmatpush1.xpose.msra.mxu0 0.0
    %6337 = vmatprep.mubr.f32.mxu0 0.0
    %6338 = vmatmul.mubr.f32.gmra.mrb[0].mxu0 %v3330
    %v6339 = vpop.f32.mrb[0].mxu0
    %v6340 = vadd.f32 %v3295, %v6339
    %v6341 = vpop.f32.mrb[0].mxu0
    %6342 = vdwg.mxu0
    %v6343 = vmul.f32 %v6340, %v3442
    %v6344 = vadd.f32 %v6343, %v3420
    %s6345 = scalar_lea.vmem %s23, 8
    %6346 = vst.msk [vmem:[%s6345] sm:$0xff] %vm285, %v6344
    // Predicated region
    $region126: #{tpu_custom_call.1} parent=1 // pred_check
      _
    $region127: #{tpu_custom_call.1} parent=1 // pred_check_branch
      %6348 = sbr.rel (0) target = $region129
    $region128: #{tpu_custom_call.1} parent=1 // pred_region
      _
    $region129: #{tpu_custom_call.1} parent=1 // pred_fallthru
      _
    // Predicated region
    $region130: #{tpu_custom_call.1} parent=1 // pred_check
      _
    $region131: #{tpu_custom_call.1} parent=1 // pred_check_branch
      %6350 = sbr.rel (0) target = $region133
    $region132: #{tpu_custom_call.1} parent=1 // pred_region
      _
    $region133: #{tpu_custom_call.1} parent=1 // pred_fallthru
      _
    %6351 = vsyncpa [#allocation3], 1
    %6352 = vsyncpa [#allocation5], 1
    %6353 = vsyncpa [#allocation8], 1
    %6354 = vsyncpa [#allocation11], 1
    %6355 = vsyncpa [#allocation14], 1

</llo_original>
